<compile_context>
chip_gen: v5e
topology: v5e:2x2
jax: 0.10.0
libtpu: 0.0.40
codegen_flags: <defaults>
</compile_context>

<pallas_src>
import functools

import numpy as np
import jax
import jax.numpy as jnp
from jax.experimental import pallas as pl
from jax.experimental.pallas import tpu as pltpu


# ------------------------------ fused kernel -------------------------------

def _net1d_kernel(x_ref, fT_ref, cT_ref, wr_ref, wi_ref, pw_ref, pb_ref,
                  f0w_ref, f0b_ref, f1w_ref, f1b_ref, f2w_ref, f2b_ref,
                  o_ref, *, n_layers, bt, modes):
    f32 = jnp.float32
    M = modes
    xb = x_ref[...]                          # (bt, 2, S)
    C = f0w_ref.shape[0]                     # width
    S = xb.shape[-1]
    R = bt * C

    def bdot(a, b):
        # batched matmul over leading dim: (B, m, k) x (B, k, n) -> (B, m, n)
        return jax.lax.dot_general(a, b, (((2,), (1,)), ((0,), (0,))),
                                   preferred_element_type=f32)

    # fc0 (pointwise over the spatial axis): h[b, w, s] = sum_c fc0_w[c, w] x[b, c, s] + b[w]
    h = bdot(jnp.broadcast_to(f0w_ref[...], (bt,) + f0w_ref.shape), xb)
    h = h + f0b_ref[...][None]               # (bt, C, S)

    fT = fT_ref[...]                         # (2M, S)  = [Fr^T; Fi^T]
    cT = cT_ref[...]                         # (2M, S)  = [Cr; Ci]
    bd_mode = (((2,), (1,)), ((0,), (0,)))   # batch over modes, contract channels

    for l in range(n_layers):
        wr_t = wr_ref[l]                     # (M, Cin, Cout)
        wi_t = wi_ref[l]                     # (M, Cin, Cout)
        pw = pw_ref[l]                       # (Cout, Cin)
        pb = pb_ref[l]                       # (Cout, 1)

        # ---- SpectralConv1d ----
        h2d = h.reshape(R, S)
        # forward restricted rDFT (mode-major), one MXU matmul: (2M,S)x(R,S) -> (2M,R)
        xcat = jax.lax.dot_general(fT, h2d, (((1,), (1,)), ((), ())),
                                   preferred_element_type=f32)
        xr = xcat[:M].reshape(M, bt, C)      # Re(x_ft)
        xi = xcat[M:].reshape(M, bt, C)      # Im(x_ft)
        # complex per-mode channel mixing as mode-batched MXU matmuls
        o_r = bdot(xr, wr_t) - bdot(xi, wi_t)            # (M, bt, Cout)
        o_i = bdot(xr, wi_t) + bdot(xi, wr_t)            # (M, bt, Cout)
        o_full = jnp.concatenate([o_r.reshape(M, R), o_i.reshape(M, R)], axis=0)
        # inverse restricted rDFT (hermitian scaling folded into cT): (2M,R)x(2M,S) -> (R,S)
        y = jax.lax.dot_general(o_full, cT, (((0,), (0,)), ((), ())),
                                preferred_element_type=f32).reshape(bt, C, S)

        # ---- pointwise (kernel-size-1) Conv1d ----
        z = bdot(jnp.broadcast_to(pw, (bt,) + pw.shape), h)

        h = y + z + pb[None]
        if l < n_layers - 1:
            h = jnp.maximum(h, 0.0)

    # fc1 (+relu) and fc2, still channels-major so no transposes are needed.
    H1 = f1w_ref.shape[0]
    h = bdot(jnp.broadcast_to(f1w_ref[...], (bt, H1, C)), h) + f1b_ref[...][None]
    h = jnp.maximum(h, 0.0)                                  # (bt, 128, S)
    out = bdot(jnp.broadcast_to(f2w_ref[...], (bt, 1, H1)), h) + f2b_ref[...][None]
    o_ref[...] = out.astype(o_ref.dtype)                     # (bt, 1, S)


def _pick_bt(B, C):
    """Batch-chunk per grid step: fill MXU rows (bt*C ~ 128-256) but keep >=2
    parallel grid steps when possible (v7x has 2 TensorCores)."""
    bt = max(1, min(B, 256 // max(C, 1)))
    while B % bt:
        bt -= 1
    if B // bt < 2:
        bt2 = max(1, B // 2)
        while bt2 > 1 and B % bt2:
            bt2 -= 1
        bt = bt2
    return bt


def net1d_forward(params, x, fr, fi, cr, ci, *, bt=None):
    """x: (B, S, 2) -> (B, S).  Single fused pallas_call for the whole forward."""
    B, S, _ = x.shape
    W = params["fc0_w"].shape[1]
    M = fr.shape[1]
    if bt is None:
        bt = _pick_bt(B, W)
    assert B % bt == 0

    # ---- host-side (one-time) weight/layout prep: pure plumbing, no compute ----
    fcatT = jnp.concatenate([fr.T, fi.T], axis=0)                      # (2M, S)
    ccat = jnp.concatenate([cr, ci], axis=0)                           # (2M, S)
    wr_all = jnp.stack([jnp.transpose(params[f"spec{i}_wr"], (2, 0, 1))
                        for i in range(4)])                            # (4, M, W, W)
    wi_all = jnp.stack([jnp.transpose(params[f"spec{i}_wi"], (2, 0, 1))
                        for i in range(4)])                            # (4, M, W, W)
    pw_all = jnp.stack([params[f"w{i}_w"] for i in range(4)])          # (4, W, W)
    pb_all = jnp.stack([params[f"w{i}_b"] for i in range(4)])          # (4, W, 1)
    f0w = params["fc0_w"].T                                            # (W, 2)
    f0b = params["fc0_b"].T                                            # (W, 1)
    f1w = params["fc1_w"].T                                            # (128, W)
    f1b = params["fc1_b"].T                                            # (128, 1)
    f2w = params["fc2_w"].T                                            # (1, 128)
    f2b = params["fc2_b"]                                              # (1, 1)
    x_t = jnp.transpose(x, (0, 2, 1))                                  # (B, 2, S)

    def wfull(arr):
        nd = arr.ndim
        return pl.BlockSpec(arr.shape, lambda g, nd=nd: (0,) * nd)

    out = pl.pallas_call(
        functools.partial(_net1d_kernel, n_layers=4, bt=bt, modes=M),
        out_shape=jax.ShapeDtypeStruct((B, 1, S), jnp.float32),
        grid=(B // bt,),
        in_specs=[
            pl.BlockSpec((bt, 2, S), lambda g: (g, 0, 0)),   # x (channels-major)
            wfull(fcatT), wfull(ccat),                        # DFT / inverse-DFT
            wfull(wr_all), wfull(wi_all),                     # spectral weights (re, im)
            wfull(pw_all), wfull(pb_all),                     # 1x1 conv weights / bias
            wfull(f0w), wfull(f0b),
            wfull(f1w), wfull(f1b),
            wfull(f2w), wfull(f2b),
        ],
        out_specs=pl.BlockSpec((bt, 1, S), lambda g: (g, 0, 0)),
        compiler_params=pltpu.CompilerParams(dimension_semantics=("parallel",)),
    )(x_t, fcatT, ccat, wr_all, wi_all, pw_all, pb_all,
      f0w, f0b, f1w, f1b, f2w, f2b)
    return out.reshape(B, S)


# ------------------------------ model assembly -----------------------------

def dft_matrices(S, M):
    """Restricted-mode rFFT / irFFT as real matrices (only the first M modes)."""
    n = np.arange(S, dtype=np.float64)[:, None]
    k = np.arange(M, dtype=np.float64)[None, :]
    ang = 2.0 * np.pi * n * k / S
    Fr = np.cos(ang).astype(np.float32)                  # (S, M)
    Fi = (-np.sin(ang)).astype(np.float32)               # (S, M)

    scale = np.where(np.arange(M) == 0, 1.0, 2.0)
    if S % 2 == 0 and M - 1 >= S // 2:                   # Nyquist mode (if present)
        scale = np.where(np.arange(M) == S // 2, 1.0, scale)
    angT = ang.T                                          # (M, S)
    Cr = (scale[:, None] * np.cos(angT) / S).astype(np.float32)
    Ci = (-scale[:, None] * np.sin(angT) / S).astype(np.float32)
    return jnp.asarray(Fr), jnp.asarray(Fi), jnp.asarray(Cr), jnp.asarray(Ci)


def init_params(key, width, modes):
    keys = jax.random.split(key, 22)
    scale = 1.0 / (width * width)
    p = {}
    p["fc0_w"] = jax.random.uniform(keys[0], (2, width), jnp.float32, -0.5, 0.5)
    p["fc0_b"] = jax.random.uniform(keys[1], (1, width), jnp.float32, -0.5, 0.5)
    for i in range(4):
        p[f"spec{i}_wr"] = scale * jax.random.uniform(keys[2 + 4 * i], (width, width, modes), jnp.float32)
        p[f"spec{i}_wi"] = scale * jax.random.uniform(keys[3 + 4 * i], (width, width, modes), jnp.float32)
        p[f"w{i}_w"] = jax.random.uniform(keys[4 + 4 * i], (width, width), jnp.float32, -0.1, 0.1)
        p[f"w{i}_b"] = jax.random.uniform(keys[5 + 4 * i], (width, 1), jnp.float32, -0.1, 0.1)
    p["fc1_w"] = jax.random.uniform(keys[18], (width, 128), jnp.float32, -0.1, 0.1)
    p["fc1_b"] = jax.random.uniform(keys[19], (1, 128), jnp.float32, -0.1, 0.1)
    p["fc2_w"] = jax.random.uniform(keys[20], (128, 1), jnp.float32, -0.1, 0.1)
    p["fc2_b"] = jax.random.uniform(keys[21], (1, 1), jnp.float32, -0.1, 0.1)
    return p


# Pure-JAX reference (same DFT-matrix formulation) for correctness checking.
def reference_forward(params, x, fr, fi, cr, ci):
    B, S, _ = x.shape
    hp = jax.lax.Precision.HIGHEST
    h = x.reshape(B * S, 2) @ params["fc0_w"] + params["fc0_b"]
    h = h.reshape(B, S, -1).transpose(0, 2, 1)
    for i in range(4):
        xr = jnp.einsum('bcs,sm->bcm', h, fr, precision=hp)
        xi = jnp.einsum('bcs,sm->bcm', h, fi, precision=hp)
        wr, wi = params[f"spec{i}_wr"], params[f"spec{i}_wi"]
        o_r = (jnp.einsum('bim,iom->bom', xr, wr, precision=hp)
               - jnp.einsum('bim,iom->bom', xi, wi, precision=hp))
        o_i = (jnp.einsum('bim,iom->bom', xr, wi, precision=hp)
               + jnp.einsum('bim,iom->bom', xi, wr, precision=hp))
        y = (jnp.einsum('bom,ms->bos', o_r, cr, precision=hp)
             + jnp.einsum('bom,ms->bos', o_i, ci, precision=hp))
        z = jnp.einsum('oi,bis->bos', params[f"w{i}_w"], h, precision=hp) + params[f"w{i}_b"][None]
        h = y + z
        if i < 3:
            h = jnp.maximum(h, 0.0)
    h = h.transpose(0, 2, 1).reshape(B * S, -1)
    h = jnp.maximum(h @ params["fc1_w"] + params["fc1_b"], 0.0)
    h = h @ params["fc2_w"] + params["fc2_b"]
    return jnp.squeeze(h.reshape(B, S, 1))


if __name__ == "__main__":
    B, S = 2, 64            # batch, spatial grid size
    modes, width = 16, 64   # module constants

    key = jax.random.PRNGKey(0)
    kp, kx = jax.random.split(key)
    params = init_params(kp, width, modes)
    x = jax.random.uniform(kx, (B, S, 2), jnp.float32)   # (batch, size_x, 2) as in PyTorch

    fr, fi, cr, ci = dft_matrices(S, modes)

    out = net1d_forward(params, x, fr, fi, cr, ci)
    out = jax.block_until_ready(out)

    ref = reference_forward(params, x, fr, fi, cr, ci)
    assert out.shape == (B, S)
    np.testing.assert_allclose(np.asarray(out), np.asarray(ref), rtol=1e-2, atol=1e-3)

    print("KERNEL_OK")
</pallas_src>

<mosaic_0001>
module attributes {stable_mosaic.version = 11 : i64} {
  func.func @_net1d_kernel(%arg0: i32, %arg1: memref<1x2x64xf32, #tpu.memory_space<vmem>>, %arg2: memref<32x64xf32, #tpu.memory_space<vmem>>, %arg3: memref<32x64xf32, #tpu.memory_space<vmem>>, %arg4: memref<4x16x64x64xf32, #tpu.memory_space<vmem>>, %arg5: memref<4x16x64x64xf32, #tpu.memory_space<vmem>>, %arg6: memref<4x64x64xf32, #tpu.memory_space<vmem>>, %arg7: memref<4x64x1xf32, #tpu.memory_space<vmem>>, %arg8: memref<64x2xf32, #tpu.memory_space<vmem>>, %arg9: memref<64x1xf32, #tpu.memory_space<vmem>>, %arg10: memref<128x64xf32, #tpu.memory_space<vmem>>, %arg11: memref<128x1xf32, #tpu.memory_space<vmem>>, %arg12: memref<1x128xf32, #tpu.memory_space<vmem>>, %arg13: memref<1x1xf32, #tpu.memory_space<vmem>>, %arg14: memref<1x1x64xf32, #tpu.memory_space<vmem>>) attributes {dimension_semantics = [#tpu.dimension_semantics<parallel>], iteration_bounds = array<i64: 2>, scalar_prefetch = 0 : i64, scratch_operands = 0 : i64, tpu.core_type = #tpu.core_type<tc>, window_params = [{transform_indices = @transform_0, window_bounds = array<i64: 1, 2, 64>}, {pipeline_mode = #tpu.pipeline_mode<synchronous>, transform_indices = @transform_1, window_bounds = array<i64: 32, 64>}, {pipeline_mode = #tpu.pipeline_mode<synchronous>, transform_indices = @transform_2, window_bounds = array<i64: 32, 64>}, {pipeline_mode = #tpu.pipeline_mode<synchronous>, transform_indices = @transform_3, window_bounds = array<i64: 4, 16, 64, 64>}, {pipeline_mode = #tpu.pipeline_mode<synchronous>, transform_indices = @transform_4, window_bounds = array<i64: 4, 16, 64, 64>}, {pipeline_mode = #tpu.pipeline_mode<synchronous>, transform_indices = @transform_5, window_bounds = array<i64: 4, 64, 64>}, {pipeline_mode = #tpu.pipeline_mode<synchronous>, transform_indices = @transform_6, window_bounds = array<i64: 4, 64, 1>}, {pipeline_mode = #tpu.pipeline_mode<synchronous>, transform_indices = @transform_7, window_bounds = array<i64: 64, 2>}, {pipeline_mode = #tpu.pipeline_mode<synchronous>, transform_indices = @transform_8, window_bounds = array<i64: 64, 1>}, {pipeline_mode = #tpu.pipeline_mode<synchronous>, transform_indices = @transform_9, window_bounds = array<i64: 128, 64>}, {pipeline_mode = #tpu.pipeline_mode<synchronous>, transform_indices = @transform_10, window_bounds = array<i64: 128, 1>}, {pipeline_mode = #tpu.pipeline_mode<synchronous>, transform_indices = @transform_11, window_bounds = array<i64: 1, 128>}, {pipeline_mode = #tpu.pipeline_mode<synchronous>, transform_indices = @transform_12, window_bounds = array<i64: 1, 1>}, {transform_indices = @transform_13, window_bounds = array<i64: 1, 1, 64>}]} {
    %c0 = arith.constant 0 : index
    %c0_0 = arith.constant 0 : index
    %c0_1 = arith.constant 0 : index
    %0 = vector.load %arg1[%c0, %c0_0, %c0_1] : memref<1x2x64xf32, #tpu.memory_space<vmem>>, vector<1x2x64xf32>
    %c0_2 = arith.constant 0 : index
    %c0_3 = arith.constant 0 : index
    %1 = vector.load %arg8[%c0_2, %c0_3] : memref<64x2xf32, #tpu.memory_space<vmem>>, vector<64x2xf32>
    %2 = vector.shape_cast %1 : vector<64x2xf32> to vector<1x64x2xf32>
    %cst = arith.constant dense<0.000000e+00> : vector<1x64x64xf32>
    %3 = tpu.matmul %2, %0, %cst {dimension_numbers = #tpu.dot_dimension_numbers<[2], [1], [1], [2], [0, 0, 0, 1, 1, 2], [0], [0]>} : vector<1x64x2xf32>, vector<1x2x64xf32>, vector<1x64x64xf32> -> vector<1x64x64xf32>
    %c0_4 = arith.constant 0 : index
    %c0_5 = arith.constant 0 : index
    %4 = vector.load %arg9[%c0_4, %c0_5] : memref<64x1xf32, #tpu.memory_space<vmem>>, vector<64x1xf32>
    %5 = vector.shape_cast %4 : vector<64x1xf32> to vector<1x64x1xf32>
    %6 = vector.broadcast %5 : vector<1x64x1xf32> to vector<1x64x64xf32>
    %7 = arith.addf %3, %6 : vector<1x64x64xf32>
    %c0_6 = arith.constant 0 : index
    %c0_7 = arith.constant 0 : index
    %8 = vector.load %arg2[%c0_6, %c0_7] : memref<32x64xf32, #tpu.memory_space<vmem>>, vector<32x64xf32>
    %c0_8 = arith.constant 0 : index
    %c0_9 = arith.constant 0 : index
    %9 = vector.load %arg3[%c0_8, %c0_9] : memref<32x64xf32, #tpu.memory_space<vmem>>, vector<32x64xf32>
    %c0_10 = arith.constant 0 : index
    %c0_11 = arith.constant 0 : index
    %c0_12 = arith.constant 0 : index
    %c0_13 = arith.constant 0 : index
    %10 = vector.load %arg4[%c0_10, %c0_11, %c0_12, %c0_13] : memref<4x16x64x64xf32, #tpu.memory_space<vmem>>, vector<1x16x64x64xf32>
    %11 = vector.shape_cast %10 : vector<1x16x64x64xf32> to vector<16x64x64xf32>
    %c0_14 = arith.constant 0 : index
    %c0_15 = arith.constant 0 : index
    %c0_16 = arith.constant 0 : index
    %c0_17 = arith.constant 0 : index
    %12 = vector.load %arg5[%c0_14, %c0_15, %c0_16, %c0_17] : memref<4x16x64x64xf32, #tpu.memory_space<vmem>>, vector<1x16x64x64xf32>
    %13 = vector.shape_cast %12 : vector<1x16x64x64xf32> to vector<16x64x64xf32>
    %c0_18 = arith.constant 0 : index
    %c0_19 = arith.constant 0 : index
    %c0_20 = arith.constant 0 : index
    %14 = vector.load %arg6[%c0_18, %c0_19, %c0_20] : memref<4x64x64xf32, #tpu.memory_space<vmem>>, vector<1x64x64xf32>
    %15 = vector.shape_cast %14 : vector<1x64x64xf32> to vector<64x64xf32>
    %c0_21 = arith.constant 0 : index
    %c0_22 = arith.constant 0 : index
    %c0_23 = arith.constant 0 : index
    %16 = vector.load %arg7[%c0_21, %c0_22, %c0_23] : memref<4x64x1xf32, #tpu.memory_space<vmem>>, vector<1x64x1xf32>
    %17 = vector.shape_cast %16 : vector<1x64x1xf32> to vector<64x1xf32>
    %18 = vector.shape_cast %7 : vector<1x64x64xf32> to vector<64x64xf32>
    %cst_24 = arith.constant dense<0.000000e+00> : vector<32x64xf32>
    %19 = tpu.matmul %8, %18, %cst_24 {dimension_numbers = #tpu.dot_dimension_numbers<[1], [1], [0], [0], [0, 0, 1, 0], [], []>} : vector<32x64xf32>, vector<64x64xf32>, vector<32x64xf32> -> vector<32x64xf32>
    %20 = vector.extract_strided_slice %19 {offsets = [0, 0], sizes = [16, 64], strides = [1, 1]} : vector<32x64xf32> to vector<16x64xf32>
    %21 = vector.shape_cast %20 : vector<16x64xf32> to vector<16x1x64xf32>
    %22 = vector.extract_strided_slice %19 {offsets = [16, 0], sizes = [16, 64], strides = [1, 1]} : vector<32x64xf32> to vector<16x64xf32>
    %23 = vector.shape_cast %22 : vector<16x64xf32> to vector<16x1x64xf32>
    %cst_25 = arith.constant dense<0.000000e+00> : vector<16x1x64xf32>
    %24 = tpu.matmul %21, %11, %cst_25 {dimension_numbers = #tpu.dot_dimension_numbers<[2], [1], [1], [2], [0, 0, 0, 1, 1, 2], [0], [0]>} : vector<16x1x64xf32>, vector<16x64x64xf32>, vector<16x1x64xf32> -> vector<16x1x64xf32>
    %cst_26 = arith.constant dense<0.000000e+00> : vector<16x1x64xf32>
    %25 = tpu.matmul %23, %13, %cst_26 {dimension_numbers = #tpu.dot_dimension_numbers<[2], [1], [1], [2], [0, 0, 0, 1, 1, 2], [0], [0]>} : vector<16x1x64xf32>, vector<16x64x64xf32>, vector<16x1x64xf32> -> vector<16x1x64xf32>
    %26 = arith.subf %24, %25 : vector<16x1x64xf32>
    %cst_27 = arith.constant dense<0.000000e+00> : vector<16x1x64xf32>
    %27 = tpu.matmul %21, %13, %cst_27 {dimension_numbers = #tpu.dot_dimension_numbers<[2], [1], [1], [2], [0, 0, 0, 1, 1, 2], [0], [0]>} : vector<16x1x64xf32>, vector<16x64x64xf32>, vector<16x1x64xf32> -> vector<16x1x64xf32>
    %cst_28 = arith.constant dense<0.000000e+00> : vector<16x1x64xf32>
    %28 = tpu.matmul %23, %11, %cst_28 {dimension_numbers = #tpu.dot_dimension_numbers<[2], [1], [1], [2], [0, 0, 0, 1, 1, 2], [0], [0]>} : vector<16x1x64xf32>, vector<16x64x64xf32>, vector<16x1x64xf32> -> vector<16x1x64xf32>
    %29 = arith.addf %27, %28 : vector<16x1x64xf32>
    %30 = vector.shape_cast %26 : vector<16x1x64xf32> to vector<16x64xf32>
    %31 = vector.shape_cast %29 : vector<16x1x64xf32> to vector<16x64xf32>
    %32 = tpu.concatenate %30, %31 in 0 : vector<16x64xf32>, vector<16x64xf32> -> vector<32x64xf32>
    %cst_29 = arith.constant dense<0.000000e+00> : vector<64x64xf32>
    %33 = tpu.matmul %32, %9, %cst_29 {dimension_numbers = #tpu.dot_dimension_numbers<[0], [0], [1], [1], [0, 1, 1, 1], [], []>} : vector<32x64xf32>, vector<32x64xf32>, vector<64x64xf32> -> vector<64x64xf32>
    %34 = vector.shape_cast %33 : vector<64x64xf32> to vector<1x64x64xf32>
    %35 = vector.shape_cast %15 : vector<64x64xf32> to vector<1x64x64xf32>
    %cst_30 = arith.constant dense<0.000000e+00> : vector<1x64x64xf32>
    %36 = tpu.matmul %35, %7, %cst_30 {dimension_numbers = #tpu.dot_dimension_numbers<[2], [1], [1], [2], [0, 0, 0, 1, 1, 2], [0], [0]>} : vector<1x64x64xf32>, vector<1x64x64xf32>, vector<1x64x64xf32> -> vector<1x64x64xf32>
    %37 = arith.addf %34, %36 : vector<1x64x64xf32>
    %38 = vector.shape_cast %17 : vector<64x1xf32> to vector<1x64x1xf32>
    %39 = vector.broadcast %38 : vector<1x64x1xf32> to vector<1x64x64xf32>
    %40 = arith.addf %37, %39 : vector<1x64x64xf32>
    %cst_31 = arith.constant 0.000000e+00 : f32
    %41 = vector.broadcast %cst_31 : f32 to vector<1x64x64xf32>
    %42 = arith.maximumf %40, %41 : vector<1x64x64xf32>
    %c1 = arith.constant 1 : index
    %c0_32 = arith.constant 0 : index
    %c0_33 = arith.constant 0 : index
    %c0_34 = arith.constant 0 : index
    %43 = vector.load %arg4[%c1, %c0_32, %c0_33, %c0_34] : memref<4x16x64x64xf32, #tpu.memory_space<vmem>>, vector<1x16x64x64xf32>
    %44 = vector.shape_cast %43 : vector<1x16x64x64xf32> to vector<16x64x64xf32>
    %c1_35 = arith.constant 1 : index
    %c0_36 = arith.constant 0 : index
    %c0_37 = arith.constant 0 : index
    %c0_38 = arith.constant 0 : index
    %45 = vector.load %arg5[%c1_35, %c0_36, %c0_37, %c0_38] : memref<4x16x64x64xf32, #tpu.memory_space<vmem>>, vector<1x16x64x64xf32>
    %46 = vector.shape_cast %45 : vector<1x16x64x64xf32> to vector<16x64x64xf32>
    %c1_39 = arith.constant 1 : index
    %c0_40 = arith.constant 0 : index
    %c0_41 = arith.constant 0 : index
    %47 = vector.load %arg6[%c1_39, %c0_40, %c0_41] : memref<4x64x64xf32, #tpu.memory_space<vmem>>, vector<1x64x64xf32>
    %48 = vector.shape_cast %47 : vector<1x64x64xf32> to vector<64x64xf32>
    %c1_42 = arith.constant 1 : index
    %c0_43 = arith.constant 0 : index
    %c0_44 = arith.constant 0 : index
    %49 = vector.load %arg7[%c1_42, %c0_43, %c0_44] : memref<4x64x1xf32, #tpu.memory_space<vmem>>, vector<1x64x1xf32>
    %50 = vector.shape_cast %49 : vector<1x64x1xf32> to vector<64x1xf32>
    %51 = vector.shape_cast %42 : vector<1x64x64xf32> to vector<64x64xf32>
    %cst_45 = arith.constant dense<0.000000e+00> : vector<32x64xf32>
    %52 = tpu.matmul %8, %51, %cst_45 {dimension_numbers = #tpu.dot_dimension_numbers<[1], [1], [0], [0], [0, 0, 1, 0], [], []>} : vector<32x64xf32>, vector<64x64xf32>, vector<32x64xf32> -> vector<32x64xf32>
    %53 = vector.extract_strided_slice %52 {offsets = [0, 0], sizes = [16, 64], strides = [1, 1]} : vector<32x64xf32> to vector<16x64xf32>
    %54 = vector.shape_cast %53 : vector<16x64xf32> to vector<16x1x64xf32>
    %55 = vector.extract_strided_slice %52 {offsets = [16, 0], sizes = [16, 64], strides = [1, 1]} : vector<32x64xf32> to vector<16x64xf32>
    %56 = vector.shape_cast %55 : vector<16x64xf32> to vector<16x1x64xf32>
    %cst_46 = arith.constant dense<0.000000e+00> : vector<16x1x64xf32>
    %57 = tpu.matmul %54, %44, %cst_46 {dimension_numbers = #tpu.dot_dimension_numbers<[2], [1], [1], [2], [0, 0, 0, 1, 1, 2], [0], [0]>} : vector<16x1x64xf32>, vector<16x64x64xf32>, vector<16x1x64xf32> -> vector<16x1x64xf32>
    %cst_47 = arith.constant dense<0.000000e+00> : vector<16x1x64xf32>
    %58 = tpu.matmul %56, %46, %cst_47 {dimension_numbers = #tpu.dot_dimension_numbers<[2], [1], [1], [2], [0, 0, 0, 1, 1, 2], [0], [0]>} : vector<16x1x64xf32>, vector<16x64x64xf32>, vector<16x1x64xf32> -> vector<16x1x64xf32>
    %59 = arith.subf %57, %58 : vector<16x1x64xf32>
    %cst_48 = arith.constant dense<0.000000e+00> : vector<16x1x64xf32>
    %60 = tpu.matmul %54, %46, %cst_48 {dimension_numbers = #tpu.dot_dimension_numbers<[2], [1], [1], [2], [0, 0, 0, 1, 1, 2], [0], [0]>} : vector<16x1x64xf32>, vector<16x64x64xf32>, vector<16x1x64xf32> -> vector<16x1x64xf32>
    %cst_49 = arith.constant dense<0.000000e+00> : vector<16x1x64xf32>
    %61 = tpu.matmul %56, %44, %cst_49 {dimension_numbers = #tpu.dot_dimension_numbers<[2], [1], [1], [2], [0, 0, 0, 1, 1, 2], [0], [0]>} : vector<16x1x64xf32>, vector<16x64x64xf32>, vector<16x1x64xf32> -> vector<16x1x64xf32>
    %62 = arith.addf %60, %61 : vector<16x1x64xf32>
    %63 = vector.shape_cast %59 : vector<16x1x64xf32> to vector<16x64xf32>
    %64 = vector.shape_cast %62 : vector<16x1x64xf32> to vector<16x64xf32>
    %65 = tpu.concatenate %63, %64 in 0 : vector<16x64xf32>, vector<16x64xf32> -> vector<32x64xf32>
    %cst_50 = arith.constant dense<0.000000e+00> : vector<64x64xf32>
    %66 = tpu.matmul %65, %9, %cst_50 {dimension_numbers = #tpu.dot_dimension_numbers<[0], [0], [1], [1], [0, 1, 1, 1], [], []>} : vector<32x64xf32>, vector<32x64xf32>, vector<64x64xf32> -> vector<64x64xf32>
    %67 = vector.shape_cast %66 : vector<64x64xf32> to vector<1x64x64xf32>
    %68 = vector.shape_cast %48 : vector<64x64xf32> to vector<1x64x64xf32>
    %cst_51 = arith.constant dense<0.000000e+00> : vector<1x64x64xf32>
    %69 = tpu.matmul %68, %42, %cst_51 {dimension_numbers = #tpu.dot_dimension_numbers<[2], [1], [1], [2], [0, 0, 0, 1, 1, 2], [0], [0]>} : vector<1x64x64xf32>, vector<1x64x64xf32>, vector<1x64x64xf32> -> vector<1x64x64xf32>
    %70 = arith.addf %67, %69 : vector<1x64x64xf32>
    %71 = vector.shape_cast %50 : vector<64x1xf32> to vector<1x64x1xf32>
    %72 = vector.broadcast %71 : vector<1x64x1xf32> to vector<1x64x64xf32>
    %73 = arith.addf %70, %72 : vector<1x64x64xf32>
    %cst_52 = arith.constant 0.000000e+00 : f32
    %74 = vector.broadcast %cst_52 : f32 to vector<1x64x64xf32>
    %75 = arith.maximumf %73, %74 : vector<1x64x64xf32>
    %c2 = arith.constant 2 : index
    %c0_53 = arith.constant 0 : index
    %c0_54 = arith.constant 0 : index
    %c0_55 = arith.constant 0 : index
    %76 = vector.load %arg4[%c2, %c0_53, %c0_54, %c0_55] : memref<4x16x64x64xf32, #tpu.memory_space<vmem>>, vector<1x16x64x64xf32>
    %77 = vector.shape_cast %76 : vector<1x16x64x64xf32> to vector<16x64x64xf32>
    %c2_56 = arith.constant 2 : index
    %c0_57 = arith.constant 0 : index
    %c0_58 = arith.constant 0 : index
    %c0_59 = arith.constant 0 : index
    %78 = vector.load %arg5[%c2_56, %c0_57, %c0_58, %c0_59] : memref<4x16x64x64xf32, #tpu.memory_space<vmem>>, vector<1x16x64x64xf32>
    %79 = vector.shape_cast %78 : vector<1x16x64x64xf32> to vector<16x64x64xf32>
    %c2_60 = arith.constant 2 : index
    %c0_61 = arith.constant 0 : index
    %c0_62 = arith.constant 0 : index
    %80 = vector.load %arg6[%c2_60, %c0_61, %c0_62] : memref<4x64x64xf32, #tpu.memory_space<vmem>>, vector<1x64x64xf32>
    %81 = vector.shape_cast %80 : vector<1x64x64xf32> to vector<64x64xf32>
    %c2_63 = arith.constant 2 : index
    %c0_64 = arith.constant 0 : index
    %c0_65 = arith.constant 0 : index
    %82 = vector.load %arg7[%c2_63, %c0_64, %c0_65] : memref<4x64x1xf32, #tpu.memory_space<vmem>>, vector<1x64x1xf32>
    %83 = vector.shape_cast %82 : vector<1x64x1xf32> to vector<64x1xf32>
    %84 = vector.shape_cast %75 : vector<1x64x64xf32> to vector<64x64xf32>
    %cst_66 = arith.constant dense<0.000000e+00> : vector<32x64xf32>
    %85 = tpu.matmul %8, %84, %cst_66 {dimension_numbers = #tpu.dot_dimension_numbers<[1], [1], [0], [0], [0, 0, 1, 0], [], []>} : vector<32x64xf32>, vector<64x64xf32>, vector<32x64xf32> -> vector<32x64xf32>
    %86 = vector.extract_strided_slice %85 {offsets = [0, 0], sizes = [16, 64], strides = [1, 1]} : vector<32x64xf32> to vector<16x64xf32>
    %87 = vector.shape_cast %86 : vector<16x64xf32> to vector<16x1x64xf32>
    %88 = vector.extract_strided_slice %85 {offsets = [16, 0], sizes = [16, 64], strides = [1, 1]} : vector<32x64xf32> to vector<16x64xf32>
    %89 = vector.shape_cast %88 : vector<16x64xf32> to vector<16x1x64xf32>
    %cst_67 = arith.constant dense<0.000000e+00> : vector<16x1x64xf32>
    %90 = tpu.matmul %87, %77, %cst_67 {dimension_numbers = #tpu.dot_dimension_numbers<[2], [1], [1], [2], [0, 0, 0, 1, 1, 2], [0], [0]>} : vector<16x1x64xf32>, vector<16x64x64xf32>, vector<16x1x64xf32> -> vector<16x1x64xf32>
    %cst_68 = arith.constant dense<0.000000e+00> : vector<16x1x64xf32>
    %91 = tpu.matmul %89, %79, %cst_68 {dimension_numbers = #tpu.dot_dimension_numbers<[2], [1], [1], [2], [0, 0, 0, 1, 1, 2], [0], [0]>} : vector<16x1x64xf32>, vector<16x64x64xf32>, vector<16x1x64xf32> -> vector<16x1x64xf32>
    %92 = arith.subf %90, %91 : vector<16x1x64xf32>
    %cst_69 = arith.constant dense<0.000000e+00> : vector<16x1x64xf32>
    %93 = tpu.matmul %87, %79, %cst_69 {dimension_numbers = #tpu.dot_dimension_numbers<[2], [1], [1], [2], [0, 0, 0, 1, 1, 2], [0], [0]>} : vector<16x1x64xf32>, vector<16x64x64xf32>, vector<16x1x64xf32> -> vector<16x1x64xf32>
    %cst_70 = arith.constant dense<0.000000e+00> : vector<16x1x64xf32>
    %94 = tpu.matmul %89, %77, %cst_70 {dimension_numbers = #tpu.dot_dimension_numbers<[2], [1], [1], [2], [0, 0, 0, 1, 1, 2], [0], [0]>} : vector<16x1x64xf32>, vector<16x64x64xf32>, vector<16x1x64xf32> -> vector<16x1x64xf32>
    %95 = arith.addf %93, %94 : vector<16x1x64xf32>
    %96 = vector.shape_cast %92 : vector<16x1x64xf32> to vector<16x64xf32>
    %97 = vector.shape_cast %95 : vector<16x1x64xf32> to vector<16x64xf32>
    %98 = tpu.concatenate %96, %97 in 0 : vector<16x64xf32>, vector<16x64xf32> -> vector<32x64xf32>
    %cst_71 = arith.constant dense<0.000000e+00> : vector<64x64xf32>
    %99 = tpu.matmul %98, %9, %cst_71 {dimension_numbers = #tpu.dot_dimension_numbers<[0], [0], [1], [1], [0, 1, 1, 1], [], []>} : vector<32x64xf32>, vector<32x64xf32>, vector<64x64xf32> -> vector<64x64xf32>
    %100 = vector.shape_cast %99 : vector<64x64xf32> to vector<1x64x64xf32>
    %101 = vector.shape_cast %81 : vector<64x64xf32> to vector<1x64x64xf32>
    %cst_72 = arith.constant dense<0.000000e+00> : vector<1x64x64xf32>
    %102 = tpu.matmul %101, %75, %cst_72 {dimension_numbers = #tpu.dot_dimension_numbers<[2], [1], [1], [2], [0, 0, 0, 1, 1, 2], [0], [0]>} : vector<1x64x64xf32>, vector<1x64x64xf32>, vector<1x64x64xf32> -> vector<1x64x64xf32>
    %103 = arith.addf %100, %102 : vector<1x64x64xf32>
    %104 = vector.shape_cast %83 : vector<64x1xf32> to vector<1x64x1xf32>
    %105 = vector.broadcast %104 : vector<1x64x1xf32> to vector<1x64x64xf32>
    %106 = arith.addf %103, %105 : vector<1x64x64xf32>
    %cst_73 = arith.constant 0.000000e+00 : f32
    %107 = vector.broadcast %cst_73 : f32 to vector<1x64x64xf32>
    %108 = arith.maximumf %106, %107 : vector<1x64x64xf32>
    %c3 = arith.constant 3 : index
    %c0_74 = arith.constant 0 : index
    %c0_75 = arith.constant 0 : index
    %c0_76 = arith.constant 0 : index
    %109 = vector.load %arg4[%c3, %c0_74, %c0_75, %c0_76] : memref<4x16x64x64xf32, #tpu.memory_space<vmem>>, vector<1x16x64x64xf32>
    %110 = vector.shape_cast %109 : vector<1x16x64x64xf32> to vector<16x64x64xf32>
    %c3_77 = arith.constant 3 : index
    %c0_78 = arith.constant 0 : index
    %c0_79 = arith.constant 0 : index
    %c0_80 = arith.constant 0 : index
    %111 = vector.load %arg5[%c3_77, %c0_78, %c0_79, %c0_80] : memref<4x16x64x64xf32, #tpu.memory_space<vmem>>, vector<1x16x64x64xf32>
    %112 = vector.shape_cast %111 : vector<1x16x64x64xf32> to vector<16x64x64xf32>
    %c3_81 = arith.constant 3 : index
    %c0_82 = arith.constant 0 : index
    %c0_83 = arith.constant 0 : index
    %113 = vector.load %arg6[%c3_81, %c0_82, %c0_83] : memref<4x64x64xf32, #tpu.memory_space<vmem>>, vector<1x64x64xf32>
    %114 = vector.shape_cast %113 : vector<1x64x64xf32> to vector<64x64xf32>
    %c3_84 = arith.constant 3 : index
    %c0_85 = arith.constant 0 : index
    %c0_86 = arith.constant 0 : index
    %115 = vector.load %arg7[%c3_84, %c0_85, %c0_86] : memref<4x64x1xf32, #tpu.memory_space<vmem>>, vector<1x64x1xf32>
    %116 = vector.shape_cast %115 : vector<1x64x1xf32> to vector<64x1xf32>
    %117 = vector.shape_cast %108 : vector<1x64x64xf32> to vector<64x64xf32>
    %cst_87 = arith.constant dense<0.000000e+00> : vector<32x64xf32>
    %118 = tpu.matmul %8, %117, %cst_87 {dimension_numbers = #tpu.dot_dimension_numbers<[1], [1], [0], [0], [0, 0, 1, 0], [], []>} : vector<32x64xf32>, vector<64x64xf32>, vector<32x64xf32> -> vector<32x64xf32>
    %119 = vector.extract_strided_slice %118 {offsets = [0, 0], sizes = [16, 64], strides = [1, 1]} : vector<32x64xf32> to vector<16x64xf32>
    %120 = vector.shape_cast %119 : vector<16x64xf32> to vector<16x1x64xf32>
    %121 = vector.extract_strided_slice %118 {offsets = [16, 0], sizes = [16, 64], strides = [1, 1]} : vector<32x64xf32> to vector<16x64xf32>
    %122 = vector.shape_cast %121 : vector<16x64xf32> to vector<16x1x64xf32>
    %cst_88 = arith.constant dense<0.000000e+00> : vector<16x1x64xf32>
    %123 = tpu.matmul %120, %110, %cst_88 {dimension_numbers = #tpu.dot_dimension_numbers<[2], [1], [1], [2], [0, 0, 0, 1, 1, 2], [0], [0]>} : vector<16x1x64xf32>, vector<16x64x64xf32>, vector<16x1x64xf32> -> vector<16x1x64xf32>
    %cst_89 = arith.constant dense<0.000000e+00> : vector<16x1x64xf32>
    %124 = tpu.matmul %122, %112, %cst_89 {dimension_numbers = #tpu.dot_dimension_numbers<[2], [1], [1], [2], [0, 0, 0, 1, 1, 2], [0], [0]>} : vector<16x1x64xf32>, vector<16x64x64xf32>, vector<16x1x64xf32> -> vector<16x1x64xf32>
    %125 = arith.subf %123, %124 : vector<16x1x64xf32>
    %cst_90 = arith.constant dense<0.000000e+00> : vector<16x1x64xf32>
    %126 = tpu.matmul %120, %112, %cst_90 {dimension_numbers = #tpu.dot_dimension_numbers<[2], [1], [1], [2], [0, 0, 0, 1, 1, 2], [0], [0]>} : vector<16x1x64xf32>, vector<16x64x64xf32>, vector<16x1x64xf32> -> vector<16x1x64xf32>
    %cst_91 = arith.constant dense<0.000000e+00> : vector<16x1x64xf32>
    %127 = tpu.matmul %122, %110, %cst_91 {dimension_numbers = #tpu.dot_dimension_numbers<[2], [1], [1], [2], [0, 0, 0, 1, 1, 2], [0], [0]>} : vector<16x1x64xf32>, vector<16x64x64xf32>, vector<16x1x64xf32> -> vector<16x1x64xf32>
    %128 = arith.addf %126, %127 : vector<16x1x64xf32>
    %129 = vector.shape_cast %125 : vector<16x1x64xf32> to vector<16x64xf32>
    %130 = vector.shape_cast %128 : vector<16x1x64xf32> to vector<16x64xf32>
    %131 = tpu.concatenate %129, %130 in 0 : vector<16x64xf32>, vector<16x64xf32> -> vector<32x64xf32>
    %cst_92 = arith.constant dense<0.000000e+00> : vector<64x64xf32>
    %132 = tpu.matmul %131, %9, %cst_92 {dimension_numbers = #tpu.dot_dimension_numbers<[0], [0], [1], [1], [0, 1, 1, 1], [], []>} : vector<32x64xf32>, vector<32x64xf32>, vector<64x64xf32> -> vector<64x64xf32>
    %133 = vector.shape_cast %132 : vector<64x64xf32> to vector<1x64x64xf32>
    %134 = vector.shape_cast %114 : vector<64x64xf32> to vector<1x64x64xf32>
    %cst_93 = arith.constant dense<0.000000e+00> : vector<1x64x64xf32>
    %135 = tpu.matmul %134, %108, %cst_93 {dimension_numbers = #tpu.dot_dimension_numbers<[2], [1], [1], [2], [0, 0, 0, 1, 1, 2], [0], [0]>} : vector<1x64x64xf32>, vector<1x64x64xf32>, vector<1x64x64xf32> -> vector<1x64x64xf32>
    %136 = arith.addf %133, %135 : vector<1x64x64xf32>
    %137 = vector.shape_cast %116 : vector<64x1xf32> to vector<1x64x1xf32>
    %138 = vector.broadcast %137 : vector<1x64x1xf32> to vector<1x64x64xf32>
    %139 = arith.addf %136, %138 : vector<1x64x64xf32>
    %c0_94 = arith.constant 0 : index
    %c0_95 = arith.constant 0 : index
    %140 = vector.load %arg10[%c0_94, %c0_95] : memref<128x64xf32, #tpu.memory_space<vmem>>, vector<128x64xf32>
    %141 = vector.shape_cast %140 : vector<128x64xf32> to vector<1x128x64xf32>
    %cst_96 = arith.constant dense<0.000000e+00> : vector<1x128x64xf32>
    %142 = tpu.matmul %141, %139, %cst_96 {dimension_numbers = #tpu.dot_dimension_numbers<[2], [1], [1], [2], [0, 0, 0, 1, 1, 2], [0], [0]>} : vector<1x128x64xf32>, vector<1x64x64xf32>, vector<1x128x64xf32> -> vector<1x128x64xf32>
    %c0_97 = arith.constant 0 : index
    %c0_98 = arith.constant 0 : index
    %143 = vector.load %arg11[%c0_97, %c0_98] : memref<128x1xf32, #tpu.memory_space<vmem>>, vector<128x1xf32>
    %144 = vector.shape_cast %143 : vector<128x1xf32> to vector<1x128x1xf32>
    %145 = vector.broadcast %144 : vector<1x128x1xf32> to vector<1x128x64xf32>
    %146 = arith.addf %142, %145 : vector<1x128x64xf32>
    %cst_99 = arith.constant 0.000000e+00 : f32
    %147 = vector.broadcast %cst_99 : f32 to vector<1x128x64xf32>
    %148 = arith.maximumf %146, %147 : vector<1x128x64xf32>
    %c0_100 = arith.constant 0 : index
    %c0_101 = arith.constant 0 : index
    %149 = vector.load %arg12[%c0_100, %c0_101] : memref<1x128xf32, #tpu.memory_space<vmem>>, vector<1x128xf32>
    %150 = vector.shape_cast %149 : vector<1x128xf32> to vector<1x1x128xf32>
    %cst_102 = arith.constant dense<0.000000e+00> : vector<1x1x64xf32>
    %151 = tpu.matmul %150, %148, %cst_102 {dimension_numbers = #tpu.dot_dimension_numbers<[2], [1], [1], [2], [0, 0, 0, 1, 1, 2], [0], [0]>} : vector<1x1x128xf32>, vector<1x128x64xf32>, vector<1x1x64xf32> -> vector<1x1x64xf32>
    %c0_103 = arith.constant 0 : index
    %c0_104 = arith.constant 0 : index
    %152 = vector.load %arg13[%c0_103, %c0_104] : memref<1x1xf32, #tpu.memory_space<vmem>>, vector<1x1xf32>
    %153 = vector.shape_cast %152 : vector<1x1xf32> to vector<1x1x1xf32>
    %154 = vector.broadcast %153 : vector<1x1x1xf32> to vector<1x1x64xf32>
    %155 = arith.addf %151, %154 : vector<1x1x64xf32>
    %c0_105 = arith.constant 0 : index
    %c0_106 = arith.constant 0 : index
    %c0_107 = arith.constant 0 : index
    %156 = vector.load %arg14[%c0_105, %c0_106, %c0_107] : memref<1x1x64xf32, #tpu.memory_space<vmem>>, vector<1x1x64xf32>
    tpu.vector_store %arg14[%c0_105, %c0_106, %c0_107], %155 {strides = array<i32>} : memref<1x1x64xf32, #tpu.memory_space<vmem>>, vector<1x1x64xf32>,
    return
  }
  func.func @transform_0(%arg0: i32) -> (i32, i32, i32) {
    %c0_i32 = arith.constant 0 : i32
    %c0_i32_0 = arith.constant 0 : i32
    %c0_i32_1 = arith.constant 0 : i32
    return %arg0, %c0_i32, %c0_i32_0 : i32, i32, i32
  }
  func.func @transform_1(%arg0: i32) -> (i32, i32) {
    %c0_i32 = arith.constant 0 : i32
    %c0_i32_0 = arith.constant 0 : i32
    %c0_i32_1 = arith.constant 0 : i32
    return %c0_i32, %c0_i32_0 : i32, i32
  }
  func.func @transform_2(%arg0: i32) -> (i32, i32) {
    %c0_i32 = arith.constant 0 : i32
    %c0_i32_0 = arith.constant 0 : i32
    %c0_i32_1 = arith.constant 0 : i32
    return %c0_i32, %c0_i32_0 : i32, i32
  }
  func.func @transform_3(%arg0: i32) -> (i32, i32, i32, i32) {
    %c0_i32 = arith.constant 0 : i32
    %c0_i32_0 = arith.constant 0 : i32
    %c0_i32_1 = arith.constant 0 : i32
    %c0_i32_2 = arith.constant 0 : i32
    %c0_i32_3 = arith.constant 0 : i32
    return %c0_i32, %c0_i32_0, %c0_i32_1, %c0_i32_2 : i32, i32, i32, i32
  }
  func.func @transform_4(%arg0: i32) -> (i32, i32, i32, i32) {
    %c0_i32 = arith.constant 0 : i32
    %c0_i32_0 = arith.constant 0 : i32
    %c0_i32_1 = arith.constant 0 : i32
    %c0_i32_2 = arith.constant 0 : i32
    %c0_i32_3 = arith.constant 0 : i32
    return %c0_i32, %c0_i32_0, %c0_i32_1, %c0_i32_2 : i32, i32, i32, i32
  }
  func.func @transform_5(%arg0: i32) -> (i32, i32, i32) {
    %c0_i32 = arith.constant 0 : i32
    %c0_i32_0 = arith.constant 0 : i32
    %c0_i32_1 = arith.constant 0 : i32
    %c0_i32_2 = arith.constant 0 : i32
    return %c0_i32, %c0_i32_0, %c0_i32_1 : i32, i32, i32
  }
  func.func @transform_6(%arg0: i32) -> (i32, i32, i32) {
    %c0_i32 = arith.constant 0 : i32
    %c0_i32_0 = arith.constant 0 : i32
    %c0_i32_1 = arith.constant 0 : i32
    %c0_i32_2 = arith.constant 0 : i32
    return %c0_i32, %c0_i32_0, %c0_i32_1 : i32, i32, i32
  }
  func.func @transform_7(%arg0: i32) -> (i32, i32) {
    %c0_i32 = arith.constant 0 : i32
    %c0_i32_0 = arith.constant 0 : i32
    %c0_i32_1 = arith.constant 0 : i32
    return %c0_i32, %c0_i32_0 : i32, i32
  }
  func.func @transform_8(%arg0: i32) -> (i32, i32) {
    %c0_i32 = arith.constant 0 : i32
    %c0_i32_0 = arith.constant 0 : i32
    %c0_i32_1 = arith.constant 0 : i32
    return %c0_i32, %c0_i32_0 : i32, i32
  }
  func.func @transform_9(%arg0: i32) -> (i32, i32) {
    %c0_i32 = arith.constant 0 : i32
    %c0_i32_0 = arith.constant 0 : i32
    %c0_i32_1 = arith.constant 0 : i32
    return %c0_i32, %c0_i32_0 : i32, i32
  }
  func.func @transform_10(%arg0: i32) -> (i32, i32) {
    %c0_i32 = arith.constant 0 : i32
    %c0_i32_0 = arith.constant 0 : i32
    %c0_i32_1 = arith.constant 0 : i32
    return %c0_i32, %c0_i32_0 : i32, i32
  }
  func.func @transform_11(%arg0: i32) -> (i32, i32) {
    %c0_i32 = arith.constant 0 : i32
    %c0_i32_0 = arith.constant 0 : i32
    %c0_i32_1 = arith.constant 0 : i32
    return %c0_i32, %c0_i32_0 : i32, i32
  }
  func.func @transform_12(%arg0: i32) -> (i32, i32) {
    %c0_i32 = arith.constant 0 : i32
    %c0_i32_0 = arith.constant 0 : i32
    %c0_i32_1 = arith.constant 0 : i32
    return %c0_i32, %c0_i32_0 : i32, i32
  }
  func.func @transform_13(%arg0: i32) -> (i32, i32, i32) {
    %c0_i32 = arith.constant 0 : i32
    %c0_i32_0 = arith.constant 0 : i32
    %c0_i32_1 = arith.constant 0 : i32
    return %arg0, %c0_i32, %c0_i32_0 : i32, i32, i32
  }
}

</mosaic_0001>

<llo_original>
// kernel: tpu_custom_call.1
$region0: #{tpu_custom_call.1}
  #allocation0 [shape = 'u32[]', space=smem, size = 0x4, offset = 0x4, fixed_abs, tag = 'smem constant byte address 0x4 - core index']
  #allocation1 [shape = 'u32[72,128]{1,0:T(1,128)}', space=vmem, size = 0x9000, scoped, tag = 'internal scratch']
  #allocation2 [shape = 'f32[1,1]{1,0:T(1,128)S(1)}', space=vmem, size = 0x200, scoped, tag = 'scoped memory for tpu_custom_call.1']
  %s0 = inlined_call_operand.hbm [shape: f32[2,2,64], index: 0, kind: input, shape index: {}]
  %s1 = inlined_call_operand.hbm [shape: f32[32,64], index: 1, kind: input, shape index: {}]
  %s2 = inlined_call_operand.hbm [shape: f32[32,64], index: 2, kind: input, shape index: {}]
  %s3 = inlined_call_operand.hbm [shape: f32[4,16,64,64], index: 3, kind: input, shape index: {}]
  %s4 = inlined_call_operand.hbm [shape: f32[4,16,64,64], index: 4, kind: input, shape index: {}]
  %s5 = inlined_call_operand.hbm [shape: f32[4,64,64], index: 5, kind: input, shape index: {}]
  %s6 = inlined_call_operand.vmem [shape: f32[4,64,1], index: 6, kind: input, shape index: {}]
  %s7 = inlined_call_operand.vmem [shape: f32[64,2], index: 7, kind: input, shape index: {}]
  %s8 = inlined_call_operand.vmem [shape: f32[64,1], index: 8, kind: input, shape index: {}]
  %s9 = inlined_call_operand.vmem [shape: f32[128,64], index: 9, kind: input, shape index: {}]
  %s10 = inlined_call_operand.vmem [shape: f32[128,1], index: 10, kind: input, shape index: {}]
  %s11 = inlined_call_operand.hbm [shape: f32[1,128], index: 11, kind: input, shape index: {}]
  %s12 = inlined_call_operand.<no memory space> [shape: f32[1,1], index: 12, kind: input, shape index: {}]
  %s13 = inlined_call_operand.hbm [shape: f32[2,1,64], index: 13, kind: output, shape index: {}]
  %s14 = sld [smem:[#allocation0]]
  $region113: #{tpu_custom_call.1} parent=0
    _
  %s16 = ssub.s32 1, %s14
  %s17 = scalar_select 0, %s16, %s14
  %v18 = vstv %s12
  %19 = vst [vmem:[#allocation2] sm:$0x1] %v18
  $region1: #{tpu_custom_call.1} parent=0
    #allocation3 [shape = 'u8[2048]{0}', space=vmem, size = 0x800, scoped, tag = 'input window, operand 0']
    #allocation4 [shape = 's32[2]{0}', space=sflag, size = 0x8, scoped, tag = 'scoped memory for tpu_custom_call.1']
    #allocation5 [shape = 's32[2]{0}', space=sflag, size = 0x8, scoped, tag = 'scoped memory for tpu_custom_call.1']
    #allocation6 [shape = 'u8[16384]{0}', space=vmem, size = 0x4000, scoped, tag = 'input window, operand 1, single buffered']
    #allocation7 [shape = 's32[1]{0}', space=sflag, size = 0x4, scoped, tag = 'scoped memory for tpu_custom_call.1']
    #allocation8 [shape = 'u8[16384]{0}', space=vmem, size = 0x4000, scoped, tag = 'input window, operand 2, single buffered']
    #allocation9 [shape = 'u8[2097152]{0}', space=vmem, size = 0x200000, scoped, tag = 'input window, operand 3, single buffered']
    #allocation10 [shape = 's32[1]{0}', space=sflag, size = 0x4, scoped, tag = 'scoped memory for tpu_custom_call.1']
    #allocation11 [shape = 'u8[2097152]{0}', space=vmem, size = 0x200000, scoped, tag = 'input window, operand 4, single buffered']
    #allocation12 [shape = 'u8[131072]{0}', space=vmem, size = 0x20000, scoped, tag = 'input window, operand 5, single buffered']
    #allocation13 [shape = 's32[1]{0}', space=sflag, size = 0x4, scoped, tag = 'scoped memory for tpu_custom_call.1']
    #allocation14 [shape = 'u8[512]{0}', space=vmem, size = 0x400, scoped, tag = 'input window, operand 11, single buffered']
    #allocation15 [shape = 'u8[1024]{0}', space=vmem, size = 0x400, scoped, tag = 'output window, operand 0']
    %20 = vsyncpa [#allocation4], 0
    %s21 = scalar_lea.sflag [#allocation4], 1
    %22 = vsyncpa %s21, 0
    %23 = vsyncpa [#allocation7], 0
    %24 = vsyncpa [#allocation10], 0
    %25 = vsyncpa [#allocation13], 0
    %26 = vsyncpa [#allocation5], 0
    %s27 = scalar_lea.sflag [#allocation5], 1
    %28 = vsyncpa %s27, 0
    loop: start=0, step=1, limit=4
    $region2: #{tpu_custom_call.1} parent=1 // loop_pre_header
      _
    $region3: #{tpu_custom_call.1} parent=1 // loop_header
      %s30 = sphi 0, %s34
      %p31 = scmp.ge.s32.totalorder %s30, 4
      %s40 = sphi 0, %s42
      %s43 = sphi 0, %s40
      %s44 = sphi 0, %s43
      %s60 = sphi 0, %s44
      %s64 = sphi 0, %s64
      %s66 = sphi 0, %s64
      %s67 = sphi 0, %s66
      %s81 = sphi 0, %s67
      %s85 = sphi 0, %s85
      %s87 = sphi 0, %s85
      %s88 = sphi 0, %s87
      %s102 = sphi 0, %s88
      %s106 = sphi 0, %s106
      %s108 = sphi 0, %s106
      %s109 = sphi 0, %s108
      %s123 = sphi 0, %s109
      %s127 = sphi 0, %s127
      %s129 = sphi 0, %s127
      %s130 = sphi 0, %s129
      %s144 = sphi 0, %s130
      %s148 = sphi 0, %s148
      %s150 = sphi 0, %s148
      %s151 = sphi 0, %s150
      %s165 = sphi 0, %s151
      %s169 = sphi 0, %s169
      %s171 = sphi 0, %s169
      %s172 = sphi 0, %s171
      %s186 = sphi 0, %s172
      %s190 = sphi 0, %s190
      %s192 = sphi 0, %s190
      %s193 = sphi 0, %s192
      %s207 = sphi 0, %s193
      %s211 = sphi 0, %s211
      %s213 = sphi 0, %s211
      %s214 = sphi 0, %s213
      %s228 = sphi 0, %s214
      %s232 = sphi 0, %s232
      %s234 = sphi 0, %s232
      %s235 = sphi 0, %s234
      %s249 = sphi 0, %s235
      %s253 = sphi 0, %s253
      %s255 = sphi 0, %s253
      %s256 = sphi 0, %s255
      %s270 = sphi 0, %s256
      %s274 = sphi 0, %s274
      %s276 = sphi 0, %s274
      %s277 = sphi 0, %s276
      %s291 = sphi 0, %s277
      %s295 = sphi 0, %s295
      %s297 = sphi 0, %s295
      %s298 = sphi 0, %s297
      %s312 = sphi 0, %s298
      %s318 = sphi 0, %s320
      %s321 = sphi 0, %s318
      %s322 = sphi 0, %s321
      %s338 = sphi 0, %s322
    $region4: #{tpu_custom_call.1} parent=1 // loop_header_branch
      %33 = sbr.rel (%p31) target = $region8
    $region5: #{tpu_custom_call.1} parent=1 // loop_body
      %s35 = ssub.s32 %s30, 1
      %s36 = ssub.s32 %s30, 2
      %s37 = sadd.s32 %s30, 1
      %s38 = ssub.s32 %s30, %s37
      %p39 = scmp.eq.s32.totalorder %s38, 0
      %s41 = sadd.s32 %s40, 1
      %s42 = scalar_select %p39, %s40, %s41
      %p45 = pneg %p39
      %p46 = scmp.eq.s32.totalorder %s30, 1
      %p47 = por %p45, %p46
      %p48 = scmp.ne.s32.totalorder %s40, %s43
      %p49 = scmp.eq.s32.totalorder %s30, 0
      %p50 = por %p48, %p49
      %p51 = scmp.ne.s32.totalorder %s40, %s43
      %p52 = scmp.eq.s32.totalorder %s35, 1
      %p53 = por %p51, %p52
      %p54 = scmp.ne.s32.totalorder %s43, %s44
      %p55 = scmp.eq.s32.totalorder %s35, 0
      %p56 = por %p54, %p55
      %p57 = scmp.ne.s32.totalorder %s43, %s44
      %p58 = scmp.eq.s32.totalorder %s36, 1
      %p59 = por %p57, %p58
      %p61 = scmp.ne.s32.totalorder %s44, %s60
      %p62 = scmp.eq.s32.totalorder %s36, 0
      %p63 = por %p61, %p62
      %s65 = sadd.s32 %s64, 1
      %p68 = scmp.eq.s32.totalorder %s30, 1
      %p69 = scmp.ne.s32.totalorder %s64, %s66
      %p70 = scmp.eq.s32.totalorder %s30, 0
      %p71 = por %p69, %p70
      %p72 = scmp.ne.s32.totalorder %s64, %s66
      %p73 = scmp.eq.s32.totalorder %s35, 1
      %p74 = por %p72, %p73
      %p75 = scmp.ne.s32.totalorder %s66, %s67
      %p76 = scmp.eq.s32.totalorder %s35, 0
      %p77 = por %p75, %p76
      %p78 = scmp.ne.s32.totalorder %s66, %s67
      %p79 = scmp.eq.s32.totalorder %s36, 1
      %p80 = por %p78, %p79
      %p82 = scmp.ne.s32.totalorder %s67, %s81
      %p83 = scmp.eq.s32.totalorder %s36, 0
      %p84 = por %p82, %p83
      %s86 = sadd.s32 %s85, 1
      %p89 = scmp.eq.s32.totalorder %s30, 1
      %p90 = scmp.ne.s32.totalorder %s85, %s87
      %p91 = scmp.eq.s32.totalorder %s30, 0
      %p92 = por %p90, %p91
      %p93 = scmp.ne.s32.totalorder %s85, %s87
      %p94 = scmp.eq.s32.totalorder %s35, 1
      %p95 = por %p93, %p94
      %p96 = scmp.ne.s32.totalorder %s87, %s88
      %p97 = scmp.eq.s32.totalorder %s35, 0
      %p98 = por %p96, %p97
      %p99 = scmp.ne.s32.totalorder %s87, %s88
      %p100 = scmp.eq.s32.totalorder %s36, 1
      %p101 = por %p99, %p100
      %p103 = scmp.ne.s32.totalorder %s88, %s102
      %p104 = scmp.eq.s32.totalorder %s36, 0
      %p105 = por %p103, %p104
      %s107 = sadd.s32 %s106, 1
      %p110 = scmp.eq.s32.totalorder %s30, 1
      %p111 = scmp.ne.s32.totalorder %s106, %s108
      %p112 = scmp.eq.s32.totalorder %s30, 0
      %p113 = por %p111, %p112
      %p114 = scmp.ne.s32.totalorder %s106, %s108
      %p115 = scmp.eq.s32.totalorder %s35, 1
      %p116 = por %p114, %p115
      %p117 = scmp.ne.s32.totalorder %s108, %s109
      %p118 = scmp.eq.s32.totalorder %s35, 0
      %p119 = por %p117, %p118
      %p120 = scmp.ne.s32.totalorder %s108, %s109
      %p121 = scmp.eq.s32.totalorder %s36, 1
      %p122 = por %p120, %p121
      %p124 = scmp.ne.s32.totalorder %s109, %s123
      %p125 = scmp.eq.s32.totalorder %s36, 0
      %p126 = por %p124, %p125
      %s128 = sadd.s32 %s127, 1
      %p131 = scmp.eq.s32.totalorder %s30, 1
      %p132 = scmp.ne.s32.totalorder %s127, %s129
      %p133 = scmp.eq.s32.totalorder %s30, 0
      %p134 = por %p132, %p133
      %p135 = scmp.ne.s32.totalorder %s127, %s129
      %p136 = scmp.eq.s32.totalorder %s35, 1
      %p137 = por %p135, %p136
      %p138 = scmp.ne.s32.totalorder %s129, %s130
      %p139 = scmp.eq.s32.totalorder %s35, 0
      %p140 = por %p138, %p139
      %p141 = scmp.ne.s32.totalorder %s129, %s130
      %p142 = scmp.eq.s32.totalorder %s36, 1
      %p143 = por %p141, %p142
      %p145 = scmp.ne.s32.totalorder %s130, %s144
      %p146 = scmp.eq.s32.totalorder %s36, 0
      %p147 = por %p145, %p146
      %s149 = sadd.s32 %s148, 1
      %p152 = scmp.eq.s32.totalorder %s30, 1
      %p153 = scmp.ne.s32.totalorder %s148, %s150
      %p154 = scmp.eq.s32.totalorder %s30, 0
      %p155 = por %p153, %p154
      %p156 = scmp.ne.s32.totalorder %s148, %s150
      %p157 = scmp.eq.s32.totalorder %s35, 1
      %p158 = por %p156, %p157
      %p159 = scmp.ne.s32.totalorder %s150, %s151
      %p160 = scmp.eq.s32.totalorder %s35, 0
      %p161 = por %p159, %p160
      %p162 = scmp.ne.s32.totalorder %s150, %s151
      %p163 = scmp.eq.s32.totalorder %s36, 1
      %p164 = por %p162, %p163
      %p166 = scmp.ne.s32.totalorder %s151, %s165
      %p167 = scmp.eq.s32.totalorder %s36, 0
      %p168 = por %p166, %p167
      %s170 = sadd.s32 %s169, 1
      %p173 = scmp.eq.s32.totalorder %s30, 1
      %p174 = scmp.ne.s32.totalorder %s169, %s171
      %p175 = scmp.eq.s32.totalorder %s30, 0
      %p176 = por %p174, %p175
      %p177 = scmp.ne.s32.totalorder %s169, %s171
      %p178 = scmp.eq.s32.totalorder %s35, 1
      %p179 = por %p177, %p178
      %p180 = scmp.ne.s32.totalorder %s171, %s172
      %p181 = scmp.eq.s32.totalorder %s35, 0
      %p182 = por %p180, %p181
      %p183 = scmp.ne.s32.totalorder %s171, %s172
      %p184 = scmp.eq.s32.totalorder %s36, 1
      %p185 = por %p183, %p184
      %p187 = scmp.ne.s32.totalorder %s172, %s186
      %p188 = scmp.eq.s32.totalorder %s36, 0
      %p189 = por %p187, %p188
      %s191 = sadd.s32 %s190, 1
      %p194 = scmp.eq.s32.totalorder %s30, 1
      %p195 = scmp.ne.s32.totalorder %s190, %s192
      %p196 = scmp.eq.s32.totalorder %s30, 0
      %p197 = por %p195, %p196
      %p198 = scmp.ne.s32.totalorder %s190, %s192
      %p199 = scmp.eq.s32.totalorder %s35, 1
      %p200 = por %p198, %p199
      %p201 = scmp.ne.s32.totalorder %s192, %s193
      %p202 = scmp.eq.s32.totalorder %s35, 0
      %p203 = por %p201, %p202
      %p204 = scmp.ne.s32.totalorder %s192, %s193
      %p205 = scmp.eq.s32.totalorder %s36, 1
      %p206 = por %p204, %p205
      %p208 = scmp.ne.s32.totalorder %s193, %s207
      %p209 = scmp.eq.s32.totalorder %s36, 0
      %p210 = por %p208, %p209
      %s212 = sadd.s32 %s211, 1
      %p215 = scmp.eq.s32.totalorder %s30, 1
      %p216 = scmp.ne.s32.totalorder %s211, %s213
      %p217 = scmp.eq.s32.totalorder %s30, 0
      %p218 = por %p216, %p217
      %p219 = scmp.ne.s32.totalorder %s211, %s213
      %p220 = scmp.eq.s32.totalorder %s35, 1
      %p221 = por %p219, %p220
      %p222 = scmp.ne.s32.totalorder %s213, %s214
      %p223 = scmp.eq.s32.totalorder %s35, 0
      %p224 = por %p222, %p223
      %p225 = scmp.ne.s32.totalorder %s213, %s214
      %p226 = scmp.eq.s32.totalorder %s36, 1
      %p227 = por %p225, %p226
      %p229 = scmp.ne.s32.totalorder %s214, %s228
      %p230 = scmp.eq.s32.totalorder %s36, 0
      %p231 = por %p229, %p230
      %s233 = sadd.s32 %s232, 1
      %p236 = scmp.eq.s32.totalorder %s30, 1
      %p237 = scmp.ne.s32.totalorder %s232, %s234
      %p238 = scmp.eq.s32.totalorder %s30, 0
      %p239 = por %p237, %p238
      %p240 = scmp.ne.s32.totalorder %s232, %s234
      %p241 = scmp.eq.s32.totalorder %s35, 1
      %p242 = por %p240, %p241
      %p243 = scmp.ne.s32.totalorder %s234, %s235
      %p244 = scmp.eq.s32.totalorder %s35, 0
      %p245 = por %p243, %p244
      %p246 = scmp.ne.s32.totalorder %s234, %s235
      %p247 = scmp.eq.s32.totalorder %s36, 1
      %p248 = por %p246, %p247
      %p250 = scmp.ne.s32.totalorder %s235, %s249
      %p251 = scmp.eq.s32.totalorder %s36, 0
      %p252 = por %p250, %p251
      %s254 = sadd.s32 %s253, 1
      %p257 = scmp.eq.s32.totalorder %s30, 1
      %p258 = scmp.ne.s32.totalorder %s253, %s255
      %p259 = scmp.eq.s32.totalorder %s30, 0
      %p260 = por %p258, %p259
      %p261 = scmp.ne.s32.totalorder %s253, %s255
      %p262 = scmp.eq.s32.totalorder %s35, 1
      %p263 = por %p261, %p262
      %p264 = scmp.ne.s32.totalorder %s255, %s256
      %p265 = scmp.eq.s32.totalorder %s35, 0
      %p266 = por %p264, %p265
      %p267 = scmp.ne.s32.totalorder %s255, %s256
      %p268 = scmp.eq.s32.totalorder %s36, 1
      %p269 = por %p267, %p268
      %p271 = scmp.ne.s32.totalorder %s256, %s270
      %p272 = scmp.eq.s32.totalorder %s36, 0
      %p273 = por %p271, %p272
      %s275 = sadd.s32 %s274, 1
      %p278 = scmp.eq.s32.totalorder %s30, 1
      %p279 = scmp.ne.s32.totalorder %s274, %s276
      %p280 = scmp.eq.s32.totalorder %s30, 0
      %p281 = por %p279, %p280
      %p282 = scmp.ne.s32.totalorder %s274, %s276
      %p283 = scmp.eq.s32.totalorder %s35, 1
      %p284 = por %p282, %p283
      %p285 = scmp.ne.s32.totalorder %s276, %s277
      %p286 = scmp.eq.s32.totalorder %s35, 0
      %p287 = por %p285, %p286
      %p288 = scmp.ne.s32.totalorder %s276, %s277
      %p289 = scmp.eq.s32.totalorder %s36, 1
      %p290 = por %p288, %p289
      %p292 = scmp.ne.s32.totalorder %s277, %s291
      %p293 = scmp.eq.s32.totalorder %s36, 0
      %p294 = por %p292, %p293
      %s296 = sadd.s32 %s295, 1
      %p299 = scmp.eq.s32.totalorder %s30, 1
      %p300 = scmp.ne.s32.totalorder %s295, %s297
      %p301 = scmp.eq.s32.totalorder %s30, 0
      %p302 = por %p300, %p301
      %p303 = scmp.ne.s32.totalorder %s295, %s297
      %p304 = scmp.eq.s32.totalorder %s35, 1
      %p305 = por %p303, %p304
      %p306 = scmp.ne.s32.totalorder %s297, %s298
      %p307 = scmp.eq.s32.totalorder %s35, 0
      %p308 = por %p306, %p307
      %p309 = scmp.ne.s32.totalorder %s297, %s298
      %p310 = scmp.eq.s32.totalorder %s36, 1
      %p311 = por %p309, %p310
      %p313 = scmp.ne.s32.totalorder %s298, %s312
      %p314 = scmp.eq.s32.totalorder %s36, 0
      %p315 = por %p313, %p314
      %s316 = ssub.s32 %s30, %s37
      %p317 = scmp.eq.s32.totalorder %s316, 0
      %s319 = sadd.s32 %s318, 1
      %s320 = scalar_select %p317, %s318, %s319
      %p323 = pneg %p317
      %p324 = scmp.eq.s32.totalorder %s30, 1
      %p325 = por %p323, %p324
      %p326 = scmp.ne.s32.totalorder %s318, %s321
      %p327 = scmp.eq.s32.totalorder %s30, 0
      %p328 = por %p326, %p327
      %p329 = scmp.ne.s32.totalorder %s318, %s321
      %p330 = scmp.eq.s32.totalorder %s35, 1
      %p331 = por %p329, %p330
      %p332 = scmp.ne.s32.totalorder %s321, %s322
      %p333 = scmp.eq.s32.totalorder %s35, 0
      %p334 = por %p332, %p333
      %p335 = scmp.ne.s32.totalorder %s321, %s322
      %p336 = scmp.eq.s32.totalorder %s36, 1
      %p337 = por %p335, %p336
      %p339 = scmp.ne.s32.totalorder %s322, %s338
      %p340 = scmp.eq.s32.totalorder %s36, 0
      %p341 = por %p339, %p340
      %p342 = scmp.le.s32.totalorder 1, %s30
      %p343 = scmp.lt.s32.totalorder %s30, 3
      %p344 = pnand %p342, %p343
      %p345 = pneg %p344
      // Predicated region
      $region9: #{tpu_custom_call.1} parent=5 // pred_check
        _
      $region10: #{tpu_custom_call.1} parent=5 // pred_check_branch
        %347 = sbr.rel (%p344) target = $region12
      $region11: #{tpu_custom_call.1} parent=5 // pred_region
        %s348 = ssub.s32 %s30, 1
        // Predicated region
        $region13: #{tpu_custom_call.1} parent=11 // pred_check
          %p349 = pneg %p77
        $region14: #{tpu_custom_call.1} parent=11 // pred_check_branch
          %351 = sbr.rel (%p349) target = $region16
        $region15: #{tpu_custom_call.1} parent=11 // pred_region
          %353 = vsyncadd [#allocation7], 0
          %s354 = sshll.u32 %s1, 4
          %s355 = int_to_ptr.hbm [resolvable:$true] %s354
          %s356 = sshll.u32 [#allocation6], 4
          %s357 = int_to_ptr.vmem [resolvable:$true] %s356
          %362 = dma.hbm_to_vmem [thread:$0]  %s355, 512, %s357, [#allocation7], 128, 128, 8
        $region16: #{tpu_custom_call.1} parent=11 // pred_fallthru
          _
        // Predicated region
        $region17: #{tpu_custom_call.1} parent=11 // pred_check
          %p363 = pneg %p98
        $region18: #{tpu_custom_call.1} parent=11 // pred_check_branch
          %365 = sbr.rel (%p363) target = $region20
        $region19: #{tpu_custom_call.1} parent=11 // pred_region
          %367 = vsyncadd [#allocation7], 0
          %s368 = sshll.u32 %s2, 4
          %s369 = int_to_ptr.hbm [resolvable:$true] %s368
          %s370 = sshll.u32 [#allocation8], 4
          %s371 = int_to_ptr.vmem [resolvable:$true] %s370
          %376 = dma.hbm_to_vmem [thread:$0]  %s369, 512, %s371, [#allocation7], 128, 128, 8
        $region20: #{tpu_custom_call.1} parent=11 // pred_fallthru
          _
        // Predicated region
        $region21: #{tpu_custom_call.1} parent=11 // pred_check
          %p377 = pneg %p119
        $region22: #{tpu_custom_call.1} parent=11 // pred_check_branch
          %379 = sbr.rel (%p377) target = $region24
        $region23: #{tpu_custom_call.1} parent=11 // pred_region
          %381 = vsyncadd [#allocation10], 0
          %s382 = sshll.u32 %s3, 4
          %s383 = int_to_ptr.hbm [resolvable:$true] %s382
          %s384 = sshll.u32 [#allocation9], 4
          %s385 = int_to_ptr.vmem [resolvable:$true] %s384
          %390 = dma.hbm_to_vmem [thread:$0]  %s383, 65536, %s385, [#allocation10], 128, 128, 8
        $region24: #{tpu_custom_call.1} parent=11 // pred_fallthru
          _
        // Predicated region
        $region25: #{tpu_custom_call.1} parent=11 // pred_check
          %p391 = pneg %p140
        $region26: #{tpu_custom_call.1} parent=11 // pred_check_branch
          %393 = sbr.rel (%p391) target = $region28
        $region27: #{tpu_custom_call.1} parent=11 // pred_region
          %395 = vsyncadd [#allocation10], 0
          %s396 = sshll.u32 %s4, 4
          %s397 = int_to_ptr.hbm [resolvable:$true] %s396
          %s398 = sshll.u32 [#allocation11], 4
          %s399 = int_to_ptr.vmem [resolvable:$true] %s398
          %404 = dma.hbm_to_vmem [thread:$0]  %s397, 65536, %s399, [#allocation10], 128, 128, 8
        $region28: #{tpu_custom_call.1} parent=11 // pred_fallthru
          _
        // Predicated region
        $region29: #{tpu_custom_call.1} parent=11 // pred_check
          %p405 = pneg %p161
        $region30: #{tpu_custom_call.1} parent=11 // pred_check_branch
          %407 = sbr.rel (%p405) target = $region32
        $region31: #{tpu_custom_call.1} parent=11 // pred_region
          %409 = vsyncadd [#allocation13], 0
          %s410 = sshll.u32 %s5, 4
          %s411 = int_to_ptr.hbm [resolvable:$true] %s410
          %s412 = sshll.u32 [#allocation12], 4
          %s413 = int_to_ptr.vmem [resolvable:$true] %s412
          %418 = dma.hbm_to_vmem [thread:$0]  %s411, 4096, %s413, [#allocation13], 128, 128, 8
        $region32: #{tpu_custom_call.1} parent=11 // pred_fallthru
          _
        // Predicated region
        $region33: #{tpu_custom_call.1} parent=11 // pred_check
          %p419 = pneg %p182
        $region34: #{tpu_custom_call.1} parent=11 // pred_check_branch
          %421 = sbr.rel (%p419) target = $region36
        $region35: #{tpu_custom_call.1} parent=11 // pred_region
          _
        $region36: #{tpu_custom_call.1} parent=11 // pred_fallthru
          _
        // Predicated region
        $region37: #{tpu_custom_call.1} parent=11 // pred_check
          %p422 = pneg %p203
        $region38: #{tpu_custom_call.1} parent=11 // pred_check_branch
          %424 = sbr.rel (%p422) target = $region40
        $region39: #{tpu_custom_call.1} parent=11 // pred_region
          _
        $region40: #{tpu_custom_call.1} parent=11 // pred_fallthru
          _
        // Predicated region
        $region41: #{tpu_custom_call.1} parent=11 // pred_check
          %p425 = pneg %p224
        $region42: #{tpu_custom_call.1} parent=11 // pred_check_branch
          %427 = sbr.rel (%p425) target = $region44
        $region43: #{tpu_custom_call.1} parent=11 // pred_region
          _
        $region44: #{tpu_custom_call.1} parent=11 // pred_fallthru
          _
        // Predicated region
        $region45: #{tpu_custom_call.1} parent=11 // pred_check
          %p428 = pneg %p245
        $region46: #{tpu_custom_call.1} parent=11 // pred_check_branch
          %430 = sbr.rel (%p428) target = $region48
        $region47: #{tpu_custom_call.1} parent=11 // pred_region
          _
        $region48: #{tpu_custom_call.1} parent=11 // pred_fallthru
          _
        // Predicated region
        $region49: #{tpu_custom_call.1} parent=11 // pred_check
          %p431 = pneg %p266
        $region50: #{tpu_custom_call.1} parent=11 // pred_check_branch
          %433 = sbr.rel (%p431) target = $region52
        $region51: #{tpu_custom_call.1} parent=11 // pred_region
          _
        $region52: #{tpu_custom_call.1} parent=11 // pred_fallthru
          _
        // Predicated region
        $region53: #{tpu_custom_call.1} parent=11 // pred_check
          %p434 = pneg %p287
        $region54: #{tpu_custom_call.1} parent=11 // pred_check_branch
          %436 = sbr.rel (%p434) target = $region56
        $region55: #{tpu_custom_call.1} parent=11 // pred_region
          %438 = vsyncadd [#allocation13], 0
          %s440 = sshll.u32 %s11, 4
          %s441 = int_to_ptr.hbm [resolvable:$true] %s440
          %s442 = sshll.u32 [#allocation14], 4
          %s443 = int_to_ptr.vmem [resolvable:$true] %s442
          %445 = dma.hbm_to_vmem [thread:$0]  %s441, 16, %s443, [#allocation13]
        $region56: #{tpu_custom_call.1} parent=11 // pred_fallthru
          _
        // Predicated region
        $region57: #{tpu_custom_call.1} parent=11 // pred_check
          %p446 = pneg %p308
        $region58: #{tpu_custom_call.1} parent=11 // pred_check_branch
          %448 = sbr.rel (%p446) target = $region60
        $region59: #{tpu_custom_call.1} parent=11 // pred_region
          _
        $region60: #{tpu_custom_call.1} parent=11 // pred_fallthru
          _
      $region12: #{tpu_custom_call.1} parent=5 // pred_fallthru
        _
      %p449 = scmp.lt.s32.totalorder %s30, 2
      // Predicated region
      $region61: #{tpu_custom_call.1} parent=5 // pred_check
        %p450 = pneg %p449
      $region62: #{tpu_custom_call.1} parent=5 // pred_check_branch
        %452 = sbr.rel (%p450) target = $region64
      $region63: #{tpu_custom_call.1} parent=5 // pred_region
        // Predicated region
        $region65: #{tpu_custom_call.1} parent=63 // pred_check
          %p453 = pneg %p50
        $region66: #{tpu_custom_call.1} parent=63 // pred_check_branch
          %455 = sbr.rel (%p453) target = $region68
        $region67: #{tpu_custom_call.1} parent=63 // pred_region
          %s456 = sand.u32 %s40, 1
          %s457 = scalar_lea.sflag [#allocation4], %s456
          %s458 = sand.u32 %s40, 1
          %s459 = smul.addr %s458, 2
          %s460 = scalar_lea.vmem [#allocation3], %s459
          %462 = vsyncadd %s457, 0
          %s463 = smul.addr %s30, 2
          %s464 = scalar_lea.hbm %s0, %s463
          %s466 = sshll.u32 %s464, 4
          %s467 = int_to_ptr.hbm [resolvable:$true] %s466
          %s468 = sshll.u32 %s460, 4
          %s469 = int_to_ptr.vmem [resolvable:$true] %s468
          %471 = dma.hbm_to_vmem [thread:$0]  %s467, 32, %s469, %s457
        $region68: #{tpu_custom_call.1} parent=63 // pred_fallthru
          _
      $region64: #{tpu_custom_call.1} parent=5 // pred_fallthru
        _
      %p472 = scmp.le.s32.totalorder 1, %s30
      %p473 = scmp.lt.s32.totalorder %s30, 3
      %p474 = pnand %p472, %p473
      %p475 = pneg %p474
      // Predicated region
      $region69: #{tpu_custom_call.1} parent=5 // pred_check
        _
      $region70: #{tpu_custom_call.1} parent=5 // pred_check_branch
        %477 = sbr.rel (%p474) target = $region72
      $region71: #{tpu_custom_call.1} parent=5 // pred_region
        %s478 = ssub.s32 %s30, 1
        %s479 = sand.u32 %s43, 1
        %s480 = scalar_lea.sflag [#allocation4], %s479
        %s481 = sand.u32 %s43, 1
        %s482 = smul.addr %s481, 2
        %s483 = scalar_lea.vmem [#allocation3], %s482
        // Predicated region
        $region73: #{tpu_custom_call.1} parent=71 // pred_check
          %p484 = pneg %p56
        $region74: #{tpu_custom_call.1} parent=71 // pred_check_branch
          %486 = sbr.rel (%p484) target = $region76
        $region75: #{tpu_custom_call.1} parent=71 // pred_region
          %488 = dma.done %s480, 32
        $region76: #{tpu_custom_call.1} parent=71 // pred_fallthru
          _
        // Predicated region
        $region77: #{tpu_custom_call.1} parent=71 // pred_check
          %p489 = pneg %p77
        $region78: #{tpu_custom_call.1} parent=71 // pred_check_branch
          %491 = sbr.rel (%p489) target = $region80
        $region79: #{tpu_custom_call.1} parent=71 // pred_region
          %493 = dma.done [#allocation7], 512
        $region80: #{tpu_custom_call.1} parent=71 // pred_fallthru
          _
        // Predicated region
        $region81: #{tpu_custom_call.1} parent=71 // pred_check
          %p494 = pneg %p98
        $region82: #{tpu_custom_call.1} parent=71 // pred_check_branch
          %496 = sbr.rel (%p494) target = $region84
        $region83: #{tpu_custom_call.1} parent=71 // pred_region
          %498 = dma.done [#allocation7], 512
        $region84: #{tpu_custom_call.1} parent=71 // pred_fallthru
          _
        // Predicated region
        $region85: #{tpu_custom_call.1} parent=71 // pred_check
          %p499 = pneg %p119
        $region86: #{tpu_custom_call.1} parent=71 // pred_check_branch
          %501 = sbr.rel (%p499) target = $region88
        $region87: #{tpu_custom_call.1} parent=71 // pred_region
          %503 = dma.done [#allocation10], 65536
        $region88: #{tpu_custom_call.1} parent=71 // pred_fallthru
          _
        // Predicated region
        $region89: #{tpu_custom_call.1} parent=71 // pred_check
          %p504 = pneg %p140
        $region90: #{tpu_custom_call.1} parent=71 // pred_check_branch
          %506 = sbr.rel (%p504) target = $region92
        $region91: #{tpu_custom_call.1} parent=71 // pred_region
          %508 = dma.done [#allocation10], 65536
        $region92: #{tpu_custom_call.1} parent=71 // pred_fallthru
          _
        // Predicated region
        $region93: #{tpu_custom_call.1} parent=71 // pred_check
          %p509 = pneg %p161
        $region94: #{tpu_custom_call.1} parent=71 // pred_check_branch
          %511 = sbr.rel (%p509) target = $region96
        $region95: #{tpu_custom_call.1} parent=71 // pred_region
          %513 = dma.done [#allocation13], 4096
        $region96: #{tpu_custom_call.1} parent=71 // pred_fallthru
          _
        // Predicated region
        $region97: #{tpu_custom_call.1} parent=71 // pred_check
          %p514 = pneg %p287
        $region98: #{tpu_custom_call.1} parent=71 // pred_check_branch
          %516 = sbr.rel (%p514) target = $region100
        $region99: #{tpu_custom_call.1} parent=71 // pred_region
          %518 = dma.done [#allocation13], 16
        $region100: #{tpu_custom_call.1} parent=71 // pred_fallthru
          _
        %s519 = sand.u32 %s43, 1
        %s520 = scalar_lea.sflag [#allocation4], %s519
        %s521 = sand.u32 %s43, 1
        %s522 = smul.addr %s521, 2
        %s523 = scalar_lea.vmem [#allocation3], %s522
        %p524 = pneg %p56
        %p525 = pneg %p53
        %p526 = pneg %p77
        %p527 = pneg %p74
        %p528 = pneg %p98
        %p529 = pneg %p95
        %p530 = pneg %p119
        %p531 = pneg %p116
        %p532 = pneg %p140
        %p533 = pneg %p137
        %p534 = pneg %p161
        %p535 = pneg %p158
        %p536 = pneg %p182
        %p537 = pneg %p179
        %p538 = pneg %p203
        %p539 = pneg %p200
        %p540 = pneg %p224
        %p541 = pneg %p221
        %p542 = pneg %p245
        %p543 = pneg %p242
        %p544 = pneg %p266
        %p545 = pneg %p263
        %p546 = pneg %p287
        %p547 = pneg %p284
        %p548 = pneg %p308
        %p549 = pneg %p305
        %p550 = pneg %p334
        %p551 = pneg %p331
        %s552 = sand.u32 %s321, 1
        %s553 = scalar_lea.sflag [#allocation5], %s552
        %s554 = sand.u32 %s321, 1
        %s555 = scalar_lea.vmem [#allocation15], %s554
        %v556 = vld [vmem:[%s483] sm:$0x3]
        %v557 = vld [vmem:[%s7] sm:$0xff]
        %v558 = vld [vmem:[%s7 + $0x8] sm:$0xff]
        %v559 = vld [vmem:[%s7 + $0x10] sm:$0xff]
        %v560 = vld [vmem:[%s7 + $0x18] sm:$0xff]
        %v561 = vld [vmem:[%s7 + $0x20] sm:$0xff]
        %v562 = vld [vmem:[%s7 + $0x28] sm:$0xff]
        %v563 = vld [vmem:[%s7 + $0x30] sm:$0xff]
        %v564 = vld [vmem:[%s7 + $0x38] sm:$0xff]
        %v565 = vld [vmem:[%s8] sm:$0xff]
        %v566 = vld [vmem:[%s8 + $0x8] sm:$0xff]
        %v567 = vld [vmem:[%s8 + $0x10] sm:$0xff]
        %v568 = vld [vmem:[%s8 + $0x18] sm:$0xff]
        %v569 = vld [vmem:[%s8 + $0x20] sm:$0xff]
        %v570 = vld [vmem:[%s8 + $0x28] sm:$0xff]
        %v571 = vld [vmem:[%s8 + $0x30] sm:$0xff]
        %v572 = vld [vmem:[%s8 + $0x38] sm:$0xff]
        %574 = vset.pattern.permute.xlu0 0
        %575 = vperm.xlu0 %574, %v565
        %v576 = vpop.permute.xlu0 %575
        %579 = vset.pattern.permute.xlu0 0
        %580 = vperm.xlu0 %579, %v566
        %v581 = vpop.permute.xlu0 %580
        %584 = vset.pattern.permute.xlu0 0
        %585 = vperm.xlu0 %584, %v567
        %v586 = vpop.permute.xlu0 %585
        %589 = vset.pattern.permute.xlu0 0
        %590 = vperm.xlu0 %589, %v568
        %v591 = vpop.permute.xlu0 %590
        %594 = vset.pattern.permute.xlu0 0
        %595 = vperm.xlu0 %594, %v569
        %v596 = vpop.permute.xlu0 %595
        %599 = vset.pattern.permute.xlu0 0
        %600 = vperm.xlu0 %599, %v570
        %v601 = vpop.permute.xlu0 %600
        %604 = vset.pattern.permute.xlu0 0
        %605 = vperm.xlu0 %604, %v571
        %v606 = vpop.permute.xlu0 %605
        %609 = vset.pattern.permute.xlu0 0
        %610 = vperm.xlu0 %609, %v572
        %v611 = vpop.permute.xlu0 %610
        %vm613 = vcmask 15360
        %v615 = vsel %vm613, %v557, 0
        %v618 = vsel %vm613, %v558, 0
        %v621 = vsel %vm613, %v559, 0
        %v624 = vsel %vm613, %v560, 0
        %v627 = vsel %vm613, %v561, 0
        %v630 = vsel %vm613, %v562, 0
        %v633 = vsel %vm613, %v563, 0
        %v636 = vsel %vm613, %v564, 0
        %vm638 = vcmask 1041408
        %v640 = vsel %vm638, %v556, 0
        %642 = vmatpush.msra.mxu0 0.0
        %643 = vmatpush.msra.mxu0 0.0
        %644 = vmatpush.msra.mxu0 0.0
        %645 = vmatpush.msra.mxu0 0.0
        %646 = vmatpush.msra.mxu0 0.0
        %647 = vmatpush.msra.mxu0 0.0
        %648 = vmatpush.msra.mxu0 0.0
        %649 = vmatpush.msra.mxu0 0.0
        %650 = vmatpush.msra.mxu0 0.0
        %651 = vmatpush.msra.mxu0 0.0
        %652 = vmatpush.msra.mxu0 0.0
        %653 = vmatpush.msra.mxu0 0.0
        %654 = vmatpush.msra.mxu0 0.0
        %655 = vmatpush.msra.mxu0 0.0
        %656 = vmatpush.msra.mxu0 0.0
        %657 = vmatpush.msra.mxu0 %v640
        %658 = vmatmul.f32.gmra.mxu0 %v615
        %v659 = vpop.f32.mrf.mxu0
        %v660 = vadd.f32 %v576, %v659
        %661 = vmatmul.f32.gmra.mxu0 %v618
        %v662 = vpop.f32.mrf.mxu0
        %v663 = vadd.f32 %v581, %v662
        %664 = vmatmul.f32.gmra.mxu0 %v621
        %v665 = vpop.f32.mrf.mxu0
        %v666 = vadd.f32 %v586, %v665
        %667 = vmatmul.f32.gmra.mxu0 %v624
        %v668 = vpop.f32.mrf.mxu0
        %v669 = vadd.f32 %v591, %v668
        %670 = vmatmul.f32.gmra.mxu0 %v627
        %v671 = vpop.f32.mrf.mxu0
        %v672 = vadd.f32 %v596, %v671
        %673 = vmatmul.f32.gmra.mxu0 %v630
        %v674 = vpop.f32.mrf.mxu0
        %v675 = vadd.f32 %v601, %v674
        %676 = vmatmul.f32.gmra.mxu0 %v633
        %v677 = vpop.f32.mrf.mxu0
        %v678 = vadd.f32 %v606, %v677
        %679 = vmatmul.f32.gmra.mxu0 %v636
        %v680 = vpop.f32.mrf.mxu0
        %v681 = vadd.f32 %v611, %v680
        %682 = vdwg.mxu0
        %v683 = vld [vmem:[#allocation6] sm:$0xff]
        %v684 = vld [vmem:[#allocation6 + $0x8] sm:$0xff]
        %v685 = vld [vmem:[#allocation6 + $0x10] sm:$0xff]
        %v686 = vld [vmem:[#allocation6 + $0x18] sm:$0xff]
        %v687 = vld [vmem:[#allocation8] sm:$0xff]
        %v688 = vld [vmem:[#allocation8 + $0x8] sm:$0xff]
        %v689 = vld [vmem:[#allocation8 + $0x10] sm:$0xff]
        %v690 = vld [vmem:[#allocation8 + $0x18] sm:$0xff]
        %v691 = vld [vmem:[#allocation9] sm:$0xff]
        %v692 = vld [vmem:[#allocation9 + $0x8] sm:$0xff]
        %v693 = vld [vmem:[#allocation9 + $0x10] sm:$0xff]
        %v694 = vld [vmem:[#allocation9 + $0x18] sm:$0xff]
        %v695 = vld [vmem:[#allocation9 + $0x20] sm:$0xff]
        %v696 = vld [vmem:[#allocation9 + $0x28] sm:$0xff]
        %v697 = vld [vmem:[#allocation9 + $0x30] sm:$0xff]
        %v698 = vld [vmem:[#allocation9 + $0x38] sm:$0xff]
        %v699 = vld [vmem:[#allocation9 + $0x40] sm:$0xff]
        %v700 = vld [vmem:[#allocation9 + $0x48] sm:$0xff]
        %v701 = vld [vmem:[#allocation9 + $0x50] sm:$0xff]
        %v702 = vld [vmem:[#allocation9 + $0x58] sm:$0xff]
        %v703 = vld [vmem:[#allocation9 + $0x60] sm:$0xff]
        %v704 = vld [vmem:[#allocation9 + $0x68] sm:$0xff]
        %v705 = vld [vmem:[#allocation9 + $0x70] sm:$0xff]
        %v706 = vld [vmem:[#allocation9 + $0x78] sm:$0xff]
        %v707 = vld [vmem:[#allocation9 + $0x80] sm:$0xff]
        %v708 = vld [vmem:[#allocation9 + $0x88] sm:$0xff]
        %v709 = vld [vmem:[#allocation9 + $0x90] sm:$0xff]
        %v710 = vld [vmem:[#allocation9 + $0x98] sm:$0xff]
        %v711 = vld [vmem:[#allocation9 + $0xa0] sm:$0xff]
        %v712 = vld [vmem:[#allocation9 + $0xa8] sm:$0xff]
        %v713 = vld [vmem:[#allocation9 + $0xb0] sm:$0xff]
        %v714 = vld [vmem:[#allocation9 + $0xb8] sm:$0xff]
        %v715 = vld [vmem:[#allocation9 + $0xc0] sm:$0xff]
        %v716 = vld [vmem:[#allocation9 + $0xc8] sm:$0xff]
        %v717 = vld [vmem:[#allocation9 + $0xd0] sm:$0xff]
        %v718 = vld [vmem:[#allocation9 + $0xd8] sm:$0xff]
        %v719 = vld [vmem:[#allocation9 + $0xe0] sm:$0xff]
        %v720 = vld [vmem:[#allocation9 + $0xe8] sm:$0xff]
        %v721 = vld [vmem:[#allocation9 + $0xf0] sm:$0xff]
        %v722 = vld [vmem:[#allocation9 + $0xf8] sm:$0xff]
        %v723 = vld [vmem:[#allocation9 + $0x100] sm:$0xff]
        %v724 = vld [vmem:[#allocation9 + $0x108] sm:$0xff]
        %v725 = vld [vmem:[#allocation9 + $0x110] sm:$0xff]
        %v726 = vld [vmem:[#allocation9 + $0x118] sm:$0xff]
        %v727 = vld [vmem:[#allocation9 + $0x120] sm:$0xff]
        %v728 = vld [vmem:[#allocation9 + $0x128] sm:$0xff]
        %v729 = vld [vmem:[#allocation9 + $0x130] sm:$0xff]
        %v730 = vld [vmem:[#allocation9 + $0x138] sm:$0xff]
        %v731 = vld [vmem:[#allocation9 + $0x140] sm:$0xff]
        %v732 = vld [vmem:[#allocation9 + $0x148] sm:$0xff]
        %v733 = vld [vmem:[#allocation9 + $0x150] sm:$0xff]
        %v734 = vld [vmem:[#allocation9 + $0x158] sm:$0xff]
        %v735 = vld [vmem:[#allocation9 + $0x160] sm:$0xff]
        %v736 = vld [vmem:[#allocation9 + $0x168] sm:$0xff]
        %v737 = vld [vmem:[#allocation9 + $0x170] sm:$0xff]
        %v738 = vld [vmem:[#allocation9 + $0x178] sm:$0xff]
        %v739 = vld [vmem:[#allocation9 + $0x180] sm:$0xff]
        %v740 = vld [vmem:[#allocation9 + $0x188] sm:$0xff]
        %v741 = vld [vmem:[#allocation9 + $0x190] sm:$0xff]
        %v742 = vld [vmem:[#allocation9 + $0x198] sm:$0xff]
        %v743 = vld [vmem:[#allocation9 + $0x1a0] sm:$0xff]
        %v744 = vld [vmem:[#allocation9 + $0x1a8] sm:$0xff]
        %v745 = vld [vmem:[#allocation9 + $0x1b0] sm:$0xff]
        %v746 = vld [vmem:[#allocation9 + $0x1b8] sm:$0xff]
        %v747 = vld [vmem:[#allocation9 + $0x1c0] sm:$0xff]
        %v748 = vld [vmem:[#allocation9 + $0x1c8] sm:$0xff]
        %v749 = vld [vmem:[#allocation9 + $0x1d0] sm:$0xff]
        %v750 = vld [vmem:[#allocation9 + $0x1d8] sm:$0xff]
        %v751 = vld [vmem:[#allocation9 + $0x1e0] sm:$0xff]
        %v752 = vld [vmem:[#allocation9 + $0x1e8] sm:$0xff]
        %v753 = vld [vmem:[#allocation9 + $0x1f0] sm:$0xff]
        %v754 = vld [vmem:[#allocation9 + $0x1f8] sm:$0xff]
        %v755 = vld [vmem:[#allocation9 + $0x200] sm:$0xff]
        %v756 = vld [vmem:[#allocation9 + $0x208] sm:$0xff]
        %v757 = vld [vmem:[#allocation9 + $0x210] sm:$0xff]
        %v758 = vld [vmem:[#allocation9 + $0x218] sm:$0xff]
        %v759 = vld [vmem:[#allocation9 + $0x220] sm:$0xff]
        %v760 = vld [vmem:[#allocation9 + $0x228] sm:$0xff]
        %v761 = vld [vmem:[#allocation9 + $0x230] sm:$0xff]
        %v762 = vld [vmem:[#allocation9 + $0x238] sm:$0xff]
        %v763 = vld [vmem:[#allocation9 + $0x240] sm:$0xff]
        %v764 = vld [vmem:[#allocation9 + $0x248] sm:$0xff]
        %v765 = vld [vmem:[#allocation9 + $0x250] sm:$0xff]
        %v766 = vld [vmem:[#allocation9 + $0x258] sm:$0xff]
        %v767 = vld [vmem:[#allocation9 + $0x260] sm:$0xff]
        %v768 = vld [vmem:[#allocation9 + $0x268] sm:$0xff]
        %v769 = vld [vmem:[#allocation9 + $0x270] sm:$0xff]
        %v770 = vld [vmem:[#allocation9 + $0x278] sm:$0xff]
        %v771 = vld [vmem:[#allocation9 + $0x280] sm:$0xff]
        %v772 = vld [vmem:[#allocation9 + $0x288] sm:$0xff]
        %v773 = vld [vmem:[#allocation9 + $0x290] sm:$0xff]
        %v774 = vld [vmem:[#allocation9 + $0x298] sm:$0xff]
        %v775 = vld [vmem:[#allocation9 + $0x2a0] sm:$0xff]
        %v776 = vld [vmem:[#allocation9 + $0x2a8] sm:$0xff]
        %v777 = vld [vmem:[#allocation9 + $0x2b0] sm:$0xff]
        %v778 = vld [vmem:[#allocation9 + $0x2b8] sm:$0xff]
        %v779 = vld [vmem:[#allocation9 + $0x2c0] sm:$0xff]
        %v780 = vld [vmem:[#allocation9 + $0x2c8] sm:$0xff]
        %v781 = vld [vmem:[#allocation9 + $0x2d0] sm:$0xff]
        %v782 = vld [vmem:[#allocation9 + $0x2d8] sm:$0xff]
        %v783 = vld [vmem:[#allocation9 + $0x2e0] sm:$0xff]
        %v784 = vld [vmem:[#allocation9 + $0x2e8] sm:$0xff]
        %v785 = vld [vmem:[#allocation9 + $0x2f0] sm:$0xff]
        %v786 = vld [vmem:[#allocation9 + $0x2f8] sm:$0xff]
        %v787 = vld [vmem:[#allocation9 + $0x300] sm:$0xff]
        %v788 = vld [vmem:[#allocation9 + $0x308] sm:$0xff]
        %v789 = vld [vmem:[#allocation9 + $0x310] sm:$0xff]
        %v790 = vld [vmem:[#allocation9 + $0x318] sm:$0xff]
        %v791 = vld [vmem:[#allocation9 + $0x320] sm:$0xff]
        %v792 = vld [vmem:[#allocation9 + $0x328] sm:$0xff]
        %v793 = vld [vmem:[#allocation9 + $0x330] sm:$0xff]
        %v794 = vld [vmem:[#allocation9 + $0x338] sm:$0xff]
        %v795 = vld [vmem:[#allocation9 + $0x340] sm:$0xff]
        %v796 = vld [vmem:[#allocation9 + $0x348] sm:$0xff]
        %v797 = vld [vmem:[#allocation9 + $0x350] sm:$0xff]
        %v798 = vld [vmem:[#allocation9 + $0x358] sm:$0xff]
        %v799 = vld [vmem:[#allocation9 + $0x360] sm:$0xff]
        %v800 = vld [vmem:[#allocation9 + $0x368] sm:$0xff]
        %v801 = vld [vmem:[#allocation9 + $0x370] sm:$0xff]
        %v802 = vld [vmem:[#allocation9 + $0x378] sm:$0xff]
        %v803 = vld [vmem:[#allocation9 + $0x380] sm:$0xff]
        %v804 = vld [vmem:[#allocation9 + $0x388] sm:$0xff]
        %v805 = vld [vmem:[#allocation9 + $0x390] sm:$0xff]
        %v806 = vld [vmem:[#allocation9 + $0x398] sm:$0xff]
        %v807 = vld [vmem:[#allocation9 + $0x3a0] sm:$0xff]
        %v808 = vld [vmem:[#allocation9 + $0x3a8] sm:$0xff]
        %v809 = vld [vmem:[#allocation9 + $0x3b0] sm:$0xff]
        %v810 = vld [vmem:[#allocation9 + $0x3b8] sm:$0xff]
        %v811 = vld [vmem:[#allocation9 + $0x3c0] sm:$0xff]
        %v812 = vld [vmem:[#allocation9 + $0x3c8] sm:$0xff]
        %v813 = vld [vmem:[#allocation9 + $0x3d0] sm:$0xff]
        %v814 = vld [vmem:[#allocation9 + $0x3d8] sm:$0xff]
        %v815 = vld [vmem:[#allocation9 + $0x3e0] sm:$0xff]
        %v816 = vld [vmem:[#allocation9 + $0x3e8] sm:$0xff]
        %v817 = vld [vmem:[#allocation9 + $0x3f0] sm:$0xff]
        %v818 = vld [vmem:[#allocation9 + $0x3f8] sm:$0xff]
        %v819 = vld [vmem:[#allocation11] sm:$0xff]
        %v820 = vld [vmem:[#allocation11 + $0x8] sm:$0xff]
        %v821 = vld [vmem:[#allocation11 + $0x10] sm:$0xff]
        %v822 = vld [vmem:[#allocation11 + $0x18] sm:$0xff]
        %v823 = vld [vmem:[#allocation11 + $0x20] sm:$0xff]
        %v824 = vld [vmem:[#allocation11 + $0x28] sm:$0xff]
        %v825 = vld [vmem:[#allocation11 + $0x30] sm:$0xff]
        %v826 = vld [vmem:[#allocation11 + $0x38] sm:$0xff]
        %v827 = vld [vmem:[#allocation11 + $0x40] sm:$0xff]
        %v828 = vld [vmem:[#allocation11 + $0x48] sm:$0xff]
        %v829 = vld [vmem:[#allocation11 + $0x50] sm:$0xff]
        %v830 = vld [vmem:[#allocation11 + $0x58] sm:$0xff]
        %v831 = vld [vmem:[#allocation11 + $0x60] sm:$0xff]
        %v832 = vld [vmem:[#allocation11 + $0x68] sm:$0xff]
        %v833 = vld [vmem:[#allocation11 + $0x70] sm:$0xff]
        %v834 = vld [vmem:[#allocation11 + $0x78] sm:$0xff]
        %v835 = vld [vmem:[#allocation11 + $0x80] sm:$0xff]
        %v836 = vld [vmem:[#allocation11 + $0x88] sm:$0xff]
        %v837 = vld [vmem:[#allocation11 + $0x90] sm:$0xff]
        %v838 = vld [vmem:[#allocation11 + $0x98] sm:$0xff]
        %v839 = vld [vmem:[#allocation11 + $0xa0] sm:$0xff]
        %v840 = vld [vmem:[#allocation11 + $0xa8] sm:$0xff]
        %v841 = vld [vmem:[#allocation11 + $0xb0] sm:$0xff]
        %v842 = vld [vmem:[#allocation11 + $0xb8] sm:$0xff]
        %v843 = vld [vmem:[#allocation11 + $0xc0] sm:$0xff]
        %v844 = vld [vmem:[#allocation11 + $0xc8] sm:$0xff]
        %v845 = vld [vmem:[#allocation11 + $0xd0] sm:$0xff]
        %v846 = vld [vmem:[#allocation11 + $0xd8] sm:$0xff]
        %v847 = vld [vmem:[#allocation11 + $0xe0] sm:$0xff]
        %v848 = vld [vmem:[#allocation11 + $0xe8] sm:$0xff]
        %v849 = vld [vmem:[#allocation11 + $0xf0] sm:$0xff]
        %v850 = vld [vmem:[#allocation11 + $0xf8] sm:$0xff]
        %v851 = vld [vmem:[#allocation11 + $0x100] sm:$0xff]
        %v852 = vld [vmem:[#allocation11 + $0x108] sm:$0xff]
        %v853 = vld [vmem:[#allocation11 + $0x110] sm:$0xff]
        %v854 = vld [vmem:[#allocation11 + $0x118] sm:$0xff]
        %v855 = vld [vmem:[#allocation11 + $0x120] sm:$0xff]
        %v856 = vld [vmem:[#allocation11 + $0x128] sm:$0xff]
        %v857 = vld [vmem:[#allocation11 + $0x130] sm:$0xff]
        %v858 = vld [vmem:[#allocation11 + $0x138] sm:$0xff]
        %v859 = vld [vmem:[#allocation11 + $0x140] sm:$0xff]
        %v860 = vld [vmem:[#allocation11 + $0x148] sm:$0xff]
        %v861 = vld [vmem:[#allocation11 + $0x150] sm:$0xff]
        %v862 = vld [vmem:[#allocation11 + $0x158] sm:$0xff]
        %v863 = vld [vmem:[#allocation11 + $0x160] sm:$0xff]
        %v864 = vld [vmem:[#allocation11 + $0x168] sm:$0xff]
        %v865 = vld [vmem:[#allocation11 + $0x170] sm:$0xff]
        %v866 = vld [vmem:[#allocation11 + $0x178] sm:$0xff]
        %v867 = vld [vmem:[#allocation11 + $0x180] sm:$0xff]
        %v868 = vld [vmem:[#allocation11 + $0x188] sm:$0xff]
        %v869 = vld [vmem:[#allocation11 + $0x190] sm:$0xff]
        %v870 = vld [vmem:[#allocation11 + $0x198] sm:$0xff]
        %v871 = vld [vmem:[#allocation11 + $0x1a0] sm:$0xff]
        %v872 = vld [vmem:[#allocation11 + $0x1a8] sm:$0xff]
        %v873 = vld [vmem:[#allocation11 + $0x1b0] sm:$0xff]
        %v874 = vld [vmem:[#allocation11 + $0x1b8] sm:$0xff]
        %v875 = vld [vmem:[#allocation11 + $0x1c0] sm:$0xff]
        %v876 = vld [vmem:[#allocation11 + $0x1c8] sm:$0xff]
        %v877 = vld [vmem:[#allocation11 + $0x1d0] sm:$0xff]
        %v878 = vld [vmem:[#allocation11 + $0x1d8] sm:$0xff]
        %v879 = vld [vmem:[#allocation11 + $0x1e0] sm:$0xff]
        %v880 = vld [vmem:[#allocation11 + $0x1e8] sm:$0xff]
        %v881 = vld [vmem:[#allocation11 + $0x1f0] sm:$0xff]
        %v882 = vld [vmem:[#allocation11 + $0x1f8] sm:$0xff]
        %v883 = vld [vmem:[#allocation11 + $0x200] sm:$0xff]
        %v884 = vld [vmem:[#allocation11 + $0x208] sm:$0xff]
        %v885 = vld [vmem:[#allocation11 + $0x210] sm:$0xff]
        %v886 = vld [vmem:[#allocation11 + $0x218] sm:$0xff]
        %v887 = vld [vmem:[#allocation11 + $0x220] sm:$0xff]
        %v888 = vld [vmem:[#allocation11 + $0x228] sm:$0xff]
        %v889 = vld [vmem:[#allocation11 + $0x230] sm:$0xff]
        %v890 = vld [vmem:[#allocation11 + $0x238] sm:$0xff]
        %v891 = vld [vmem:[#allocation11 + $0x240] sm:$0xff]
        %v892 = vld [vmem:[#allocation11 + $0x248] sm:$0xff]
        %v893 = vld [vmem:[#allocation11 + $0x250] sm:$0xff]
        %v894 = vld [vmem:[#allocation11 + $0x258] sm:$0xff]
        %v895 = vld [vmem:[#allocation11 + $0x260] sm:$0xff]
        %v896 = vld [vmem:[#allocation11 + $0x268] sm:$0xff]
        %v897 = vld [vmem:[#allocation11 + $0x270] sm:$0xff]
        %v898 = vld [vmem:[#allocation11 + $0x278] sm:$0xff]
        %v899 = vld [vmem:[#allocation11 + $0x280] sm:$0xff]
        %v900 = vld [vmem:[#allocation11 + $0x288] sm:$0xff]
        %v901 = vld [vmem:[#allocation11 + $0x290] sm:$0xff]
        %v902 = vld [vmem:[#allocation11 + $0x298] sm:$0xff]
        %v903 = vld [vmem:[#allocation11 + $0x2a0] sm:$0xff]
        %v904 = vld [vmem:[#allocation11 + $0x2a8] sm:$0xff]
        %v905 = vld [vmem:[#allocation11 + $0x2b0] sm:$0xff]
        %v906 = vld [vmem:[#allocation11 + $0x2b8] sm:$0xff]
        %v907 = vld [vmem:[#allocation11 + $0x2c0] sm:$0xff]
        %v908 = vld [vmem:[#allocation11 + $0x2c8] sm:$0xff]
        %v909 = vld [vmem:[#allocation11 + $0x2d0] sm:$0xff]
        %v910 = vld [vmem:[#allocation11 + $0x2d8] sm:$0xff]
        %v911 = vld [vmem:[#allocation11 + $0x2e0] sm:$0xff]
        %v912 = vld [vmem:[#allocation11 + $0x2e8] sm:$0xff]
        %v913 = vld [vmem:[#allocation11 + $0x2f0] sm:$0xff]
        %v914 = vld [vmem:[#allocation11 + $0x2f8] sm:$0xff]
        %v915 = vld [vmem:[#allocation11 + $0x300] sm:$0xff]
        %v916 = vld [vmem:[#allocation11 + $0x308] sm:$0xff]
        %v917 = vld [vmem:[#allocation11 + $0x310] sm:$0xff]
        %v918 = vld [vmem:[#allocation11 + $0x318] sm:$0xff]
        %v919 = vld [vmem:[#allocation11 + $0x320] sm:$0xff]
        %v920 = vld [vmem:[#allocation11 + $0x328] sm:$0xff]
        %v921 = vld [vmem:[#allocation11 + $0x330] sm:$0xff]
        %v922 = vld [vmem:[#allocation11 + $0x338] sm:$0xff]
        %v923 = vld [vmem:[#allocation11 + $0x340] sm:$0xff]
        %v924 = vld [vmem:[#allocation11 + $0x348] sm:$0xff]
        %v925 = vld [vmem:[#allocation11 + $0x350] sm:$0xff]
        %v926 = vld [vmem:[#allocation11 + $0x358] sm:$0xff]
        %v927 = vld [vmem:[#allocation11 + $0x360] sm:$0xff]
        %v928 = vld [vmem:[#allocation11 + $0x368] sm:$0xff]
        %v929 = vld [vmem:[#allocation11 + $0x370] sm:$0xff]
        %v930 = vld [vmem:[#allocation11 + $0x378] sm:$0xff]
        %v931 = vld [vmem:[#allocation11 + $0x380] sm:$0xff]
        %v932 = vld [vmem:[#allocation11 + $0x388] sm:$0xff]
        %v933 = vld [vmem:[#allocation11 + $0x390] sm:$0xff]
        %v934 = vld [vmem:[#allocation11 + $0x398] sm:$0xff]
        %v935 = vld [vmem:[#allocation11 + $0x3a0] sm:$0xff]
        %v936 = vld [vmem:[#allocation11 + $0x3a8] sm:$0xff]
        %v937 = vld [vmem:[#allocation11 + $0x3b0] sm:$0xff]
        %v938 = vld [vmem:[#allocation11 + $0x3b8] sm:$0xff]
        %v939 = vld [vmem:[#allocation11 + $0x3c0] sm:$0xff]
        %v940 = vld [vmem:[#allocation11 + $0x3c8] sm:$0xff]
        %v941 = vld [vmem:[#allocation11 + $0x3d0] sm:$0xff]
        %v942 = vld [vmem:[#allocation11 + $0x3d8] sm:$0xff]
        %v943 = vld [vmem:[#allocation11 + $0x3e0] sm:$0xff]
        %v944 = vld [vmem:[#allocation11 + $0x3e8] sm:$0xff]
        %v945 = vld [vmem:[#allocation11 + $0x3f0] sm:$0xff]
        %v946 = vld [vmem:[#allocation11 + $0x3f8] sm:$0xff]
        %v947 = vld [vmem:[#allocation12] sm:$0xff]
        %v948 = vld [vmem:[#allocation12 + $0x8] sm:$0xff]
        %v949 = vld [vmem:[#allocation12 + $0x10] sm:$0xff]
        %v950 = vld [vmem:[#allocation12 + $0x18] sm:$0xff]
        %v951 = vld [vmem:[#allocation12 + $0x20] sm:$0xff]
        %v952 = vld [vmem:[#allocation12 + $0x28] sm:$0xff]
        %v953 = vld [vmem:[#allocation12 + $0x30] sm:$0xff]
        %v954 = vld [vmem:[#allocation12 + $0x38] sm:$0xff]
        %v955 = vld [vmem:[%s6] sm:$0xff]
        %v956 = vld [vmem:[%s6 + $0x8] sm:$0xff]
        %v957 = vld [vmem:[%s6 + $0x10] sm:$0xff]
        %v958 = vld [vmem:[%s6 + $0x18] sm:$0xff]
        %v959 = vld [vmem:[%s6 + $0x20] sm:$0xff]
        %v960 = vld [vmem:[%s6 + $0x28] sm:$0xff]
        %v961 = vld [vmem:[%s6 + $0x30] sm:$0xff]
        %v962 = vld [vmem:[%s6 + $0x38] sm:$0xff]
        %vm963 = vcmask 523264
        %v965 = vsel %vm963, %v683, 0
        %v968 = vsel %vm963, %v684, 0
        %v971 = vsel %vm963, %v685, 0
        %v974 = vsel %vm963, %v686, 0
        %v977 = vsel %vm963, %v660, 0
        %v980 = vsel %vm963, %v663, 0
        %v983 = vsel %vm963, %v666, 0
        %v986 = vsel %vm963, %v669, 0
        %v989 = vsel %vm963, %v672, 0
        %v992 = vsel %vm963, %v675, 0
        %v995 = vsel %vm963, %v678, 0
        %v998 = vsel %vm963, %v681, 0
        %1000 = vmatpush.xpose.msra.mxu0 0.0
        %1001 = vmatpush.xpose.msra.mxu0 0.0
        %1002 = vmatpush.xpose.msra.mxu0 0.0
        %1003 = vmatpush.xpose.msra.mxu0 0.0
        %1004 = vmatpush.xpose.msra.mxu0 0.0
        %1005 = vmatpush.xpose.msra.mxu0 0.0
        %1006 = vmatpush.xpose.msra.mxu0 0.0
        %1007 = vmatpush.xpose.msra.mxu0 0.0
        %1008 = vmatpush.xpose.msra.mxu0 %v998
        %1009 = vmatpush.xpose.msra.mxu0 %v995
        %1010 = vmatpush.xpose.msra.mxu0 %v992
        %1011 = vmatpush.xpose.msra.mxu0 %v989
        %1012 = vmatpush.xpose.msra.mxu0 %v986
        %1013 = vmatpush.xpose.msra.mxu0 %v983
        %1014 = vmatpush.xpose.msra.mxu0 %v980
        %1015 = vmatpush.xpose.msra.mxu0 %v977
        %1016 = vmatmul.f32.gmra.mxu0 %v965
        %v1017 = vpop.f32.mrf.mxu0
        %v1018 = vadd.f32 0.0, %v1017
        %1019 = vmatmul.f32.gmra.mxu0 %v968
        %v1020 = vpop.f32.mrf.mxu0
        %v1021 = vadd.f32 0.0, %v1020
        %1022 = vmatmul.f32.gmra.mxu0 %v971
        %v1023 = vpop.f32.mrf.mxu0
        %v1024 = vadd.f32 0.0, %v1023
        %1025 = vmatmul.f32.gmra.mxu0 %v974
        %v1026 = vpop.f32.mrf.mxu0
        %v1027 = vadd.f32 0.0, %v1026
        %1028 = vdwg.mxu0
        %v1031 = vrot.slane %v1018, 1
        %v1032 = vrot.slane %v1018, 2
        %v1033 = vrot.slane %v1018, 3
        %v1034 = vrot.slane %v1018, 4
        %v1035 = vrot.slane %v1018, 5
        %v1036 = vrot.slane %v1018, 6
        %v1037 = vrot.slane %v1018, 7
        %v1038 = vrot.slane %v1021, 1
        %v1039 = vrot.slane %v1021, 2
        %v1040 = vrot.slane %v1021, 3
        %v1041 = vrot.slane %v1021, 4
        %v1042 = vrot.slane %v1021, 5
        %v1043 = vrot.slane %v1021, 6
        %v1044 = vrot.slane %v1021, 7
        %v1047 = vrot.slane %v1024, 1
        %v1048 = vrot.slane %v1024, 2
        %v1049 = vrot.slane %v1024, 3
        %v1050 = vrot.slane %v1024, 4
        %v1051 = vrot.slane %v1024, 5
        %v1052 = vrot.slane %v1024, 6
        %v1053 = vrot.slane %v1024, 7
        %v1054 = vrot.slane %v1027, 1
        %v1055 = vrot.slane %v1027, 2
        %v1056 = vrot.slane %v1027, 3
        %v1057 = vrot.slane %v1027, 4
        %v1058 = vrot.slane %v1027, 5
        %v1059 = vrot.slane %v1027, 6
        %v1060 = vrot.slane %v1027, 7
        %v1061 = vsel %vm963, %v1018, 0
        %1063 = vmatpush.msra.mxu0 0.0
        %1064 = vmatpush.msra.mxu0 0.0
        %1065 = vmatpush.msra.mxu0 0.0
        %1066 = vmatpush.msra.mxu0 0.0
        %1067 = vmatpush.msra.mxu0 0.0
        %1068 = vmatpush.msra.mxu0 0.0
        %1069 = vmatpush.msra.mxu0 0.0
        %1070 = vmatpush.msra.mxu0 0.0
        %1071 = vmatpush.msra.mxu0 %v698
        %1072 = vmatpush.msra.mxu0 %v697
        %1073 = vmatpush.msra.mxu0 %v696
        %1074 = vmatpush.msra.mxu0 %v695
        %1075 = vmatpush.msra.mxu0 %v694
        %1076 = vmatpush.msra.mxu0 %v693
        %1077 = vmatpush.msra.mxu0 %v692
        %1078 = vmatpush.msra.mxu0 %v691
        %1079 = vmatmul.f32.gmra.mxu0 %v1061
        %v1080 = vpop.f32.mrf.mxu0
        %v1081 = vadd.f32 0.0, %v1080
        %1082 = vdwg.mxu0
        %v1083 = vsel %vm963, %v1031, 0
        %1085 = vmatpush.msra.mxu0 0.0
        %1086 = vmatpush.msra.mxu0 0.0
        %1087 = vmatpush.msra.mxu0 0.0
        %1088 = vmatpush.msra.mxu0 0.0
        %1089 = vmatpush.msra.mxu0 0.0
        %1090 = vmatpush.msra.mxu0 0.0
        %1091 = vmatpush.msra.mxu0 0.0
        %1092 = vmatpush.msra.mxu0 0.0
        %1093 = vmatpush.msra.mxu0 %v706
        %1094 = vmatpush.msra.mxu0 %v705
        %1095 = vmatpush.msra.mxu0 %v704
        %1096 = vmatpush.msra.mxu0 %v703
        %1097 = vmatpush.msra.mxu0 %v702
        %1098 = vmatpush.msra.mxu0 %v701
        %1099 = vmatpush.msra.mxu0 %v700
        %1100 = vmatpush.msra.mxu0 %v699
        %1101 = vmatmul.f32.gmra.mxu0 %v1083
        %v1102 = vpop.f32.mrf.mxu0
        %v1103 = vadd.f32 0.0, %v1102
        %1104 = vdwg.mxu0
        %v1105 = vsel %vm963, %v1032, 0
        %1107 = vmatpush.msra.mxu0 0.0
        %1108 = vmatpush.msra.mxu0 0.0
        %1109 = vmatpush.msra.mxu0 0.0
        %1110 = vmatpush.msra.mxu0 0.0
        %1111 = vmatpush.msra.mxu0 0.0
        %1112 = vmatpush.msra.mxu0 0.0
        %1113 = vmatpush.msra.mxu0 0.0
        %1114 = vmatpush.msra.mxu0 0.0
        %1115 = vmatpush.msra.mxu0 %v714
        %1116 = vmatpush.msra.mxu0 %v713
        %1117 = vmatpush.msra.mxu0 %v712
        %1118 = vmatpush.msra.mxu0 %v711
        %1119 = vmatpush.msra.mxu0 %v710
        %1120 = vmatpush.msra.mxu0 %v709
        %1121 = vmatpush.msra.mxu0 %v708
        %1122 = vmatpush.msra.mxu0 %v707
        %1123 = vmatmul.f32.gmra.mxu0 %v1105
        %v1124 = vpop.f32.mrf.mxu0
        %v1125 = vadd.f32 0.0, %v1124
        %1126 = vdwg.mxu0
        %v1127 = vsel %vm963, %v1033, 0
        %1129 = vmatpush.msra.mxu0 0.0
        %1130 = vmatpush.msra.mxu0 0.0
        %1131 = vmatpush.msra.mxu0 0.0
        %1132 = vmatpush.msra.mxu0 0.0
        %1133 = vmatpush.msra.mxu0 0.0
        %1134 = vmatpush.msra.mxu0 0.0
        %1135 = vmatpush.msra.mxu0 0.0
        %1136 = vmatpush.msra.mxu0 0.0
        %1137 = vmatpush.msra.mxu0 %v722
        %1138 = vmatpush.msra.mxu0 %v721
        %1139 = vmatpush.msra.mxu0 %v720
        %1140 = vmatpush.msra.mxu0 %v719
        %1141 = vmatpush.msra.mxu0 %v718
        %1142 = vmatpush.msra.mxu0 %v717
        %1143 = vmatpush.msra.mxu0 %v716
        %1144 = vmatpush.msra.mxu0 %v715
        %1145 = vmatmul.f32.gmra.mxu0 %v1127
        %v1146 = vpop.f32.mrf.mxu0
        %v1147 = vadd.f32 0.0, %v1146
        %1148 = vdwg.mxu0
        %v1149 = vsel %vm963, %v1034, 0
        %1151 = vmatpush.msra.mxu0 0.0
        %1152 = vmatpush.msra.mxu0 0.0
        %1153 = vmatpush.msra.mxu0 0.0
        %1154 = vmatpush.msra.mxu0 0.0
        %1155 = vmatpush.msra.mxu0 0.0
        %1156 = vmatpush.msra.mxu0 0.0
        %1157 = vmatpush.msra.mxu0 0.0
        %1158 = vmatpush.msra.mxu0 0.0
        %1159 = vmatpush.msra.mxu0 %v730
        %1160 = vmatpush.msra.mxu0 %v729
        %1161 = vmatpush.msra.mxu0 %v728
        %1162 = vmatpush.msra.mxu0 %v727
        %1163 = vmatpush.msra.mxu0 %v726
        %1164 = vmatpush.msra.mxu0 %v725
        %1165 = vmatpush.msra.mxu0 %v724
        %1166 = vmatpush.msra.mxu0 %v723
        %1167 = vmatmul.f32.gmra.mxu0 %v1149
        %v1168 = vpop.f32.mrf.mxu0
        %v1169 = vadd.f32 0.0, %v1168
        %1170 = vdwg.mxu0
        %v1171 = vsel %vm963, %v1035, 0
        %1173 = vmatpush.msra.mxu0 0.0
        %1174 = vmatpush.msra.mxu0 0.0
        %1175 = vmatpush.msra.mxu0 0.0
        %1176 = vmatpush.msra.mxu0 0.0
        %1177 = vmatpush.msra.mxu0 0.0
        %1178 = vmatpush.msra.mxu0 0.0
        %1179 = vmatpush.msra.mxu0 0.0
        %1180 = vmatpush.msra.mxu0 0.0
        %1181 = vmatpush.msra.mxu0 %v738
        %1182 = vmatpush.msra.mxu0 %v737
        %1183 = vmatpush.msra.mxu0 %v736
        %1184 = vmatpush.msra.mxu0 %v735
        %1185 = vmatpush.msra.mxu0 %v734
        %1186 = vmatpush.msra.mxu0 %v733
        %1187 = vmatpush.msra.mxu0 %v732
        %1188 = vmatpush.msra.mxu0 %v731
        %1189 = vmatmul.f32.gmra.mxu0 %v1171
        %v1190 = vpop.f32.mrf.mxu0
        %v1191 = vadd.f32 0.0, %v1190
        %1192 = vdwg.mxu0
        %v1193 = vsel %vm963, %v1036, 0
        %1195 = vmatpush.msra.mxu0 0.0
        %1196 = vmatpush.msra.mxu0 0.0
        %1197 = vmatpush.msra.mxu0 0.0
        %1198 = vmatpush.msra.mxu0 0.0
        %1199 = vmatpush.msra.mxu0 0.0
        %1200 = vmatpush.msra.mxu0 0.0
        %1201 = vmatpush.msra.mxu0 0.0
        %1202 = vmatpush.msra.mxu0 0.0
        %1203 = vmatpush.msra.mxu0 %v746
        %1204 = vmatpush.msra.mxu0 %v745
        %1205 = vmatpush.msra.mxu0 %v744
        %1206 = vmatpush.msra.mxu0 %v743
        %1207 = vmatpush.msra.mxu0 %v742
        %1208 = vmatpush.msra.mxu0 %v741
        %1209 = vmatpush.msra.mxu0 %v740
        %1210 = vmatpush.msra.mxu0 %v739
        %1211 = vmatmul.f32.gmra.mxu0 %v1193
        %v1212 = vpop.f32.mrf.mxu0
        %v1213 = vadd.f32 0.0, %v1212
        %1214 = vdwg.mxu0
        %v1215 = vsel %vm963, %v1037, 0
        %1217 = vmatpush.msra.mxu0 0.0
        %1218 = vmatpush.msra.mxu0 0.0
        %1219 = vmatpush.msra.mxu0 0.0
        %1220 = vmatpush.msra.mxu0 0.0
        %1221 = vmatpush.msra.mxu0 0.0
        %1222 = vmatpush.msra.mxu0 0.0
        %1223 = vmatpush.msra.mxu0 0.0
        %1224 = vmatpush.msra.mxu0 0.0
        %1225 = vmatpush.msra.mxu0 %v754
        %1226 = vmatpush.msra.mxu0 %v753
        %1227 = vmatpush.msra.mxu0 %v752
        %1228 = vmatpush.msra.mxu0 %v751
        %1229 = vmatpush.msra.mxu0 %v750
        %1230 = vmatpush.msra.mxu0 %v749
        %1231 = vmatpush.msra.mxu0 %v748
        %1232 = vmatpush.msra.mxu0 %v747
        %1233 = vmatmul.f32.gmra.mxu0 %v1215
        %v1234 = vpop.f32.mrf.mxu0
        %v1235 = vadd.f32 0.0, %v1234
        %1236 = vdwg.mxu0
        %v1237 = vsel %vm963, %v1021, 0
        %1239 = vmatpush.msra.mxu0 0.0
        %1240 = vmatpush.msra.mxu0 0.0
        %1241 = vmatpush.msra.mxu0 0.0
        %1242 = vmatpush.msra.mxu0 0.0
        %1243 = vmatpush.msra.mxu0 0.0
        %1244 = vmatpush.msra.mxu0 0.0
        %1245 = vmatpush.msra.mxu0 0.0
        %1246 = vmatpush.msra.mxu0 0.0
        %1247 = vmatpush.msra.mxu0 %v762
        %1248 = vmatpush.msra.mxu0 %v761
        %1249 = vmatpush.msra.mxu0 %v760
        %1250 = vmatpush.msra.mxu0 %v759
        %1251 = vmatpush.msra.mxu0 %v758
        %1252 = vmatpush.msra.mxu0 %v757
        %1253 = vmatpush.msra.mxu0 %v756
        %1254 = vmatpush.msra.mxu0 %v755
        %1255 = vmatmul.f32.gmra.mxu0 %v1237
        %v1256 = vpop.f32.mrf.mxu0
        %v1257 = vadd.f32 0.0, %v1256
        %1258 = vdwg.mxu0
        %v1259 = vsel %vm963, %v1038, 0
        %1261 = vmatpush.msra.mxu0 0.0
        %1262 = vmatpush.msra.mxu0 0.0
        %1263 = vmatpush.msra.mxu0 0.0
        %1264 = vmatpush.msra.mxu0 0.0
        %1265 = vmatpush.msra.mxu0 0.0
        %1266 = vmatpush.msra.mxu0 0.0
        %1267 = vmatpush.msra.mxu0 0.0
        %1268 = vmatpush.msra.mxu0 0.0
        %1269 = vmatpush.msra.mxu0 %v770
        %1270 = vmatpush.msra.mxu0 %v769
        %1271 = vmatpush.msra.mxu0 %v768
        %1272 = vmatpush.msra.mxu0 %v767
        %1273 = vmatpush.msra.mxu0 %v766
        %1274 = vmatpush.msra.mxu0 %v765
        %1275 = vmatpush.msra.mxu0 %v764
        %1276 = vmatpush.msra.mxu0 %v763
        %1277 = vmatmul.f32.gmra.mxu0 %v1259
        %v1278 = vpop.f32.mrf.mxu0
        %v1279 = vadd.f32 0.0, %v1278
        %1280 = vdwg.mxu0
        %v1281 = vsel %vm963, %v1039, 0
        %1283 = vmatpush.msra.mxu0 0.0
        %1284 = vmatpush.msra.mxu0 0.0
        %1285 = vmatpush.msra.mxu0 0.0
        %1286 = vmatpush.msra.mxu0 0.0
        %1287 = vmatpush.msra.mxu0 0.0
        %1288 = vmatpush.msra.mxu0 0.0
        %1289 = vmatpush.msra.mxu0 0.0
        %1290 = vmatpush.msra.mxu0 0.0
        %1291 = vmatpush.msra.mxu0 %v778
        %1292 = vmatpush.msra.mxu0 %v777
        %1293 = vmatpush.msra.mxu0 %v776
        %1294 = vmatpush.msra.mxu0 %v775
        %1295 = vmatpush.msra.mxu0 %v774
        %1296 = vmatpush.msra.mxu0 %v773
        %1297 = vmatpush.msra.mxu0 %v772
        %1298 = vmatpush.msra.mxu0 %v771
        %1299 = vmatmul.f32.gmra.mxu0 %v1281
        %v1300 = vpop.f32.mrf.mxu0
        %v1301 = vadd.f32 0.0, %v1300
        %1302 = vdwg.mxu0
        %v1303 = vsel %vm963, %v1040, 0
        %1305 = vmatpush.msra.mxu0 0.0
        %1306 = vmatpush.msra.mxu0 0.0
        %1307 = vmatpush.msra.mxu0 0.0
        %1308 = vmatpush.msra.mxu0 0.0
        %1309 = vmatpush.msra.mxu0 0.0
        %1310 = vmatpush.msra.mxu0 0.0
        %1311 = vmatpush.msra.mxu0 0.0
        %1312 = vmatpush.msra.mxu0 0.0
        %1313 = vmatpush.msra.mxu0 %v786
        %1314 = vmatpush.msra.mxu0 %v785
        %1315 = vmatpush.msra.mxu0 %v784
        %1316 = vmatpush.msra.mxu0 %v783
        %1317 = vmatpush.msra.mxu0 %v782
        %1318 = vmatpush.msra.mxu0 %v781
        %1319 = vmatpush.msra.mxu0 %v780
        %1320 = vmatpush.msra.mxu0 %v779
        %1321 = vmatmul.f32.gmra.mxu0 %v1303
        %v1322 = vpop.f32.mrf.mxu0
        %v1323 = vadd.f32 0.0, %v1322
        %1324 = vdwg.mxu0
        %v1325 = vsel %vm963, %v1041, 0
        %1327 = vmatpush.msra.mxu0 0.0
        %1328 = vmatpush.msra.mxu0 0.0
        %1329 = vmatpush.msra.mxu0 0.0
        %1330 = vmatpush.msra.mxu0 0.0
        %1331 = vmatpush.msra.mxu0 0.0
        %1332 = vmatpush.msra.mxu0 0.0
        %1333 = vmatpush.msra.mxu0 0.0
        %1334 = vmatpush.msra.mxu0 0.0
        %1335 = vmatpush.msra.mxu0 %v794
        %1336 = vmatpush.msra.mxu0 %v793
        %1337 = vmatpush.msra.mxu0 %v792
        %1338 = vmatpush.msra.mxu0 %v791
        %1339 = vmatpush.msra.mxu0 %v790
        %1340 = vmatpush.msra.mxu0 %v789
        %1341 = vmatpush.msra.mxu0 %v788
        %1342 = vmatpush.msra.mxu0 %v787
        %1343 = vmatmul.f32.gmra.mxu0 %v1325
        %v1344 = vpop.f32.mrf.mxu0
        %v1345 = vadd.f32 0.0, %v1344
        %1346 = vdwg.mxu0
        %v1347 = vsel %vm963, %v1042, 0
        %1349 = vmatpush.msra.mxu0 0.0
        %1350 = vmatpush.msra.mxu0 0.0
        %1351 = vmatpush.msra.mxu0 0.0
        %1352 = vmatpush.msra.mxu0 0.0
        %1353 = vmatpush.msra.mxu0 0.0
        %1354 = vmatpush.msra.mxu0 0.0
        %1355 = vmatpush.msra.mxu0 0.0
        %1356 = vmatpush.msra.mxu0 0.0
        %1357 = vmatpush.msra.mxu0 %v802
        %1358 = vmatpush.msra.mxu0 %v801
        %1359 = vmatpush.msra.mxu0 %v800
        %1360 = vmatpush.msra.mxu0 %v799
        %1361 = vmatpush.msra.mxu0 %v798
        %1362 = vmatpush.msra.mxu0 %v797
        %1363 = vmatpush.msra.mxu0 %v796
        %1364 = vmatpush.msra.mxu0 %v795
        %1365 = vmatmul.f32.gmra.mxu0 %v1347
        %v1366 = vpop.f32.mrf.mxu0
        %v1367 = vadd.f32 0.0, %v1366
        %1368 = vdwg.mxu0
        %v1369 = vsel %vm963, %v1043, 0
        %1371 = vmatpush.msra.mxu0 0.0
        %1372 = vmatpush.msra.mxu0 0.0
        %1373 = vmatpush.msra.mxu0 0.0
        %1374 = vmatpush.msra.mxu0 0.0
        %1375 = vmatpush.msra.mxu0 0.0
        %1376 = vmatpush.msra.mxu0 0.0
        %1377 = vmatpush.msra.mxu0 0.0
        %1378 = vmatpush.msra.mxu0 0.0
        %1379 = vmatpush.msra.mxu0 %v810
        %1380 = vmatpush.msra.mxu0 %v809
        %1381 = vmatpush.msra.mxu0 %v808
        %1382 = vmatpush.msra.mxu0 %v807
        %1383 = vmatpush.msra.mxu0 %v806
        %1384 = vmatpush.msra.mxu0 %v805
        %1385 = vmatpush.msra.mxu0 %v804
        %1386 = vmatpush.msra.mxu0 %v803
        %1387 = vmatmul.f32.gmra.mxu0 %v1369
        %v1388 = vpop.f32.mrf.mxu0
        %v1389 = vadd.f32 0.0, %v1388
        %1390 = vdwg.mxu0
        %v1391 = vsel %vm963, %v1044, 0
        %1393 = vmatpush.msra.mxu0 0.0
        %1394 = vmatpush.msra.mxu0 0.0
        %1395 = vmatpush.msra.mxu0 0.0
        %1396 = vmatpush.msra.mxu0 0.0
        %1397 = vmatpush.msra.mxu0 0.0
        %1398 = vmatpush.msra.mxu0 0.0
        %1399 = vmatpush.msra.mxu0 0.0
        %1400 = vmatpush.msra.mxu0 0.0
        %1401 = vmatpush.msra.mxu0 %v818
        %1402 = vmatpush.msra.mxu0 %v817
        %1403 = vmatpush.msra.mxu0 %v816
        %1404 = vmatpush.msra.mxu0 %v815
        %1405 = vmatpush.msra.mxu0 %v814
        %1406 = vmatpush.msra.mxu0 %v813
        %1407 = vmatpush.msra.mxu0 %v812
        %1408 = vmatpush.msra.mxu0 %v811
        %1409 = vmatmul.f32.gmra.mxu0 %v1391
        %v1410 = vpop.f32.mrf.mxu0
        %v1411 = vadd.f32 0.0, %v1410
        %1412 = vdwg.mxu0
        %v1413 = vsel %vm963, %v1024, 0
        %1415 = vmatpush.msra.mxu0 0.0
        %1416 = vmatpush.msra.mxu0 0.0
        %1417 = vmatpush.msra.mxu0 0.0
        %1418 = vmatpush.msra.mxu0 0.0
        %1419 = vmatpush.msra.mxu0 0.0
        %1420 = vmatpush.msra.mxu0 0.0
        %1421 = vmatpush.msra.mxu0 0.0
        %1422 = vmatpush.msra.mxu0 0.0
        %1423 = vmatpush.msra.mxu0 %v826
        %1424 = vmatpush.msra.mxu0 %v825
        %1425 = vmatpush.msra.mxu0 %v824
        %1426 = vmatpush.msra.mxu0 %v823
        %1427 = vmatpush.msra.mxu0 %v822
        %1428 = vmatpush.msra.mxu0 %v821
        %1429 = vmatpush.msra.mxu0 %v820
        %1430 = vmatpush.msra.mxu0 %v819
        %1431 = vmatmul.f32.gmra.mxu0 %v1413
        %v1432 = vpop.f32.mrf.mxu0
        %v1433 = vadd.f32 0.0, %v1432
        %1434 = vdwg.mxu0
        %v1435 = vsel %vm963, %v1047, 0
        %1437 = vmatpush.msra.mxu0 0.0
        %1438 = vmatpush.msra.mxu0 0.0
        %1439 = vmatpush.msra.mxu0 0.0
        %1440 = vmatpush.msra.mxu0 0.0
        %1441 = vmatpush.msra.mxu0 0.0
        %1442 = vmatpush.msra.mxu0 0.0
        %1443 = vmatpush.msra.mxu0 0.0
        %1444 = vmatpush.msra.mxu0 0.0
        %1445 = vmatpush.msra.mxu0 %v834
        %1446 = vmatpush.msra.mxu0 %v833
        %1447 = vmatpush.msra.mxu0 %v832
        %1448 = vmatpush.msra.mxu0 %v831
        %1449 = vmatpush.msra.mxu0 %v830
        %1450 = vmatpush.msra.mxu0 %v829
        %1451 = vmatpush.msra.mxu0 %v828
        %1452 = vmatpush.msra.mxu0 %v827
        %1453 = vmatmul.f32.gmra.mxu0 %v1435
        %v1454 = vpop.f32.mrf.mxu0
        %v1455 = vadd.f32 0.0, %v1454
        %1456 = vdwg.mxu0
        %v1457 = vsel %vm963, %v1048, 0
        %1459 = vmatpush.msra.mxu0 0.0
        %1460 = vmatpush.msra.mxu0 0.0
        %1461 = vmatpush.msra.mxu0 0.0
        %1462 = vmatpush.msra.mxu0 0.0
        %1463 = vmatpush.msra.mxu0 0.0
        %1464 = vmatpush.msra.mxu0 0.0
        %1465 = vmatpush.msra.mxu0 0.0
        %1466 = vmatpush.msra.mxu0 0.0
        %1467 = vmatpush.msra.mxu0 %v842
        %1468 = vmatpush.msra.mxu0 %v841
        %1469 = vmatpush.msra.mxu0 %v840
        %1470 = vmatpush.msra.mxu0 %v839
        %1471 = vmatpush.msra.mxu0 %v838
        %1472 = vmatpush.msra.mxu0 %v837
        %1473 = vmatpush.msra.mxu0 %v836
        %1474 = vmatpush.msra.mxu0 %v835
        %1475 = vmatmul.f32.gmra.mxu0 %v1457
        %v1476 = vpop.f32.mrf.mxu0
        %v1477 = vadd.f32 0.0, %v1476
        %1478 = vdwg.mxu0
        %v1479 = vsel %vm963, %v1049, 0
        %1481 = vmatpush.msra.mxu0 0.0
        %1482 = vmatpush.msra.mxu0 0.0
        %1483 = vmatpush.msra.mxu0 0.0
        %1484 = vmatpush.msra.mxu0 0.0
        %1485 = vmatpush.msra.mxu0 0.0
        %1486 = vmatpush.msra.mxu0 0.0
        %1487 = vmatpush.msra.mxu0 0.0
        %1488 = vmatpush.msra.mxu0 0.0
        %1489 = vmatpush.msra.mxu0 %v850
        %1490 = vmatpush.msra.mxu0 %v849
        %1491 = vmatpush.msra.mxu0 %v848
        %1492 = vmatpush.msra.mxu0 %v847
        %1493 = vmatpush.msra.mxu0 %v846
        %1494 = vmatpush.msra.mxu0 %v845
        %1495 = vmatpush.msra.mxu0 %v844
        %1496 = vmatpush.msra.mxu0 %v843
        %1497 = vmatmul.f32.gmra.mxu0 %v1479
        %v1498 = vpop.f32.mrf.mxu0
        %v1499 = vadd.f32 0.0, %v1498
        %1500 = vdwg.mxu0
        %v1501 = vsel %vm963, %v1050, 0
        %1503 = vmatpush.msra.mxu0 0.0
        %1504 = vmatpush.msra.mxu0 0.0
        %1505 = vmatpush.msra.mxu0 0.0
        %1506 = vmatpush.msra.mxu0 0.0
        %1507 = vmatpush.msra.mxu0 0.0
        %1508 = vmatpush.msra.mxu0 0.0
        %1509 = vmatpush.msra.mxu0 0.0
        %1510 = vmatpush.msra.mxu0 0.0
        %1511 = vmatpush.msra.mxu0 %v858
        %1512 = vmatpush.msra.mxu0 %v857
        %1513 = vmatpush.msra.mxu0 %v856
        %1514 = vmatpush.msra.mxu0 %v855
        %1515 = vmatpush.msra.mxu0 %v854
        %1516 = vmatpush.msra.mxu0 %v853
        %1517 = vmatpush.msra.mxu0 %v852
        %1518 = vmatpush.msra.mxu0 %v851
        %1519 = vmatmul.f32.gmra.mxu0 %v1501
        %v1520 = vpop.f32.mrf.mxu0
        %v1521 = vadd.f32 0.0, %v1520
        %1522 = vdwg.mxu0
        %v1523 = vsel %vm963, %v1051, 0
        %1525 = vmatpush.msra.mxu0 0.0
        %1526 = vmatpush.msra.mxu0 0.0
        %1527 = vmatpush.msra.mxu0 0.0
        %1528 = vmatpush.msra.mxu0 0.0
        %1529 = vmatpush.msra.mxu0 0.0
        %1530 = vmatpush.msra.mxu0 0.0
        %1531 = vmatpush.msra.mxu0 0.0
        %1532 = vmatpush.msra.mxu0 0.0
        %1533 = vmatpush.msra.mxu0 %v866
        %1534 = vmatpush.msra.mxu0 %v865
        %1535 = vmatpush.msra.mxu0 %v864
        %1536 = vmatpush.msra.mxu0 %v863
        %1537 = vmatpush.msra.mxu0 %v862
        %1538 = vmatpush.msra.mxu0 %v861
        %1539 = vmatpush.msra.mxu0 %v860
        %1540 = vmatpush.msra.mxu0 %v859
        %1541 = vmatmul.f32.gmra.mxu0 %v1523
        %v1542 = vpop.f32.mrf.mxu0
        %v1543 = vadd.f32 0.0, %v1542
        %1544 = vdwg.mxu0
        %v1545 = vsel %vm963, %v1052, 0
        %1547 = vmatpush.msra.mxu0 0.0
        %1548 = vmatpush.msra.mxu0 0.0
        %1549 = vmatpush.msra.mxu0 0.0
        %1550 = vmatpush.msra.mxu0 0.0
        %1551 = vmatpush.msra.mxu0 0.0
        %1552 = vmatpush.msra.mxu0 0.0
        %1553 = vmatpush.msra.mxu0 0.0
        %1554 = vmatpush.msra.mxu0 0.0
        %1555 = vmatpush.msra.mxu0 %v874
        %1556 = vmatpush.msra.mxu0 %v873
        %1557 = vmatpush.msra.mxu0 %v872
        %1558 = vmatpush.msra.mxu0 %v871
        %1559 = vmatpush.msra.mxu0 %v870
        %1560 = vmatpush.msra.mxu0 %v869
        %1561 = vmatpush.msra.mxu0 %v868
        %1562 = vmatpush.msra.mxu0 %v867
        %1563 = vmatmul.f32.gmra.mxu0 %v1545
        %v1564 = vpop.f32.mrf.mxu0
        %v1565 = vadd.f32 0.0, %v1564
        %1566 = vdwg.mxu0
        %v1567 = vsel %vm963, %v1053, 0
        %1569 = vmatpush.msra.mxu0 0.0
        %1570 = vmatpush.msra.mxu0 0.0
        %1571 = vmatpush.msra.mxu0 0.0
        %1572 = vmatpush.msra.mxu0 0.0
        %1573 = vmatpush.msra.mxu0 0.0
        %1574 = vmatpush.msra.mxu0 0.0
        %1575 = vmatpush.msra.mxu0 0.0
        %1576 = vmatpush.msra.mxu0 0.0
        %1577 = vmatpush.msra.mxu0 %v882
        %1578 = vmatpush.msra.mxu0 %v881
        %1579 = vmatpush.msra.mxu0 %v880
        %1580 = vmatpush.msra.mxu0 %v879
        %1581 = vmatpush.msra.mxu0 %v878
        %1582 = vmatpush.msra.mxu0 %v877
        %1583 = vmatpush.msra.mxu0 %v876
        %1584 = vmatpush.msra.mxu0 %v875
        %1585 = vmatmul.f32.gmra.mxu0 %v1567
        %v1586 = vpop.f32.mrf.mxu0
        %v1587 = vadd.f32 0.0, %v1586
        %1588 = vdwg.mxu0
        %v1589 = vsel %vm963, %v1027, 0
        %1591 = vmatpush.msra.mxu0 0.0
        %1592 = vmatpush.msra.mxu0 0.0
        %1593 = vmatpush.msra.mxu0 0.0
        %1594 = vmatpush.msra.mxu0 0.0
        %1595 = vmatpush.msra.mxu0 0.0
        %1596 = vmatpush.msra.mxu0 0.0
        %1597 = vmatpush.msra.mxu0 0.0
        %1598 = vmatpush.msra.mxu0 0.0
        %1599 = vmatpush.msra.mxu0 %v890
        %1600 = vmatpush.msra.mxu0 %v889
        %1601 = vmatpush.msra.mxu0 %v888
        %1602 = vmatpush.msra.mxu0 %v887
        %1603 = vmatpush.msra.mxu0 %v886
        %1604 = vmatpush.msra.mxu0 %v885
        %1605 = vmatpush.msra.mxu0 %v884
        %1606 = vmatpush.msra.mxu0 %v883
        %1607 = vmatmul.f32.gmra.mxu0 %v1589
        %v1608 = vpop.f32.mrf.mxu0
        %v1609 = vadd.f32 0.0, %v1608
        %1610 = vdwg.mxu0
        %v1611 = vsel %vm963, %v1054, 0
        %1613 = vmatpush.msra.mxu0 0.0
        %1614 = vmatpush.msra.mxu0 0.0
        %1615 = vmatpush.msra.mxu0 0.0
        %1616 = vmatpush.msra.mxu0 0.0
        %1617 = vmatpush.msra.mxu0 0.0
        %1618 = vmatpush.msra.mxu0 0.0
        %1619 = vmatpush.msra.mxu0 0.0
        %1620 = vmatpush.msra.mxu0 0.0
        %1621 = vmatpush.msra.mxu0 %v898
        %1622 = vmatpush.msra.mxu0 %v897
        %1623 = vmatpush.msra.mxu0 %v896
        %1624 = vmatpush.msra.mxu0 %v895
        %1625 = vmatpush.msra.mxu0 %v894
        %1626 = vmatpush.msra.mxu0 %v893
        %1627 = vmatpush.msra.mxu0 %v892
        %1628 = vmatpush.msra.mxu0 %v891
        %1629 = vmatmul.f32.gmra.mxu0 %v1611
        %v1630 = vpop.f32.mrf.mxu0
        %v1631 = vadd.f32 0.0, %v1630
        %1632 = vdwg.mxu0
        %v1633 = vsel %vm963, %v1055, 0
        %1635 = vmatpush.msra.mxu0 0.0
        %1636 = vmatpush.msra.mxu0 0.0
        %1637 = vmatpush.msra.mxu0 0.0
        %1638 = vmatpush.msra.mxu0 0.0
        %1639 = vmatpush.msra.mxu0 0.0
        %1640 = vmatpush.msra.mxu0 0.0
        %1641 = vmatpush.msra.mxu0 0.0
        %1642 = vmatpush.msra.mxu0 0.0
        %1643 = vmatpush.msra.mxu0 %v906
        %1644 = vmatpush.msra.mxu0 %v905
        %1645 = vmatpush.msra.mxu0 %v904
        %1646 = vmatpush.msra.mxu0 %v903
        %1647 = vmatpush.msra.mxu0 %v902
        %1648 = vmatpush.msra.mxu0 %v901
        %1649 = vmatpush.msra.mxu0 %v900
        %1650 = vmatpush.msra.mxu0 %v899
        %1651 = vmatmul.f32.gmra.mxu0 %v1633
        %v1652 = vpop.f32.mrf.mxu0
        %v1653 = vadd.f32 0.0, %v1652
        %1654 = vdwg.mxu0
        %v1655 = vsel %vm963, %v1056, 0
        %1657 = vmatpush.msra.mxu0 0.0
        %1658 = vmatpush.msra.mxu0 0.0
        %1659 = vmatpush.msra.mxu0 0.0
        %1660 = vmatpush.msra.mxu0 0.0
        %1661 = vmatpush.msra.mxu0 0.0
        %1662 = vmatpush.msra.mxu0 0.0
        %1663 = vmatpush.msra.mxu0 0.0
        %1664 = vmatpush.msra.mxu0 0.0
        %1665 = vmatpush.msra.mxu0 %v914
        %1666 = vmatpush.msra.mxu0 %v913
        %1667 = vmatpush.msra.mxu0 %v912
        %1668 = vmatpush.msra.mxu0 %v911
        %1669 = vmatpush.msra.mxu0 %v910
        %1670 = vmatpush.msra.mxu0 %v909
        %1671 = vmatpush.msra.mxu0 %v908
        %1672 = vmatpush.msra.mxu0 %v907
        %1673 = vmatmul.f32.gmra.mxu0 %v1655
        %v1674 = vpop.f32.mrf.mxu0
        %v1675 = vadd.f32 0.0, %v1674
        %1676 = vdwg.mxu0
        %v1677 = vsel %vm963, %v1057, 0
        %1679 = vmatpush.msra.mxu0 0.0
        %1680 = vmatpush.msra.mxu0 0.0
        %1681 = vmatpush.msra.mxu0 0.0
        %1682 = vmatpush.msra.mxu0 0.0
        %1683 = vmatpush.msra.mxu0 0.0
        %1684 = vmatpush.msra.mxu0 0.0
        %1685 = vmatpush.msra.mxu0 0.0
        %1686 = vmatpush.msra.mxu0 0.0
        %1687 = vmatpush.msra.mxu0 %v922
        %1688 = vmatpush.msra.mxu0 %v921
        %1689 = vmatpush.msra.mxu0 %v920
        %1690 = vmatpush.msra.mxu0 %v919
        %1691 = vmatpush.msra.mxu0 %v918
        %1692 = vmatpush.msra.mxu0 %v917
        %1693 = vmatpush.msra.mxu0 %v916
        %1694 = vmatpush.msra.mxu0 %v915
        %1695 = vmatmul.f32.gmra.mxu0 %v1677
        %v1696 = vpop.f32.mrf.mxu0
        %v1697 = vadd.f32 0.0, %v1696
        %1698 = vdwg.mxu0
        %v1699 = vsel %vm963, %v1058, 0
        %1701 = vmatpush.msra.mxu0 0.0
        %1702 = vmatpush.msra.mxu0 0.0
        %1703 = vmatpush.msra.mxu0 0.0
        %1704 = vmatpush.msra.mxu0 0.0
        %1705 = vmatpush.msra.mxu0 0.0
        %1706 = vmatpush.msra.mxu0 0.0
        %1707 = vmatpush.msra.mxu0 0.0
        %1708 = vmatpush.msra.mxu0 0.0
        %1709 = vmatpush.msra.mxu0 %v930
        %1710 = vmatpush.msra.mxu0 %v929
        %1711 = vmatpush.msra.mxu0 %v928
        %1712 = vmatpush.msra.mxu0 %v927
        %1713 = vmatpush.msra.mxu0 %v926
        %1714 = vmatpush.msra.mxu0 %v925
        %1715 = vmatpush.msra.mxu0 %v924
        %1716 = vmatpush.msra.mxu0 %v923
        %1717 = vmatmul.f32.gmra.mxu0 %v1699
        %v1718 = vpop.f32.mrf.mxu0
        %v1719 = vadd.f32 0.0, %v1718
        %1720 = vdwg.mxu0
        %v1721 = vsel %vm963, %v1059, 0
        %1723 = vmatpush.msra.mxu0 0.0
        %1724 = vmatpush.msra.mxu0 0.0
        %1725 = vmatpush.msra.mxu0 0.0
        %1726 = vmatpush.msra.mxu0 0.0
        %1727 = vmatpush.msra.mxu0 0.0
        %1728 = vmatpush.msra.mxu0 0.0
        %1729 = vmatpush.msra.mxu0 0.0
        %1730 = vmatpush.msra.mxu0 0.0
        %1731 = vmatpush.msra.mxu0 %v938
        %1732 = vmatpush.msra.mxu0 %v937
        %1733 = vmatpush.msra.mxu0 %v936
        %1734 = vmatpush.msra.mxu0 %v935
        %1735 = vmatpush.msra.mxu0 %v934
        %1736 = vmatpush.msra.mxu0 %v933
        %1737 = vmatpush.msra.mxu0 %v932
        %1738 = vmatpush.msra.mxu0 %v931
        %1739 = vmatmul.f32.gmra.mxu0 %v1721
        %v1740 = vpop.f32.mrf.mxu0
        %v1741 = vadd.f32 0.0, %v1740
        %1742 = vdwg.mxu0
        %v1743 = vsel %vm963, %v1060, 0
        %1745 = vmatpush.msra.mxu0 0.0
        %1746 = vmatpush.msra.mxu0 0.0
        %1747 = vmatpush.msra.mxu0 0.0
        %1748 = vmatpush.msra.mxu0 0.0
        %1749 = vmatpush.msra.mxu0 0.0
        %1750 = vmatpush.msra.mxu0 0.0
        %1751 = vmatpush.msra.mxu0 0.0
        %1752 = vmatpush.msra.mxu0 0.0
        %1753 = vmatpush.msra.mxu0 %v946
        %1754 = vmatpush.msra.mxu0 %v945
        %1755 = vmatpush.msra.mxu0 %v944
        %1756 = vmatpush.msra.mxu0 %v943
        %1757 = vmatpush.msra.mxu0 %v942
        %1758 = vmatpush.msra.mxu0 %v941
        %1759 = vmatpush.msra.mxu0 %v940
        %1760 = vmatpush.msra.mxu0 %v939
        %1761 = vmatmul.f32.gmra.mxu0 %v1743
        %v1762 = vpop.f32.mrf.mxu0
        %v1763 = vadd.f32 0.0, %v1762
        %1764 = vdwg.mxu0
        %v1765 = vsub.f32 %v1081, %v1433
        %v1766 = vsub.f32 %v1103, %v1455
        %v1767 = vsub.f32 %v1125, %v1477
        %v1768 = vsub.f32 %v1147, %v1499
        %v1769 = vsub.f32 %v1169, %v1521
        %v1770 = vsub.f32 %v1191, %v1543
        %v1771 = vsub.f32 %v1213, %v1565
        %v1772 = vsub.f32 %v1235, %v1587
        %v1773 = vsub.f32 %v1257, %v1609
        %v1774 = vsub.f32 %v1279, %v1631
        %v1775 = vsub.f32 %v1301, %v1653
        %v1776 = vsub.f32 %v1323, %v1675
        %v1777 = vsub.f32 %v1345, %v1697
        %v1778 = vsub.f32 %v1367, %v1719
        %v1779 = vsub.f32 %v1389, %v1741
        %v1780 = vsub.f32 %v1411, %v1763
        %1781 = vmatpush.msra.mxu0 0.0
        %1782 = vmatpush.msra.mxu0 0.0
        %1783 = vmatpush.msra.mxu0 0.0
        %1784 = vmatpush.msra.mxu0 0.0
        %1785 = vmatpush.msra.mxu0 0.0
        %1786 = vmatpush.msra.mxu0 0.0
        %1787 = vmatpush.msra.mxu0 0.0
        %1788 = vmatpush.msra.mxu0 0.0
        %1789 = vmatpush.msra.mxu0 %v698
        %1790 = vmatpush.msra.mxu0 %v697
        %1791 = vmatpush.msra.mxu0 %v696
        %1792 = vmatpush.msra.mxu0 %v695
        %1793 = vmatpush.msra.mxu0 %v694
        %1794 = vmatpush.msra.mxu0 %v693
        %1795 = vmatpush.msra.mxu0 %v692
        %1796 = vmatpush.msra.mxu0 %v691
        %1797 = vmatmul.f32.gmra.mxu0 %v1413
        %v1798 = vpop.f32.mrf.mxu0
        %v1799 = vadd.f32 0.0, %v1798
        %1800 = vdwg.mxu0
        %1801 = vmatpush.msra.mxu0 0.0
        %1802 = vmatpush.msra.mxu0 0.0
        %1803 = vmatpush.msra.mxu0 0.0
        %1804 = vmatpush.msra.mxu0 0.0
        %1805 = vmatpush.msra.mxu0 0.0
        %1806 = vmatpush.msra.mxu0 0.0
        %1807 = vmatpush.msra.mxu0 0.0
        %1808 = vmatpush.msra.mxu0 0.0
        %1809 = vmatpush.msra.mxu0 %v706
        %1810 = vmatpush.msra.mxu0 %v705
        %1811 = vmatpush.msra.mxu0 %v704
        %1812 = vmatpush.msra.mxu0 %v703
        %1813 = vmatpush.msra.mxu0 %v702
        %1814 = vmatpush.msra.mxu0 %v701
        %1815 = vmatpush.msra.mxu0 %v700
        %1816 = vmatpush.msra.mxu0 %v699
        %1817 = vmatmul.f32.gmra.mxu0 %v1435
        %v1818 = vpop.f32.mrf.mxu0
        %v1819 = vadd.f32 0.0, %v1818
        %1820 = vdwg.mxu0
        %1821 = vmatpush.msra.mxu0 0.0
        %1822 = vmatpush.msra.mxu0 0.0
        %1823 = vmatpush.msra.mxu0 0.0
        %1824 = vmatpush.msra.mxu0 0.0
        %1825 = vmatpush.msra.mxu0 0.0
        %1826 = vmatpush.msra.mxu0 0.0
        %1827 = vmatpush.msra.mxu0 0.0
        %1828 = vmatpush.msra.mxu0 0.0
        %1829 = vmatpush.msra.mxu0 %v714
        %1830 = vmatpush.msra.mxu0 %v713
        %1831 = vmatpush.msra.mxu0 %v712
        %1832 = vmatpush.msra.mxu0 %v711
        %1833 = vmatpush.msra.mxu0 %v710
        %1834 = vmatpush.msra.mxu0 %v709
        %1835 = vmatpush.msra.mxu0 %v708
        %1836 = vmatpush.msra.mxu0 %v707
        %1837 = vmatmul.f32.gmra.mxu0 %v1457
        %v1838 = vpop.f32.mrf.mxu0
        %v1839 = vadd.f32 0.0, %v1838
        %1840 = vdwg.mxu0
        %1841 = vmatpush.msra.mxu0 0.0
        %1842 = vmatpush.msra.mxu0 0.0
        %1843 = vmatpush.msra.mxu0 0.0
        %1844 = vmatpush.msra.mxu0 0.0
        %1845 = vmatpush.msra.mxu0 0.0
        %1846 = vmatpush.msra.mxu0 0.0
        %1847 = vmatpush.msra.mxu0 0.0
        %1848 = vmatpush.msra.mxu0 0.0
        %1849 = vmatpush.msra.mxu0 %v722
        %1850 = vmatpush.msra.mxu0 %v721
        %1851 = vmatpush.msra.mxu0 %v720
        %1852 = vmatpush.msra.mxu0 %v719
        %1853 = vmatpush.msra.mxu0 %v718
        %1854 = vmatpush.msra.mxu0 %v717
        %1855 = vmatpush.msra.mxu0 %v716
        %1856 = vmatpush.msra.mxu0 %v715
        %1857 = vmatmul.f32.gmra.mxu0 %v1479
        %v1858 = vpop.f32.mrf.mxu0
        %v1859 = vadd.f32 0.0, %v1858
        %1860 = vdwg.mxu0
        %1861 = vmatpush.msra.mxu0 0.0
        %1862 = vmatpush.msra.mxu0 0.0
        %1863 = vmatpush.msra.mxu0 0.0
        %1864 = vmatpush.msra.mxu0 0.0
        %1865 = vmatpush.msra.mxu0 0.0
        %1866 = vmatpush.msra.mxu0 0.0
        %1867 = vmatpush.msra.mxu0 0.0
        %1868 = vmatpush.msra.mxu0 0.0
        %1869 = vmatpush.msra.mxu0 %v730
        %1870 = vmatpush.msra.mxu0 %v729
        %1871 = vmatpush.msra.mxu0 %v728
        %1872 = vmatpush.msra.mxu0 %v727
        %1873 = vmatpush.msra.mxu0 %v726
        %1874 = vmatpush.msra.mxu0 %v725
        %1875 = vmatpush.msra.mxu0 %v724
        %1876 = vmatpush.msra.mxu0 %v723
        %1877 = vmatmul.f32.gmra.mxu0 %v1501
        %v1878 = vpop.f32.mrf.mxu0
        %v1879 = vadd.f32 0.0, %v1878
        %1880 = vdwg.mxu0
        %1881 = vmatpush.msra.mxu0 0.0
        %1882 = vmatpush.msra.mxu0 0.0
        %1883 = vmatpush.msra.mxu0 0.0
        %1884 = vmatpush.msra.mxu0 0.0
        %1885 = vmatpush.msra.mxu0 0.0
        %1886 = vmatpush.msra.mxu0 0.0
        %1887 = vmatpush.msra.mxu0 0.0
        %1888 = vmatpush.msra.mxu0 0.0
        %1889 = vmatpush.msra.mxu0 %v738
        %1890 = vmatpush.msra.mxu0 %v737
        %1891 = vmatpush.msra.mxu0 %v736
        %1892 = vmatpush.msra.mxu0 %v735
        %1893 = vmatpush.msra.mxu0 %v734
        %1894 = vmatpush.msra.mxu0 %v733
        %1895 = vmatpush.msra.mxu0 %v732
        %1896 = vmatpush.msra.mxu0 %v731
        %1897 = vmatmul.f32.gmra.mxu0 %v1523
        %v1898 = vpop.f32.mrf.mxu0
        %v1899 = vadd.f32 0.0, %v1898
        %1900 = vdwg.mxu0
        %1901 = vmatpush.msra.mxu0 0.0
        %1902 = vmatpush.msra.mxu0 0.0
        %1903 = vmatpush.msra.mxu0 0.0
        %1904 = vmatpush.msra.mxu0 0.0
        %1905 = vmatpush.msra.mxu0 0.0
        %1906 = vmatpush.msra.mxu0 0.0
        %1907 = vmatpush.msra.mxu0 0.0
        %1908 = vmatpush.msra.mxu0 0.0
        %1909 = vmatpush.msra.mxu0 %v746
        %1910 = vmatpush.msra.mxu0 %v745
        %1911 = vmatpush.msra.mxu0 %v744
        %1912 = vmatpush.msra.mxu0 %v743
        %1913 = vmatpush.msra.mxu0 %v742
        %1914 = vmatpush.msra.mxu0 %v741
        %1915 = vmatpush.msra.mxu0 %v740
        %1916 = vmatpush.msra.mxu0 %v739
        %1917 = vmatmul.f32.gmra.mxu0 %v1545
        %v1918 = vpop.f32.mrf.mxu0
        %v1919 = vadd.f32 0.0, %v1918
        %1920 = vdwg.mxu0
        %1921 = vmatpush.msra.mxu0 0.0
        %1922 = vmatpush.msra.mxu0 0.0
        %1923 = vmatpush.msra.mxu0 0.0
        %1924 = vmatpush.msra.mxu0 0.0
        %1925 = vmatpush.msra.mxu0 0.0
        %1926 = vmatpush.msra.mxu0 0.0
        %1927 = vmatpush.msra.mxu0 0.0
        %1928 = vmatpush.msra.mxu0 0.0
        %1929 = vmatpush.msra.mxu0 %v754
        %1930 = vmatpush.msra.mxu0 %v753
        %1931 = vmatpush.msra.mxu0 %v752
        %1932 = vmatpush.msra.mxu0 %v751
        %1933 = vmatpush.msra.mxu0 %v750
        %1934 = vmatpush.msra.mxu0 %v749
        %1935 = vmatpush.msra.mxu0 %v748
        %1936 = vmatpush.msra.mxu0 %v747
        %1937 = vmatmul.f32.gmra.mxu0 %v1567
        %v1938 = vpop.f32.mrf.mxu0
        %v1939 = vadd.f32 0.0, %v1938
        %1940 = vdwg.mxu0
        %1941 = vmatpush.msra.mxu0 0.0
        %1942 = vmatpush.msra.mxu0 0.0
        %1943 = vmatpush.msra.mxu0 0.0
        %1944 = vmatpush.msra.mxu0 0.0
        %1945 = vmatpush.msra.mxu0 0.0
        %1946 = vmatpush.msra.mxu0 0.0
        %1947 = vmatpush.msra.mxu0 0.0
        %1948 = vmatpush.msra.mxu0 0.0
        %1949 = vmatpush.msra.mxu0 %v762
        %1950 = vmatpush.msra.mxu0 %v761
        %1951 = vmatpush.msra.mxu0 %v760
        %1952 = vmatpush.msra.mxu0 %v759
        %1953 = vmatpush.msra.mxu0 %v758
        %1954 = vmatpush.msra.mxu0 %v757
        %1955 = vmatpush.msra.mxu0 %v756
        %1956 = vmatpush.msra.mxu0 %v755
        %1957 = vmatmul.f32.gmra.mxu0 %v1589
        %v1958 = vpop.f32.mrf.mxu0
        %v1959 = vadd.f32 0.0, %v1958
        %1960 = vdwg.mxu0
        %1961 = vmatpush.msra.mxu0 0.0
        %1962 = vmatpush.msra.mxu0 0.0
        %1963 = vmatpush.msra.mxu0 0.0
        %1964 = vmatpush.msra.mxu0 0.0
        %1965 = vmatpush.msra.mxu0 0.0
        %1966 = vmatpush.msra.mxu0 0.0
        %1967 = vmatpush.msra.mxu0 0.0
        %1968 = vmatpush.msra.mxu0 0.0
        %1969 = vmatpush.msra.mxu0 %v770
        %1970 = vmatpush.msra.mxu0 %v769
        %1971 = vmatpush.msra.mxu0 %v768
        %1972 = vmatpush.msra.mxu0 %v767
        %1973 = vmatpush.msra.mxu0 %v766
        %1974 = vmatpush.msra.mxu0 %v765
        %1975 = vmatpush.msra.mxu0 %v764
        %1976 = vmatpush.msra.mxu0 %v763
        %1977 = vmatmul.f32.gmra.mxu0 %v1611
        %v1978 = vpop.f32.mrf.mxu0
        %v1979 = vadd.f32 0.0, %v1978
        %1980 = vdwg.mxu0
        %1981 = vmatpush.msra.mxu0 0.0
        %1982 = vmatpush.msra.mxu0 0.0
        %1983 = vmatpush.msra.mxu0 0.0
        %1984 = vmatpush.msra.mxu0 0.0
        %1985 = vmatpush.msra.mxu0 0.0
        %1986 = vmatpush.msra.mxu0 0.0
        %1987 = vmatpush.msra.mxu0 0.0
        %1988 = vmatpush.msra.mxu0 0.0
        %1989 = vmatpush.msra.mxu0 %v778
        %1990 = vmatpush.msra.mxu0 %v777
        %1991 = vmatpush.msra.mxu0 %v776
        %1992 = vmatpush.msra.mxu0 %v775
        %1993 = vmatpush.msra.mxu0 %v774
        %1994 = vmatpush.msra.mxu0 %v773
        %1995 = vmatpush.msra.mxu0 %v772
        %1996 = vmatpush.msra.mxu0 %v771
        %1997 = vmatmul.f32.gmra.mxu0 %v1633
        %v1998 = vpop.f32.mrf.mxu0
        %v1999 = vadd.f32 0.0, %v1998
        %2000 = vdwg.mxu0
        %2001 = vmatpush.msra.mxu0 0.0
        %2002 = vmatpush.msra.mxu0 0.0
        %2003 = vmatpush.msra.mxu0 0.0
        %2004 = vmatpush.msra.mxu0 0.0
        %2005 = vmatpush.msra.mxu0 0.0
        %2006 = vmatpush.msra.mxu0 0.0
        %2007 = vmatpush.msra.mxu0 0.0
        %2008 = vmatpush.msra.mxu0 0.0
        %2009 = vmatpush.msra.mxu0 %v786
        %2010 = vmatpush.msra.mxu0 %v785
        %2011 = vmatpush.msra.mxu0 %v784
        %2012 = vmatpush.msra.mxu0 %v783
        %2013 = vmatpush.msra.mxu0 %v782
        %2014 = vmatpush.msra.mxu0 %v781
        %2015 = vmatpush.msra.mxu0 %v780
        %2016 = vmatpush.msra.mxu0 %v779
        %2017 = vmatmul.f32.gmra.mxu0 %v1655
        %v2018 = vpop.f32.mrf.mxu0
        %v2019 = vadd.f32 0.0, %v2018
        %2020 = vdwg.mxu0
        %2021 = vmatpush.msra.mxu0 0.0
        %2022 = vmatpush.msra.mxu0 0.0
        %2023 = vmatpush.msra.mxu0 0.0
        %2024 = vmatpush.msra.mxu0 0.0
        %2025 = vmatpush.msra.mxu0 0.0
        %2026 = vmatpush.msra.mxu0 0.0
        %2027 = vmatpush.msra.mxu0 0.0
        %2028 = vmatpush.msra.mxu0 0.0
        %2029 = vmatpush.msra.mxu0 %v794
        %2030 = vmatpush.msra.mxu0 %v793
        %2031 = vmatpush.msra.mxu0 %v792
        %2032 = vmatpush.msra.mxu0 %v791
        %2033 = vmatpush.msra.mxu0 %v790
        %2034 = vmatpush.msra.mxu0 %v789
        %2035 = vmatpush.msra.mxu0 %v788
        %2036 = vmatpush.msra.mxu0 %v787
        %2037 = vmatmul.f32.gmra.mxu0 %v1677
        %v2038 = vpop.f32.mrf.mxu0
        %v2039 = vadd.f32 0.0, %v2038
        %2040 = vdwg.mxu0
        %2041 = vmatpush.msra.mxu0 0.0
        %2042 = vmatpush.msra.mxu0 0.0
        %2043 = vmatpush.msra.mxu0 0.0
        %2044 = vmatpush.msra.mxu0 0.0
        %2045 = vmatpush.msra.mxu0 0.0
        %2046 = vmatpush.msra.mxu0 0.0
        %2047 = vmatpush.msra.mxu0 0.0
        %2048 = vmatpush.msra.mxu0 0.0
        %2049 = vmatpush.msra.mxu0 %v802
        %2050 = vmatpush.msra.mxu0 %v801
        %2051 = vmatpush.msra.mxu0 %v800
        %2052 = vmatpush.msra.mxu0 %v799
        %2053 = vmatpush.msra.mxu0 %v798
        %2054 = vmatpush.msra.mxu0 %v797
        %2055 = vmatpush.msra.mxu0 %v796
        %2056 = vmatpush.msra.mxu0 %v795
        %2057 = vmatmul.f32.gmra.mxu0 %v1699
        %v2058 = vpop.f32.mrf.mxu0
        %v2059 = vadd.f32 0.0, %v2058
        %2060 = vdwg.mxu0
        %2061 = vmatpush.msra.mxu0 0.0
        %2062 = vmatpush.msra.mxu0 0.0
        %2063 = vmatpush.msra.mxu0 0.0
        %2064 = vmatpush.msra.mxu0 0.0
        %2065 = vmatpush.msra.mxu0 0.0
        %2066 = vmatpush.msra.mxu0 0.0
        %2067 = vmatpush.msra.mxu0 0.0
        %2068 = vmatpush.msra.mxu0 0.0
        %2069 = vmatpush.msra.mxu0 %v810
        %2070 = vmatpush.msra.mxu0 %v809
        %2071 = vmatpush.msra.mxu0 %v808
        %2072 = vmatpush.msra.mxu0 %v807
        %2073 = vmatpush.msra.mxu0 %v806
        %2074 = vmatpush.msra.mxu0 %v805
        %2075 = vmatpush.msra.mxu0 %v804
        %2076 = vmatpush.msra.mxu0 %v803
        %2077 = vmatmul.f32.gmra.mxu0 %v1721
        %v2078 = vpop.f32.mrf.mxu0
        %v2079 = vadd.f32 0.0, %v2078
        %2080 = vdwg.mxu0
        %2081 = vmatpush.msra.mxu0 0.0
        %2082 = vmatpush.msra.mxu0 0.0
        %2083 = vmatpush.msra.mxu0 0.0
        %2084 = vmatpush.msra.mxu0 0.0
        %2085 = vmatpush.msra.mxu0 0.0
        %2086 = vmatpush.msra.mxu0 0.0
        %2087 = vmatpush.msra.mxu0 0.0
        %2088 = vmatpush.msra.mxu0 0.0
        %2089 = vmatpush.msra.mxu0 %v818
        %2090 = vmatpush.msra.mxu0 %v817
        %2091 = vmatpush.msra.mxu0 %v816
        %2092 = vmatpush.msra.mxu0 %v815
        %2093 = vmatpush.msra.mxu0 %v814
        %2094 = vmatpush.msra.mxu0 %v813
        %2095 = vmatpush.msra.mxu0 %v812
        %2096 = vmatpush.msra.mxu0 %v811
        %2097 = vmatmul.f32.gmra.mxu0 %v1743
        %v2098 = vpop.f32.mrf.mxu0
        %v2099 = vadd.f32 0.0, %v2098
        %2100 = vdwg.mxu0
        %2101 = vmatpush.msra.mxu0 0.0
        %2102 = vmatpush.msra.mxu0 0.0
        %2103 = vmatpush.msra.mxu0 0.0
        %2104 = vmatpush.msra.mxu0 0.0
        %2105 = vmatpush.msra.mxu0 0.0
        %2106 = vmatpush.msra.mxu0 0.0
        %2107 = vmatpush.msra.mxu0 0.0
        %2108 = vmatpush.msra.mxu0 0.0
        %2109 = vmatpush.msra.mxu0 %v826
        %2110 = vmatpush.msra.mxu0 %v825
        %2111 = vmatpush.msra.mxu0 %v824
        %2112 = vmatpush.msra.mxu0 %v823
        %2113 = vmatpush.msra.mxu0 %v822
        %2114 = vmatpush.msra.mxu0 %v821
        %2115 = vmatpush.msra.mxu0 %v820
        %2116 = vmatpush.msra.mxu0 %v819
        %2117 = vmatmul.f32.gmra.mxu0 %v1061
        %v2118 = vpop.f32.mrf.mxu0
        %v2119 = vadd.f32 %v1799, %v2118
        %2120 = vdwg.mxu0
        %2121 = vmatpush.msra.mxu0 0.0
        %2122 = vmatpush.msra.mxu0 0.0
        %2123 = vmatpush.msra.mxu0 0.0
        %2124 = vmatpush.msra.mxu0 0.0
        %2125 = vmatpush.msra.mxu0 0.0
        %2126 = vmatpush.msra.mxu0 0.0
        %2127 = vmatpush.msra.mxu0 0.0
        %2128 = vmatpush.msra.mxu0 0.0
        %2129 = vmatpush.msra.mxu0 %v834
        %2130 = vmatpush.msra.mxu0 %v833
        %2131 = vmatpush.msra.mxu0 %v832
        %2132 = vmatpush.msra.mxu0 %v831
        %2133 = vmatpush.msra.mxu0 %v830
        %2134 = vmatpush.msra.mxu0 %v829
        %2135 = vmatpush.msra.mxu0 %v828
        %2136 = vmatpush.msra.mxu0 %v827
        %2137 = vmatmul.f32.gmra.mxu0 %v1083
        %v2138 = vpop.f32.mrf.mxu0
        %v2139 = vadd.f32 %v1819, %v2138
        %2140 = vdwg.mxu0
        %2141 = vmatpush.msra.mxu0 0.0
        %2142 = vmatpush.msra.mxu0 0.0
        %2143 = vmatpush.msra.mxu0 0.0
        %2144 = vmatpush.msra.mxu0 0.0
        %2145 = vmatpush.msra.mxu0 0.0
        %2146 = vmatpush.msra.mxu0 0.0
        %2147 = vmatpush.msra.mxu0 0.0
        %2148 = vmatpush.msra.mxu0 0.0
        %2149 = vmatpush.msra.mxu0 %v842
        %2150 = vmatpush.msra.mxu0 %v841
        %2151 = vmatpush.msra.mxu0 %v840
        %2152 = vmatpush.msra.mxu0 %v839
        %2153 = vmatpush.msra.mxu0 %v838
        %2154 = vmatpush.msra.mxu0 %v837
        %2155 = vmatpush.msra.mxu0 %v836
        %2156 = vmatpush.msra.mxu0 %v835
        %2157 = vmatmul.f32.gmra.mxu0 %v1105
        %v2158 = vpop.f32.mrf.mxu0
        %v2159 = vadd.f32 %v1839, %v2158
        %2160 = vdwg.mxu0
        %2161 = vmatpush.msra.mxu0 0.0
        %2162 = vmatpush.msra.mxu0 0.0
        %2163 = vmatpush.msra.mxu0 0.0
        %2164 = vmatpush.msra.mxu0 0.0
        %2165 = vmatpush.msra.mxu0 0.0
        %2166 = vmatpush.msra.mxu0 0.0
        %2167 = vmatpush.msra.mxu0 0.0
        %2168 = vmatpush.msra.mxu0 0.0
        %2169 = vmatpush.msra.mxu0 %v850
        %2170 = vmatpush.msra.mxu0 %v849
        %2171 = vmatpush.msra.mxu0 %v848
        %2172 = vmatpush.msra.mxu0 %v847
        %2173 = vmatpush.msra.mxu0 %v846
        %2174 = vmatpush.msra.mxu0 %v845
        %2175 = vmatpush.msra.mxu0 %v844
        %2176 = vmatpush.msra.mxu0 %v843
        %2177 = vmatmul.f32.gmra.mxu0 %v1127
        %v2178 = vpop.f32.mrf.mxu0
        %v2179 = vadd.f32 %v1859, %v2178
        %2180 = vdwg.mxu0
        %2181 = vmatpush.msra.mxu0 0.0
        %2182 = vmatpush.msra.mxu0 0.0
        %2183 = vmatpush.msra.mxu0 0.0
        %2184 = vmatpush.msra.mxu0 0.0
        %2185 = vmatpush.msra.mxu0 0.0
        %2186 = vmatpush.msra.mxu0 0.0
        %2187 = vmatpush.msra.mxu0 0.0
        %2188 = vmatpush.msra.mxu0 0.0
        %2189 = vmatpush.msra.mxu0 %v858
        %2190 = vmatpush.msra.mxu0 %v857
        %2191 = vmatpush.msra.mxu0 %v856
        %2192 = vmatpush.msra.mxu0 %v855
        %2193 = vmatpush.msra.mxu0 %v854
        %2194 = vmatpush.msra.mxu0 %v853
        %2195 = vmatpush.msra.mxu0 %v852
        %2196 = vmatpush.msra.mxu0 %v851
        %2197 = vmatmul.f32.gmra.mxu0 %v1149
        %v2198 = vpop.f32.mrf.mxu0
        %v2199 = vadd.f32 %v1879, %v2198
        %2200 = vdwg.mxu0
        %2201 = vmatpush.msra.mxu0 0.0
        %2202 = vmatpush.msra.mxu0 0.0
        %2203 = vmatpush.msra.mxu0 0.0
        %2204 = vmatpush.msra.mxu0 0.0
        %2205 = vmatpush.msra.mxu0 0.0
        %2206 = vmatpush.msra.mxu0 0.0
        %2207 = vmatpush.msra.mxu0 0.0
        %2208 = vmatpush.msra.mxu0 0.0
        %2209 = vmatpush.msra.mxu0 %v866
        %2210 = vmatpush.msra.mxu0 %v865
        %2211 = vmatpush.msra.mxu0 %v864
        %2212 = vmatpush.msra.mxu0 %v863
        %2213 = vmatpush.msra.mxu0 %v862
        %2214 = vmatpush.msra.mxu0 %v861
        %2215 = vmatpush.msra.mxu0 %v860
        %2216 = vmatpush.msra.mxu0 %v859
        %2217 = vmatmul.f32.gmra.mxu0 %v1171
        %v2218 = vpop.f32.mrf.mxu0
        %v2219 = vadd.f32 %v1899, %v2218
        %2220 = vdwg.mxu0
        %2221 = vmatpush.msra.mxu0 0.0
        %2222 = vmatpush.msra.mxu0 0.0
        %2223 = vmatpush.msra.mxu0 0.0
        %2224 = vmatpush.msra.mxu0 0.0
        %2225 = vmatpush.msra.mxu0 0.0
        %2226 = vmatpush.msra.mxu0 0.0
        %2227 = vmatpush.msra.mxu0 0.0
        %2228 = vmatpush.msra.mxu0 0.0
        %2229 = vmatpush.msra.mxu0 %v874
        %2230 = vmatpush.msra.mxu0 %v873
        %2231 = vmatpush.msra.mxu0 %v872
        %2232 = vmatpush.msra.mxu0 %v871
        %2233 = vmatpush.msra.mxu0 %v870
        %2234 = vmatpush.msra.mxu0 %v869
        %2235 = vmatpush.msra.mxu0 %v868
        %2236 = vmatpush.msra.mxu0 %v867
        %2237 = vmatmul.f32.gmra.mxu0 %v1193
        %v2238 = vpop.f32.mrf.mxu0
        %v2239 = vadd.f32 %v1919, %v2238
        %2240 = vdwg.mxu0
        %2241 = vmatpush.msra.mxu0 0.0
        %2242 = vmatpush.msra.mxu0 0.0
        %2243 = vmatpush.msra.mxu0 0.0
        %2244 = vmatpush.msra.mxu0 0.0
        %2245 = vmatpush.msra.mxu0 0.0
        %2246 = vmatpush.msra.mxu0 0.0
        %2247 = vmatpush.msra.mxu0 0.0
        %2248 = vmatpush.msra.mxu0 0.0
        %2249 = vmatpush.msra.mxu0 %v882
        %2250 = vmatpush.msra.mxu0 %v881
        %2251 = vmatpush.msra.mxu0 %v880
        %2252 = vmatpush.msra.mxu0 %v879
        %2253 = vmatpush.msra.mxu0 %v878
        %2254 = vmatpush.msra.mxu0 %v877
        %2255 = vmatpush.msra.mxu0 %v876
        %2256 = vmatpush.msra.mxu0 %v875
        %2257 = vmatmul.f32.gmra.mxu0 %v1215
        %v2258 = vpop.f32.mrf.mxu0
        %v2259 = vadd.f32 %v1939, %v2258
        %2260 = vdwg.mxu0
        %2261 = vmatpush.msra.mxu0 0.0
        %2262 = vmatpush.msra.mxu0 0.0
        %2263 = vmatpush.msra.mxu0 0.0
        %2264 = vmatpush.msra.mxu0 0.0
        %2265 = vmatpush.msra.mxu0 0.0
        %2266 = vmatpush.msra.mxu0 0.0
        %2267 = vmatpush.msra.mxu0 0.0
        %2268 = vmatpush.msra.mxu0 0.0
        %2269 = vmatpush.msra.mxu0 %v890
        %2270 = vmatpush.msra.mxu0 %v889
        %2271 = vmatpush.msra.mxu0 %v888
        %2272 = vmatpush.msra.mxu0 %v887
        %2273 = vmatpush.msra.mxu0 %v886
        %2274 = vmatpush.msra.mxu0 %v885
        %2275 = vmatpush.msra.mxu0 %v884
        %2276 = vmatpush.msra.mxu0 %v883
        %2277 = vmatmul.f32.gmra.mxu0 %v1237
        %v2278 = vpop.f32.mrf.mxu0
        %v2279 = vadd.f32 %v1959, %v2278
        %2280 = vdwg.mxu0
        %2281 = vmatpush.msra.mxu0 0.0
        %2282 = vmatpush.msra.mxu0 0.0
        %2283 = vmatpush.msra.mxu0 0.0
        %2284 = vmatpush.msra.mxu0 0.0
        %2285 = vmatpush.msra.mxu0 0.0
        %2286 = vmatpush.msra.mxu0 0.0
        %2287 = vmatpush.msra.mxu0 0.0
        %2288 = vmatpush.msra.mxu0 0.0
        %2289 = vmatpush.msra.mxu0 %v898
        %2290 = vmatpush.msra.mxu0 %v897
        %2291 = vmatpush.msra.mxu0 %v896
        %2292 = vmatpush.msra.mxu0 %v895
        %2293 = vmatpush.msra.mxu0 %v894
        %2294 = vmatpush.msra.mxu0 %v893
        %2295 = vmatpush.msra.mxu0 %v892
        %2296 = vmatpush.msra.mxu0 %v891
        %2297 = vmatmul.f32.gmra.mxu0 %v1259
        %v2298 = vpop.f32.mrf.mxu0
        %v2299 = vadd.f32 %v1979, %v2298
        %2300 = vdwg.mxu0
        %2301 = vmatpush.msra.mxu0 0.0
        %2302 = vmatpush.msra.mxu0 0.0
        %2303 = vmatpush.msra.mxu0 0.0
        %2304 = vmatpush.msra.mxu0 0.0
        %2305 = vmatpush.msra.mxu0 0.0
        %2306 = vmatpush.msra.mxu0 0.0
        %2307 = vmatpush.msra.mxu0 0.0
        %2308 = vmatpush.msra.mxu0 0.0
        %2309 = vmatpush.msra.mxu0 %v906
        %2310 = vmatpush.msra.mxu0 %v905
        %2311 = vmatpush.msra.mxu0 %v904
        %2312 = vmatpush.msra.mxu0 %v903
        %2313 = vmatpush.msra.mxu0 %v902
        %2314 = vmatpush.msra.mxu0 %v901
        %2315 = vmatpush.msra.mxu0 %v900
        %2316 = vmatpush.msra.mxu0 %v899
        %2317 = vmatmul.f32.gmra.mxu0 %v1281
        %v2318 = vpop.f32.mrf.mxu0
        %v2319 = vadd.f32 %v1999, %v2318
        %2320 = vdwg.mxu0
        %2321 = vmatpush.msra.mxu0 0.0
        %2322 = vmatpush.msra.mxu0 0.0
        %2323 = vmatpush.msra.mxu0 0.0
        %2324 = vmatpush.msra.mxu0 0.0
        %2325 = vmatpush.msra.mxu0 0.0
        %2326 = vmatpush.msra.mxu0 0.0
        %2327 = vmatpush.msra.mxu0 0.0
        %2328 = vmatpush.msra.mxu0 0.0
        %2329 = vmatpush.msra.mxu0 %v914
        %2330 = vmatpush.msra.mxu0 %v913
        %2331 = vmatpush.msra.mxu0 %v912
        %2332 = vmatpush.msra.mxu0 %v911
        %2333 = vmatpush.msra.mxu0 %v910
        %2334 = vmatpush.msra.mxu0 %v909
        %2335 = vmatpush.msra.mxu0 %v908
        %2336 = vmatpush.msra.mxu0 %v907
        %2337 = vmatmul.f32.gmra.mxu0 %v1303
        %v2338 = vpop.f32.mrf.mxu0
        %v2339 = vadd.f32 %v2019, %v2338
        %2340 = vdwg.mxu0
        %2341 = vmatpush.msra.mxu0 0.0
        %2342 = vmatpush.msra.mxu0 0.0
        %2343 = vmatpush.msra.mxu0 0.0
        %2344 = vmatpush.msra.mxu0 0.0
        %2345 = vmatpush.msra.mxu0 0.0
        %2346 = vmatpush.msra.mxu0 0.0
        %2347 = vmatpush.msra.mxu0 0.0
        %2348 = vmatpush.msra.mxu0 0.0
        %2349 = vmatpush.msra.mxu0 %v922
        %2350 = vmatpush.msra.mxu0 %v921
        %2351 = vmatpush.msra.mxu0 %v920
        %2352 = vmatpush.msra.mxu0 %v919
        %2353 = vmatpush.msra.mxu0 %v918
        %2354 = vmatpush.msra.mxu0 %v917
        %2355 = vmatpush.msra.mxu0 %v916
        %2356 = vmatpush.msra.mxu0 %v915
        %2357 = vmatmul.f32.gmra.mxu0 %v1325
        %v2358 = vpop.f32.mrf.mxu0
        %v2359 = vadd.f32 %v2039, %v2358
        %2360 = vdwg.mxu0
        %2361 = vmatpush.msra.mxu0 0.0
        %2362 = vmatpush.msra.mxu0 0.0
        %2363 = vmatpush.msra.mxu0 0.0
        %2364 = vmatpush.msra.mxu0 0.0
        %2365 = vmatpush.msra.mxu0 0.0
        %2366 = vmatpush.msra.mxu0 0.0
        %2367 = vmatpush.msra.mxu0 0.0
        %2368 = vmatpush.msra.mxu0 0.0
        %2369 = vmatpush.msra.mxu0 %v930
        %2370 = vmatpush.msra.mxu0 %v929
        %2371 = vmatpush.msra.mxu0 %v928
        %2372 = vmatpush.msra.mxu0 %v927
        %2373 = vmatpush.msra.mxu0 %v926
        %2374 = vmatpush.msra.mxu0 %v925
        %2375 = vmatpush.msra.mxu0 %v924
        %2376 = vmatpush.msra.mxu0 %v923
        %2377 = vmatmul.f32.gmra.mxu0 %v1347
        %v2378 = vpop.f32.mrf.mxu0
        %v2379 = vadd.f32 %v2059, %v2378
        %2380 = vdwg.mxu0
        %2381 = vmatpush.msra.mxu0 0.0
        %2382 = vmatpush.msra.mxu0 0.0
        %2383 = vmatpush.msra.mxu0 0.0
        %2384 = vmatpush.msra.mxu0 0.0
        %2385 = vmatpush.msra.mxu0 0.0
        %2386 = vmatpush.msra.mxu0 0.0
        %2387 = vmatpush.msra.mxu0 0.0
        %2388 = vmatpush.msra.mxu0 0.0
        %2389 = vmatpush.msra.mxu0 %v938
        %2390 = vmatpush.msra.mxu0 %v937
        %2391 = vmatpush.msra.mxu0 %v936
        %2392 = vmatpush.msra.mxu0 %v935
        %2393 = vmatpush.msra.mxu0 %v934
        %2394 = vmatpush.msra.mxu0 %v933
        %2395 = vmatpush.msra.mxu0 %v932
        %2396 = vmatpush.msra.mxu0 %v931
        %2397 = vmatmul.f32.gmra.mxu0 %v1369
        %v2398 = vpop.f32.mrf.mxu0
        %v2399 = vadd.f32 %v2079, %v2398
        %2400 = vdwg.mxu0
        %2401 = vmatpush.msra.mxu0 0.0
        %2402 = vmatpush.msra.mxu0 0.0
        %2403 = vmatpush.msra.mxu0 0.0
        %2404 = vmatpush.msra.mxu0 0.0
        %2405 = vmatpush.msra.mxu0 0.0
        %2406 = vmatpush.msra.mxu0 0.0
        %2407 = vmatpush.msra.mxu0 0.0
        %2408 = vmatpush.msra.mxu0 0.0
        %2409 = vmatpush.msra.mxu0 %v946
        %2410 = vmatpush.msra.mxu0 %v945
        %2411 = vmatpush.msra.mxu0 %v944
        %2412 = vmatpush.msra.mxu0 %v943
        %2413 = vmatpush.msra.mxu0 %v942
        %2414 = vmatpush.msra.mxu0 %v941
        %2415 = vmatpush.msra.mxu0 %v940
        %2416 = vmatpush.msra.mxu0 %v939
        %2417 = vmatmul.f32.gmra.mxu0 %v1391
        %v2418 = vpop.f32.mrf.mxu0
        %v2419 = vadd.f32 %v2099, %v2418
        %2420 = vdwg.mxu0
        %v2437 = vrot.slane %v1766, 7
        %vm2438 = vcmask 1041409
        %v2439 = vsel %vm2438, %v2437, %v1765
        %v2440 = vrot.slane %v1767, 6
        %vm2441 = vcmask 1042434
        %v2442 = vsel %vm2441, %v2440, %v2439
        %v2443 = vrot.slane %v1768, 5
        %vm2444 = vcmask 1043459
        %v2445 = vsel %vm2444, %v2443, %v2442
        %v2446 = vrot.slane %v1769, 4
        %vm2447 = vcmask 1044484
        %v2448 = vsel %vm2447, %v2446, %v2445
        %v2449 = vrot.slane %v1770, 3
        %vm2450 = vcmask 1045509
        %v2451 = vsel %vm2450, %v2449, %v2448
        %v2452 = vrot.slane %v1771, 2
        %vm2453 = vcmask 1046534
        %v2454 = vsel %vm2453, %v2452, %v2451
        %v2455 = vrot.slane %v1772, 1
        %vm2456 = vcmask 1047559
        %v2457 = vsel %vm2456, %v2455, %v2454
        %v2458 = vrot.slane %v1774, 7
        %v2459 = vsel %vm2438, %v2458, %v1773
        %v2460 = vrot.slane %v1775, 6
        %v2461 = vsel %vm2441, %v2460, %v2459
        %v2462 = vrot.slane %v1776, 5
        %v2463 = vsel %vm2444, %v2462, %v2461
        %v2464 = vrot.slane %v1777, 4
        %v2465 = vsel %vm2447, %v2464, %v2463
        %v2466 = vrot.slane %v1778, 3
        %v2467 = vsel %vm2450, %v2466, %v2465
        %v2468 = vrot.slane %v1779, 2
        %v2469 = vsel %vm2453, %v2468, %v2467
        %v2470 = vrot.slane %v1780, 1
        %v2471 = vsel %vm2456, %v2470, %v2469
        %v2490 = vrot.slane %v2139, 7
        %v2491 = vsel %vm2438, %v2490, %v2119
        %v2492 = vrot.slane %v2159, 6
        %v2493 = vsel %vm2441, %v2492, %v2491
        %v2494 = vrot.slane %v2179, 5
        %v2495 = vsel %vm2444, %v2494, %v2493
        %v2496 = vrot.slane %v2199, 4
        %v2497 = vsel %vm2447, %v2496, %v2495
        %v2498 = vrot.slane %v2219, 3
        %v2499 = vsel %vm2450, %v2498, %v2497
        %v2500 = vrot.slane %v2239, 2
        %v2501 = vsel %vm2453, %v2500, %v2499
        %v2502 = vrot.slane %v2259, 1
        %v2503 = vsel %vm2456, %v2502, %v2501
        %v2504 = vrot.slane %v2299, 7
        %v2505 = vsel %vm2438, %v2504, %v2279
        %v2506 = vrot.slane %v2319, 6
        %v2507 = vsel %vm2441, %v2506, %v2505
        %v2508 = vrot.slane %v2339, 5
        %v2509 = vsel %vm2444, %v2508, %v2507
        %v2510 = vrot.slane %v2359, 4
        %v2511 = vsel %vm2447, %v2510, %v2509
        %v2512 = vrot.slane %v2379, 3
        %v2513 = vsel %vm2450, %v2512, %v2511
        %v2514 = vrot.slane %v2399, 2
        %v2515 = vsel %vm2453, %v2514, %v2513
        %v2516 = vrot.slane %v2419, 1
        %v2517 = vsel %vm2456, %v2516, %v2515
        %2520 = vxpose.xlu0.b32.start [1/16] %v2457, 128
        %2521 = vxpose.xlu0.b32.cont [2/16] %v2471, 128
        %2522 = vxpose.xlu0.b32.cont [3/16] %v2503, 128
        %2523 = vxpose.xlu0.b32.cont [4/16] %v2517, 128
        %2524 = vxpose.xlu0.b32.cont [5/16] 0.0, 128
        %2525 = vxpose.xlu0.b32.cont [6/16] 0.0, 128
        %2526 = vxpose.xlu0.b32.cont [7/16] 0.0, 128
        %2527 = vxpose.xlu0.b32.cont [8/16] 0.0, 128
        %2528 = vxpose.xlu0.b32.cont [9/16] 0.0, 128
        %2529 = vxpose.xlu0.b32.cont [10/16] 0.0, 128
        %2530 = vxpose.xlu0.b32.cont [11/16] 0.0, 128
        %2531 = vxpose.xlu0.b32.cont [12/16] 0.0, 128
        %2532 = vxpose.xlu0.b32.cont [13/16] 0.0, 128
        %2533 = vxpose.xlu0.b32.cont [14/16] 0.0, 128
        %2534 = vxpose.xlu0.b32.cont [15/16] 0.0, 128
        %2535 = vxpose.xlu0.b32.end [16/16] 0.0, 128
        %v2536 = vpop.trf.xlu0
        %v2537 = vpop.trf.xlu0
        %v2538 = vpop.trf.xlu0
        %v2539 = vpop.trf.xlu0
        %v2540 = vpop.trf.xlu0
        %v2541 = vpop.trf.xlu0
        %v2542 = vpop.trf.xlu0
        %v2543 = vpop.trf.xlu0
        %v2544 = vpop.trf.xlu0
        %v2545 = vpop.trf.xlu0
        %v2546 = vpop.trf.xlu0
        %v2547 = vpop.trf.xlu0
        %v2548 = vpop.trf.xlu0
        %v2549 = vpop.trf.xlu0
        %v2550 = vpop.trf.xlu0
        %v2551 = vpop.trf.xlu0
        %vm2552 = vcmask 261120
        %v2554 = vsel %vm2552, %v2536, 0
        %v2557 = vsel %vm2552, %v2537, 0
        %v2560 = vsel %vm2552, %v2538, 0
        %v2563 = vsel %vm2552, %v2539, 0
        %v2566 = vsel %vm2552, %v2540, 0
        %v2569 = vsel %vm2552, %v2541, 0
        %v2572 = vsel %vm2552, %v2542, 0
        %v2575 = vsel %vm2552, %v2543, 0
        %2577 = vmatpush.msra.mxu0 0.0
        %2578 = vmatpush.msra.mxu0 0.0
        %2579 = vmatpush.msra.mxu0 0.0
        %2580 = vmatpush.msra.mxu0 0.0
        %2581 = vmatpush.msra.mxu0 0.0
        %2582 = vmatpush.msra.mxu0 0.0
        %2583 = vmatpush.msra.mxu0 0.0
        %2584 = vmatpush.msra.mxu0 0.0
        %2585 = vmatpush.msra.mxu0 0.0
        %2586 = vmatpush.msra.mxu0 0.0
        %2587 = vmatpush.msra.mxu0 0.0
        %2588 = vmatpush.msra.mxu0 0.0
        %2589 = vmatpush.msra.mxu0 %v690
        %2590 = vmatpush.msra.mxu0 %v689
        %2591 = vmatpush.msra.mxu0 %v688
        %2592 = vmatpush.msra.mxu0 %v687
        %2593 = vmatmul.f32.gmra.mxu0 %v2554
        %v2594 = vpop.f32.mrf.mxu0
        %v2595 = vadd.f32 0.0, %v2594
        %2596 = vmatmul.f32.gmra.mxu0 %v2557
        %v2597 = vpop.f32.mrf.mxu0
        %v2598 = vadd.f32 0.0, %v2597
        %2599 = vmatmul.f32.gmra.mxu0 %v2560
        %v2600 = vpop.f32.mrf.mxu0
        %v2601 = vadd.f32 0.0, %v2600
        %2602 = vmatmul.f32.gmra.mxu0 %v2563
        %v2603 = vpop.f32.mrf.mxu0
        %v2604 = vadd.f32 0.0, %v2603
        %2605 = vmatmul.f32.gmra.mxu0 %v2566
        %v2606 = vpop.f32.mrf.mxu0
        %v2607 = vadd.f32 0.0, %v2606
        %2608 = vmatmul.f32.gmra.mxu0 %v2569
        %v2609 = vpop.f32.mrf.mxu0
        %v2610 = vadd.f32 0.0, %v2609
        %2611 = vmatmul.f32.gmra.mxu0 %v2572
        %v2612 = vpop.f32.mrf.mxu0
        %v2613 = vadd.f32 0.0, %v2612
        %2614 = vmatmul.f32.gmra.mxu0 %v2575
        %v2615 = vpop.f32.mrf.mxu0
        %v2616 = vadd.f32 0.0, %v2615
        %2617 = vdwg.mxu0
        %v2619 = vsel %vm963, %v947, 0
        %v2622 = vsel %vm963, %v948, 0
        %v2625 = vsel %vm963, %v949, 0
        %v2628 = vsel %vm963, %v950, 0
        %v2631 = vsel %vm963, %v951, 0
        %v2634 = vsel %vm963, %v952, 0
        %v2637 = vsel %vm963, %v953, 0
        %v2640 = vsel %vm963, %v954, 0
        %2642 = vmatpush.msra.mxu0 0.0
        %2643 = vmatpush.msra.mxu0 0.0
        %2644 = vmatpush.msra.mxu0 0.0
        %2645 = vmatpush.msra.mxu0 0.0
        %2646 = vmatpush.msra.mxu0 0.0
        %2647 = vmatpush.msra.mxu0 0.0
        %2648 = vmatpush.msra.mxu0 0.0
        %2649 = vmatpush.msra.mxu0 0.0
        %2650 = vmatpush.msra.mxu0 %v681
        %2651 = vmatpush.msra.mxu0 %v678
        %2652 = vmatpush.msra.mxu0 %v675
        %2653 = vmatpush.msra.mxu0 %v672
        %2654 = vmatpush.msra.mxu0 %v669
        %2655 = vmatpush.msra.mxu0 %v666
        %2656 = vmatpush.msra.mxu0 %v663
        %2657 = vmatpush.msra.mxu0 %v660
        %2658 = vmatmul.f32.gmra.mxu0 %v2619
        %v2659 = vpop.f32.mrf.mxu0
        %v2660 = vadd.f32 0.0, %v2659
        %2661 = vmatmul.f32.gmra.mxu0 %v2622
        %v2662 = vpop.f32.mrf.mxu0
        %v2663 = vadd.f32 0.0, %v2662
        %2664 = vmatmul.f32.gmra.mxu0 %v2625
        %v2665 = vpop.f32.mrf.mxu0
        %v2666 = vadd.f32 0.0, %v2665
        %2667 = vmatmul.f32.gmra.mxu0 %v2628
        %v2668 = vpop.f32.mrf.mxu0
        %v2669 = vadd.f32 0.0, %v2668
        %2670 = vmatmul.f32.gmra.mxu0 %v2631
        %v2671 = vpop.f32.mrf.mxu0
        %v2672 = vadd.f32 0.0, %v2671
        %2673 = vmatmul.f32.gmra.mxu0 %v2634
        %v2674 = vpop.f32.mrf.mxu0
        %v2675 = vadd.f32 0.0, %v2674
        %2676 = vmatmul.f32.gmra.mxu0 %v2637
        %v2677 = vpop.f32.mrf.mxu0
        %v2678 = vadd.f32 0.0, %v2677
        %2679 = vmatmul.f32.gmra.mxu0 %v2640
        %v2680 = vpop.f32.mrf.mxu0
        %v2681 = vadd.f32 0.0, %v2680
        %2682 = vdwg.mxu0
        %v2683 = vadd.f32 %v2595, %v2660
        %v2684 = vadd.f32 %v2598, %v2663
        %v2685 = vadd.f32 %v2601, %v2666
        %v2686 = vadd.f32 %v2604, %v2669
        %v2687 = vadd.f32 %v2607, %v2672
        %v2688 = vadd.f32 %v2610, %v2675
        %v2689 = vadd.f32 %v2613, %v2678
        %v2690 = vadd.f32 %v2616, %v2681
        %2692 = vset.pattern.permute.xlu0 0
        %2693 = vperm.xlu0 %2692, %v955
        %v2694 = vpop.permute.xlu0 %2693
        %2697 = vset.pattern.permute.xlu0 0
        %2698 = vperm.xlu0 %2697, %v956
        %v2699 = vpop.permute.xlu0 %2698
        %2702 = vset.pattern.permute.xlu0 0
        %2703 = vperm.xlu0 %2702, %v957
        %v2704 = vpop.permute.xlu0 %2703
        %2707 = vset.pattern.permute.xlu0 0
        %2708 = vperm.xlu0 %2707, %v958
        %v2709 = vpop.permute.xlu0 %2708
        %2712 = vset.pattern.permute.xlu0 0
        %2713 = vperm.xlu0 %2712, %v959
        %v2714 = vpop.permute.xlu0 %2713
        %2717 = vset.pattern.permute.xlu0 0
        %2718 = vperm.xlu0 %2717, %v960
        %v2719 = vpop.permute.xlu0 %2718
        %2722 = vset.pattern.permute.xlu0 0
        %2723 = vperm.xlu0 %2722, %v961
        %v2724 = vpop.permute.xlu0 %2723
        %2727 = vset.pattern.permute.xlu0 0
        %2728 = vperm.xlu0 %2727, %v962
        %v2729 = vpop.permute.xlu0 %2728
        %v2731 = vadd.f32 %v2683, %v2694
        %v2732 = vadd.f32 %v2684, %v2699
        %v2733 = vadd.f32 %v2685, %v2704
        %v2734 = vadd.f32 %v2686, %v2709
        %v2735 = vadd.f32 %v2687, %v2714
        %v2736 = vadd.f32 %v2688, %v2719
        %v2737 = vadd.f32 %v2689, %v2724
        %v2738 = vadd.f32 %v2690, %v2729
        %v2739 = vmax.f32 %v2731, 0.0
        %v2740 = vmax.f32 %v2732, 0.0
        %v2741 = vmax.f32 %v2733, 0.0
        %v2742 = vmax.f32 %v2734, 0.0
        %v2743 = vmax.f32 %v2735, 0.0
        %v2744 = vmax.f32 %v2736, 0.0
        %v2745 = vmax.f32 %v2737, 0.0
        %v2746 = vmax.f32 %v2738, 0.0
        %s2747 = scalar_lea.vmem [#allocation9], 1024
        %v2748 = vld [vmem:[%s2747] sm:$0xff]
        %v2749 = vld [vmem:[%s2747 + $0x8] sm:$0xff]
        %v2750 = vld [vmem:[%s2747 + $0x10] sm:$0xff]
        %v2751 = vld [vmem:[%s2747 + $0x18] sm:$0xff]
        %v2752 = vld [vmem:[%s2747 + $0x20] sm:$0xff]
        %v2753 = vld [vmem:[%s2747 + $0x28] sm:$0xff]
        %v2754 = vld [vmem:[%s2747 + $0x30] sm:$0xff]
        %v2755 = vld [vmem:[%s2747 + $0x38] sm:$0xff]
        %v2756 = vld [vmem:[%s2747 + $0x40] sm:$0xff]
        %v2757 = vld [vmem:[%s2747 + $0x48] sm:$0xff]
        %v2758 = vld [vmem:[%s2747 + $0x50] sm:$0xff]
        %v2759 = vld [vmem:[%s2747 + $0x58] sm:$0xff]
        %v2760 = vld [vmem:[%s2747 + $0x60] sm:$0xff]
        %v2761 = vld [vmem:[%s2747 + $0x68] sm:$0xff]
        %v2762 = vld [vmem:[%s2747 + $0x70] sm:$0xff]
        %v2763 = vld [vmem:[%s2747 + $0x78] sm:$0xff]
        %v2764 = vld [vmem:[%s2747 + $0x80] sm:$0xff]
        %v2765 = vld [vmem:[%s2747 + $0x88] sm:$0xff]
        %v2766 = vld [vmem:[%s2747 + $0x90] sm:$0xff]
        %v2767 = vld [vmem:[%s2747 + $0x98] sm:$0xff]
        %v2768 = vld [vmem:[%s2747 + $0xa0] sm:$0xff]
        %v2769 = vld [vmem:[%s2747 + $0xa8] sm:$0xff]
        %v2770 = vld [vmem:[%s2747 + $0xb0] sm:$0xff]
        %v2771 = vld [vmem:[%s2747 + $0xb8] sm:$0xff]
        %v2772 = vld [vmem:[%s2747 + $0xc0] sm:$0xff]
        %v2773 = vld [vmem:[%s2747 + $0xc8] sm:$0xff]
        %v2774 = vld [vmem:[%s2747 + $0xd0] sm:$0xff]
        %v2775 = vld [vmem:[%s2747 + $0xd8] sm:$0xff]
        %v2776 = vld [vmem:[%s2747 + $0xe0] sm:$0xff]
        %v2777 = vld [vmem:[%s2747 + $0xe8] sm:$0xff]
        %v2778 = vld [vmem:[%s2747 + $0xf0] sm:$0xff]
        %v2779 = vld [vmem:[%s2747 + $0xf8] sm:$0xff]
        %v2780 = vld [vmem:[%s2747 + $0x100] sm:$0xff]
        %v2781 = vld [vmem:[%s2747 + $0x108] sm:$0xff]
        %v2782 = vld [vmem:[%s2747 + $0x110] sm:$0xff]
        %v2783 = vld [vmem:[%s2747 + $0x118] sm:$0xff]
        %v2784 = vld [vmem:[%s2747 + $0x120] sm:$0xff]
        %v2785 = vld [vmem:[%s2747 + $0x128] sm:$0xff]
        %v2786 = vld [vmem:[%s2747 + $0x130] sm:$0xff]
        %v2787 = vld [vmem:[%s2747 + $0x138] sm:$0xff]
        %v2788 = vld [vmem:[%s2747 + $0x140] sm:$0xff]
        %v2789 = vld [vmem:[%s2747 + $0x148] sm:$0xff]
        %v2790 = vld [vmem:[%s2747 + $0x150] sm:$0xff]
        %v2791 = vld [vmem:[%s2747 + $0x158] sm:$0xff]
        %v2792 = vld [vmem:[%s2747 + $0x160] sm:$0xff]
        %v2793 = vld [vmem:[%s2747 + $0x168] sm:$0xff]
        %v2794 = vld [vmem:[%s2747 + $0x170] sm:$0xff]
        %v2795 = vld [vmem:[%s2747 + $0x178] sm:$0xff]
        %v2796 = vld [vmem:[%s2747 + $0x180] sm:$0xff]
        %v2797 = vld [vmem:[%s2747 + $0x188] sm:$0xff]
        %v2798 = vld [vmem:[%s2747 + $0x190] sm:$0xff]
        %v2799 = vld [vmem:[%s2747 + $0x198] sm:$0xff]
        %v2800 = vld [vmem:[%s2747 + $0x1a0] sm:$0xff]
        %v2801 = vld [vmem:[%s2747 + $0x1a8] sm:$0xff]
        %v2802 = vld [vmem:[%s2747 + $0x1b0] sm:$0xff]
        %v2803 = vld [vmem:[%s2747 + $0x1b8] sm:$0xff]
        %v2804 = vld [vmem:[%s2747 + $0x1c0] sm:$0xff]
        %v2805 = vld [vmem:[%s2747 + $0x1c8] sm:$0xff]
        %v2806 = vld [vmem:[%s2747 + $0x1d0] sm:$0xff]
        %v2807 = vld [vmem:[%s2747 + $0x1d8] sm:$0xff]
        %v2808 = vld [vmem:[%s2747 + $0x1e0] sm:$0xff]
        %v2809 = vld [vmem:[%s2747 + $0x1e8] sm:$0xff]
        %v2810 = vld [vmem:[%s2747 + $0x1f0] sm:$0xff]
        %v2811 = vld [vmem:[%s2747 + $0x1f8] sm:$0xff]
        %v2812 = vld [vmem:[%s2747 + $0x200] sm:$0xff]
        %v2813 = vld [vmem:[%s2747 + $0x208] sm:$0xff]
        %v2814 = vld [vmem:[%s2747 + $0x210] sm:$0xff]
        %v2815 = vld [vmem:[%s2747 + $0x218] sm:$0xff]
        %v2816 = vld [vmem:[%s2747 + $0x220] sm:$0xff]
        %v2817 = vld [vmem:[%s2747 + $0x228] sm:$0xff]
        %v2818 = vld [vmem:[%s2747 + $0x230] sm:$0xff]
        %v2819 = vld [vmem:[%s2747 + $0x238] sm:$0xff]
        %v2820 = vld [vmem:[%s2747 + $0x240] sm:$0xff]
        %v2821 = vld [vmem:[%s2747 + $0x248] sm:$0xff]
        %v2822 = vld [vmem:[%s2747 + $0x250] sm:$0xff]
        %v2823 = vld [vmem:[%s2747 + $0x258] sm:$0xff]
        %v2824 = vld [vmem:[%s2747 + $0x260] sm:$0xff]
        %v2825 = vld [vmem:[%s2747 + $0x268] sm:$0xff]
        %v2826 = vld [vmem:[%s2747 + $0x270] sm:$0xff]
        %v2827 = vld [vmem:[%s2747 + $0x278] sm:$0xff]
        %v2828 = vld [vmem:[%s2747 + $0x280] sm:$0xff]
        %v2829 = vld [vmem:[%s2747 + $0x288] sm:$0xff]
        %v2830 = vld [vmem:[%s2747 + $0x290] sm:$0xff]
        %v2831 = vld [vmem:[%s2747 + $0x298] sm:$0xff]
        %v2832 = vld [vmem:[%s2747 + $0x2a0] sm:$0xff]
        %v2833 = vld [vmem:[%s2747 + $0x2a8] sm:$0xff]
        %v2834 = vld [vmem:[%s2747 + $0x2b0] sm:$0xff]
        %v2835 = vld [vmem:[%s2747 + $0x2b8] sm:$0xff]
        %v2836 = vld [vmem:[%s2747 + $0x2c0] sm:$0xff]
        %v2837 = vld [vmem:[%s2747 + $0x2c8] sm:$0xff]
        %v2838 = vld [vmem:[%s2747 + $0x2d0] sm:$0xff]
        %v2839 = vld [vmem:[%s2747 + $0x2d8] sm:$0xff]
        %v2840 = vld [vmem:[%s2747 + $0x2e0] sm:$0xff]
        %v2841 = vld [vmem:[%s2747 + $0x2e8] sm:$0xff]
        %v2842 = vld [vmem:[%s2747 + $0x2f0] sm:$0xff]
        %v2843 = vld [vmem:[%s2747 + $0x2f8] sm:$0xff]
        %v2844 = vld [vmem:[%s2747 + $0x300] sm:$0xff]
        %v2845 = vld [vmem:[%s2747 + $0x308] sm:$0xff]
        %v2846 = vld [vmem:[%s2747 + $0x310] sm:$0xff]
        %v2847 = vld [vmem:[%s2747 + $0x318] sm:$0xff]
        %v2848 = vld [vmem:[%s2747 + $0x320] sm:$0xff]
        %v2849 = vld [vmem:[%s2747 + $0x328] sm:$0xff]
        %v2850 = vld [vmem:[%s2747 + $0x330] sm:$0xff]
        %v2851 = vld [vmem:[%s2747 + $0x338] sm:$0xff]
        %v2852 = vld [vmem:[%s2747 + $0x340] sm:$0xff]
        %v2853 = vld [vmem:[%s2747 + $0x348] sm:$0xff]
        %v2854 = vld [vmem:[%s2747 + $0x350] sm:$0xff]
        %v2855 = vld [vmem:[%s2747 + $0x358] sm:$0xff]
        %v2856 = vld [vmem:[%s2747 + $0x360] sm:$0xff]
        %v2857 = vld [vmem:[%s2747 + $0x368] sm:$0xff]
        %v2858 = vld [vmem:[%s2747 + $0x370] sm:$0xff]
        %v2859 = vld [vmem:[%s2747 + $0x378] sm:$0xff]
        %v2860 = vld [vmem:[%s2747 + $0x380] sm:$0xff]
        %v2861 = vld [vmem:[%s2747 + $0x388] sm:$0xff]
        %v2862 = vld [vmem:[%s2747 + $0x390] sm:$0xff]
        %v2863 = vld [vmem:[%s2747 + $0x398] sm:$0xff]
        %v2864 = vld [vmem:[%s2747 + $0x3a0] sm:$0xff]
        %v2865 = vld [vmem:[%s2747 + $0x3a8] sm:$0xff]
        %v2866 = vld [vmem:[%s2747 + $0x3b0] sm:$0xff]
        %v2867 = vld [vmem:[%s2747 + $0x3b8] sm:$0xff]
        %v2868 = vld [vmem:[%s2747 + $0x3c0] sm:$0xff]
        %v2869 = vld [vmem:[%s2747 + $0x3c8] sm:$0xff]
        %v2870 = vld [vmem:[%s2747 + $0x3d0] sm:$0xff]
        %v2871 = vld [vmem:[%s2747 + $0x3d8] sm:$0xff]
        %v2872 = vld [vmem:[%s2747 + $0x3e0] sm:$0xff]
        %v2873 = vld [vmem:[%s2747 + $0x3e8] sm:$0xff]
        %v2874 = vld [vmem:[%s2747 + $0x3f0] sm:$0xff]
        %v2875 = vld [vmem:[%s2747 + $0x3f8] sm:$0xff]
        %s2876 = scalar_lea.vmem [#allocation11], 1024
        %v2877 = vld [vmem:[%s2876] sm:$0xff]
        %v2878 = vld [vmem:[%s2876 + $0x8] sm:$0xff]
        %v2879 = vld [vmem:[%s2876 + $0x10] sm:$0xff]
        %v2880 = vld [vmem:[%s2876 + $0x18] sm:$0xff]
        %v2881 = vld [vmem:[%s2876 + $0x20] sm:$0xff]
        %v2882 = vld [vmem:[%s2876 + $0x28] sm:$0xff]
        %v2883 = vld [vmem:[%s2876 + $0x30] sm:$0xff]
        %v2884 = vld [vmem:[%s2876 + $0x38] sm:$0xff]
        %v2885 = vld [vmem:[%s2876 + $0x40] sm:$0xff]
        %v2886 = vld [vmem:[%s2876 + $0x48] sm:$0xff]
        %v2887 = vld [vmem:[%s2876 + $0x50] sm:$0xff]
        %v2888 = vld [vmem:[%s2876 + $0x58] sm:$0xff]
        %v2889 = vld [vmem:[%s2876 + $0x60] sm:$0xff]
        %v2890 = vld [vmem:[%s2876 + $0x68] sm:$0xff]
        %v2891 = vld [vmem:[%s2876 + $0x70] sm:$0xff]
        %v2892 = vld [vmem:[%s2876 + $0x78] sm:$0xff]
        %v2893 = vld [vmem:[%s2876 + $0x80] sm:$0xff]
        %v2894 = vld [vmem:[%s2876 + $0x88] sm:$0xff]
        %v2895 = vld [vmem:[%s2876 + $0x90] sm:$0xff]
        %v2896 = vld [vmem:[%s2876 + $0x98] sm:$0xff]
        %v2897 = vld [vmem:[%s2876 + $0xa0] sm:$0xff]
        %v2898 = vld [vmem:[%s2876 + $0xa8] sm:$0xff]
        %v2899 = vld [vmem:[%s2876 + $0xb0] sm:$0xff]
        %v2900 = vld [vmem:[%s2876 + $0xb8] sm:$0xff]
        %v2901 = vld [vmem:[%s2876 + $0xc0] sm:$0xff]
        %v2902 = vld [vmem:[%s2876 + $0xc8] sm:$0xff]
        %v2903 = vld [vmem:[%s2876 + $0xd0] sm:$0xff]
        %v2904 = vld [vmem:[%s2876 + $0xd8] sm:$0xff]
        %v2905 = vld [vmem:[%s2876 + $0xe0] sm:$0xff]
        %v2906 = vld [vmem:[%s2876 + $0xe8] sm:$0xff]
        %v2907 = vld [vmem:[%s2876 + $0xf0] sm:$0xff]
        %v2908 = vld [vmem:[%s2876 + $0xf8] sm:$0xff]
        %v2909 = vld [vmem:[%s2876 + $0x100] sm:$0xff]
        %v2910 = vld [vmem:[%s2876 + $0x108] sm:$0xff]
        %v2911 = vld [vmem:[%s2876 + $0x110] sm:$0xff]
        %v2912 = vld [vmem:[%s2876 + $0x118] sm:$0xff]
        %v2913 = vld [vmem:[%s2876 + $0x120] sm:$0xff]
        %v2914 = vld [vmem:[%s2876 + $0x128] sm:$0xff]
        %v2915 = vld [vmem:[%s2876 + $0x130] sm:$0xff]
        %v2916 = vld [vmem:[%s2876 + $0x138] sm:$0xff]
        %v2917 = vld [vmem:[%s2876 + $0x140] sm:$0xff]
        %v2918 = vld [vmem:[%s2876 + $0x148] sm:$0xff]
        %v2919 = vld [vmem:[%s2876 + $0x150] sm:$0xff]
        %v2920 = vld [vmem:[%s2876 + $0x158] sm:$0xff]
        %v2921 = vld [vmem:[%s2876 + $0x160] sm:$0xff]
        %v2922 = vld [vmem:[%s2876 + $0x168] sm:$0xff]
        %v2923 = vld [vmem:[%s2876 + $0x170] sm:$0xff]
        %v2924 = vld [vmem:[%s2876 + $0x178] sm:$0xff]
        %v2925 = vld [vmem:[%s2876 + $0x180] sm:$0xff]
        %v2926 = vld [vmem:[%s2876 + $0x188] sm:$0xff]
        %v2927 = vld [vmem:[%s2876 + $0x190] sm:$0xff]
        %v2928 = vld [vmem:[%s2876 + $0x198] sm:$0xff]
        %v2929 = vld [vmem:[%s2876 + $0x1a0] sm:$0xff]
        %v2930 = vld [vmem:[%s2876 + $0x1a8] sm:$0xff]
        %v2931 = vld [vmem:[%s2876 + $0x1b0] sm:$0xff]
        %v2932 = vld [vmem:[%s2876 + $0x1b8] sm:$0xff]
        %v2933 = vld [vmem:[%s2876 + $0x1c0] sm:$0xff]
        %v2934 = vld [vmem:[%s2876 + $0x1c8] sm:$0xff]
        %v2935 = vld [vmem:[%s2876 + $0x1d0] sm:$0xff]
        %v2936 = vld [vmem:[%s2876 + $0x1d8] sm:$0xff]
        %v2937 = vld [vmem:[%s2876 + $0x1e0] sm:$0xff]
        %v2938 = vld [vmem:[%s2876 + $0x1e8] sm:$0xff]
        %v2939 = vld [vmem:[%s2876 + $0x1f0] sm:$0xff]
        %v2940 = vld [vmem:[%s2876 + $0x1f8] sm:$0xff]
        %v2941 = vld [vmem:[%s2876 + $0x200] sm:$0xff]
        %v2942 = vld [vmem:[%s2876 + $0x208] sm:$0xff]
        %v2943 = vld [vmem:[%s2876 + $0x210] sm:$0xff]
        %v2944 = vld [vmem:[%s2876 + $0x218] sm:$0xff]
        %v2945 = vld [vmem:[%s2876 + $0x220] sm:$0xff]
        %v2946 = vld [vmem:[%s2876 + $0x228] sm:$0xff]
        %v2947 = vld [vmem:[%s2876 + $0x230] sm:$0xff]
        %v2948 = vld [vmem:[%s2876 + $0x238] sm:$0xff]
        %v2949 = vld [vmem:[%s2876 + $0x240] sm:$0xff]
        %v2950 = vld [vmem:[%s2876 + $0x248] sm:$0xff]
        %v2951 = vld [vmem:[%s2876 + $0x250] sm:$0xff]
        %v2952 = vld [vmem:[%s2876 + $0x258] sm:$0xff]
        %v2953 = vld [vmem:[%s2876 + $0x260] sm:$0xff]
        %v2954 = vld [vmem:[%s2876 + $0x268] sm:$0xff]
        %v2955 = vld [vmem:[%s2876 + $0x270] sm:$0xff]
        %v2956 = vld [vmem:[%s2876 + $0x278] sm:$0xff]
        %v2957 = vld [vmem:[%s2876 + $0x280] sm:$0xff]
        %v2958 = vld [vmem:[%s2876 + $0x288] sm:$0xff]
        %v2959 = vld [vmem:[%s2876 + $0x290] sm:$0xff]
        %v2960 = vld [vmem:[%s2876 + $0x298] sm:$0xff]
        %v2961 = vld [vmem:[%s2876 + $0x2a0] sm:$0xff]
        %v2962 = vld [vmem:[%s2876 + $0x2a8] sm:$0xff]
        %v2963 = vld [vmem:[%s2876 + $0x2b0] sm:$0xff]
        %v2964 = vld [vmem:[%s2876 + $0x2b8] sm:$0xff]
        %v2965 = vld [vmem:[%s2876 + $0x2c0] sm:$0xff]
        %v2966 = vld [vmem:[%s2876 + $0x2c8] sm:$0xff]
        %v2967 = vld [vmem:[%s2876 + $0x2d0] sm:$0xff]
        %v2968 = vld [vmem:[%s2876 + $0x2d8] sm:$0xff]
        %v2969 = vld [vmem:[%s2876 + $0x2e0] sm:$0xff]
        %v2970 = vld [vmem:[%s2876 + $0x2e8] sm:$0xff]
        %v2971 = vld [vmem:[%s2876 + $0x2f0] sm:$0xff]
        %v2972 = vld [vmem:[%s2876 + $0x2f8] sm:$0xff]
        %v2973 = vld [vmem:[%s2876 + $0x300] sm:$0xff]
        %v2974 = vld [vmem:[%s2876 + $0x308] sm:$0xff]
        %v2975 = vld [vmem:[%s2876 + $0x310] sm:$0xff]
        %v2976 = vld [vmem:[%s2876 + $0x318] sm:$0xff]
        %v2977 = vld [vmem:[%s2876 + $0x320] sm:$0xff]
        %v2978 = vld [vmem:[%s2876 + $0x328] sm:$0xff]
        %v2979 = vld [vmem:[%s2876 + $0x330] sm:$0xff]
        %v2980 = vld [vmem:[%s2876 + $0x338] sm:$0xff]
        %v2981 = vld [vmem:[%s2876 + $0x340] sm:$0xff]
        %v2982 = vld [vmem:[%s2876 + $0x348] sm:$0xff]
        %v2983 = vld [vmem:[%s2876 + $0x350] sm:$0xff]
        %v2984 = vld [vmem:[%s2876 + $0x358] sm:$0xff]
        %v2985 = vld [vmem:[%s2876 + $0x360] sm:$0xff]
        %v2986 = vld [vmem:[%s2876 + $0x368] sm:$0xff]
        %v2987 = vld [vmem:[%s2876 + $0x370] sm:$0xff]
        %v2988 = vld [vmem:[%s2876 + $0x378] sm:$0xff]
        %v2989 = vld [vmem:[%s2876 + $0x380] sm:$0xff]
        %v2990 = vld [vmem:[%s2876 + $0x388] sm:$0xff]
        %v2991 = vld [vmem:[%s2876 + $0x390] sm:$0xff]
        %v2992 = vld [vmem:[%s2876 + $0x398] sm:$0xff]
        %v2993 = vld [vmem:[%s2876 + $0x3a0] sm:$0xff]
        %v2994 = vld [vmem:[%s2876 + $0x3a8] sm:$0xff]
        %v2995 = vld [vmem:[%s2876 + $0x3b0] sm:$0xff]
        %v2996 = vld [vmem:[%s2876 + $0x3b8] sm:$0xff]
        %v2997 = vld [vmem:[%s2876 + $0x3c0] sm:$0xff]
        %v2998 = vld [vmem:[%s2876 + $0x3c8] sm:$0xff]
        %v2999 = vld [vmem:[%s2876 + $0x3d0] sm:$0xff]
        %v3000 = vld [vmem:[%s2876 + $0x3d8] sm:$0xff]
        %v3001 = vld [vmem:[%s2876 + $0x3e0] sm:$0xff]
        %v3002 = vld [vmem:[%s2876 + $0x3e8] sm:$0xff]
        %v3003 = vld [vmem:[%s2876 + $0x3f0] sm:$0xff]
        %v3004 = vld [vmem:[%s2876 + $0x3f8] sm:$0xff]
        %s3005 = scalar_lea.vmem [#allocation12], 64
        %v3006 = vld [vmem:[%s3005] sm:$0xff]
        %v3007 = vld [vmem:[%s3005 + $0x8] sm:$0xff]
        %v3008 = vld [vmem:[%s3005 + $0x10] sm:$0xff]
        %v3009 = vld [vmem:[%s3005 + $0x18] sm:$0xff]
        %v3010 = vld [vmem:[%s3005 + $0x20] sm:$0xff]
        %v3011 = vld [vmem:[%s3005 + $0x28] sm:$0xff]
        %v3012 = vld [vmem:[%s3005 + $0x30] sm:$0xff]
        %v3013 = vld [vmem:[%s3005 + $0x38] sm:$0xff]
        %s3014 = scalar_lea.vmem %s6, 64
        %v3015 = vld [vmem:[%s3014] sm:$0xff]
        %v3016 = vld [vmem:[%s3014 + $0x8] sm:$0xff]
        %v3017 = vld [vmem:[%s3014 + $0x10] sm:$0xff]
        %v3018 = vld [vmem:[%s3014 + $0x18] sm:$0xff]
        %v3019 = vld [vmem:[%s3014 + $0x20] sm:$0xff]
        %v3020 = vld [vmem:[%s3014 + $0x28] sm:$0xff]
        %v3021 = vld [vmem:[%s3014 + $0x30] sm:$0xff]
        %v3022 = vld [vmem:[%s3014 + $0x38] sm:$0xff]
        %v3024 = vsel %vm963, %v2739, 0
        %v3027 = vsel %vm963, %v2740, 0
        %v3030 = vsel %vm963, %v2741, 0
        %v3033 = vsel %vm963, %v2742, 0
        %v3036 = vsel %vm963, %v2743, 0
        %v3039 = vsel %vm963, %v2744, 0
        %v3042 = vsel %vm963, %v2745, 0
        %v3045 = vsel %vm963, %v2746, 0
        %3047 = vmatpush.xpose.msra.mxu0 0.0
        %3048 = vmatpush.xpose.msra.mxu0 0.0
        %3049 = vmatpush.xpose.msra.mxu0 0.0
        %3050 = vmatpush.xpose.msra.mxu0 0.0
        %3051 = vmatpush.xpose.msra.mxu0 0.0
        %3052 = vmatpush.xpose.msra.mxu0 0.0
        %3053 = vmatpush.xpose.msra.mxu0 0.0
        %3054 = vmatpush.xpose.msra.mxu0 0.0
        %3055 = vmatpush.xpose.msra.mxu0 %v3045
        %3056 = vmatpush.xpose.msra.mxu0 %v3042
        %3057 = vmatpush.xpose.msra.mxu0 %v3039
        %3058 = vmatpush.xpose.msra.mxu0 %v3036
        %3059 = vmatpush.xpose.msra.mxu0 %v3033
        %3060 = vmatpush.xpose.msra.mxu0 %v3030
        %3061 = vmatpush.xpose.msra.mxu0 %v3027
        %3062 = vmatpush.xpose.msra.mxu0 %v3024
        %3063 = vmatmul.f32.gmra.mxu0 %v965
        %v3064 = vpop.f32.mrf.mxu0
        %v3065 = vadd.f32 0.0, %v3064
        %3066 = vmatmul.f32.gmra.mxu0 %v968
        %v3067 = vpop.f32.mrf.mxu0
        %v3068 = vadd.f32 0.0, %v3067
        %3069 = vmatmul.f32.gmra.mxu0 %v971
        %v3070 = vpop.f32.mrf.mxu0
        %v3071 = vadd.f32 0.0, %v3070
        %3072 = vmatmul.f32.gmra.mxu0 %v974
        %v3073 = vpop.f32.mrf.mxu0
        %v3074 = vadd.f32 0.0, %v3073
        %3075 = vdwg.mxu0
        %v3078 = vrot.slane %v3065, 1
        %v3079 = vrot.slane %v3065, 2
        %v3080 = vrot.slane %v3065, 3
        %v3081 = vrot.slane %v3065, 4
        %v3082 = vrot.slane %v3065, 5
        %v3083 = vrot.slane %v3065, 6
        %v3084 = vrot.slane %v3065, 7
        %v3085 = vrot.slane %v3068, 1
        %v3086 = vrot.slane %v3068, 2
        %v3087 = vrot.slane %v3068, 3
        %v3088 = vrot.slane %v3068, 4
        %v3089 = vrot.slane %v3068, 5
        %v3090 = vrot.slane %v3068, 6
        %v3091 = vrot.slane %v3068, 7
        %v3094 = vrot.slane %v3071, 1
        %v3095 = vrot.slane %v3071, 2
        %v3096 = vrot.slane %v3071, 3
        %v3097 = vrot.slane %v3071, 4
        %v3098 = vrot.slane %v3071, 5
        %v3099 = vrot.slane %v3071, 6
        %v3100 = vrot.slane %v3071, 7
        %v3101 = vrot.slane %v3074, 1
        %v3102 = vrot.slane %v3074, 2
        %v3103 = vrot.slane %v3074, 3
        %v3104 = vrot.slane %v3074, 4
        %v3105 = vrot.slane %v3074, 5
        %v3106 = vrot.slane %v3074, 6
        %v3107 = vrot.slane %v3074, 7
        %v3108 = vsel %vm963, %v3065, 0
        %3110 = vmatpush.msra.mxu0 0.0
        %3111 = vmatpush.msra.mxu0 0.0
        %3112 = vmatpush.msra.mxu0 0.0
        %3113 = vmatpush.msra.mxu0 0.0
        %3114 = vmatpush.msra.mxu0 0.0
        %3115 = vmatpush.msra.mxu0 0.0
        %3116 = vmatpush.msra.mxu0 0.0
        %3117 = vmatpush.msra.mxu0 0.0
        %3118 = vmatpush.msra.mxu0 %v2755
        %3119 = vmatpush.msra.mxu0 %v2754
        %3120 = vmatpush.msra.mxu0 %v2753
        %3121 = vmatpush.msra.mxu0 %v2752
        %3122 = vmatpush.msra.mxu0 %v2751
        %3123 = vmatpush.msra.mxu0 %v2750
        %3124 = vmatpush.msra.mxu0 %v2749
        %3125 = vmatpush.msra.mxu0 %v2748
        %3126 = vmatmul.f32.gmra.mxu0 %v3108
        %v3127 = vpop.f32.mrf.mxu0
        %v3128 = vadd.f32 0.0, %v3127
        %3129 = vdwg.mxu0
        %v3130 = vsel %vm963, %v3078, 0
        %3132 = vmatpush.msra.mxu0 0.0
        %3133 = vmatpush.msra.mxu0 0.0
        %3134 = vmatpush.msra.mxu0 0.0
        %3135 = vmatpush.msra.mxu0 0.0
        %3136 = vmatpush.msra.mxu0 0.0
        %3137 = vmatpush.msra.mxu0 0.0
        %3138 = vmatpush.msra.mxu0 0.0
        %3139 = vmatpush.msra.mxu0 0.0
        %3140 = vmatpush.msra.mxu0 %v2763
        %3141 = vmatpush.msra.mxu0 %v2762
        %3142 = vmatpush.msra.mxu0 %v2761
        %3143 = vmatpush.msra.mxu0 %v2760
        %3144 = vmatpush.msra.mxu0 %v2759
        %3145 = vmatpush.msra.mxu0 %v2758
        %3146 = vmatpush.msra.mxu0 %v2757
        %3147 = vmatpush.msra.mxu0 %v2756
        %3148 = vmatmul.f32.gmra.mxu0 %v3130
        %v3149 = vpop.f32.mrf.mxu0
        %v3150 = vadd.f32 0.0, %v3149
        %3151 = vdwg.mxu0
        %v3152 = vsel %vm963, %v3079, 0
        %3154 = vmatpush.msra.mxu0 0.0
        %3155 = vmatpush.msra.mxu0 0.0
        %3156 = vmatpush.msra.mxu0 0.0
        %3157 = vmatpush.msra.mxu0 0.0
        %3158 = vmatpush.msra.mxu0 0.0
        %3159 = vmatpush.msra.mxu0 0.0
        %3160 = vmatpush.msra.mxu0 0.0
        %3161 = vmatpush.msra.mxu0 0.0
        %3162 = vmatpush.msra.mxu0 %v2771
        %3163 = vmatpush.msra.mxu0 %v2770
        %3164 = vmatpush.msra.mxu0 %v2769
        %3165 = vmatpush.msra.mxu0 %v2768
        %3166 = vmatpush.msra.mxu0 %v2767
        %3167 = vmatpush.msra.mxu0 %v2766
        %3168 = vmatpush.msra.mxu0 %v2765
        %3169 = vmatpush.msra.mxu0 %v2764
        %3170 = vmatmul.f32.gmra.mxu0 %v3152
        %v3171 = vpop.f32.mrf.mxu0
        %v3172 = vadd.f32 0.0, %v3171
        %3173 = vdwg.mxu0
        %v3174 = vsel %vm963, %v3080, 0
        %3176 = vmatpush.msra.mxu0 0.0
        %3177 = vmatpush.msra.mxu0 0.0
        %3178 = vmatpush.msra.mxu0 0.0
        %3179 = vmatpush.msra.mxu0 0.0
        %3180 = vmatpush.msra.mxu0 0.0
        %3181 = vmatpush.msra.mxu0 0.0
        %3182 = vmatpush.msra.mxu0 0.0
        %3183 = vmatpush.msra.mxu0 0.0
        %3184 = vmatpush.msra.mxu0 %v2779
        %3185 = vmatpush.msra.mxu0 %v2778
        %3186 = vmatpush.msra.mxu0 %v2777
        %3187 = vmatpush.msra.mxu0 %v2776
        %3188 = vmatpush.msra.mxu0 %v2775
        %3189 = vmatpush.msra.mxu0 %v2774
        %3190 = vmatpush.msra.mxu0 %v2773
        %3191 = vmatpush.msra.mxu0 %v2772
        %3192 = vmatmul.f32.gmra.mxu0 %v3174
        %v3193 = vpop.f32.mrf.mxu0
        %v3194 = vadd.f32 0.0, %v3193
        %3195 = vdwg.mxu0
        %v3196 = vsel %vm963, %v3081, 0
        %3198 = vmatpush.msra.mxu0 0.0
        %3199 = vmatpush.msra.mxu0 0.0
        %3200 = vmatpush.msra.mxu0 0.0
        %3201 = vmatpush.msra.mxu0 0.0
        %3202 = vmatpush.msra.mxu0 0.0
        %3203 = vmatpush.msra.mxu0 0.0
        %3204 = vmatpush.msra.mxu0 0.0
        %3205 = vmatpush.msra.mxu0 0.0
        %3206 = vmatpush.msra.mxu0 %v2787
        %3207 = vmatpush.msra.mxu0 %v2786
        %3208 = vmatpush.msra.mxu0 %v2785
        %3209 = vmatpush.msra.mxu0 %v2784
        %3210 = vmatpush.msra.mxu0 %v2783
        %3211 = vmatpush.msra.mxu0 %v2782
        %3212 = vmatpush.msra.mxu0 %v2781
        %3213 = vmatpush.msra.mxu0 %v2780
        %3214 = vmatmul.f32.gmra.mxu0 %v3196
        %v3215 = vpop.f32.mrf.mxu0
        %v3216 = vadd.f32 0.0, %v3215
        %3217 = vdwg.mxu0
        %v3218 = vsel %vm963, %v3082, 0
        %3220 = vmatpush.msra.mxu0 0.0
        %3221 = vmatpush.msra.mxu0 0.0
        %3222 = vmatpush.msra.mxu0 0.0
        %3223 = vmatpush.msra.mxu0 0.0
        %3224 = vmatpush.msra.mxu0 0.0
        %3225 = vmatpush.msra.mxu0 0.0
        %3226 = vmatpush.msra.mxu0 0.0
        %3227 = vmatpush.msra.mxu0 0.0
        %3228 = vmatpush.msra.mxu0 %v2795
        %3229 = vmatpush.msra.mxu0 %v2794
        %3230 = vmatpush.msra.mxu0 %v2793
        %3231 = vmatpush.msra.mxu0 %v2792
        %3232 = vmatpush.msra.mxu0 %v2791
        %3233 = vmatpush.msra.mxu0 %v2790
        %3234 = vmatpush.msra.mxu0 %v2789
        %3235 = vmatpush.msra.mxu0 %v2788
        %3236 = vmatmul.f32.gmra.mxu0 %v3218
        %v3237 = vpop.f32.mrf.mxu0
        %v3238 = vadd.f32 0.0, %v3237
        %3239 = vdwg.mxu0
        %v3240 = vsel %vm963, %v3083, 0
        %3242 = vmatpush.msra.mxu0 0.0
        %3243 = vmatpush.msra.mxu0 0.0
        %3244 = vmatpush.msra.mxu0 0.0
        %3245 = vmatpush.msra.mxu0 0.0
        %3246 = vmatpush.msra.mxu0 0.0
        %3247 = vmatpush.msra.mxu0 0.0
        %3248 = vmatpush.msra.mxu0 0.0
        %3249 = vmatpush.msra.mxu0 0.0
        %3250 = vmatpush.msra.mxu0 %v2803
        %3251 = vmatpush.msra.mxu0 %v2802
        %3252 = vmatpush.msra.mxu0 %v2801
        %3253 = vmatpush.msra.mxu0 %v2800
        %3254 = vmatpush.msra.mxu0 %v2799
        %3255 = vmatpush.msra.mxu0 %v2798
        %3256 = vmatpush.msra.mxu0 %v2797
        %3257 = vmatpush.msra.mxu0 %v2796
        %3258 = vmatmul.f32.gmra.mxu0 %v3240
        %v3259 = vpop.f32.mrf.mxu0
        %v3260 = vadd.f32 0.0, %v3259
        %3261 = vdwg.mxu0
        %v3262 = vsel %vm963, %v3084, 0
        %3264 = vmatpush.msra.mxu0 0.0
        %3265 = vmatpush.msra.mxu0 0.0
        %3266 = vmatpush.msra.mxu0 0.0
        %3267 = vmatpush.msra.mxu0 0.0
        %3268 = vmatpush.msra.mxu0 0.0
        %3269 = vmatpush.msra.mxu0 0.0
        %3270 = vmatpush.msra.mxu0 0.0
        %3271 = vmatpush.msra.mxu0 0.0
        %3272 = vmatpush.msra.mxu0 %v2811
        %3273 = vmatpush.msra.mxu0 %v2810
        %3274 = vmatpush.msra.mxu0 %v2809
        %3275 = vmatpush.msra.mxu0 %v2808
        %3276 = vmatpush.msra.mxu0 %v2807
        %3277 = vmatpush.msra.mxu0 %v2806
        %3278 = vmatpush.msra.mxu0 %v2805
        %3279 = vmatpush.msra.mxu0 %v2804
        %3280 = vmatmul.f32.gmra.mxu0 %v3262
        %v3281 = vpop.f32.mrf.mxu0
        %v3282 = vadd.f32 0.0, %v3281
        %3283 = vdwg.mxu0
        %v3284 = vsel %vm963, %v3068, 0
        %3286 = vmatpush.msra.mxu0 0.0
        %3287 = vmatpush.msra.mxu0 0.0
        %3288 = vmatpush.msra.mxu0 0.0
        %3289 = vmatpush.msra.mxu0 0.0
        %3290 = vmatpush.msra.mxu0 0.0
        %3291 = vmatpush.msra.mxu0 0.0
        %3292 = vmatpush.msra.mxu0 0.0
        %3293 = vmatpush.msra.mxu0 0.0
        %3294 = vmatpush.msra.mxu0 %v2819
        %3295 = vmatpush.msra.mxu0 %v2818
        %3296 = vmatpush.msra.mxu0 %v2817
        %3297 = vmatpush.msra.mxu0 %v2816
        %3298 = vmatpush.msra.mxu0 %v2815
        %3299 = vmatpush.msra.mxu0 %v2814
        %3300 = vmatpush.msra.mxu0 %v2813
        %3301 = vmatpush.msra.mxu0 %v2812
        %3302 = vmatmul.f32.gmra.mxu0 %v3284
        %v3303 = vpop.f32.mrf.mxu0
        %v3304 = vadd.f32 0.0, %v3303
        %3305 = vdwg.mxu0
        %v3306 = vsel %vm963, %v3085, 0
        %3308 = vmatpush.msra.mxu0 0.0
        %3309 = vmatpush.msra.mxu0 0.0
        %3310 = vmatpush.msra.mxu0 0.0
        %3311 = vmatpush.msra.mxu0 0.0
        %3312 = vmatpush.msra.mxu0 0.0
        %3313 = vmatpush.msra.mxu0 0.0
        %3314 = vmatpush.msra.mxu0 0.0
        %3315 = vmatpush.msra.mxu0 0.0
        %3316 = vmatpush.msra.mxu0 %v2827
        %3317 = vmatpush.msra.mxu0 %v2826
        %3318 = vmatpush.msra.mxu0 %v2825
        %3319 = vmatpush.msra.mxu0 %v2824
        %3320 = vmatpush.msra.mxu0 %v2823
        %3321 = vmatpush.msra.mxu0 %v2822
        %3322 = vmatpush.msra.mxu0 %v2821
        %3323 = vmatpush.msra.mxu0 %v2820
        %3324 = vmatmul.f32.gmra.mxu0 %v3306
        %v3325 = vpop.f32.mrf.mxu0
        %v3326 = vadd.f32 0.0, %v3325
        %3327 = vdwg.mxu0
        %v3328 = vsel %vm963, %v3086, 0
        %3330 = vmatpush.msra.mxu0 0.0
        %3331 = vmatpush.msra.mxu0 0.0
        %3332 = vmatpush.msra.mxu0 0.0
        %3333 = vmatpush.msra.mxu0 0.0
        %3334 = vmatpush.msra.mxu0 0.0
        %3335 = vmatpush.msra.mxu0 0.0
        %3336 = vmatpush.msra.mxu0 0.0
        %3337 = vmatpush.msra.mxu0 0.0
        %3338 = vmatpush.msra.mxu0 %v2835
        %3339 = vmatpush.msra.mxu0 %v2834
        %3340 = vmatpush.msra.mxu0 %v2833
        %3341 = vmatpush.msra.mxu0 %v2832
        %3342 = vmatpush.msra.mxu0 %v2831
        %3343 = vmatpush.msra.mxu0 %v2830
        %3344 = vmatpush.msra.mxu0 %v2829
        %3345 = vmatpush.msra.mxu0 %v2828
        %3346 = vmatmul.f32.gmra.mxu0 %v3328
        %v3347 = vpop.f32.mrf.mxu0
        %v3348 = vadd.f32 0.0, %v3347
        %3349 = vdwg.mxu0
        %v3350 = vsel %vm963, %v3087, 0
        %3352 = vmatpush.msra.mxu0 0.0
        %3353 = vmatpush.msra.mxu0 0.0
        %3354 = vmatpush.msra.mxu0 0.0
        %3355 = vmatpush.msra.mxu0 0.0
        %3356 = vmatpush.msra.mxu0 0.0
        %3357 = vmatpush.msra.mxu0 0.0
        %3358 = vmatpush.msra.mxu0 0.0
        %3359 = vmatpush.msra.mxu0 0.0
        %3360 = vmatpush.msra.mxu0 %v2843
        %3361 = vmatpush.msra.mxu0 %v2842
        %3362 = vmatpush.msra.mxu0 %v2841
        %3363 = vmatpush.msra.mxu0 %v2840
        %3364 = vmatpush.msra.mxu0 %v2839
        %3365 = vmatpush.msra.mxu0 %v2838
        %3366 = vmatpush.msra.mxu0 %v2837
        %3367 = vmatpush.msra.mxu0 %v2836
        %3368 = vmatmul.f32.gmra.mxu0 %v3350
        %v3369 = vpop.f32.mrf.mxu0
        %v3370 = vadd.f32 0.0, %v3369
        %3371 = vdwg.mxu0
        %v3372 = vsel %vm963, %v3088, 0
        %3374 = vmatpush.msra.mxu0 0.0
        %3375 = vmatpush.msra.mxu0 0.0
        %3376 = vmatpush.msra.mxu0 0.0
        %3377 = vmatpush.msra.mxu0 0.0
        %3378 = vmatpush.msra.mxu0 0.0
        %3379 = vmatpush.msra.mxu0 0.0
        %3380 = vmatpush.msra.mxu0 0.0
        %3381 = vmatpush.msra.mxu0 0.0
        %3382 = vmatpush.msra.mxu0 %v2851
        %3383 = vmatpush.msra.mxu0 %v2850
        %3384 = vmatpush.msra.mxu0 %v2849
        %3385 = vmatpush.msra.mxu0 %v2848
        %3386 = vmatpush.msra.mxu0 %v2847
        %3387 = vmatpush.msra.mxu0 %v2846
        %3388 = vmatpush.msra.mxu0 %v2845
        %3389 = vmatpush.msra.mxu0 %v2844
        %3390 = vmatmul.f32.gmra.mxu0 %v3372
        %v3391 = vpop.f32.mrf.mxu0
        %v3392 = vadd.f32 0.0, %v3391
        %3393 = vdwg.mxu0
        %v3394 = vsel %vm963, %v3089, 0
        %3396 = vmatpush.msra.mxu0 0.0
        %3397 = vmatpush.msra.mxu0 0.0
        %3398 = vmatpush.msra.mxu0 0.0
        %3399 = vmatpush.msra.mxu0 0.0
        %3400 = vmatpush.msra.mxu0 0.0
        %3401 = vmatpush.msra.mxu0 0.0
        %3402 = vmatpush.msra.mxu0 0.0
        %3403 = vmatpush.msra.mxu0 0.0
        %3404 = vmatpush.msra.mxu0 %v2859
        %3405 = vmatpush.msra.mxu0 %v2858
        %3406 = vmatpush.msra.mxu0 %v2857
        %3407 = vmatpush.msra.mxu0 %v2856
        %3408 = vmatpush.msra.mxu0 %v2855
        %3409 = vmatpush.msra.mxu0 %v2854
        %3410 = vmatpush.msra.mxu0 %v2853
        %3411 = vmatpush.msra.mxu0 %v2852
        %3412 = vmatmul.f32.gmra.mxu0 %v3394
        %v3413 = vpop.f32.mrf.mxu0
        %v3414 = vadd.f32 0.0, %v3413
        %3415 = vdwg.mxu0
        %v3416 = vsel %vm963, %v3090, 0
        %3418 = vmatpush.msra.mxu0 0.0
        %3419 = vmatpush.msra.mxu0 0.0
        %3420 = vmatpush.msra.mxu0 0.0
        %3421 = vmatpush.msra.mxu0 0.0
        %3422 = vmatpush.msra.mxu0 0.0
        %3423 = vmatpush.msra.mxu0 0.0
        %3424 = vmatpush.msra.mxu0 0.0
        %3425 = vmatpush.msra.mxu0 0.0
        %3426 = vmatpush.msra.mxu0 %v2867
        %3427 = vmatpush.msra.mxu0 %v2866
        %3428 = vmatpush.msra.mxu0 %v2865
        %3429 = vmatpush.msra.mxu0 %v2864
        %3430 = vmatpush.msra.mxu0 %v2863
        %3431 = vmatpush.msra.mxu0 %v2862
        %3432 = vmatpush.msra.mxu0 %v2861
        %3433 = vmatpush.msra.mxu0 %v2860
        %3434 = vmatmul.f32.gmra.mxu0 %v3416
        %v3435 = vpop.f32.mrf.mxu0
        %v3436 = vadd.f32 0.0, %v3435
        %3437 = vdwg.mxu0
        %v3438 = vsel %vm963, %v3091, 0
        %3440 = vmatpush.msra.mxu0 0.0
        %3441 = vmatpush.msra.mxu0 0.0
        %3442 = vmatpush.msra.mxu0 0.0
        %3443 = vmatpush.msra.mxu0 0.0
        %3444 = vmatpush.msra.mxu0 0.0
        %3445 = vmatpush.msra.mxu0 0.0
        %3446 = vmatpush.msra.mxu0 0.0
        %3447 = vmatpush.msra.mxu0 0.0
        %3448 = vmatpush.msra.mxu0 %v2875
        %3449 = vmatpush.msra.mxu0 %v2874
        %3450 = vmatpush.msra.mxu0 %v2873
        %3451 = vmatpush.msra.mxu0 %v2872
        %3452 = vmatpush.msra.mxu0 %v2871
        %3453 = vmatpush.msra.mxu0 %v2870
        %3454 = vmatpush.msra.mxu0 %v2869
        %3455 = vmatpush.msra.mxu0 %v2868
        %3456 = vmatmul.f32.gmra.mxu0 %v3438
        %v3457 = vpop.f32.mrf.mxu0
        %v3458 = vadd.f32 0.0, %v3457
        %3459 = vdwg.mxu0
        %v3460 = vsel %vm963, %v3071, 0
        %3462 = vmatpush.msra.mxu0 0.0
        %3463 = vmatpush.msra.mxu0 0.0
        %3464 = vmatpush.msra.mxu0 0.0
        %3465 = vmatpush.msra.mxu0 0.0
        %3466 = vmatpush.msra.mxu0 0.0
        %3467 = vmatpush.msra.mxu0 0.0
        %3468 = vmatpush.msra.mxu0 0.0
        %3469 = vmatpush.msra.mxu0 0.0
        %3470 = vmatpush.msra.mxu0 %v2884
        %3471 = vmatpush.msra.mxu0 %v2883
        %3472 = vmatpush.msra.mxu0 %v2882
        %3473 = vmatpush.msra.mxu0 %v2881
        %3474 = vmatpush.msra.mxu0 %v2880
        %3475 = vmatpush.msra.mxu0 %v2879
        %3476 = vmatpush.msra.mxu0 %v2878
        %3477 = vmatpush.msra.mxu0 %v2877
        %3478 = vmatmul.f32.gmra.mxu0 %v3460
        %v3479 = vpop.f32.mrf.mxu0
        %v3480 = vadd.f32 0.0, %v3479
        %3481 = vdwg.mxu0
        %v3482 = vsel %vm963, %v3094, 0
        %3484 = vmatpush.msra.mxu0 0.0
        %3485 = vmatpush.msra.mxu0 0.0
        %3486 = vmatpush.msra.mxu0 0.0
        %3487 = vmatpush.msra.mxu0 0.0
        %3488 = vmatpush.msra.mxu0 0.0
        %3489 = vmatpush.msra.mxu0 0.0
        %3490 = vmatpush.msra.mxu0 0.0
        %3491 = vmatpush.msra.mxu0 0.0
        %3492 = vmatpush.msra.mxu0 %v2892
        %3493 = vmatpush.msra.mxu0 %v2891
        %3494 = vmatpush.msra.mxu0 %v2890
        %3495 = vmatpush.msra.mxu0 %v2889
        %3496 = vmatpush.msra.mxu0 %v2888
        %3497 = vmatpush.msra.mxu0 %v2887
        %3498 = vmatpush.msra.mxu0 %v2886
        %3499 = vmatpush.msra.mxu0 %v2885
        %3500 = vmatmul.f32.gmra.mxu0 %v3482
        %v3501 = vpop.f32.mrf.mxu0
        %v3502 = vadd.f32 0.0, %v3501
        %3503 = vdwg.mxu0
        %v3504 = vsel %vm963, %v3095, 0
        %3506 = vmatpush.msra.mxu0 0.0
        %3507 = vmatpush.msra.mxu0 0.0
        %3508 = vmatpush.msra.mxu0 0.0
        %3509 = vmatpush.msra.mxu0 0.0
        %3510 = vmatpush.msra.mxu0 0.0
        %3511 = vmatpush.msra.mxu0 0.0
        %3512 = vmatpush.msra.mxu0 0.0
        %3513 = vmatpush.msra.mxu0 0.0
        %3514 = vmatpush.msra.mxu0 %v2900
        %3515 = vmatpush.msra.mxu0 %v2899
        %3516 = vmatpush.msra.mxu0 %v2898
        %3517 = vmatpush.msra.mxu0 %v2897
        %3518 = vmatpush.msra.mxu0 %v2896
        %3519 = vmatpush.msra.mxu0 %v2895
        %3520 = vmatpush.msra.mxu0 %v2894
        %3521 = vmatpush.msra.mxu0 %v2893
        %3522 = vmatmul.f32.gmra.mxu0 %v3504
        %v3523 = vpop.f32.mrf.mxu0
        %v3524 = vadd.f32 0.0, %v3523
        %3525 = vdwg.mxu0
        %v3526 = vsel %vm963, %v3096, 0
        %3528 = vmatpush.msra.mxu0 0.0
        %3529 = vmatpush.msra.mxu0 0.0
        %3530 = vmatpush.msra.mxu0 0.0
        %3531 = vmatpush.msra.mxu0 0.0
        %3532 = vmatpush.msra.mxu0 0.0
        %3533 = vmatpush.msra.mxu0 0.0
        %3534 = vmatpush.msra.mxu0 0.0
        %3535 = vmatpush.msra.mxu0 0.0
        %3536 = vmatpush.msra.mxu0 %v2908
        %3537 = vmatpush.msra.mxu0 %v2907
        %3538 = vmatpush.msra.mxu0 %v2906
        %3539 = vmatpush.msra.mxu0 %v2905
        %3540 = vmatpush.msra.mxu0 %v2904
        %3541 = vmatpush.msra.mxu0 %v2903
        %3542 = vmatpush.msra.mxu0 %v2902
        %3543 = vmatpush.msra.mxu0 %v2901
        %3544 = vmatmul.f32.gmra.mxu0 %v3526
        %v3545 = vpop.f32.mrf.mxu0
        %v3546 = vadd.f32 0.0, %v3545
        %3547 = vdwg.mxu0
        %v3548 = vsel %vm963, %v3097, 0
        %3550 = vmatpush.msra.mxu0 0.0
        %3551 = vmatpush.msra.mxu0 0.0
        %3552 = vmatpush.msra.mxu0 0.0
        %3553 = vmatpush.msra.mxu0 0.0
        %3554 = vmatpush.msra.mxu0 0.0
        %3555 = vmatpush.msra.mxu0 0.0
        %3556 = vmatpush.msra.mxu0 0.0
        %3557 = vmatpush.msra.mxu0 0.0
        %3558 = vmatpush.msra.mxu0 %v2916
        %3559 = vmatpush.msra.mxu0 %v2915
        %3560 = vmatpush.msra.mxu0 %v2914
        %3561 = vmatpush.msra.mxu0 %v2913
        %3562 = vmatpush.msra.mxu0 %v2912
        %3563 = vmatpush.msra.mxu0 %v2911
        %3564 = vmatpush.msra.mxu0 %v2910
        %3565 = vmatpush.msra.mxu0 %v2909
        %3566 = vmatmul.f32.gmra.mxu0 %v3548
        %v3567 = vpop.f32.mrf.mxu0
        %v3568 = vadd.f32 0.0, %v3567
        %3569 = vdwg.mxu0
        %v3570 = vsel %vm963, %v3098, 0
        %3572 = vmatpush.msra.mxu0 0.0
        %3573 = vmatpush.msra.mxu0 0.0
        %3574 = vmatpush.msra.mxu0 0.0
        %3575 = vmatpush.msra.mxu0 0.0
        %3576 = vmatpush.msra.mxu0 0.0
        %3577 = vmatpush.msra.mxu0 0.0
        %3578 = vmatpush.msra.mxu0 0.0
        %3579 = vmatpush.msra.mxu0 0.0
        %3580 = vmatpush.msra.mxu0 %v2924
        %3581 = vmatpush.msra.mxu0 %v2923
        %3582 = vmatpush.msra.mxu0 %v2922
        %3583 = vmatpush.msra.mxu0 %v2921
        %3584 = vmatpush.msra.mxu0 %v2920
        %3585 = vmatpush.msra.mxu0 %v2919
        %3586 = vmatpush.msra.mxu0 %v2918
        %3587 = vmatpush.msra.mxu0 %v2917
        %3588 = vmatmul.f32.gmra.mxu0 %v3570
        %v3589 = vpop.f32.mrf.mxu0
        %v3590 = vadd.f32 0.0, %v3589
        %3591 = vdwg.mxu0
        %v3592 = vsel %vm963, %v3099, 0
        %3594 = vmatpush.msra.mxu0 0.0
        %3595 = vmatpush.msra.mxu0 0.0
        %3596 = vmatpush.msra.mxu0 0.0
        %3597 = vmatpush.msra.mxu0 0.0
        %3598 = vmatpush.msra.mxu0 0.0
        %3599 = vmatpush.msra.mxu0 0.0
        %3600 = vmatpush.msra.mxu0 0.0
        %3601 = vmatpush.msra.mxu0 0.0
        %3602 = vmatpush.msra.mxu0 %v2932
        %3603 = vmatpush.msra.mxu0 %v2931
        %3604 = vmatpush.msra.mxu0 %v2930
        %3605 = vmatpush.msra.mxu0 %v2929
        %3606 = vmatpush.msra.mxu0 %v2928
        %3607 = vmatpush.msra.mxu0 %v2927
        %3608 = vmatpush.msra.mxu0 %v2926
        %3609 = vmatpush.msra.mxu0 %v2925
        %3610 = vmatmul.f32.gmra.mxu0 %v3592
        %v3611 = vpop.f32.mrf.mxu0
        %v3612 = vadd.f32 0.0, %v3611
        %3613 = vdwg.mxu0
        %v3614 = vsel %vm963, %v3100, 0
        %3616 = vmatpush.msra.mxu0 0.0
        %3617 = vmatpush.msra.mxu0 0.0
        %3618 = vmatpush.msra.mxu0 0.0
        %3619 = vmatpush.msra.mxu0 0.0
        %3620 = vmatpush.msra.mxu0 0.0
        %3621 = vmatpush.msra.mxu0 0.0
        %3622 = vmatpush.msra.mxu0 0.0
        %3623 = vmatpush.msra.mxu0 0.0
        %3624 = vmatpush.msra.mxu0 %v2940
        %3625 = vmatpush.msra.mxu0 %v2939
        %3626 = vmatpush.msra.mxu0 %v2938
        %3627 = vmatpush.msra.mxu0 %v2937
        %3628 = vmatpush.msra.mxu0 %v2936
        %3629 = vmatpush.msra.mxu0 %v2935
        %3630 = vmatpush.msra.mxu0 %v2934
        %3631 = vmatpush.msra.mxu0 %v2933
        %3632 = vmatmul.f32.gmra.mxu0 %v3614
        %v3633 = vpop.f32.mrf.mxu0
        %v3634 = vadd.f32 0.0, %v3633
        %3635 = vdwg.mxu0
        %v3636 = vsel %vm963, %v3074, 0
        %3638 = vmatpush.msra.mxu0 0.0
        %3639 = vmatpush.msra.mxu0 0.0
        %3640 = vmatpush.msra.mxu0 0.0
        %3641 = vmatpush.msra.mxu0 0.0
        %3642 = vmatpush.msra.mxu0 0.0
        %3643 = vmatpush.msra.mxu0 0.0
        %3644 = vmatpush.msra.mxu0 0.0
        %3645 = vmatpush.msra.mxu0 0.0
        %3646 = vmatpush.msra.mxu0 %v2948
        %3647 = vmatpush.msra.mxu0 %v2947
        %3648 = vmatpush.msra.mxu0 %v2946
        %3649 = vmatpush.msra.mxu0 %v2945
        %3650 = vmatpush.msra.mxu0 %v2944
        %3651 = vmatpush.msra.mxu0 %v2943
        %3652 = vmatpush.msra.mxu0 %v2942
        %3653 = vmatpush.msra.mxu0 %v2941
        %3654 = vmatmul.f32.gmra.mxu0 %v3636
        %v3655 = vpop.f32.mrf.mxu0
        %v3656 = vadd.f32 0.0, %v3655
        %3657 = vdwg.mxu0
        %v3658 = vsel %vm963, %v3101, 0
        %3660 = vmatpush.msra.mxu0 0.0
        %3661 = vmatpush.msra.mxu0 0.0
        %3662 = vmatpush.msra.mxu0 0.0
        %3663 = vmatpush.msra.mxu0 0.0
        %3664 = vmatpush.msra.mxu0 0.0
        %3665 = vmatpush.msra.mxu0 0.0
        %3666 = vmatpush.msra.mxu0 0.0
        %3667 = vmatpush.msra.mxu0 0.0
        %3668 = vmatpush.msra.mxu0 %v2956
        %3669 = vmatpush.msra.mxu0 %v2955
        %3670 = vmatpush.msra.mxu0 %v2954
        %3671 = vmatpush.msra.mxu0 %v2953
        %3672 = vmatpush.msra.mxu0 %v2952
        %3673 = vmatpush.msra.mxu0 %v2951
        %3674 = vmatpush.msra.mxu0 %v2950
        %3675 = vmatpush.msra.mxu0 %v2949
        %3676 = vmatmul.f32.gmra.mxu0 %v3658
        %v3677 = vpop.f32.mrf.mxu0
        %v3678 = vadd.f32 0.0, %v3677
        %3679 = vdwg.mxu0
        %v3680 = vsel %vm963, %v3102, 0
        %3682 = vmatpush.msra.mxu0 0.0
        %3683 = vmatpush.msra.mxu0 0.0
        %3684 = vmatpush.msra.mxu0 0.0
        %3685 = vmatpush.msra.mxu0 0.0
        %3686 = vmatpush.msra.mxu0 0.0
        %3687 = vmatpush.msra.mxu0 0.0
        %3688 = vmatpush.msra.mxu0 0.0
        %3689 = vmatpush.msra.mxu0 0.0
        %3690 = vmatpush.msra.mxu0 %v2964
        %3691 = vmatpush.msra.mxu0 %v2963
        %3692 = vmatpush.msra.mxu0 %v2962
        %3693 = vmatpush.msra.mxu0 %v2961
        %3694 = vmatpush.msra.mxu0 %v2960
        %3695 = vmatpush.msra.mxu0 %v2959
        %3696 = vmatpush.msra.mxu0 %v2958
        %3697 = vmatpush.msra.mxu0 %v2957
        %3698 = vmatmul.f32.gmra.mxu0 %v3680
        %v3699 = vpop.f32.mrf.mxu0
        %v3700 = vadd.f32 0.0, %v3699
        %3701 = vdwg.mxu0
        %v3702 = vsel %vm963, %v3103, 0
        %3704 = vmatpush.msra.mxu0 0.0
        %3705 = vmatpush.msra.mxu0 0.0
        %3706 = vmatpush.msra.mxu0 0.0
        %3707 = vmatpush.msra.mxu0 0.0
        %3708 = vmatpush.msra.mxu0 0.0
        %3709 = vmatpush.msra.mxu0 0.0
        %3710 = vmatpush.msra.mxu0 0.0
        %3711 = vmatpush.msra.mxu0 0.0
        %3712 = vmatpush.msra.mxu0 %v2972
        %3713 = vmatpush.msra.mxu0 %v2971
        %3714 = vmatpush.msra.mxu0 %v2970
        %3715 = vmatpush.msra.mxu0 %v2969
        %3716 = vmatpush.msra.mxu0 %v2968
        %3717 = vmatpush.msra.mxu0 %v2967
        %3718 = vmatpush.msra.mxu0 %v2966
        %3719 = vmatpush.msra.mxu0 %v2965
        %3720 = vmatmul.f32.gmra.mxu0 %v3702
        %v3721 = vpop.f32.mrf.mxu0
        %v3722 = vadd.f32 0.0, %v3721
        %3723 = vdwg.mxu0
        %v3724 = vsel %vm963, %v3104, 0
        %3726 = vmatpush.msra.mxu0 0.0
        %3727 = vmatpush.msra.mxu0 0.0
        %3728 = vmatpush.msra.mxu0 0.0
        %3729 = vmatpush.msra.mxu0 0.0
        %3730 = vmatpush.msra.mxu0 0.0
        %3731 = vmatpush.msra.mxu0 0.0
        %3732 = vmatpush.msra.mxu0 0.0
        %3733 = vmatpush.msra.mxu0 0.0
        %3734 = vmatpush.msra.mxu0 %v2980
        %3735 = vmatpush.msra.mxu0 %v2979
        %3736 = vmatpush.msra.mxu0 %v2978
        %3737 = vmatpush.msra.mxu0 %v2977
        %3738 = vmatpush.msra.mxu0 %v2976
        %3739 = vmatpush.msra.mxu0 %v2975
        %3740 = vmatpush.msra.mxu0 %v2974
        %3741 = vmatpush.msra.mxu0 %v2973
        %3742 = vmatmul.f32.gmra.mxu0 %v3724
        %v3743 = vpop.f32.mrf.mxu0
        %v3744 = vadd.f32 0.0, %v3743
        %3745 = vdwg.mxu0
        %v3746 = vsel %vm963, %v3105, 0
        %3748 = vmatpush.msra.mxu0 0.0
        %3749 = vmatpush.msra.mxu0 0.0
        %3750 = vmatpush.msra.mxu0 0.0
        %3751 = vmatpush.msra.mxu0 0.0
        %3752 = vmatpush.msra.mxu0 0.0
        %3753 = vmatpush.msra.mxu0 0.0
        %3754 = vmatpush.msra.mxu0 0.0
        %3755 = vmatpush.msra.mxu0 0.0
        %3756 = vmatpush.msra.mxu0 %v2988
        %3757 = vmatpush.msra.mxu0 %v2987
        %3758 = vmatpush.msra.mxu0 %v2986
        %3759 = vmatpush.msra.mxu0 %v2985
        %3760 = vmatpush.msra.mxu0 %v2984
        %3761 = vmatpush.msra.mxu0 %v2983
        %3762 = vmatpush.msra.mxu0 %v2982
        %3763 = vmatpush.msra.mxu0 %v2981
        %3764 = vmatmul.f32.gmra.mxu0 %v3746
        %v3765 = vpop.f32.mrf.mxu0
        %v3766 = vadd.f32 0.0, %v3765
        %3767 = vdwg.mxu0
        %v3768 = vsel %vm963, %v3106, 0
        %3770 = vmatpush.msra.mxu0 0.0
        %3771 = vmatpush.msra.mxu0 0.0
        %3772 = vmatpush.msra.mxu0 0.0
        %3773 = vmatpush.msra.mxu0 0.0
        %3774 = vmatpush.msra.mxu0 0.0
        %3775 = vmatpush.msra.mxu0 0.0
        %3776 = vmatpush.msra.mxu0 0.0
        %3777 = vmatpush.msra.mxu0 0.0
        %3778 = vmatpush.msra.mxu0 %v2996
        %3779 = vmatpush.msra.mxu0 %v2995
        %3780 = vmatpush.msra.mxu0 %v2994
        %3781 = vmatpush.msra.mxu0 %v2993
        %3782 = vmatpush.msra.mxu0 %v2992
        %3783 = vmatpush.msra.mxu0 %v2991
        %3784 = vmatpush.msra.mxu0 %v2990
        %3785 = vmatpush.msra.mxu0 %v2989
        %3786 = vmatmul.f32.gmra.mxu0 %v3768
        %v3787 = vpop.f32.mrf.mxu0
        %v3788 = vadd.f32 0.0, %v3787
        %3789 = vdwg.mxu0
        %v3790 = vsel %vm963, %v3107, 0
        %3792 = vmatpush.msra.mxu0 0.0
        %3793 = vmatpush.msra.mxu0 0.0
        %3794 = vmatpush.msra.mxu0 0.0
        %3795 = vmatpush.msra.mxu0 0.0
        %3796 = vmatpush.msra.mxu0 0.0
        %3797 = vmatpush.msra.mxu0 0.0
        %3798 = vmatpush.msra.mxu0 0.0
        %3799 = vmatpush.msra.mxu0 0.0
        %3800 = vmatpush.msra.mxu0 %v3004
        %3801 = vmatpush.msra.mxu0 %v3003
        %3802 = vmatpush.msra.mxu0 %v3002
        %3803 = vmatpush.msra.mxu0 %v3001
        %3804 = vmatpush.msra.mxu0 %v3000
        %3805 = vmatpush.msra.mxu0 %v2999
        %3806 = vmatpush.msra.mxu0 %v2998
        %3807 = vmatpush.msra.mxu0 %v2997
        %3808 = vmatmul.f32.gmra.mxu0 %v3790
        %v3809 = vpop.f32.mrf.mxu0
        %v3810 = vadd.f32 0.0, %v3809
        %3811 = vdwg.mxu0
        %v3812 = vsub.f32 %v3128, %v3480
        %v3813 = vsub.f32 %v3150, %v3502
        %v3814 = vsub.f32 %v3172, %v3524
        %v3815 = vsub.f32 %v3194, %v3546
        %v3816 = vsub.f32 %v3216, %v3568
        %v3817 = vsub.f32 %v3238, %v3590
        %v3818 = vsub.f32 %v3260, %v3612
        %v3819 = vsub.f32 %v3282, %v3634
        %v3820 = vsub.f32 %v3304, %v3656
        %v3821 = vsub.f32 %v3326, %v3678
        %v3822 = vsub.f32 %v3348, %v3700
        %v3823 = vsub.f32 %v3370, %v3722
        %v3824 = vsub.f32 %v3392, %v3744
        %v3825 = vsub.f32 %v3414, %v3766
        %v3826 = vsub.f32 %v3436, %v3788
        %v3827 = vsub.f32 %v3458, %v3810
        %3828 = vmatpush.msra.mxu0 0.0
        %3829 = vmatpush.msra.mxu0 0.0
        %3830 = vmatpush.msra.mxu0 0.0
        %3831 = vmatpush.msra.mxu0 0.0
        %3832 = vmatpush.msra.mxu0 0.0
        %3833 = vmatpush.msra.mxu0 0.0
        %3834 = vmatpush.msra.mxu0 0.0
        %3835 = vmatpush.msra.mxu0 0.0
        %3836 = vmatpush.msra.mxu0 %v2755
        %3837 = vmatpush.msra.mxu0 %v2754
        %3838 = vmatpush.msra.mxu0 %v2753
        %3839 = vmatpush.msra.mxu0 %v2752
        %3840 = vmatpush.msra.mxu0 %v2751
        %3841 = vmatpush.msra.mxu0 %v2750
        %3842 = vmatpush.msra.mxu0 %v2749
        %3843 = vmatpush.msra.mxu0 %v2748
        %3844 = vmatmul.f32.gmra.mxu0 %v3460
        %v3845 = vpop.f32.mrf.mxu0
        %v3846 = vadd.f32 0.0, %v3845
        %3847 = vdwg.mxu0
        %3848 = vmatpush.msra.mxu0 0.0
        %3849 = vmatpush.msra.mxu0 0.0
        %3850 = vmatpush.msra.mxu0 0.0
        %3851 = vmatpush.msra.mxu0 0.0
        %3852 = vmatpush.msra.mxu0 0.0
        %3853 = vmatpush.msra.mxu0 0.0
        %3854 = vmatpush.msra.mxu0 0.0
        %3855 = vmatpush.msra.mxu0 0.0
        %3856 = vmatpush.msra.mxu0 %v2763
        %3857 = vmatpush.msra.mxu0 %v2762
        %3858 = vmatpush.msra.mxu0 %v2761
        %3859 = vmatpush.msra.mxu0 %v2760
        %3860 = vmatpush.msra.mxu0 %v2759
        %3861 = vmatpush.msra.mxu0 %v2758
        %3862 = vmatpush.msra.mxu0 %v2757
        %3863 = vmatpush.msra.mxu0 %v2756
        %3864 = vmatmul.f32.gmra.mxu0 %v3482
        %v3865 = vpop.f32.mrf.mxu0
        %v3866 = vadd.f32 0.0, %v3865
        %3867 = vdwg.mxu0
        %3868 = vmatpush.msra.mxu0 0.0
        %3869 = vmatpush.msra.mxu0 0.0
        %3870 = vmatpush.msra.mxu0 0.0
        %3871 = vmatpush.msra.mxu0 0.0
        %3872 = vmatpush.msra.mxu0 0.0
        %3873 = vmatpush.msra.mxu0 0.0
        %3874 = vmatpush.msra.mxu0 0.0
        %3875 = vmatpush.msra.mxu0 0.0
        %3876 = vmatpush.msra.mxu0 %v2771
        %3877 = vmatpush.msra.mxu0 %v2770
        %3878 = vmatpush.msra.mxu0 %v2769
        %3879 = vmatpush.msra.mxu0 %v2768
        %3880 = vmatpush.msra.mxu0 %v2767
        %3881 = vmatpush.msra.mxu0 %v2766
        %3882 = vmatpush.msra.mxu0 %v2765
        %3883 = vmatpush.msra.mxu0 %v2764
        %3884 = vmatmul.f32.gmra.mxu0 %v3504
        %v3885 = vpop.f32.mrf.mxu0
        %v3886 = vadd.f32 0.0, %v3885
        %3887 = vdwg.mxu0
        %3888 = vmatpush.msra.mxu0 0.0
        %3889 = vmatpush.msra.mxu0 0.0
        %3890 = vmatpush.msra.mxu0 0.0
        %3891 = vmatpush.msra.mxu0 0.0
        %3892 = vmatpush.msra.mxu0 0.0
        %3893 = vmatpush.msra.mxu0 0.0
        %3894 = vmatpush.msra.mxu0 0.0
        %3895 = vmatpush.msra.mxu0 0.0
        %3896 = vmatpush.msra.mxu0 %v2779
        %3897 = vmatpush.msra.mxu0 %v2778
        %3898 = vmatpush.msra.mxu0 %v2777
        %3899 = vmatpush.msra.mxu0 %v2776
        %3900 = vmatpush.msra.mxu0 %v2775
        %3901 = vmatpush.msra.mxu0 %v2774
        %3902 = vmatpush.msra.mxu0 %v2773
        %3903 = vmatpush.msra.mxu0 %v2772
        %3904 = vmatmul.f32.gmra.mxu0 %v3526
        %v3905 = vpop.f32.mrf.mxu0
        %v3906 = vadd.f32 0.0, %v3905
        %3907 = vdwg.mxu0
        %3908 = vmatpush.msra.mxu0 0.0
        %3909 = vmatpush.msra.mxu0 0.0
        %3910 = vmatpush.msra.mxu0 0.0
        %3911 = vmatpush.msra.mxu0 0.0
        %3912 = vmatpush.msra.mxu0 0.0
        %3913 = vmatpush.msra.mxu0 0.0
        %3914 = vmatpush.msra.mxu0 0.0
        %3915 = vmatpush.msra.mxu0 0.0
        %3916 = vmatpush.msra.mxu0 %v2787
        %3917 = vmatpush.msra.mxu0 %v2786
        %3918 = vmatpush.msra.mxu0 %v2785
        %3919 = vmatpush.msra.mxu0 %v2784
        %3920 = vmatpush.msra.mxu0 %v2783
        %3921 = vmatpush.msra.mxu0 %v2782
        %3922 = vmatpush.msra.mxu0 %v2781
        %3923 = vmatpush.msra.mxu0 %v2780
        %3924 = vmatmul.f32.gmra.mxu0 %v3548
        %v3925 = vpop.f32.mrf.mxu0
        %v3926 = vadd.f32 0.0, %v3925
        %3927 = vdwg.mxu0
        %3928 = vmatpush.msra.mxu0 0.0
        %3929 = vmatpush.msra.mxu0 0.0
        %3930 = vmatpush.msra.mxu0 0.0
        %3931 = vmatpush.msra.mxu0 0.0
        %3932 = vmatpush.msra.mxu0 0.0
        %3933 = vmatpush.msra.mxu0 0.0
        %3934 = vmatpush.msra.mxu0 0.0
        %3935 = vmatpush.msra.mxu0 0.0
        %3936 = vmatpush.msra.mxu0 %v2795
        %3937 = vmatpush.msra.mxu0 %v2794
        %3938 = vmatpush.msra.mxu0 %v2793
        %3939 = vmatpush.msra.mxu0 %v2792
        %3940 = vmatpush.msra.mxu0 %v2791
        %3941 = vmatpush.msra.mxu0 %v2790
        %3942 = vmatpush.msra.mxu0 %v2789
        %3943 = vmatpush.msra.mxu0 %v2788
        %3944 = vmatmul.f32.gmra.mxu0 %v3570
        %v3945 = vpop.f32.mrf.mxu0
        %v3946 = vadd.f32 0.0, %v3945
        %3947 = vdwg.mxu0
        %3948 = vmatpush.msra.mxu0 0.0
        %3949 = vmatpush.msra.mxu0 0.0
        %3950 = vmatpush.msra.mxu0 0.0
        %3951 = vmatpush.msra.mxu0 0.0
        %3952 = vmatpush.msra.mxu0 0.0
        %3953 = vmatpush.msra.mxu0 0.0
        %3954 = vmatpush.msra.mxu0 0.0
        %3955 = vmatpush.msra.mxu0 0.0
        %3956 = vmatpush.msra.mxu0 %v2803
        %3957 = vmatpush.msra.mxu0 %v2802
        %3958 = vmatpush.msra.mxu0 %v2801
        %3959 = vmatpush.msra.mxu0 %v2800
        %3960 = vmatpush.msra.mxu0 %v2799
        %3961 = vmatpush.msra.mxu0 %v2798
        %3962 = vmatpush.msra.mxu0 %v2797
        %3963 = vmatpush.msra.mxu0 %v2796
        %3964 = vmatmul.f32.gmra.mxu0 %v3592
        %v3965 = vpop.f32.mrf.mxu0
        %v3966 = vadd.f32 0.0, %v3965
        %3967 = vdwg.mxu0
        %3968 = vmatpush.msra.mxu0 0.0
        %3969 = vmatpush.msra.mxu0 0.0
        %3970 = vmatpush.msra.mxu0 0.0
        %3971 = vmatpush.msra.mxu0 0.0
        %3972 = vmatpush.msra.mxu0 0.0
        %3973 = vmatpush.msra.mxu0 0.0
        %3974 = vmatpush.msra.mxu0 0.0
        %3975 = vmatpush.msra.mxu0 0.0
        %3976 = vmatpush.msra.mxu0 %v2811
        %3977 = vmatpush.msra.mxu0 %v2810
        %3978 = vmatpush.msra.mxu0 %v2809
        %3979 = vmatpush.msra.mxu0 %v2808
        %3980 = vmatpush.msra.mxu0 %v2807
        %3981 = vmatpush.msra.mxu0 %v2806
        %3982 = vmatpush.msra.mxu0 %v2805
        %3983 = vmatpush.msra.mxu0 %v2804
        %3984 = vmatmul.f32.gmra.mxu0 %v3614
        %v3985 = vpop.f32.mrf.mxu0
        %v3986 = vadd.f32 0.0, %v3985
        %3987 = vdwg.mxu0
        %3988 = vmatpush.msra.mxu0 0.0
        %3989 = vmatpush.msra.mxu0 0.0
        %3990 = vmatpush.msra.mxu0 0.0
        %3991 = vmatpush.msra.mxu0 0.0
        %3992 = vmatpush.msra.mxu0 0.0
        %3993 = vmatpush.msra.mxu0 0.0
        %3994 = vmatpush.msra.mxu0 0.0
        %3995 = vmatpush.msra.mxu0 0.0
        %3996 = vmatpush.msra.mxu0 %v2819
        %3997 = vmatpush.msra.mxu0 %v2818
        %3998 = vmatpush.msra.mxu0 %v2817
        %3999 = vmatpush.msra.mxu0 %v2816
        %4000 = vmatpush.msra.mxu0 %v2815
        %4001 = vmatpush.msra.mxu0 %v2814
        %4002 = vmatpush.msra.mxu0 %v2813
        %4003 = vmatpush.msra.mxu0 %v2812
        %4004 = vmatmul.f32.gmra.mxu0 %v3636
        %v4005 = vpop.f32.mrf.mxu0
        %v4006 = vadd.f32 0.0, %v4005
        %4007 = vdwg.mxu0
        %4008 = vmatpush.msra.mxu0 0.0
        %4009 = vmatpush.msra.mxu0 0.0
        %4010 = vmatpush.msra.mxu0 0.0
        %4011 = vmatpush.msra.mxu0 0.0
        %4012 = vmatpush.msra.mxu0 0.0
        %4013 = vmatpush.msra.mxu0 0.0
        %4014 = vmatpush.msra.mxu0 0.0
        %4015 = vmatpush.msra.mxu0 0.0
        %4016 = vmatpush.msra.mxu0 %v2827
        %4017 = vmatpush.msra.mxu0 %v2826
        %4018 = vmatpush.msra.mxu0 %v2825
        %4019 = vmatpush.msra.mxu0 %v2824
        %4020 = vmatpush.msra.mxu0 %v2823
        %4021 = vmatpush.msra.mxu0 %v2822
        %4022 = vmatpush.msra.mxu0 %v2821
        %4023 = vmatpush.msra.mxu0 %v2820
        %4024 = vmatmul.f32.gmra.mxu0 %v3658
        %v4025 = vpop.f32.mrf.mxu0
        %v4026 = vadd.f32 0.0, %v4025
        %4027 = vdwg.mxu0
        %4028 = vmatpush.msra.mxu0 0.0
        %4029 = vmatpush.msra.mxu0 0.0
        %4030 = vmatpush.msra.mxu0 0.0
        %4031 = vmatpush.msra.mxu0 0.0
        %4032 = vmatpush.msra.mxu0 0.0
        %4033 = vmatpush.msra.mxu0 0.0
        %4034 = vmatpush.msra.mxu0 0.0
        %4035 = vmatpush.msra.mxu0 0.0
        %4036 = vmatpush.msra.mxu0 %v2835
        %4037 = vmatpush.msra.mxu0 %v2834
        %4038 = vmatpush.msra.mxu0 %v2833
        %4039 = vmatpush.msra.mxu0 %v2832
        %4040 = vmatpush.msra.mxu0 %v2831
        %4041 = vmatpush.msra.mxu0 %v2830
        %4042 = vmatpush.msra.mxu0 %v2829
        %4043 = vmatpush.msra.mxu0 %v2828
        %4044 = vmatmul.f32.gmra.mxu0 %v3680
        %v4045 = vpop.f32.mrf.mxu0
        %v4046 = vadd.f32 0.0, %v4045
        %4047 = vdwg.mxu0
        %4048 = vmatpush.msra.mxu0 0.0
        %4049 = vmatpush.msra.mxu0 0.0
        %4050 = vmatpush.msra.mxu0 0.0
        %4051 = vmatpush.msra.mxu0 0.0
        %4052 = vmatpush.msra.mxu0 0.0
        %4053 = vmatpush.msra.mxu0 0.0
        %4054 = vmatpush.msra.mxu0 0.0
        %4055 = vmatpush.msra.mxu0 0.0
        %4056 = vmatpush.msra.mxu0 %v2843
        %4057 = vmatpush.msra.mxu0 %v2842
        %4058 = vmatpush.msra.mxu0 %v2841
        %4059 = vmatpush.msra.mxu0 %v2840
        %4060 = vmatpush.msra.mxu0 %v2839
        %4061 = vmatpush.msra.mxu0 %v2838
        %4062 = vmatpush.msra.mxu0 %v2837
        %4063 = vmatpush.msra.mxu0 %v2836
        %4064 = vmatmul.f32.gmra.mxu0 %v3702
        %v4065 = vpop.f32.mrf.mxu0
        %v4066 = vadd.f32 0.0, %v4065
        %4067 = vdwg.mxu0
        %4068 = vmatpush.msra.mxu0 0.0
        %4069 = vmatpush.msra.mxu0 0.0
        %4070 = vmatpush.msra.mxu0 0.0
        %4071 = vmatpush.msra.mxu0 0.0
        %4072 = vmatpush.msra.mxu0 0.0
        %4073 = vmatpush.msra.mxu0 0.0
        %4074 = vmatpush.msra.mxu0 0.0
        %4075 = vmatpush.msra.mxu0 0.0
        %4076 = vmatpush.msra.mxu0 %v2851
        %4077 = vmatpush.msra.mxu0 %v2850
        %4078 = vmatpush.msra.mxu0 %v2849
        %4079 = vmatpush.msra.mxu0 %v2848
        %4080 = vmatpush.msra.mxu0 %v2847
        %4081 = vmatpush.msra.mxu0 %v2846
        %4082 = vmatpush.msra.mxu0 %v2845
        %4083 = vmatpush.msra.mxu0 %v2844
        %4084 = vmatmul.f32.gmra.mxu0 %v3724
        %v4085 = vpop.f32.mrf.mxu0
        %v4086 = vadd.f32 0.0, %v4085
        %4087 = vdwg.mxu0
        %4088 = vmatpush.msra.mxu0 0.0
        %4089 = vmatpush.msra.mxu0 0.0
        %4090 = vmatpush.msra.mxu0 0.0
        %4091 = vmatpush.msra.mxu0 0.0
        %4092 = vmatpush.msra.mxu0 0.0
        %4093 = vmatpush.msra.mxu0 0.0
        %4094 = vmatpush.msra.mxu0 0.0
        %4095 = vmatpush.msra.mxu0 0.0
        %4096 = vmatpush.msra.mxu0 %v2859
        %4097 = vmatpush.msra.mxu0 %v2858
        %4098 = vmatpush.msra.mxu0 %v2857
        %4099 = vmatpush.msra.mxu0 %v2856
        %4100 = vmatpush.msra.mxu0 %v2855
        %4101 = vmatpush.msra.mxu0 %v2854
        %4102 = vmatpush.msra.mxu0 %v2853
        %4103 = vmatpush.msra.mxu0 %v2852
        %4104 = vmatmul.f32.gmra.mxu0 %v3746
        %v4105 = vpop.f32.mrf.mxu0
        %v4106 = vadd.f32 0.0, %v4105
        %4107 = vdwg.mxu0
        %4108 = vmatpush.msra.mxu0 0.0
        %4109 = vmatpush.msra.mxu0 0.0
        %4110 = vmatpush.msra.mxu0 0.0
        %4111 = vmatpush.msra.mxu0 0.0
        %4112 = vmatpush.msra.mxu0 0.0
        %4113 = vmatpush.msra.mxu0 0.0
        %4114 = vmatpush.msra.mxu0 0.0
        %4115 = vmatpush.msra.mxu0 0.0
        %4116 = vmatpush.msra.mxu0 %v2867
        %4117 = vmatpush.msra.mxu0 %v2866
        %4118 = vmatpush.msra.mxu0 %v2865
        %4119 = vmatpush.msra.mxu0 %v2864
        %4120 = vmatpush.msra.mxu0 %v2863
        %4121 = vmatpush.msra.mxu0 %v2862
        %4122 = vmatpush.msra.mxu0 %v2861
        %4123 = vmatpush.msra.mxu0 %v2860
        %4124 = vmatmul.f32.gmra.mxu0 %v3768
        %v4125 = vpop.f32.mrf.mxu0
        %v4126 = vadd.f32 0.0, %v4125
        %4127 = vdwg.mxu0
        %4128 = vmatpush.msra.mxu0 0.0
        %4129 = vmatpush.msra.mxu0 0.0
        %4130 = vmatpush.msra.mxu0 0.0
        %4131 = vmatpush.msra.mxu0 0.0
        %4132 = vmatpush.msra.mxu0 0.0
        %4133 = vmatpush.msra.mxu0 0.0
        %4134 = vmatpush.msra.mxu0 0.0
        %4135 = vmatpush.msra.mxu0 0.0
        %4136 = vmatpush.msra.mxu0 %v2875
        %4137 = vmatpush.msra.mxu0 %v2874
        %4138 = vmatpush.msra.mxu0 %v2873
        %4139 = vmatpush.msra.mxu0 %v2872
        %4140 = vmatpush.msra.mxu0 %v2871
        %4141 = vmatpush.msra.mxu0 %v2870
        %4142 = vmatpush.msra.mxu0 %v2869
        %4143 = vmatpush.msra.mxu0 %v2868
        %4144 = vmatmul.f32.gmra.mxu0 %v3790
        %v4145 = vpop.f32.mrf.mxu0
        %v4146 = vadd.f32 0.0, %v4145
        %4147 = vdwg.mxu0
        %4148 = vmatpush.msra.mxu0 0.0
        %4149 = vmatpush.msra.mxu0 0.0
        %4150 = vmatpush.msra.mxu0 0.0
        %4151 = vmatpush.msra.mxu0 0.0
        %4152 = vmatpush.msra.mxu0 0.0
        %4153 = vmatpush.msra.mxu0 0.0
        %4154 = vmatpush.msra.mxu0 0.0
        %4155 = vmatpush.msra.mxu0 0.0
        %4156 = vmatpush.msra.mxu0 %v2884
        %4157 = vmatpush.msra.mxu0 %v2883
        %4158 = vmatpush.msra.mxu0 %v2882
        %4159 = vmatpush.msra.mxu0 %v2881
        %4160 = vmatpush.msra.mxu0 %v2880
        %4161 = vmatpush.msra.mxu0 %v2879
        %4162 = vmatpush.msra.mxu0 %v2878
        %4163 = vmatpush.msra.mxu0 %v2877
        %4164 = vmatmul.f32.gmra.mxu0 %v3108
        %v4165 = vpop.f32.mrf.mxu0
        %v4166 = vadd.f32 %v3846, %v4165
        %4167 = vdwg.mxu0
        %4168 = vmatpush.msra.mxu0 0.0
        %4169 = vmatpush.msra.mxu0 0.0
        %4170 = vmatpush.msra.mxu0 0.0
        %4171 = vmatpush.msra.mxu0 0.0
        %4172 = vmatpush.msra.mxu0 0.0
        %4173 = vmatpush.msra.mxu0 0.0
        %4174 = vmatpush.msra.mxu0 0.0
        %4175 = vmatpush.msra.mxu0 0.0
        %4176 = vmatpush.msra.mxu0 %v2892
        %4177 = vmatpush.msra.mxu0 %v2891
        %4178 = vmatpush.msra.mxu0 %v2890
        %4179 = vmatpush.msra.mxu0 %v2889
        %4180 = vmatpush.msra.mxu0 %v2888
        %4181 = vmatpush.msra.mxu0 %v2887
        %4182 = vmatpush.msra.mxu0 %v2886
        %4183 = vmatpush.msra.mxu0 %v2885
        %4184 = vmatmul.f32.gmra.mxu0 %v3130
        %v4185 = vpop.f32.mrf.mxu0
        %v4186 = vadd.f32 %v3866, %v4185
        %4187 = vdwg.mxu0
        %4188 = vmatpush.msra.mxu0 0.0
        %4189 = vmatpush.msra.mxu0 0.0
        %4190 = vmatpush.msra.mxu0 0.0
        %4191 = vmatpush.msra.mxu0 0.0
        %4192 = vmatpush.msra.mxu0 0.0
        %4193 = vmatpush.msra.mxu0 0.0
        %4194 = vmatpush.msra.mxu0 0.0
        %4195 = vmatpush.msra.mxu0 0.0
        %4196 = vmatpush.msra.mxu0 %v2900
        %4197 = vmatpush.msra.mxu0 %v2899
        %4198 = vmatpush.msra.mxu0 %v2898
        %4199 = vmatpush.msra.mxu0 %v2897
        %4200 = vmatpush.msra.mxu0 %v2896
        %4201 = vmatpush.msra.mxu0 %v2895
        %4202 = vmatpush.msra.mxu0 %v2894
        %4203 = vmatpush.msra.mxu0 %v2893
        %4204 = vmatmul.f32.gmra.mxu0 %v3152
        %v4205 = vpop.f32.mrf.mxu0
        %v4206 = vadd.f32 %v3886, %v4205
        %4207 = vdwg.mxu0
        %4208 = vmatpush.msra.mxu0 0.0
        %4209 = vmatpush.msra.mxu0 0.0
        %4210 = vmatpush.msra.mxu0 0.0
        %4211 = vmatpush.msra.mxu0 0.0
        %4212 = vmatpush.msra.mxu0 0.0
        %4213 = vmatpush.msra.mxu0 0.0
        %4214 = vmatpush.msra.mxu0 0.0
        %4215 = vmatpush.msra.mxu0 0.0
        %4216 = vmatpush.msra.mxu0 %v2908
        %4217 = vmatpush.msra.mxu0 %v2907
        %4218 = vmatpush.msra.mxu0 %v2906
        %4219 = vmatpush.msra.mxu0 %v2905
        %4220 = vmatpush.msra.mxu0 %v2904
        %4221 = vmatpush.msra.mxu0 %v2903
        %4222 = vmatpush.msra.mxu0 %v2902
        %4223 = vmatpush.msra.mxu0 %v2901
        %4224 = vmatmul.f32.gmra.mxu0 %v3174
        %v4225 = vpop.f32.mrf.mxu0
        %v4226 = vadd.f32 %v3906, %v4225
        %4227 = vdwg.mxu0
        %4228 = vmatpush.msra.mxu0 0.0
        %4229 = vmatpush.msra.mxu0 0.0
        %4230 = vmatpush.msra.mxu0 0.0
        %4231 = vmatpush.msra.mxu0 0.0
        %4232 = vmatpush.msra.mxu0 0.0
        %4233 = vmatpush.msra.mxu0 0.0
        %4234 = vmatpush.msra.mxu0 0.0
        %4235 = vmatpush.msra.mxu0 0.0
        %4236 = vmatpush.msra.mxu0 %v2916
        %4237 = vmatpush.msra.mxu0 %v2915
        %4238 = vmatpush.msra.mxu0 %v2914
        %4239 = vmatpush.msra.mxu0 %v2913
        %4240 = vmatpush.msra.mxu0 %v2912
        %4241 = vmatpush.msra.mxu0 %v2911
        %4242 = vmatpush.msra.mxu0 %v2910
        %4243 = vmatpush.msra.mxu0 %v2909
        %4244 = vmatmul.f32.gmra.mxu0 %v3196
        %v4245 = vpop.f32.mrf.mxu0
        %v4246 = vadd.f32 %v3926, %v4245
        %4247 = vdwg.mxu0
        %4248 = vmatpush.msra.mxu0 0.0
        %4249 = vmatpush.msra.mxu0 0.0
        %4250 = vmatpush.msra.mxu0 0.0
        %4251 = vmatpush.msra.mxu0 0.0
        %4252 = vmatpush.msra.mxu0 0.0
        %4253 = vmatpush.msra.mxu0 0.0
        %4254 = vmatpush.msra.mxu0 0.0
        %4255 = vmatpush.msra.mxu0 0.0
        %4256 = vmatpush.msra.mxu0 %v2924
        %4257 = vmatpush.msra.mxu0 %v2923
        %4258 = vmatpush.msra.mxu0 %v2922
        %4259 = vmatpush.msra.mxu0 %v2921
        %4260 = vmatpush.msra.mxu0 %v2920
        %4261 = vmatpush.msra.mxu0 %v2919
        %4262 = vmatpush.msra.mxu0 %v2918
        %4263 = vmatpush.msra.mxu0 %v2917
        %4264 = vmatmul.f32.gmra.mxu0 %v3218
        %v4265 = vpop.f32.mrf.mxu0
        %v4266 = vadd.f32 %v3946, %v4265
        %4267 = vdwg.mxu0
        %4268 = vmatpush.msra.mxu0 0.0
        %4269 = vmatpush.msra.mxu0 0.0
        %4270 = vmatpush.msra.mxu0 0.0
        %4271 = vmatpush.msra.mxu0 0.0
        %4272 = vmatpush.msra.mxu0 0.0
        %4273 = vmatpush.msra.mxu0 0.0
        %4274 = vmatpush.msra.mxu0 0.0
        %4275 = vmatpush.msra.mxu0 0.0
        %4276 = vmatpush.msra.mxu0 %v2932
        %4277 = vmatpush.msra.mxu0 %v2931
        %4278 = vmatpush.msra.mxu0 %v2930
        %4279 = vmatpush.msra.mxu0 %v2929
        %4280 = vmatpush.msra.mxu0 %v2928
        %4281 = vmatpush.msra.mxu0 %v2927
        %4282 = vmatpush.msra.mxu0 %v2926
        %4283 = vmatpush.msra.mxu0 %v2925
        %4284 = vmatmul.f32.gmra.mxu0 %v3240
        %v4285 = vpop.f32.mrf.mxu0
        %v4286 = vadd.f32 %v3966, %v4285
        %4287 = vdwg.mxu0
        %4288 = vmatpush.msra.mxu0 0.0
        %4289 = vmatpush.msra.mxu0 0.0
        %4290 = vmatpush.msra.mxu0 0.0
        %4291 = vmatpush.msra.mxu0 0.0
        %4292 = vmatpush.msra.mxu0 0.0
        %4293 = vmatpush.msra.mxu0 0.0
        %4294 = vmatpush.msra.mxu0 0.0
        %4295 = vmatpush.msra.mxu0 0.0
        %4296 = vmatpush.msra.mxu0 %v2940
        %4297 = vmatpush.msra.mxu0 %v2939
        %4298 = vmatpush.msra.mxu0 %v2938
        %4299 = vmatpush.msra.mxu0 %v2937
        %4300 = vmatpush.msra.mxu0 %v2936
        %4301 = vmatpush.msra.mxu0 %v2935
        %4302 = vmatpush.msra.mxu0 %v2934
        %4303 = vmatpush.msra.mxu0 %v2933
        %4304 = vmatmul.f32.gmra.mxu0 %v3262
        %v4305 = vpop.f32.mrf.mxu0
        %v4306 = vadd.f32 %v3986, %v4305
        %4307 = vdwg.mxu0
        %4308 = vmatpush.msra.mxu0 0.0
        %4309 = vmatpush.msra.mxu0 0.0
        %4310 = vmatpush.msra.mxu0 0.0
        %4311 = vmatpush.msra.mxu0 0.0
        %4312 = vmatpush.msra.mxu0 0.0
        %4313 = vmatpush.msra.mxu0 0.0
        %4314 = vmatpush.msra.mxu0 0.0
        %4315 = vmatpush.msra.mxu0 0.0
        %4316 = vmatpush.msra.mxu0 %v2948
        %4317 = vmatpush.msra.mxu0 %v2947
        %4318 = vmatpush.msra.mxu0 %v2946
        %4319 = vmatpush.msra.mxu0 %v2945
        %4320 = vmatpush.msra.mxu0 %v2944
        %4321 = vmatpush.msra.mxu0 %v2943
        %4322 = vmatpush.msra.mxu0 %v2942
        %4323 = vmatpush.msra.mxu0 %v2941
        %4324 = vmatmul.f32.gmra.mxu0 %v3284
        %v4325 = vpop.f32.mrf.mxu0
        %v4326 = vadd.f32 %v4006, %v4325
        %4327 = vdwg.mxu0
        %4328 = vmatpush.msra.mxu0 0.0
        %4329 = vmatpush.msra.mxu0 0.0
        %4330 = vmatpush.msra.mxu0 0.0
        %4331 = vmatpush.msra.mxu0 0.0
        %4332 = vmatpush.msra.mxu0 0.0
        %4333 = vmatpush.msra.mxu0 0.0
        %4334 = vmatpush.msra.mxu0 0.0
        %4335 = vmatpush.msra.mxu0 0.0
        %4336 = vmatpush.msra.mxu0 %v2956
        %4337 = vmatpush.msra.mxu0 %v2955
        %4338 = vmatpush.msra.mxu0 %v2954
        %4339 = vmatpush.msra.mxu0 %v2953
        %4340 = vmatpush.msra.mxu0 %v2952
        %4341 = vmatpush.msra.mxu0 %v2951
        %4342 = vmatpush.msra.mxu0 %v2950
        %4343 = vmatpush.msra.mxu0 %v2949
        %4344 = vmatmul.f32.gmra.mxu0 %v3306
        %v4345 = vpop.f32.mrf.mxu0
        %v4346 = vadd.f32 %v4026, %v4345
        %4347 = vdwg.mxu0
        %4348 = vmatpush.msra.mxu0 0.0
        %4349 = vmatpush.msra.mxu0 0.0
        %4350 = vmatpush.msra.mxu0 0.0
        %4351 = vmatpush.msra.mxu0 0.0
        %4352 = vmatpush.msra.mxu0 0.0
        %4353 = vmatpush.msra.mxu0 0.0
        %4354 = vmatpush.msra.mxu0 0.0
        %4355 = vmatpush.msra.mxu0 0.0
        %4356 = vmatpush.msra.mxu0 %v2964
        %4357 = vmatpush.msra.mxu0 %v2963
        %4358 = vmatpush.msra.mxu0 %v2962
        %4359 = vmatpush.msra.mxu0 %v2961
        %4360 = vmatpush.msra.mxu0 %v2960
        %4361 = vmatpush.msra.mxu0 %v2959
        %4362 = vmatpush.msra.mxu0 %v2958
        %4363 = vmatpush.msra.mxu0 %v2957
        %4364 = vmatmul.f32.gmra.mxu0 %v3328
        %v4365 = vpop.f32.mrf.mxu0
        %v4366 = vadd.f32 %v4046, %v4365
        %4367 = vdwg.mxu0
        %4368 = vmatpush.msra.mxu0 0.0
        %4369 = vmatpush.msra.mxu0 0.0
        %4370 = vmatpush.msra.mxu0 0.0
        %4371 = vmatpush.msra.mxu0 0.0
        %4372 = vmatpush.msra.mxu0 0.0
        %4373 = vmatpush.msra.mxu0 0.0
        %4374 = vmatpush.msra.mxu0 0.0
        %4375 = vmatpush.msra.mxu0 0.0
        %4376 = vmatpush.msra.mxu0 %v2972
        %4377 = vmatpush.msra.mxu0 %v2971
        %4378 = vmatpush.msra.mxu0 %v2970
        %4379 = vmatpush.msra.mxu0 %v2969
        %4380 = vmatpush.msra.mxu0 %v2968
        %4381 = vmatpush.msra.mxu0 %v2967
        %4382 = vmatpush.msra.mxu0 %v2966
        %4383 = vmatpush.msra.mxu0 %v2965
        %4384 = vmatmul.f32.gmra.mxu0 %v3350
        %v4385 = vpop.f32.mrf.mxu0
        %v4386 = vadd.f32 %v4066, %v4385
        %4387 = vdwg.mxu0
        %4388 = vmatpush.msra.mxu0 0.0
        %4389 = vmatpush.msra.mxu0 0.0
        %4390 = vmatpush.msra.mxu0 0.0
        %4391 = vmatpush.msra.mxu0 0.0
        %4392 = vmatpush.msra.mxu0 0.0
        %4393 = vmatpush.msra.mxu0 0.0
        %4394 = vmatpush.msra.mxu0 0.0
        %4395 = vmatpush.msra.mxu0 0.0
        %4396 = vmatpush.msra.mxu0 %v2980
        %4397 = vmatpush.msra.mxu0 %v2979
        %4398 = vmatpush.msra.mxu0 %v2978
        %4399 = vmatpush.msra.mxu0 %v2977
        %4400 = vmatpush.msra.mxu0 %v2976
        %4401 = vmatpush.msra.mxu0 %v2975
        %4402 = vmatpush.msra.mxu0 %v2974
        %4403 = vmatpush.msra.mxu0 %v2973
        %4404 = vmatmul.f32.gmra.mxu0 %v3372
        %v4405 = vpop.f32.mrf.mxu0
        %v4406 = vadd.f32 %v4086, %v4405
        %4407 = vdwg.mxu0
        %4408 = vmatpush.msra.mxu0 0.0
        %4409 = vmatpush.msra.mxu0 0.0
        %4410 = vmatpush.msra.mxu0 0.0
        %4411 = vmatpush.msra.mxu0 0.0
        %4412 = vmatpush.msra.mxu0 0.0
        %4413 = vmatpush.msra.mxu0 0.0
        %4414 = vmatpush.msra.mxu0 0.0
        %4415 = vmatpush.msra.mxu0 0.0
        %4416 = vmatpush.msra.mxu0 %v2988
        %4417 = vmatpush.msra.mxu0 %v2987
        %4418 = vmatpush.msra.mxu0 %v2986
        %4419 = vmatpush.msra.mxu0 %v2985
        %4420 = vmatpush.msra.mxu0 %v2984
        %4421 = vmatpush.msra.mxu0 %v2983
        %4422 = vmatpush.msra.mxu0 %v2982
        %4423 = vmatpush.msra.mxu0 %v2981
        %4424 = vmatmul.f32.gmra.mxu0 %v3394
        %v4425 = vpop.f32.mrf.mxu0
        %v4426 = vadd.f32 %v4106, %v4425
        %4427 = vdwg.mxu0
        %4428 = vmatpush.msra.mxu0 0.0
        %4429 = vmatpush.msra.mxu0 0.0
        %4430 = vmatpush.msra.mxu0 0.0
        %4431 = vmatpush.msra.mxu0 0.0
        %4432 = vmatpush.msra.mxu0 0.0
        %4433 = vmatpush.msra.mxu0 0.0
        %4434 = vmatpush.msra.mxu0 0.0
        %4435 = vmatpush.msra.mxu0 0.0
        %4436 = vmatpush.msra.mxu0 %v2996
        %4437 = vmatpush.msra.mxu0 %v2995
        %4438 = vmatpush.msra.mxu0 %v2994
        %4439 = vmatpush.msra.mxu0 %v2993
        %4440 = vmatpush.msra.mxu0 %v2992
        %4441 = vmatpush.msra.mxu0 %v2991
        %4442 = vmatpush.msra.mxu0 %v2990
        %4443 = vmatpush.msra.mxu0 %v2989
        %4444 = vmatmul.f32.gmra.mxu0 %v3416
        %v4445 = vpop.f32.mrf.mxu0
        %v4446 = vadd.f32 %v4126, %v4445
        %4447 = vdwg.mxu0
        %4448 = vmatpush.msra.mxu0 0.0
        %4449 = vmatpush.msra.mxu0 0.0
        %4450 = vmatpush.msra.mxu0 0.0
        %4451 = vmatpush.msra.mxu0 0.0
        %4452 = vmatpush.msra.mxu0 0.0
        %4453 = vmatpush.msra.mxu0 0.0
        %4454 = vmatpush.msra.mxu0 0.0
        %4455 = vmatpush.msra.mxu0 0.0
        %4456 = vmatpush.msra.mxu0 %v3004
        %4457 = vmatpush.msra.mxu0 %v3003
        %4458 = vmatpush.msra.mxu0 %v3002
        %4459 = vmatpush.msra.mxu0 %v3001
        %4460 = vmatpush.msra.mxu0 %v3000
        %4461 = vmatpush.msra.mxu0 %v2999
        %4462 = vmatpush.msra.mxu0 %v2998
        %4463 = vmatpush.msra.mxu0 %v2997
        %4464 = vmatmul.f32.gmra.mxu0 %v3438
        %v4465 = vpop.f32.mrf.mxu0
        %v4466 = vadd.f32 %v4146, %v4465
        %4467 = vdwg.mxu0
        %v4484 = vrot.slane %v3813, 7
        %v4485 = vsel %vm2438, %v4484, %v3812
        %v4486 = vrot.slane %v3814, 6
        %v4487 = vsel %vm2441, %v4486, %v4485
        %v4488 = vrot.slane %v3815, 5
        %v4489 = vsel %vm2444, %v4488, %v4487
        %v4490 = vrot.slane %v3816, 4
        %v4491 = vsel %vm2447, %v4490, %v4489
        %v4492 = vrot.slane %v3817, 3
        %v4493 = vsel %vm2450, %v4492, %v4491
        %v4494 = vrot.slane %v3818, 2
        %v4495 = vsel %vm2453, %v4494, %v4493
        %v4496 = vrot.slane %v3819, 1
        %v4497 = vsel %vm2456, %v4496, %v4495
        %v4498 = vrot.slane %v3821, 7
        %v4499 = vsel %vm2438, %v4498, %v3820
        %v4500 = vrot.slane %v3822, 6
        %v4501 = vsel %vm2441, %v4500, %v4499
        %v4502 = vrot.slane %v3823, 5
        %v4503 = vsel %vm2444, %v4502, %v4501
        %v4504 = vrot.slane %v3824, 4
        %v4505 = vsel %vm2447, %v4504, %v4503
        %v4506 = vrot.slane %v3825, 3
        %v4507 = vsel %vm2450, %v4506, %v4505
        %v4508 = vrot.slane %v3826, 2
        %v4509 = vsel %vm2453, %v4508, %v4507
        %v4510 = vrot.slane %v3827, 1
        %v4511 = vsel %vm2456, %v4510, %v4509
        %v4530 = vrot.slane %v4186, 7
        %v4531 = vsel %vm2438, %v4530, %v4166
        %v4532 = vrot.slane %v4206, 6
        %v4533 = vsel %vm2441, %v4532, %v4531
        %v4534 = vrot.slane %v4226, 5
        %v4535 = vsel %vm2444, %v4534, %v4533
        %v4536 = vrot.slane %v4246, 4
        %v4537 = vsel %vm2447, %v4536, %v4535
        %v4538 = vrot.slane %v4266, 3
        %v4539 = vsel %vm2450, %v4538, %v4537
        %v4540 = vrot.slane %v4286, 2
        %v4541 = vsel %vm2453, %v4540, %v4539
        %v4542 = vrot.slane %v4306, 1
        %v4543 = vsel %vm2456, %v4542, %v4541
        %v4544 = vrot.slane %v4346, 7
        %v4545 = vsel %vm2438, %v4544, %v4326
        %v4546 = vrot.slane %v4366, 6
        %v4547 = vsel %vm2441, %v4546, %v4545
        %v4548 = vrot.slane %v4386, 5
        %v4549 = vsel %vm2444, %v4548, %v4547
        %v4550 = vrot.slane %v4406, 4
        %v4551 = vsel %vm2447, %v4550, %v4549
        %v4552 = vrot.slane %v4426, 3
        %v4553 = vsel %vm2450, %v4552, %v4551
        %v4554 = vrot.slane %v4446, 2
        %v4555 = vsel %vm2453, %v4554, %v4553
        %v4556 = vrot.slane %v4466, 1
        %v4557 = vsel %vm2456, %v4556, %v4555
        %4560 = vxpose.xlu0.b32.start [1/16] %v4497, 128
        %4561 = vxpose.xlu0.b32.cont [2/16] %v4511, 128
        %4562 = vxpose.xlu0.b32.cont [3/16] %v4543, 128
        %4563 = vxpose.xlu0.b32.cont [4/16] %v4557, 128
        %4564 = vxpose.xlu0.b32.cont [5/16] 0.0, 128
        %4565 = vxpose.xlu0.b32.cont [6/16] 0.0, 128
        %4566 = vxpose.xlu0.b32.cont [7/16] 0.0, 128
        %4567 = vxpose.xlu0.b32.cont [8/16] 0.0, 128
        %4568 = vxpose.xlu0.b32.cont [9/16] 0.0, 128
        %4569 = vxpose.xlu0.b32.cont [10/16] 0.0, 128
        %4570 = vxpose.xlu0.b32.cont [11/16] 0.0, 128
        %4571 = vxpose.xlu0.b32.cont [12/16] 0.0, 128
        %4572 = vxpose.xlu0.b32.cont [13/16] 0.0, 128
        %4573 = vxpose.xlu0.b32.cont [14/16] 0.0, 128
        %4574 = vxpose.xlu0.b32.cont [15/16] 0.0, 128
        %4575 = vxpose.xlu0.b32.end [16/16] 0.0, 128
        %v4576 = vpop.trf.xlu0
        %v4577 = vpop.trf.xlu0
        %v4578 = vpop.trf.xlu0
        %v4579 = vpop.trf.xlu0
        %v4580 = vpop.trf.xlu0
        %v4581 = vpop.trf.xlu0
        %v4582 = vpop.trf.xlu0
        %v4583 = vpop.trf.xlu0
        %v4584 = vpop.trf.xlu0
        %v4585 = vpop.trf.xlu0
        %v4586 = vpop.trf.xlu0
        %v4587 = vpop.trf.xlu0
        %v4588 = vpop.trf.xlu0
        %v4589 = vpop.trf.xlu0
        %v4590 = vpop.trf.xlu0
        %v4591 = vpop.trf.xlu0
        %v4593 = vsel %vm2552, %v4576, 0
        %v4596 = vsel %vm2552, %v4577, 0
        %v4599 = vsel %vm2552, %v4578, 0
        %v4602 = vsel %vm2552, %v4579, 0
        %v4605 = vsel %vm2552, %v4580, 0
        %v4608 = vsel %vm2552, %v4581, 0
        %v4611 = vsel %vm2552, %v4582, 0
        %v4614 = vsel %vm2552, %v4583, 0
        %4616 = vmatpush.msra.mxu0 0.0
        %4617 = vmatpush.msra.mxu0 0.0
        %4618 = vmatpush.msra.mxu0 0.0
        %4619 = vmatpush.msra.mxu0 0.0
        %4620 = vmatpush.msra.mxu0 0.0
        %4621 = vmatpush.msra.mxu0 0.0
        %4622 = vmatpush.msra.mxu0 0.0
        %4623 = vmatpush.msra.mxu0 0.0
        %4624 = vmatpush.msra.mxu0 0.0
        %4625 = vmatpush.msra.mxu0 0.0
        %4626 = vmatpush.msra.mxu0 0.0
        %4627 = vmatpush.msra.mxu0 0.0
        %4628 = vmatpush.msra.mxu0 %v690
        %4629 = vmatpush.msra.mxu0 %v689
        %4630 = vmatpush.msra.mxu0 %v688
        %4631 = vmatpush.msra.mxu0 %v687
        %4632 = vmatmul.f32.gmra.mxu0 %v4593
        %v4633 = vpop.f32.mrf.mxu0
        %v4634 = vadd.f32 0.0, %v4633
        %4635 = vmatmul.f32.gmra.mxu0 %v4596
        %v4636 = vpop.f32.mrf.mxu0
        %v4637 = vadd.f32 0.0, %v4636
        %4638 = vmatmul.f32.gmra.mxu0 %v4599
        %v4639 = vpop.f32.mrf.mxu0
        %v4640 = vadd.f32 0.0, %v4639
        %4641 = vmatmul.f32.gmra.mxu0 %v4602
        %v4642 = vpop.f32.mrf.mxu0
        %v4643 = vadd.f32 0.0, %v4642
        %4644 = vmatmul.f32.gmra.mxu0 %v4605
        %v4645 = vpop.f32.mrf.mxu0
        %v4646 = vadd.f32 0.0, %v4645
        %4647 = vmatmul.f32.gmra.mxu0 %v4608
        %v4648 = vpop.f32.mrf.mxu0
        %v4649 = vadd.f32 0.0, %v4648
        %4650 = vmatmul.f32.gmra.mxu0 %v4611
        %v4651 = vpop.f32.mrf.mxu0
        %v4652 = vadd.f32 0.0, %v4651
        %4653 = vmatmul.f32.gmra.mxu0 %v4614
        %v4654 = vpop.f32.mrf.mxu0
        %v4655 = vadd.f32 0.0, %v4654
        %4656 = vdwg.mxu0
        %v4658 = vsel %vm963, %v3006, 0
        %v4661 = vsel %vm963, %v3007, 0
        %v4664 = vsel %vm963, %v3008, 0
        %v4667 = vsel %vm963, %v3009, 0
        %v4670 = vsel %vm963, %v3010, 0
        %v4673 = vsel %vm963, %v3011, 0
        %v4676 = vsel %vm963, %v3012, 0
        %v4679 = vsel %vm963, %v3013, 0
        %4681 = vmatpush.msra.mxu0 0.0
        %4682 = vmatpush.msra.mxu0 0.0
        %4683 = vmatpush.msra.mxu0 0.0
        %4684 = vmatpush.msra.mxu0 0.0
        %4685 = vmatpush.msra.mxu0 0.0
        %4686 = vmatpush.msra.mxu0 0.0
        %4687 = vmatpush.msra.mxu0 0.0
        %4688 = vmatpush.msra.mxu0 0.0
        %4689 = vmatpush.msra.mxu0 %v2746
        %4690 = vmatpush.msra.mxu0 %v2745
        %4691 = vmatpush.msra.mxu0 %v2744
        %4692 = vmatpush.msra.mxu0 %v2743
        %4693 = vmatpush.msra.mxu0 %v2742
        %4694 = vmatpush.msra.mxu0 %v2741
        %4695 = vmatpush.msra.mxu0 %v2740
        %4696 = vmatpush.msra.mxu0 %v2739
        %4697 = vmatmul.f32.gmra.mxu0 %v4658
        %v4698 = vpop.f32.mrf.mxu0
        %v4699 = vadd.f32 0.0, %v4698
        %4700 = vmatmul.f32.gmra.mxu0 %v4661
        %v4701 = vpop.f32.mrf.mxu0
        %v4702 = vadd.f32 0.0, %v4701
        %4703 = vmatmul.f32.gmra.mxu0 %v4664
        %v4704 = vpop.f32.mrf.mxu0
        %v4705 = vadd.f32 0.0, %v4704
        %4706 = vmatmul.f32.gmra.mxu0 %v4667
        %v4707 = vpop.f32.mrf.mxu0
        %v4708 = vadd.f32 0.0, %v4707
        %4709 = vmatmul.f32.gmra.mxu0 %v4670
        %v4710 = vpop.f32.mrf.mxu0
        %v4711 = vadd.f32 0.0, %v4710
        %4712 = vmatmul.f32.gmra.mxu0 %v4673
        %v4713 = vpop.f32.mrf.mxu0
        %v4714 = vadd.f32 0.0, %v4713
        %4715 = vmatmul.f32.gmra.mxu0 %v4676
        %v4716 = vpop.f32.mrf.mxu0
        %v4717 = vadd.f32 0.0, %v4716
        %4718 = vmatmul.f32.gmra.mxu0 %v4679
        %v4719 = vpop.f32.mrf.mxu0
        %v4720 = vadd.f32 0.0, %v4719
        %4721 = vdwg.mxu0
        %v4722 = vadd.f32 %v4634, %v4699
        %v4723 = vadd.f32 %v4637, %v4702
        %v4724 = vadd.f32 %v4640, %v4705
        %v4725 = vadd.f32 %v4643, %v4708
        %v4726 = vadd.f32 %v4646, %v4711
        %v4727 = vadd.f32 %v4649, %v4714
        %v4728 = vadd.f32 %v4652, %v4717
        %v4729 = vadd.f32 %v4655, %v4720
        %4731 = vset.pattern.permute.xlu0 0
        %4732 = vperm.xlu0 %4731, %v3015
        %v4733 = vpop.permute.xlu0 %4732
        %4736 = vset.pattern.permute.xlu0 0
        %4737 = vperm.xlu0 %4736, %v3016
        %v4738 = vpop.permute.xlu0 %4737
        %4741 = vset.pattern.permute.xlu0 0
        %4742 = vperm.xlu0 %4741, %v3017
        %v4743 = vpop.permute.xlu0 %4742
        %4746 = vset.pattern.permute.xlu0 0
        %4747 = vperm.xlu0 %4746, %v3018
        %v4748 = vpop.permute.xlu0 %4747
        %4751 = vset.pattern.permute.xlu0 0
        %4752 = vperm.xlu0 %4751, %v3019
        %v4753 = vpop.permute.xlu0 %4752
        %4756 = vset.pattern.permute.xlu0 0
        %4757 = vperm.xlu0 %4756, %v3020
        %v4758 = vpop.permute.xlu0 %4757
        %4761 = vset.pattern.permute.xlu0 0
        %4762 = vperm.xlu0 %4761, %v3021
        %v4763 = vpop.permute.xlu0 %4762
        %4766 = vset.pattern.permute.xlu0 0
        %4767 = vperm.xlu0 %4766, %v3022
        %v4768 = vpop.permute.xlu0 %4767
        %v4770 = vadd.f32 %v4722, %v4733
        %v4771 = vadd.f32 %v4723, %v4738
        %v4772 = vadd.f32 %v4724, %v4743
        %v4773 = vadd.f32 %v4725, %v4748
        %v4774 = vadd.f32 %v4726, %v4753
        %v4775 = vadd.f32 %v4727, %v4758
        %v4776 = vadd.f32 %v4728, %v4763
        %v4777 = vadd.f32 %v4729, %v4768
        %v4778 = vmax.f32 %v4770, 0.0
        %v4779 = vmax.f32 %v4771, 0.0
        %v4780 = vmax.f32 %v4772, 0.0
        %v4781 = vmax.f32 %v4773, 0.0
        %v4782 = vmax.f32 %v4774, 0.0
        %v4783 = vmax.f32 %v4775, 0.0
        %v4784 = vmax.f32 %v4776, 0.0
        %v4785 = vmax.f32 %v4777, 0.0
        %s4786 = scalar_lea.vmem [#allocation9], 2048
        %v4787 = vld [vmem:[%s4786] sm:$0xff]
        %v4788 = vld [vmem:[%s4786 + $0x8] sm:$0xff]
        %v4789 = vld [vmem:[%s4786 + $0x10] sm:$0xff]
        %v4790 = vld [vmem:[%s4786 + $0x18] sm:$0xff]
        %v4791 = vld [vmem:[%s4786 + $0x20] sm:$0xff]
        %v4792 = vld [vmem:[%s4786 + $0x28] sm:$0xff]
        %v4793 = vld [vmem:[%s4786 + $0x30] sm:$0xff]
        %v4794 = vld [vmem:[%s4786 + $0x38] sm:$0xff]
        %v4795 = vld [vmem:[%s4786 + $0x40] sm:$0xff]
        %v4796 = vld [vmem:[%s4786 + $0x48] sm:$0xff]
        %v4797 = vld [vmem:[%s4786 + $0x50] sm:$0xff]
        %v4798 = vld [vmem:[%s4786 + $0x58] sm:$0xff]
        %v4799 = vld [vmem:[%s4786 + $0x60] sm:$0xff]
        %v4800 = vld [vmem:[%s4786 + $0x68] sm:$0xff]
        %v4801 = vld [vmem:[%s4786 + $0x70] sm:$0xff]
        %v4802 = vld [vmem:[%s4786 + $0x78] sm:$0xff]
        %v4803 = vld [vmem:[%s4786 + $0x80] sm:$0xff]
        %v4804 = vld [vmem:[%s4786 + $0x88] sm:$0xff]
        %v4805 = vld [vmem:[%s4786 + $0x90] sm:$0xff]
        %v4806 = vld [vmem:[%s4786 + $0x98] sm:$0xff]
        %v4807 = vld [vmem:[%s4786 + $0xa0] sm:$0xff]
        %v4808 = vld [vmem:[%s4786 + $0xa8] sm:$0xff]
        %v4809 = vld [vmem:[%s4786 + $0xb0] sm:$0xff]
        %v4810 = vld [vmem:[%s4786 + $0xb8] sm:$0xff]
        %v4811 = vld [vmem:[%s4786 + $0xc0] sm:$0xff]
        %v4812 = vld [vmem:[%s4786 + $0xc8] sm:$0xff]
        %v4813 = vld [vmem:[%s4786 + $0xd0] sm:$0xff]
        %v4814 = vld [vmem:[%s4786 + $0xd8] sm:$0xff]
        %v4815 = vld [vmem:[%s4786 + $0xe0] sm:$0xff]
        %v4816 = vld [vmem:[%s4786 + $0xe8] sm:$0xff]
        %v4817 = vld [vmem:[%s4786 + $0xf0] sm:$0xff]
        %v4818 = vld [vmem:[%s4786 + $0xf8] sm:$0xff]
        %v4819 = vld [vmem:[%s4786 + $0x100] sm:$0xff]
        %v4820 = vld [vmem:[%s4786 + $0x108] sm:$0xff]
        %v4821 = vld [vmem:[%s4786 + $0x110] sm:$0xff]
        %v4822 = vld [vmem:[%s4786 + $0x118] sm:$0xff]
        %v4823 = vld [vmem:[%s4786 + $0x120] sm:$0xff]
        %v4824 = vld [vmem:[%s4786 + $0x128] sm:$0xff]
        %v4825 = vld [vmem:[%s4786 + $0x130] sm:$0xff]
        %v4826 = vld [vmem:[%s4786 + $0x138] sm:$0xff]
        %v4827 = vld [vmem:[%s4786 + $0x140] sm:$0xff]
        %v4828 = vld [vmem:[%s4786 + $0x148] sm:$0xff]
        %v4829 = vld [vmem:[%s4786 + $0x150] sm:$0xff]
        %v4830 = vld [vmem:[%s4786 + $0x158] sm:$0xff]
        %v4831 = vld [vmem:[%s4786 + $0x160] sm:$0xff]
        %v4832 = vld [vmem:[%s4786 + $0x168] sm:$0xff]
        %v4833 = vld [vmem:[%s4786 + $0x170] sm:$0xff]
        %v4834 = vld [vmem:[%s4786 + $0x178] sm:$0xff]
        %v4835 = vld [vmem:[%s4786 + $0x180] sm:$0xff]
        %v4836 = vld [vmem:[%s4786 + $0x188] sm:$0xff]
        %v4837 = vld [vmem:[%s4786 + $0x190] sm:$0xff]
        %v4838 = vld [vmem:[%s4786 + $0x198] sm:$0xff]
        %v4839 = vld [vmem:[%s4786 + $0x1a0] sm:$0xff]
        %v4840 = vld [vmem:[%s4786 + $0x1a8] sm:$0xff]
        %v4841 = vld [vmem:[%s4786 + $0x1b0] sm:$0xff]
        %v4842 = vld [vmem:[%s4786 + $0x1b8] sm:$0xff]
        %v4843 = vld [vmem:[%s4786 + $0x1c0] sm:$0xff]
        %v4844 = vld [vmem:[%s4786 + $0x1c8] sm:$0xff]
        %v4845 = vld [vmem:[%s4786 + $0x1d0] sm:$0xff]
        %v4846 = vld [vmem:[%s4786 + $0x1d8] sm:$0xff]
        %v4847 = vld [vmem:[%s4786 + $0x1e0] sm:$0xff]
        %v4848 = vld [vmem:[%s4786 + $0x1e8] sm:$0xff]
        %v4849 = vld [vmem:[%s4786 + $0x1f0] sm:$0xff]
        %v4850 = vld [vmem:[%s4786 + $0x1f8] sm:$0xff]
        %v4851 = vld [vmem:[%s4786 + $0x200] sm:$0xff]
        %v4852 = vld [vmem:[%s4786 + $0x208] sm:$0xff]
        %v4853 = vld [vmem:[%s4786 + $0x210] sm:$0xff]
        %v4854 = vld [vmem:[%s4786 + $0x218] sm:$0xff]
        %v4855 = vld [vmem:[%s4786 + $0x220] sm:$0xff]
        %v4856 = vld [vmem:[%s4786 + $0x228] sm:$0xff]
        %v4857 = vld [vmem:[%s4786 + $0x230] sm:$0xff]
        %v4858 = vld [vmem:[%s4786 + $0x238] sm:$0xff]
        %v4859 = vld [vmem:[%s4786 + $0x240] sm:$0xff]
        %v4860 = vld [vmem:[%s4786 + $0x248] sm:$0xff]
        %v4861 = vld [vmem:[%s4786 + $0x250] sm:$0xff]
        %v4862 = vld [vmem:[%s4786 + $0x258] sm:$0xff]
        %v4863 = vld [vmem:[%s4786 + $0x260] sm:$0xff]
        %v4864 = vld [vmem:[%s4786 + $0x268] sm:$0xff]
        %v4865 = vld [vmem:[%s4786 + $0x270] sm:$0xff]
        %v4866 = vld [vmem:[%s4786 + $0x278] sm:$0xff]
        %v4867 = vld [vmem:[%s4786 + $0x280] sm:$0xff]
        %v4868 = vld [vmem:[%s4786 + $0x288] sm:$0xff]
        %v4869 = vld [vmem:[%s4786 + $0x290] sm:$0xff]
        %v4870 = vld [vmem:[%s4786 + $0x298] sm:$0xff]
        %v4871 = vld [vmem:[%s4786 + $0x2a0] sm:$0xff]
        %v4872 = vld [vmem:[%s4786 + $0x2a8] sm:$0xff]
        %v4873 = vld [vmem:[%s4786 + $0x2b0] sm:$0xff]
        %v4874 = vld [vmem:[%s4786 + $0x2b8] sm:$0xff]
        %v4875 = vld [vmem:[%s4786 + $0x2c0] sm:$0xff]
        %v4876 = vld [vmem:[%s4786 + $0x2c8] sm:$0xff]
        %v4877 = vld [vmem:[%s4786 + $0x2d0] sm:$0xff]
        %v4878 = vld [vmem:[%s4786 + $0x2d8] sm:$0xff]
        %v4879 = vld [vmem:[%s4786 + $0x2e0] sm:$0xff]
        %v4880 = vld [vmem:[%s4786 + $0x2e8] sm:$0xff]
        %v4881 = vld [vmem:[%s4786 + $0x2f0] sm:$0xff]
        %v4882 = vld [vmem:[%s4786 + $0x2f8] sm:$0xff]
        %v4883 = vld [vmem:[%s4786 + $0x300] sm:$0xff]
        %v4884 = vld [vmem:[%s4786 + $0x308] sm:$0xff]
        %v4885 = vld [vmem:[%s4786 + $0x310] sm:$0xff]
        %v4886 = vld [vmem:[%s4786 + $0x318] sm:$0xff]
        %v4887 = vld [vmem:[%s4786 + $0x320] sm:$0xff]
        %v4888 = vld [vmem:[%s4786 + $0x328] sm:$0xff]
        %v4889 = vld [vmem:[%s4786 + $0x330] sm:$0xff]
        %v4890 = vld [vmem:[%s4786 + $0x338] sm:$0xff]
        %v4891 = vld [vmem:[%s4786 + $0x340] sm:$0xff]
        %v4892 = vld [vmem:[%s4786 + $0x348] sm:$0xff]
        %v4893 = vld [vmem:[%s4786 + $0x350] sm:$0xff]
        %v4894 = vld [vmem:[%s4786 + $0x358] sm:$0xff]
        %v4895 = vld [vmem:[%s4786 + $0x360] sm:$0xff]
        %v4896 = vld [vmem:[%s4786 + $0x368] sm:$0xff]
        %v4897 = vld [vmem:[%s4786 + $0x370] sm:$0xff]
        %v4898 = vld [vmem:[%s4786 + $0x378] sm:$0xff]
        %v4899 = vld [vmem:[%s4786 + $0x380] sm:$0xff]
        %v4900 = vld [vmem:[%s4786 + $0x388] sm:$0xff]
        %v4901 = vld [vmem:[%s4786 + $0x390] sm:$0xff]
        %v4902 = vld [vmem:[%s4786 + $0x398] sm:$0xff]
        %v4903 = vld [vmem:[%s4786 + $0x3a0] sm:$0xff]
        %v4904 = vld [vmem:[%s4786 + $0x3a8] sm:$0xff]
        %v4905 = vld [vmem:[%s4786 + $0x3b0] sm:$0xff]
        %v4906 = vld [vmem:[%s4786 + $0x3b8] sm:$0xff]
        %v4907 = vld [vmem:[%s4786 + $0x3c0] sm:$0xff]
        %v4908 = vld [vmem:[%s4786 + $0x3c8] sm:$0xff]
        %v4909 = vld [vmem:[%s4786 + $0x3d0] sm:$0xff]
        %v4910 = vld [vmem:[%s4786 + $0x3d8] sm:$0xff]
        %v4911 = vld [vmem:[%s4786 + $0x3e0] sm:$0xff]
        %v4912 = vld [vmem:[%s4786 + $0x3e8] sm:$0xff]
        %v4913 = vld [vmem:[%s4786 + $0x3f0] sm:$0xff]
        %v4914 = vld [vmem:[%s4786 + $0x3f8] sm:$0xff]
        %s4915 = scalar_lea.vmem [#allocation11], 2048
        %v4916 = vld [vmem:[%s4915] sm:$0xff]
        %v4917 = vld [vmem:[%s4915 + $0x8] sm:$0xff]
        %v4918 = vld [vmem:[%s4915 + $0x10] sm:$0xff]
        %v4919 = vld [vmem:[%s4915 + $0x18] sm:$0xff]
        %v4920 = vld [vmem:[%s4915 + $0x20] sm:$0xff]
        %v4921 = vld [vmem:[%s4915 + $0x28] sm:$0xff]
        %v4922 = vld [vmem:[%s4915 + $0x30] sm:$0xff]
        %v4923 = vld [vmem:[%s4915 + $0x38] sm:$0xff]
        %v4924 = vld [vmem:[%s4915 + $0x40] sm:$0xff]
        %v4925 = vld [vmem:[%s4915 + $0x48] sm:$0xff]
        %v4926 = vld [vmem:[%s4915 + $0x50] sm:$0xff]
        %v4927 = vld [vmem:[%s4915 + $0x58] sm:$0xff]
        %v4928 = vld [vmem:[%s4915 + $0x60] sm:$0xff]
        %v4929 = vld [vmem:[%s4915 + $0x68] sm:$0xff]
        %v4930 = vld [vmem:[%s4915 + $0x70] sm:$0xff]
        %v4931 = vld [vmem:[%s4915 + $0x78] sm:$0xff]
        %v4932 = vld [vmem:[%s4915 + $0x80] sm:$0xff]
        %v4933 = vld [vmem:[%s4915 + $0x88] sm:$0xff]
        %v4934 = vld [vmem:[%s4915 + $0x90] sm:$0xff]
        %v4935 = vld [vmem:[%s4915 + $0x98] sm:$0xff]
        %v4936 = vld [vmem:[%s4915 + $0xa0] sm:$0xff]
        %v4937 = vld [vmem:[%s4915 + $0xa8] sm:$0xff]
        %v4938 = vld [vmem:[%s4915 + $0xb0] sm:$0xff]
        %v4939 = vld [vmem:[%s4915 + $0xb8] sm:$0xff]
        %v4940 = vld [vmem:[%s4915 + $0xc0] sm:$0xff]
        %v4941 = vld [vmem:[%s4915 + $0xc8] sm:$0xff]
        %v4942 = vld [vmem:[%s4915 + $0xd0] sm:$0xff]
        %v4943 = vld [vmem:[%s4915 + $0xd8] sm:$0xff]
        %v4944 = vld [vmem:[%s4915 + $0xe0] sm:$0xff]
        %v4945 = vld [vmem:[%s4915 + $0xe8] sm:$0xff]
        %v4946 = vld [vmem:[%s4915 + $0xf0] sm:$0xff]
        %v4947 = vld [vmem:[%s4915 + $0xf8] sm:$0xff]
        %v4948 = vld [vmem:[%s4915 + $0x100] sm:$0xff]
        %v4949 = vld [vmem:[%s4915 + $0x108] sm:$0xff]
        %v4950 = vld [vmem:[%s4915 + $0x110] sm:$0xff]
        %v4951 = vld [vmem:[%s4915 + $0x118] sm:$0xff]
        %v4952 = vld [vmem:[%s4915 + $0x120] sm:$0xff]
        %v4953 = vld [vmem:[%s4915 + $0x128] sm:$0xff]
        %v4954 = vld [vmem:[%s4915 + $0x130] sm:$0xff]
        %v4955 = vld [vmem:[%s4915 + $0x138] sm:$0xff]
        %v4956 = vld [vmem:[%s4915 + $0x140] sm:$0xff]
        %v4957 = vld [vmem:[%s4915 + $0x148] sm:$0xff]
        %v4958 = vld [vmem:[%s4915 + $0x150] sm:$0xff]
        %v4959 = vld [vmem:[%s4915 + $0x158] sm:$0xff]
        %v4960 = vld [vmem:[%s4915 + $0x160] sm:$0xff]
        %v4961 = vld [vmem:[%s4915 + $0x168] sm:$0xff]
        %v4962 = vld [vmem:[%s4915 + $0x170] sm:$0xff]
        %v4963 = vld [vmem:[%s4915 + $0x178] sm:$0xff]
        %v4964 = vld [vmem:[%s4915 + $0x180] sm:$0xff]
        %v4965 = vld [vmem:[%s4915 + $0x188] sm:$0xff]
        %v4966 = vld [vmem:[%s4915 + $0x190] sm:$0xff]
        %v4967 = vld [vmem:[%s4915 + $0x198] sm:$0xff]
        %v4968 = vld [vmem:[%s4915 + $0x1a0] sm:$0xff]
        %v4969 = vld [vmem:[%s4915 + $0x1a8] sm:$0xff]
        %v4970 = vld [vmem:[%s4915 + $0x1b0] sm:$0xff]
        %v4971 = vld [vmem:[%s4915 + $0x1b8] sm:$0xff]
        %v4972 = vld [vmem:[%s4915 + $0x1c0] sm:$0xff]
        %v4973 = vld [vmem:[%s4915 + $0x1c8] sm:$0xff]
        %v4974 = vld [vmem:[%s4915 + $0x1d0] sm:$0xff]
        %v4975 = vld [vmem:[%s4915 + $0x1d8] sm:$0xff]
        %v4976 = vld [vmem:[%s4915 + $0x1e0] sm:$0xff]
        %v4977 = vld [vmem:[%s4915 + $0x1e8] sm:$0xff]
        %v4978 = vld [vmem:[%s4915 + $0x1f0] sm:$0xff]
        %v4979 = vld [vmem:[%s4915 + $0x1f8] sm:$0xff]
        %v4980 = vld [vmem:[%s4915 + $0x200] sm:$0xff]
        %v4981 = vld [vmem:[%s4915 + $0x208] sm:$0xff]
        %v4982 = vld [vmem:[%s4915 + $0x210] sm:$0xff]
        %v4983 = vld [vmem:[%s4915 + $0x218] sm:$0xff]
        %v4984 = vld [vmem:[%s4915 + $0x220] sm:$0xff]
        %v4985 = vld [vmem:[%s4915 + $0x228] sm:$0xff]
        %v4986 = vld [vmem:[%s4915 + $0x230] sm:$0xff]
        %v4987 = vld [vmem:[%s4915 + $0x238] sm:$0xff]
        %v4988 = vld [vmem:[%s4915 + $0x240] sm:$0xff]
        %v4989 = vld [vmem:[%s4915 + $0x248] sm:$0xff]
        %v4990 = vld [vmem:[%s4915 + $0x250] sm:$0xff]
        %v4991 = vld [vmem:[%s4915 + $0x258] sm:$0xff]
        %v4992 = vld [vmem:[%s4915 + $0x260] sm:$0xff]
        %v4993 = vld [vmem:[%s4915 + $0x268] sm:$0xff]
        %v4994 = vld [vmem:[%s4915 + $0x270] sm:$0xff]
        %v4995 = vld [vmem:[%s4915 + $0x278] sm:$0xff]
        %v4996 = vld [vmem:[%s4915 + $0x280] sm:$0xff]
        %v4997 = vld [vmem:[%s4915 + $0x288] sm:$0xff]
        %v4998 = vld [vmem:[%s4915 + $0x290] sm:$0xff]
        %v4999 = vld [vmem:[%s4915 + $0x298] sm:$0xff]
        %v5000 = vld [vmem:[%s4915 + $0x2a0] sm:$0xff]
        %v5001 = vld [vmem:[%s4915 + $0x2a8] sm:$0xff]
        %v5002 = vld [vmem:[%s4915 + $0x2b0] sm:$0xff]
        %v5003 = vld [vmem:[%s4915 + $0x2b8] sm:$0xff]
        %v5004 = vld [vmem:[%s4915 + $0x2c0] sm:$0xff]
        %v5005 = vld [vmem:[%s4915 + $0x2c8] sm:$0xff]
        %v5006 = vld [vmem:[%s4915 + $0x2d0] sm:$0xff]
        %v5007 = vld [vmem:[%s4915 + $0x2d8] sm:$0xff]
        %v5008 = vld [vmem:[%s4915 + $0x2e0] sm:$0xff]
        %v5009 = vld [vmem:[%s4915 + $0x2e8] sm:$0xff]
        %v5010 = vld [vmem:[%s4915 + $0x2f0] sm:$0xff]
        %v5011 = vld [vmem:[%s4915 + $0x2f8] sm:$0xff]
        %v5012 = vld [vmem:[%s4915 + $0x300] sm:$0xff]
        %v5013 = vld [vmem:[%s4915 + $0x308] sm:$0xff]
        %v5014 = vld [vmem:[%s4915 + $0x310] sm:$0xff]
        %v5015 = vld [vmem:[%s4915 + $0x318] sm:$0xff]
        %v5016 = vld [vmem:[%s4915 + $0x320] sm:$0xff]
        %v5017 = vld [vmem:[%s4915 + $0x328] sm:$0xff]
        %v5018 = vld [vmem:[%s4915 + $0x330] sm:$0xff]
        %v5019 = vld [vmem:[%s4915 + $0x338] sm:$0xff]
        %v5020 = vld [vmem:[%s4915 + $0x340] sm:$0xff]
        %v5021 = vld [vmem:[%s4915 + $0x348] sm:$0xff]
        %v5022 = vld [vmem:[%s4915 + $0x350] sm:$0xff]
        %v5023 = vld [vmem:[%s4915 + $0x358] sm:$0xff]
        %v5024 = vld [vmem:[%s4915 + $0x360] sm:$0xff]
        %v5025 = vld [vmem:[%s4915 + $0x368] sm:$0xff]
        %v5026 = vld [vmem:[%s4915 + $0x370] sm:$0xff]
        %v5027 = vld [vmem:[%s4915 + $0x378] sm:$0xff]
        %v5028 = vld [vmem:[%s4915 + $0x380] sm:$0xff]
        %v5029 = vld [vmem:[%s4915 + $0x388] sm:$0xff]
        %v5030 = vld [vmem:[%s4915 + $0x390] sm:$0xff]
        %v5031 = vld [vmem:[%s4915 + $0x398] sm:$0xff]
        %v5032 = vld [vmem:[%s4915 + $0x3a0] sm:$0xff]
        %v5033 = vld [vmem:[%s4915 + $0x3a8] sm:$0xff]
        %v5034 = vld [vmem:[%s4915 + $0x3b0] sm:$0xff]
        %v5035 = vld [vmem:[%s4915 + $0x3b8] sm:$0xff]
        %v5036 = vld [vmem:[%s4915 + $0x3c0] sm:$0xff]
        %v5037 = vld [vmem:[%s4915 + $0x3c8] sm:$0xff]
        %v5038 = vld [vmem:[%s4915 + $0x3d0] sm:$0xff]
        %v5039 = vld [vmem:[%s4915 + $0x3d8] sm:$0xff]
        %v5040 = vld [vmem:[%s4915 + $0x3e0] sm:$0xff]
        %v5041 = vld [vmem:[%s4915 + $0x3e8] sm:$0xff]
        %v5042 = vld [vmem:[%s4915 + $0x3f0] sm:$0xff]
        %v5043 = vld [vmem:[%s4915 + $0x3f8] sm:$0xff]
        %s5044 = scalar_lea.vmem [#allocation12], 128
        %v5045 = vld [vmem:[%s5044] sm:$0xff]
        %v5046 = vld [vmem:[%s5044 + $0x8] sm:$0xff]
        %v5047 = vld [vmem:[%s5044 + $0x10] sm:$0xff]
        %v5048 = vld [vmem:[%s5044 + $0x18] sm:$0xff]
        %v5049 = vld [vmem:[%s5044 + $0x20] sm:$0xff]
        %v5050 = vld [vmem:[%s5044 + $0x28] sm:$0xff]
        %v5051 = vld [vmem:[%s5044 + $0x30] sm:$0xff]
        %v5052 = vld [vmem:[%s5044 + $0x38] sm:$0xff]
        %s5053 = scalar_lea.vmem %s6, 128
        %v5054 = vld [vmem:[%s5053] sm:$0xff]
        %v5055 = vld [vmem:[%s5053 + $0x8] sm:$0xff]
        %v5056 = vld [vmem:[%s5053 + $0x10] sm:$0xff]
        %v5057 = vld [vmem:[%s5053 + $0x18] sm:$0xff]
        %v5058 = vld [vmem:[%s5053 + $0x20] sm:$0xff]
        %v5059 = vld [vmem:[%s5053 + $0x28] sm:$0xff]
        %v5060 = vld [vmem:[%s5053 + $0x30] sm:$0xff]
        %v5061 = vld [vmem:[%s5053 + $0x38] sm:$0xff]
        %v5063 = vsel %vm963, %v4778, 0
        %v5066 = vsel %vm963, %v4779, 0
        %v5069 = vsel %vm963, %v4780, 0
        %v5072 = vsel %vm963, %v4781, 0
        %v5075 = vsel %vm963, %v4782, 0
        %v5078 = vsel %vm963, %v4783, 0
        %v5081 = vsel %vm963, %v4784, 0
        %v5084 = vsel %vm963, %v4785, 0
        %5086 = vmatpush.xpose.msra.mxu0 0.0
        %5087 = vmatpush.xpose.msra.mxu0 0.0
        %5088 = vmatpush.xpose.msra.mxu0 0.0
        %5089 = vmatpush.xpose.msra.mxu0 0.0
        %5090 = vmatpush.xpose.msra.mxu0 0.0
        %5091 = vmatpush.xpose.msra.mxu0 0.0
        %5092 = vmatpush.xpose.msra.mxu0 0.0
        %5093 = vmatpush.xpose.msra.mxu0 0.0
        %5094 = vmatpush.xpose.msra.mxu0 %v5084
        %5095 = vmatpush.xpose.msra.mxu0 %v5081
        %5096 = vmatpush.xpose.msra.mxu0 %v5078
        %5097 = vmatpush.xpose.msra.mxu0 %v5075
        %5098 = vmatpush.xpose.msra.mxu0 %v5072
        %5099 = vmatpush.xpose.msra.mxu0 %v5069
        %5100 = vmatpush.xpose.msra.mxu0 %v5066
        %5101 = vmatpush.xpose.msra.mxu0 %v5063
        %5102 = vmatmul.f32.gmra.mxu0 %v965
        %v5103 = vpop.f32.mrf.mxu0
        %v5104 = vadd.f32 0.0, %v5103
        %5105 = vmatmul.f32.gmra.mxu0 %v968
        %v5106 = vpop.f32.mrf.mxu0
        %v5107 = vadd.f32 0.0, %v5106
        %5108 = vmatmul.f32.gmra.mxu0 %v971
        %v5109 = vpop.f32.mrf.mxu0
        %v5110 = vadd.f32 0.0, %v5109
        %5111 = vmatmul.f32.gmra.mxu0 %v974
        %v5112 = vpop.f32.mrf.mxu0
        %v5113 = vadd.f32 0.0, %v5112
        %5114 = vdwg.mxu0
        %v5117 = vrot.slane %v5104, 1
        %v5118 = vrot.slane %v5104, 2
        %v5119 = vrot.slane %v5104, 3
        %v5120 = vrot.slane %v5104, 4
        %v5121 = vrot.slane %v5104, 5
        %v5122 = vrot.slane %v5104, 6
        %v5123 = vrot.slane %v5104, 7
        %v5124 = vrot.slane %v5107, 1
        %v5125 = vrot.slane %v5107, 2
        %v5126 = vrot.slane %v5107, 3
        %v5127 = vrot.slane %v5107, 4
        %v5128 = vrot.slane %v5107, 5
        %v5129 = vrot.slane %v5107, 6
        %v5130 = vrot.slane %v5107, 7
        %v5133 = vrot.slane %v5110, 1
        %v5134 = vrot.slane %v5110, 2
        %v5135 = vrot.slane %v5110, 3
        %v5136 = vrot.slane %v5110, 4
        %v5137 = vrot.slane %v5110, 5
        %v5138 = vrot.slane %v5110, 6
        %v5139 = vrot.slane %v5110, 7
        %v5140 = vrot.slane %v5113, 1
        %v5141 = vrot.slane %v5113, 2
        %v5142 = vrot.slane %v5113, 3
        %v5143 = vrot.slane %v5113, 4
        %v5144 = vrot.slane %v5113, 5
        %v5145 = vrot.slane %v5113, 6
        %v5146 = vrot.slane %v5113, 7
        %v5147 = vsel %vm963, %v5104, 0
        %5149 = vmatpush.msra.mxu0 0.0
        %5150 = vmatpush.msra.mxu0 0.0
        %5151 = vmatpush.msra.mxu0 0.0
        %5152 = vmatpush.msra.mxu0 0.0
        %5153 = vmatpush.msra.mxu0 0.0
        %5154 = vmatpush.msra.mxu0 0.0
        %5155 = vmatpush.msra.mxu0 0.0
        %5156 = vmatpush.msra.mxu0 0.0
        %5157 = vmatpush.msra.mxu0 %v4794
        %5158 = vmatpush.msra.mxu0 %v4793
        %5159 = vmatpush.msra.mxu0 %v4792
        %5160 = vmatpush.msra.mxu0 %v4791
        %5161 = vmatpush.msra.mxu0 %v4790
        %5162 = vmatpush.msra.mxu0 %v4789
        %5163 = vmatpush.msra.mxu0 %v4788
        %5164 = vmatpush.msra.mxu0 %v4787
        %5165 = vmatmul.f32.gmra.mxu0 %v5147
        %v5166 = vpop.f32.mrf.mxu0
        %v5167 = vadd.f32 0.0, %v5166
        %5168 = vdwg.mxu0
        %v5169 = vsel %vm963, %v5117, 0
        %5171 = vmatpush.msra.mxu0 0.0
        %5172 = vmatpush.msra.mxu0 0.0
        %5173 = vmatpush.msra.mxu0 0.0
        %5174 = vmatpush.msra.mxu0 0.0
        %5175 = vmatpush.msra.mxu0 0.0
        %5176 = vmatpush.msra.mxu0 0.0
        %5177 = vmatpush.msra.mxu0 0.0
        %5178 = vmatpush.msra.mxu0 0.0
        %5179 = vmatpush.msra.mxu0 %v4802
        %5180 = vmatpush.msra.mxu0 %v4801
        %5181 = vmatpush.msra.mxu0 %v4800
        %5182 = vmatpush.msra.mxu0 %v4799
        %5183 = vmatpush.msra.mxu0 %v4798
        %5184 = vmatpush.msra.mxu0 %v4797
        %5185 = vmatpush.msra.mxu0 %v4796
        %5186 = vmatpush.msra.mxu0 %v4795
        %5187 = vmatmul.f32.gmra.mxu0 %v5169
        %v5188 = vpop.f32.mrf.mxu0
        %v5189 = vadd.f32 0.0, %v5188
        %5190 = vdwg.mxu0
        %v5191 = vsel %vm963, %v5118, 0
        %5193 = vmatpush.msra.mxu0 0.0
        %5194 = vmatpush.msra.mxu0 0.0
        %5195 = vmatpush.msra.mxu0 0.0
        %5196 = vmatpush.msra.mxu0 0.0
        %5197 = vmatpush.msra.mxu0 0.0
        %5198 = vmatpush.msra.mxu0 0.0
        %5199 = vmatpush.msra.mxu0 0.0
        %5200 = vmatpush.msra.mxu0 0.0
        %5201 = vmatpush.msra.mxu0 %v4810
        %5202 = vmatpush.msra.mxu0 %v4809
        %5203 = vmatpush.msra.mxu0 %v4808
        %5204 = vmatpush.msra.mxu0 %v4807
        %5205 = vmatpush.msra.mxu0 %v4806
        %5206 = vmatpush.msra.mxu0 %v4805
        %5207 = vmatpush.msra.mxu0 %v4804
        %5208 = vmatpush.msra.mxu0 %v4803
        %5209 = vmatmul.f32.gmra.mxu0 %v5191
        %v5210 = vpop.f32.mrf.mxu0
        %v5211 = vadd.f32 0.0, %v5210
        %5212 = vdwg.mxu0
        %v5213 = vsel %vm963, %v5119, 0
        %5215 = vmatpush.msra.mxu0 0.0
        %5216 = vmatpush.msra.mxu0 0.0
        %5217 = vmatpush.msra.mxu0 0.0
        %5218 = vmatpush.msra.mxu0 0.0
        %5219 = vmatpush.msra.mxu0 0.0
        %5220 = vmatpush.msra.mxu0 0.0
        %5221 = vmatpush.msra.mxu0 0.0
        %5222 = vmatpush.msra.mxu0 0.0
        %5223 = vmatpush.msra.mxu0 %v4818
        %5224 = vmatpush.msra.mxu0 %v4817
        %5225 = vmatpush.msra.mxu0 %v4816
        %5226 = vmatpush.msra.mxu0 %v4815
        %5227 = vmatpush.msra.mxu0 %v4814
        %5228 = vmatpush.msra.mxu0 %v4813
        %5229 = vmatpush.msra.mxu0 %v4812
        %5230 = vmatpush.msra.mxu0 %v4811
        %5231 = vmatmul.f32.gmra.mxu0 %v5213
        %v5232 = vpop.f32.mrf.mxu0
        %v5233 = vadd.f32 0.0, %v5232
        %5234 = vdwg.mxu0
        %v5235 = vsel %vm963, %v5120, 0
        %5237 = vmatpush.msra.mxu0 0.0
        %5238 = vmatpush.msra.mxu0 0.0
        %5239 = vmatpush.msra.mxu0 0.0
        %5240 = vmatpush.msra.mxu0 0.0
        %5241 = vmatpush.msra.mxu0 0.0
        %5242 = vmatpush.msra.mxu0 0.0
        %5243 = vmatpush.msra.mxu0 0.0
        %5244 = vmatpush.msra.mxu0 0.0
        %5245 = vmatpush.msra.mxu0 %v4826
        %5246 = vmatpush.msra.mxu0 %v4825
        %5247 = vmatpush.msra.mxu0 %v4824
        %5248 = vmatpush.msra.mxu0 %v4823
        %5249 = vmatpush.msra.mxu0 %v4822
        %5250 = vmatpush.msra.mxu0 %v4821
        %5251 = vmatpush.msra.mxu0 %v4820
        %5252 = vmatpush.msra.mxu0 %v4819
        %5253 = vmatmul.f32.gmra.mxu0 %v5235
        %v5254 = vpop.f32.mrf.mxu0
        %v5255 = vadd.f32 0.0, %v5254
        %5256 = vdwg.mxu0
        %v5257 = vsel %vm963, %v5121, 0
        %5259 = vmatpush.msra.mxu0 0.0
        %5260 = vmatpush.msra.mxu0 0.0
        %5261 = vmatpush.msra.mxu0 0.0
        %5262 = vmatpush.msra.mxu0 0.0
        %5263 = vmatpush.msra.mxu0 0.0
        %5264 = vmatpush.msra.mxu0 0.0
        %5265 = vmatpush.msra.mxu0 0.0
        %5266 = vmatpush.msra.mxu0 0.0
        %5267 = vmatpush.msra.mxu0 %v4834
        %5268 = vmatpush.msra.mxu0 %v4833
        %5269 = vmatpush.msra.mxu0 %v4832
        %5270 = vmatpush.msra.mxu0 %v4831
        %5271 = vmatpush.msra.mxu0 %v4830
        %5272 = vmatpush.msra.mxu0 %v4829
        %5273 = vmatpush.msra.mxu0 %v4828
        %5274 = vmatpush.msra.mxu0 %v4827
        %5275 = vmatmul.f32.gmra.mxu0 %v5257
        %v5276 = vpop.f32.mrf.mxu0
        %v5277 = vadd.f32 0.0, %v5276
        %5278 = vdwg.mxu0
        %v5279 = vsel %vm963, %v5122, 0
        %5281 = vmatpush.msra.mxu0 0.0
        %5282 = vmatpush.msra.mxu0 0.0
        %5283 = vmatpush.msra.mxu0 0.0
        %5284 = vmatpush.msra.mxu0 0.0
        %5285 = vmatpush.msra.mxu0 0.0
        %5286 = vmatpush.msra.mxu0 0.0
        %5287 = vmatpush.msra.mxu0 0.0
        %5288 = vmatpush.msra.mxu0 0.0
        %5289 = vmatpush.msra.mxu0 %v4842
        %5290 = vmatpush.msra.mxu0 %v4841
        %5291 = vmatpush.msra.mxu0 %v4840
        %5292 = vmatpush.msra.mxu0 %v4839
        %5293 = vmatpush.msra.mxu0 %v4838
        %5294 = vmatpush.msra.mxu0 %v4837
        %5295 = vmatpush.msra.mxu0 %v4836
        %5296 = vmatpush.msra.mxu0 %v4835
        %5297 = vmatmul.f32.gmra.mxu0 %v5279
        %v5298 = vpop.f32.mrf.mxu0
        %v5299 = vadd.f32 0.0, %v5298
        %5300 = vdwg.mxu0
        %v5301 = vsel %vm963, %v5123, 0
        %5303 = vmatpush.msra.mxu0 0.0
        %5304 = vmatpush.msra.mxu0 0.0
        %5305 = vmatpush.msra.mxu0 0.0
        %5306 = vmatpush.msra.mxu0 0.0
        %5307 = vmatpush.msra.mxu0 0.0
        %5308 = vmatpush.msra.mxu0 0.0
        %5309 = vmatpush.msra.mxu0 0.0
        %5310 = vmatpush.msra.mxu0 0.0
        %5311 = vmatpush.msra.mxu0 %v4850
        %5312 = vmatpush.msra.mxu0 %v4849
        %5313 = vmatpush.msra.mxu0 %v4848
        %5314 = vmatpush.msra.mxu0 %v4847
        %5315 = vmatpush.msra.mxu0 %v4846
        %5316 = vmatpush.msra.mxu0 %v4845
        %5317 = vmatpush.msra.mxu0 %v4844
        %5318 = vmatpush.msra.mxu0 %v4843
        %5319 = vmatmul.f32.gmra.mxu0 %v5301
        %v5320 = vpop.f32.mrf.mxu0
        %v5321 = vadd.f32 0.0, %v5320
        %5322 = vdwg.mxu0
        %v5323 = vsel %vm963, %v5107, 0
        %5325 = vmatpush.msra.mxu0 0.0
        %5326 = vmatpush.msra.mxu0 0.0
        %5327 = vmatpush.msra.mxu0 0.0
        %5328 = vmatpush.msra.mxu0 0.0
        %5329 = vmatpush.msra.mxu0 0.0
        %5330 = vmatpush.msra.mxu0 0.0
        %5331 = vmatpush.msra.mxu0 0.0
        %5332 = vmatpush.msra.mxu0 0.0
        %5333 = vmatpush.msra.mxu0 %v4858
        %5334 = vmatpush.msra.mxu0 %v4857
        %5335 = vmatpush.msra.mxu0 %v4856
        %5336 = vmatpush.msra.mxu0 %v4855
        %5337 = vmatpush.msra.mxu0 %v4854
        %5338 = vmatpush.msra.mxu0 %v4853
        %5339 = vmatpush.msra.mxu0 %v4852
        %5340 = vmatpush.msra.mxu0 %v4851
        %5341 = vmatmul.f32.gmra.mxu0 %v5323
        %v5342 = vpop.f32.mrf.mxu0
        %v5343 = vadd.f32 0.0, %v5342
        %5344 = vdwg.mxu0
        %v5345 = vsel %vm963, %v5124, 0
        %5347 = vmatpush.msra.mxu0 0.0
        %5348 = vmatpush.msra.mxu0 0.0
        %5349 = vmatpush.msra.mxu0 0.0
        %5350 = vmatpush.msra.mxu0 0.0
        %5351 = vmatpush.msra.mxu0 0.0
        %5352 = vmatpush.msra.mxu0 0.0
        %5353 = vmatpush.msra.mxu0 0.0
        %5354 = vmatpush.msra.mxu0 0.0
        %5355 = vmatpush.msra.mxu0 %v4866
        %5356 = vmatpush.msra.mxu0 %v4865
        %5357 = vmatpush.msra.mxu0 %v4864
        %5358 = vmatpush.msra.mxu0 %v4863
        %5359 = vmatpush.msra.mxu0 %v4862
        %5360 = vmatpush.msra.mxu0 %v4861
        %5361 = vmatpush.msra.mxu0 %v4860
        %5362 = vmatpush.msra.mxu0 %v4859
        %5363 = vmatmul.f32.gmra.mxu0 %v5345
        %v5364 = vpop.f32.mrf.mxu0
        %v5365 = vadd.f32 0.0, %v5364
        %5366 = vdwg.mxu0
        %v5367 = vsel %vm963, %v5125, 0
        %5369 = vmatpush.msra.mxu0 0.0
        %5370 = vmatpush.msra.mxu0 0.0
        %5371 = vmatpush.msra.mxu0 0.0
        %5372 = vmatpush.msra.mxu0 0.0
        %5373 = vmatpush.msra.mxu0 0.0
        %5374 = vmatpush.msra.mxu0 0.0
        %5375 = vmatpush.msra.mxu0 0.0
        %5376 = vmatpush.msra.mxu0 0.0
        %5377 = vmatpush.msra.mxu0 %v4874
        %5378 = vmatpush.msra.mxu0 %v4873
        %5379 = vmatpush.msra.mxu0 %v4872
        %5380 = vmatpush.msra.mxu0 %v4871
        %5381 = vmatpush.msra.mxu0 %v4870
        %5382 = vmatpush.msra.mxu0 %v4869
        %5383 = vmatpush.msra.mxu0 %v4868
        %5384 = vmatpush.msra.mxu0 %v4867
        %5385 = vmatmul.f32.gmra.mxu0 %v5367
        %v5386 = vpop.f32.mrf.mxu0
        %v5387 = vadd.f32 0.0, %v5386
        %5388 = vdwg.mxu0
        %v5389 = vsel %vm963, %v5126, 0
        %5391 = vmatpush.msra.mxu0 0.0
        %5392 = vmatpush.msra.mxu0 0.0
        %5393 = vmatpush.msra.mxu0 0.0
        %5394 = vmatpush.msra.mxu0 0.0
        %5395 = vmatpush.msra.mxu0 0.0
        %5396 = vmatpush.msra.mxu0 0.0
        %5397 = vmatpush.msra.mxu0 0.0
        %5398 = vmatpush.msra.mxu0 0.0
        %5399 = vmatpush.msra.mxu0 %v4882
        %5400 = vmatpush.msra.mxu0 %v4881
        %5401 = vmatpush.msra.mxu0 %v4880
        %5402 = vmatpush.msra.mxu0 %v4879
        %5403 = vmatpush.msra.mxu0 %v4878
        %5404 = vmatpush.msra.mxu0 %v4877
        %5405 = vmatpush.msra.mxu0 %v4876
        %5406 = vmatpush.msra.mxu0 %v4875
        %5407 = vmatmul.f32.gmra.mxu0 %v5389
        %v5408 = vpop.f32.mrf.mxu0
        %v5409 = vadd.f32 0.0, %v5408
        %5410 = vdwg.mxu0
        %v5411 = vsel %vm963, %v5127, 0
        %5413 = vmatpush.msra.mxu0 0.0
        %5414 = vmatpush.msra.mxu0 0.0
        %5415 = vmatpush.msra.mxu0 0.0
        %5416 = vmatpush.msra.mxu0 0.0
        %5417 = vmatpush.msra.mxu0 0.0
        %5418 = vmatpush.msra.mxu0 0.0
        %5419 = vmatpush.msra.mxu0 0.0
        %5420 = vmatpush.msra.mxu0 0.0
        %5421 = vmatpush.msra.mxu0 %v4890
        %5422 = vmatpush.msra.mxu0 %v4889
        %5423 = vmatpush.msra.mxu0 %v4888
        %5424 = vmatpush.msra.mxu0 %v4887
        %5425 = vmatpush.msra.mxu0 %v4886
        %5426 = vmatpush.msra.mxu0 %v4885
        %5427 = vmatpush.msra.mxu0 %v4884
        %5428 = vmatpush.msra.mxu0 %v4883
        %5429 = vmatmul.f32.gmra.mxu0 %v5411
        %v5430 = vpop.f32.mrf.mxu0
        %v5431 = vadd.f32 0.0, %v5430
        %5432 = vdwg.mxu0
        %v5433 = vsel %vm963, %v5128, 0
        %5435 = vmatpush.msra.mxu0 0.0
        %5436 = vmatpush.msra.mxu0 0.0
        %5437 = vmatpush.msra.mxu0 0.0
        %5438 = vmatpush.msra.mxu0 0.0
        %5439 = vmatpush.msra.mxu0 0.0
        %5440 = vmatpush.msra.mxu0 0.0
        %5441 = vmatpush.msra.mxu0 0.0
        %5442 = vmatpush.msra.mxu0 0.0
        %5443 = vmatpush.msra.mxu0 %v4898
        %5444 = vmatpush.msra.mxu0 %v4897
        %5445 = vmatpush.msra.mxu0 %v4896
        %5446 = vmatpush.msra.mxu0 %v4895
        %5447 = vmatpush.msra.mxu0 %v4894
        %5448 = vmatpush.msra.mxu0 %v4893
        %5449 = vmatpush.msra.mxu0 %v4892
        %5450 = vmatpush.msra.mxu0 %v4891
        %5451 = vmatmul.f32.gmra.mxu0 %v5433
        %v5452 = vpop.f32.mrf.mxu0
        %v5453 = vadd.f32 0.0, %v5452
        %5454 = vdwg.mxu0
        %v5455 = vsel %vm963, %v5129, 0
        %5457 = vmatpush.msra.mxu0 0.0
        %5458 = vmatpush.msra.mxu0 0.0
        %5459 = vmatpush.msra.mxu0 0.0
        %5460 = vmatpush.msra.mxu0 0.0
        %5461 = vmatpush.msra.mxu0 0.0
        %5462 = vmatpush.msra.mxu0 0.0
        %5463 = vmatpush.msra.mxu0 0.0
        %5464 = vmatpush.msra.mxu0 0.0
        %5465 = vmatpush.msra.mxu0 %v4906
        %5466 = vmatpush.msra.mxu0 %v4905
        %5467 = vmatpush.msra.mxu0 %v4904
        %5468 = vmatpush.msra.mxu0 %v4903
        %5469 = vmatpush.msra.mxu0 %v4902
        %5470 = vmatpush.msra.mxu0 %v4901
        %5471 = vmatpush.msra.mxu0 %v4900
        %5472 = vmatpush.msra.mxu0 %v4899
        %5473 = vmatmul.f32.gmra.mxu0 %v5455
        %v5474 = vpop.f32.mrf.mxu0
        %v5475 = vadd.f32 0.0, %v5474
        %5476 = vdwg.mxu0
        %v5477 = vsel %vm963, %v5130, 0
        %5479 = vmatpush.msra.mxu0 0.0
        %5480 = vmatpush.msra.mxu0 0.0
        %5481 = vmatpush.msra.mxu0 0.0
        %5482 = vmatpush.msra.mxu0 0.0
        %5483 = vmatpush.msra.mxu0 0.0
        %5484 = vmatpush.msra.mxu0 0.0
        %5485 = vmatpush.msra.mxu0 0.0
        %5486 = vmatpush.msra.mxu0 0.0
        %5487 = vmatpush.msra.mxu0 %v4914
        %5488 = vmatpush.msra.mxu0 %v4913
        %5489 = vmatpush.msra.mxu0 %v4912
        %5490 = vmatpush.msra.mxu0 %v4911
        %5491 = vmatpush.msra.mxu0 %v4910
        %5492 = vmatpush.msra.mxu0 %v4909
        %5493 = vmatpush.msra.mxu0 %v4908
        %5494 = vmatpush.msra.mxu0 %v4907
        %5495 = vmatmul.f32.gmra.mxu0 %v5477
        %v5496 = vpop.f32.mrf.mxu0
        %v5497 = vadd.f32 0.0, %v5496
        %5498 = vdwg.mxu0
        %v5499 = vsel %vm963, %v5110, 0
        %5501 = vmatpush.msra.mxu0 0.0
        %5502 = vmatpush.msra.mxu0 0.0
        %5503 = vmatpush.msra.mxu0 0.0
        %5504 = vmatpush.msra.mxu0 0.0
        %5505 = vmatpush.msra.mxu0 0.0
        %5506 = vmatpush.msra.mxu0 0.0
        %5507 = vmatpush.msra.mxu0 0.0
        %5508 = vmatpush.msra.mxu0 0.0
        %5509 = vmatpush.msra.mxu0 %v4923
        %5510 = vmatpush.msra.mxu0 %v4922
        %5511 = vmatpush.msra.mxu0 %v4921
        %5512 = vmatpush.msra.mxu0 %v4920
        %5513 = vmatpush.msra.mxu0 %v4919
        %5514 = vmatpush.msra.mxu0 %v4918
        %5515 = vmatpush.msra.mxu0 %v4917
        %5516 = vmatpush.msra.mxu0 %v4916
        %5517 = vmatmul.f32.gmra.mxu0 %v5499
        %v5518 = vpop.f32.mrf.mxu0
        %v5519 = vadd.f32 0.0, %v5518
        %5520 = vdwg.mxu0
        %v5521 = vsel %vm963, %v5133, 0
        %5523 = vmatpush.msra.mxu0 0.0
        %5524 = vmatpush.msra.mxu0 0.0
        %5525 = vmatpush.msra.mxu0 0.0
        %5526 = vmatpush.msra.mxu0 0.0
        %5527 = vmatpush.msra.mxu0 0.0
        %5528 = vmatpush.msra.mxu0 0.0
        %5529 = vmatpush.msra.mxu0 0.0
        %5530 = vmatpush.msra.mxu0 0.0
        %5531 = vmatpush.msra.mxu0 %v4931
        %5532 = vmatpush.msra.mxu0 %v4930
        %5533 = vmatpush.msra.mxu0 %v4929
        %5534 = vmatpush.msra.mxu0 %v4928
        %5535 = vmatpush.msra.mxu0 %v4927
        %5536 = vmatpush.msra.mxu0 %v4926
        %5537 = vmatpush.msra.mxu0 %v4925
        %5538 = vmatpush.msra.mxu0 %v4924
        %5539 = vmatmul.f32.gmra.mxu0 %v5521
        %v5540 = vpop.f32.mrf.mxu0
        %v5541 = vadd.f32 0.0, %v5540
        %5542 = vdwg.mxu0
        %v5543 = vsel %vm963, %v5134, 0
        %5545 = vmatpush.msra.mxu0 0.0
        %5546 = vmatpush.msra.mxu0 0.0
        %5547 = vmatpush.msra.mxu0 0.0
        %5548 = vmatpush.msra.mxu0 0.0
        %5549 = vmatpush.msra.mxu0 0.0
        %5550 = vmatpush.msra.mxu0 0.0
        %5551 = vmatpush.msra.mxu0 0.0
        %5552 = vmatpush.msra.mxu0 0.0
        %5553 = vmatpush.msra.mxu0 %v4939
        %5554 = vmatpush.msra.mxu0 %v4938
        %5555 = vmatpush.msra.mxu0 %v4937
        %5556 = vmatpush.msra.mxu0 %v4936
        %5557 = vmatpush.msra.mxu0 %v4935
        %5558 = vmatpush.msra.mxu0 %v4934
        %5559 = vmatpush.msra.mxu0 %v4933
        %5560 = vmatpush.msra.mxu0 %v4932
        %5561 = vmatmul.f32.gmra.mxu0 %v5543
        %v5562 = vpop.f32.mrf.mxu0
        %v5563 = vadd.f32 0.0, %v5562
        %5564 = vdwg.mxu0
        %v5565 = vsel %vm963, %v5135, 0
        %5567 = vmatpush.msra.mxu0 0.0
        %5568 = vmatpush.msra.mxu0 0.0
        %5569 = vmatpush.msra.mxu0 0.0
        %5570 = vmatpush.msra.mxu0 0.0
        %5571 = vmatpush.msra.mxu0 0.0
        %5572 = vmatpush.msra.mxu0 0.0
        %5573 = vmatpush.msra.mxu0 0.0
        %5574 = vmatpush.msra.mxu0 0.0
        %5575 = vmatpush.msra.mxu0 %v4947
        %5576 = vmatpush.msra.mxu0 %v4946
        %5577 = vmatpush.msra.mxu0 %v4945
        %5578 = vmatpush.msra.mxu0 %v4944
        %5579 = vmatpush.msra.mxu0 %v4943
        %5580 = vmatpush.msra.mxu0 %v4942
        %5581 = vmatpush.msra.mxu0 %v4941
        %5582 = vmatpush.msra.mxu0 %v4940
        %5583 = vmatmul.f32.gmra.mxu0 %v5565
        %v5584 = vpop.f32.mrf.mxu0
        %v5585 = vadd.f32 0.0, %v5584
        %5586 = vdwg.mxu0
        %v5587 = vsel %vm963, %v5136, 0
        %5589 = vmatpush.msra.mxu0 0.0
        %5590 = vmatpush.msra.mxu0 0.0
        %5591 = vmatpush.msra.mxu0 0.0
        %5592 = vmatpush.msra.mxu0 0.0
        %5593 = vmatpush.msra.mxu0 0.0
        %5594 = vmatpush.msra.mxu0 0.0
        %5595 = vmatpush.msra.mxu0 0.0
        %5596 = vmatpush.msra.mxu0 0.0
        %5597 = vmatpush.msra.mxu0 %v4955
        %5598 = vmatpush.msra.mxu0 %v4954
        %5599 = vmatpush.msra.mxu0 %v4953
        %5600 = vmatpush.msra.mxu0 %v4952
        %5601 = vmatpush.msra.mxu0 %v4951
        %5602 = vmatpush.msra.mxu0 %v4950
        %5603 = vmatpush.msra.mxu0 %v4949
        %5604 = vmatpush.msra.mxu0 %v4948
        %5605 = vmatmul.f32.gmra.mxu0 %v5587
        %v5606 = vpop.f32.mrf.mxu0
        %v5607 = vadd.f32 0.0, %v5606
        %5608 = vdwg.mxu0
        %v5609 = vsel %vm963, %v5137, 0
        %5611 = vmatpush.msra.mxu0 0.0
        %5612 = vmatpush.msra.mxu0 0.0
        %5613 = vmatpush.msra.mxu0 0.0
        %5614 = vmatpush.msra.mxu0 0.0
        %5615 = vmatpush.msra.mxu0 0.0
        %5616 = vmatpush.msra.mxu0 0.0
        %5617 = vmatpush.msra.mxu0 0.0
        %5618 = vmatpush.msra.mxu0 0.0
        %5619 = vmatpush.msra.mxu0 %v4963
        %5620 = vmatpush.msra.mxu0 %v4962
        %5621 = vmatpush.msra.mxu0 %v4961
        %5622 = vmatpush.msra.mxu0 %v4960
        %5623 = vmatpush.msra.mxu0 %v4959
        %5624 = vmatpush.msra.mxu0 %v4958
        %5625 = vmatpush.msra.mxu0 %v4957
        %5626 = vmatpush.msra.mxu0 %v4956
        %5627 = vmatmul.f32.gmra.mxu0 %v5609
        %v5628 = vpop.f32.mrf.mxu0
        %v5629 = vadd.f32 0.0, %v5628
        %5630 = vdwg.mxu0
        %v5631 = vsel %vm963, %v5138, 0
        %5633 = vmatpush.msra.mxu0 0.0
        %5634 = vmatpush.msra.mxu0 0.0
        %5635 = vmatpush.msra.mxu0 0.0
        %5636 = vmatpush.msra.mxu0 0.0
        %5637 = vmatpush.msra.mxu0 0.0
        %5638 = vmatpush.msra.mxu0 0.0
        %5639 = vmatpush.msra.mxu0 0.0
        %5640 = vmatpush.msra.mxu0 0.0
        %5641 = vmatpush.msra.mxu0 %v4971
        %5642 = vmatpush.msra.mxu0 %v4970
        %5643 = vmatpush.msra.mxu0 %v4969
        %5644 = vmatpush.msra.mxu0 %v4968
        %5645 = vmatpush.msra.mxu0 %v4967
        %5646 = vmatpush.msra.mxu0 %v4966
        %5647 = vmatpush.msra.mxu0 %v4965
        %5648 = vmatpush.msra.mxu0 %v4964
        %5649 = vmatmul.f32.gmra.mxu0 %v5631
        %v5650 = vpop.f32.mrf.mxu0
        %v5651 = vadd.f32 0.0, %v5650
        %5652 = vdwg.mxu0
        %v5653 = vsel %vm963, %v5139, 0
        %5655 = vmatpush.msra.mxu0 0.0
        %5656 = vmatpush.msra.mxu0 0.0
        %5657 = vmatpush.msra.mxu0 0.0
        %5658 = vmatpush.msra.mxu0 0.0
        %5659 = vmatpush.msra.mxu0 0.0
        %5660 = vmatpush.msra.mxu0 0.0
        %5661 = vmatpush.msra.mxu0 0.0
        %5662 = vmatpush.msra.mxu0 0.0
        %5663 = vmatpush.msra.mxu0 %v4979
        %5664 = vmatpush.msra.mxu0 %v4978
        %5665 = vmatpush.msra.mxu0 %v4977
        %5666 = vmatpush.msra.mxu0 %v4976
        %5667 = vmatpush.msra.mxu0 %v4975
        %5668 = vmatpush.msra.mxu0 %v4974
        %5669 = vmatpush.msra.mxu0 %v4973
        %5670 = vmatpush.msra.mxu0 %v4972
        %5671 = vmatmul.f32.gmra.mxu0 %v5653
        %v5672 = vpop.f32.mrf.mxu0
        %v5673 = vadd.f32 0.0, %v5672
        %5674 = vdwg.mxu0
        %v5675 = vsel %vm963, %v5113, 0
        %5677 = vmatpush.msra.mxu0 0.0
        %5678 = vmatpush.msra.mxu0 0.0
        %5679 = vmatpush.msra.mxu0 0.0
        %5680 = vmatpush.msra.mxu0 0.0
        %5681 = vmatpush.msra.mxu0 0.0
        %5682 = vmatpush.msra.mxu0 0.0
        %5683 = vmatpush.msra.mxu0 0.0
        %5684 = vmatpush.msra.mxu0 0.0
        %5685 = vmatpush.msra.mxu0 %v4987
        %5686 = vmatpush.msra.mxu0 %v4986
        %5687 = vmatpush.msra.mxu0 %v4985
        %5688 = vmatpush.msra.mxu0 %v4984
        %5689 = vmatpush.msra.mxu0 %v4983
        %5690 = vmatpush.msra.mxu0 %v4982
        %5691 = vmatpush.msra.mxu0 %v4981
        %5692 = vmatpush.msra.mxu0 %v4980
        %5693 = vmatmul.f32.gmra.mxu0 %v5675
        %v5694 = vpop.f32.mrf.mxu0
        %v5695 = vadd.f32 0.0, %v5694
        %5696 = vdwg.mxu0
        %v5697 = vsel %vm963, %v5140, 0
        %5699 = vmatpush.msra.mxu0 0.0
        %5700 = vmatpush.msra.mxu0 0.0
        %5701 = vmatpush.msra.mxu0 0.0
        %5702 = vmatpush.msra.mxu0 0.0
        %5703 = vmatpush.msra.mxu0 0.0
        %5704 = vmatpush.msra.mxu0 0.0
        %5705 = vmatpush.msra.mxu0 0.0
        %5706 = vmatpush.msra.mxu0 0.0
        %5707 = vmatpush.msra.mxu0 %v4995
        %5708 = vmatpush.msra.mxu0 %v4994
        %5709 = vmatpush.msra.mxu0 %v4993
        %5710 = vmatpush.msra.mxu0 %v4992
        %5711 = vmatpush.msra.mxu0 %v4991
        %5712 = vmatpush.msra.mxu0 %v4990
        %5713 = vmatpush.msra.mxu0 %v4989
        %5714 = vmatpush.msra.mxu0 %v4988
        %5715 = vmatmul.f32.gmra.mxu0 %v5697
        %v5716 = vpop.f32.mrf.mxu0
        %v5717 = vadd.f32 0.0, %v5716
        %5718 = vdwg.mxu0
        %v5719 = vsel %vm963, %v5141, 0
        %5721 = vmatpush.msra.mxu0 0.0
        %5722 = vmatpush.msra.mxu0 0.0
        %5723 = vmatpush.msra.mxu0 0.0
        %5724 = vmatpush.msra.mxu0 0.0
        %5725 = vmatpush.msra.mxu0 0.0
        %5726 = vmatpush.msra.mxu0 0.0
        %5727 = vmatpush.msra.mxu0 0.0
        %5728 = vmatpush.msra.mxu0 0.0
        %5729 = vmatpush.msra.mxu0 %v5003
        %5730 = vmatpush.msra.mxu0 %v5002
        %5731 = vmatpush.msra.mxu0 %v5001
        %5732 = vmatpush.msra.mxu0 %v5000
        %5733 = vmatpush.msra.mxu0 %v4999
        %5734 = vmatpush.msra.mxu0 %v4998
        %5735 = vmatpush.msra.mxu0 %v4997
        %5736 = vmatpush.msra.mxu0 %v4996
        %5737 = vmatmul.f32.gmra.mxu0 %v5719
        %v5738 = vpop.f32.mrf.mxu0
        %v5739 = vadd.f32 0.0, %v5738
        %5740 = vdwg.mxu0
        %v5741 = vsel %vm963, %v5142, 0
        %5743 = vmatpush.msra.mxu0 0.0
        %5744 = vmatpush.msra.mxu0 0.0
        %5745 = vmatpush.msra.mxu0 0.0
        %5746 = vmatpush.msra.mxu0 0.0
        %5747 = vmatpush.msra.mxu0 0.0
        %5748 = vmatpush.msra.mxu0 0.0
        %5749 = vmatpush.msra.mxu0 0.0
        %5750 = vmatpush.msra.mxu0 0.0
        %5751 = vmatpush.msra.mxu0 %v5011
        %5752 = vmatpush.msra.mxu0 %v5010
        %5753 = vmatpush.msra.mxu0 %v5009
        %5754 = vmatpush.msra.mxu0 %v5008
        %5755 = vmatpush.msra.mxu0 %v5007
        %5756 = vmatpush.msra.mxu0 %v5006
        %5757 = vmatpush.msra.mxu0 %v5005
        %5758 = vmatpush.msra.mxu0 %v5004
        %5759 = vmatmul.f32.gmra.mxu0 %v5741
        %v5760 = vpop.f32.mrf.mxu0
        %v5761 = vadd.f32 0.0, %v5760
        %5762 = vdwg.mxu0
        %v5763 = vsel %vm963, %v5143, 0
        %5765 = vmatpush.msra.mxu0 0.0
        %5766 = vmatpush.msra.mxu0 0.0
        %5767 = vmatpush.msra.mxu0 0.0
        %5768 = vmatpush.msra.mxu0 0.0
        %5769 = vmatpush.msra.mxu0 0.0
        %5770 = vmatpush.msra.mxu0 0.0
        %5771 = vmatpush.msra.mxu0 0.0
        %5772 = vmatpush.msra.mxu0 0.0
        %5773 = vmatpush.msra.mxu0 %v5019
        %5774 = vmatpush.msra.mxu0 %v5018
        %5775 = vmatpush.msra.mxu0 %v5017
        %5776 = vmatpush.msra.mxu0 %v5016
        %5777 = vmatpush.msra.mxu0 %v5015
        %5778 = vmatpush.msra.mxu0 %v5014
        %5779 = vmatpush.msra.mxu0 %v5013
        %5780 = vmatpush.msra.mxu0 %v5012
        %5781 = vmatmul.f32.gmra.mxu0 %v5763
        %v5782 = vpop.f32.mrf.mxu0
        %v5783 = vadd.f32 0.0, %v5782
        %5784 = vdwg.mxu0
        %v5785 = vsel %vm963, %v5144, 0
        %5787 = vmatpush.msra.mxu0 0.0
        %5788 = vmatpush.msra.mxu0 0.0
        %5789 = vmatpush.msra.mxu0 0.0
        %5790 = vmatpush.msra.mxu0 0.0
        %5791 = vmatpush.msra.mxu0 0.0
        %5792 = vmatpush.msra.mxu0 0.0
        %5793 = vmatpush.msra.mxu0 0.0
        %5794 = vmatpush.msra.mxu0 0.0
        %5795 = vmatpush.msra.mxu0 %v5027
        %5796 = vmatpush.msra.mxu0 %v5026
        %5797 = vmatpush.msra.mxu0 %v5025
        %5798 = vmatpush.msra.mxu0 %v5024
        %5799 = vmatpush.msra.mxu0 %v5023
        %5800 = vmatpush.msra.mxu0 %v5022
        %5801 = vmatpush.msra.mxu0 %v5021
        %5802 = vmatpush.msra.mxu0 %v5020
        %5803 = vmatmul.f32.gmra.mxu0 %v5785
        %v5804 = vpop.f32.mrf.mxu0
        %v5805 = vadd.f32 0.0, %v5804
        %5806 = vdwg.mxu0
        %v5807 = vsel %vm963, %v5145, 0
        %5809 = vmatpush.msra.mxu0 0.0
        %5810 = vmatpush.msra.mxu0 0.0
        %5811 = vmatpush.msra.mxu0 0.0
        %5812 = vmatpush.msra.mxu0 0.0
        %5813 = vmatpush.msra.mxu0 0.0
        %5814 = vmatpush.msra.mxu0 0.0
        %5815 = vmatpush.msra.mxu0 0.0
        %5816 = vmatpush.msra.mxu0 0.0
        %5817 = vmatpush.msra.mxu0 %v5035
        %5818 = vmatpush.msra.mxu0 %v5034
        %5819 = vmatpush.msra.mxu0 %v5033
        %5820 = vmatpush.msra.mxu0 %v5032
        %5821 = vmatpush.msra.mxu0 %v5031
        %5822 = vmatpush.msra.mxu0 %v5030
        %5823 = vmatpush.msra.mxu0 %v5029
        %5824 = vmatpush.msra.mxu0 %v5028
        %5825 = vmatmul.f32.gmra.mxu0 %v5807
        %v5826 = vpop.f32.mrf.mxu0
        %v5827 = vadd.f32 0.0, %v5826
        %5828 = vdwg.mxu0
        %v5829 = vsel %vm963, %v5146, 0
        %5831 = vmatpush.msra.mxu0 0.0
        %5832 = vmatpush.msra.mxu0 0.0
        %5833 = vmatpush.msra.mxu0 0.0
        %5834 = vmatpush.msra.mxu0 0.0
        %5835 = vmatpush.msra.mxu0 0.0
        %5836 = vmatpush.msra.mxu0 0.0
        %5837 = vmatpush.msra.mxu0 0.0
        %5838 = vmatpush.msra.mxu0 0.0
        %5839 = vmatpush.msra.mxu0 %v5043
        %5840 = vmatpush.msra.mxu0 %v5042
        %5841 = vmatpush.msra.mxu0 %v5041
        %5842 = vmatpush.msra.mxu0 %v5040
        %5843 = vmatpush.msra.mxu0 %v5039
        %5844 = vmatpush.msra.mxu0 %v5038
        %5845 = vmatpush.msra.mxu0 %v5037
        %5846 = vmatpush.msra.mxu0 %v5036
        %5847 = vmatmul.f32.gmra.mxu0 %v5829
        %v5848 = vpop.f32.mrf.mxu0
        %v5849 = vadd.f32 0.0, %v5848
        %5850 = vdwg.mxu0
        %v5851 = vsub.f32 %v5167, %v5519
        %v5852 = vsub.f32 %v5189, %v5541
        %v5853 = vsub.f32 %v5211, %v5563
        %v5854 = vsub.f32 %v5233, %v5585
        %v5855 = vsub.f32 %v5255, %v5607
        %v5856 = vsub.f32 %v5277, %v5629
        %v5857 = vsub.f32 %v5299, %v5651
        %v5858 = vsub.f32 %v5321, %v5673
        %v5859 = vsub.f32 %v5343, %v5695
        %v5860 = vsub.f32 %v5365, %v5717
        %v5861 = vsub.f32 %v5387, %v5739
        %v5862 = vsub.f32 %v5409, %v5761
        %v5863 = vsub.f32 %v5431, %v5783
        %v5864 = vsub.f32 %v5453, %v5805
        %v5865 = vsub.f32 %v5475, %v5827
        %v5866 = vsub.f32 %v5497, %v5849
        %5867 = vmatpush.msra.mxu0 0.0
        %5868 = vmatpush.msra.mxu0 0.0
        %5869 = vmatpush.msra.mxu0 0.0
        %5870 = vmatpush.msra.mxu0 0.0
        %5871 = vmatpush.msra.mxu0 0.0
        %5872 = vmatpush.msra.mxu0 0.0
        %5873 = vmatpush.msra.mxu0 0.0
        %5874 = vmatpush.msra.mxu0 0.0
        %5875 = vmatpush.msra.mxu0 %v4794
        %5876 = vmatpush.msra.mxu0 %v4793
        %5877 = vmatpush.msra.mxu0 %v4792
        %5878 = vmatpush.msra.mxu0 %v4791
        %5879 = vmatpush.msra.mxu0 %v4790
        %5880 = vmatpush.msra.mxu0 %v4789
        %5881 = vmatpush.msra.mxu0 %v4788
        %5882 = vmatpush.msra.mxu0 %v4787
        %5883 = vmatmul.f32.gmra.mxu0 %v5499
        %v5884 = vpop.f32.mrf.mxu0
        %v5885 = vadd.f32 0.0, %v5884
        %5886 = vdwg.mxu0
        %5887 = vmatpush.msra.mxu0 0.0
        %5888 = vmatpush.msra.mxu0 0.0
        %5889 = vmatpush.msra.mxu0 0.0
        %5890 = vmatpush.msra.mxu0 0.0
        %5891 = vmatpush.msra.mxu0 0.0
        %5892 = vmatpush.msra.mxu0 0.0
        %5893 = vmatpush.msra.mxu0 0.0
        %5894 = vmatpush.msra.mxu0 0.0
        %5895 = vmatpush.msra.mxu0 %v4802
        %5896 = vmatpush.msra.mxu0 %v4801
        %5897 = vmatpush.msra.mxu0 %v4800
        %5898 = vmatpush.msra.mxu0 %v4799
        %5899 = vmatpush.msra.mxu0 %v4798
        %5900 = vmatpush.msra.mxu0 %v4797
        %5901 = vmatpush.msra.mxu0 %v4796
        %5902 = vmatpush.msra.mxu0 %v4795
        %5903 = vmatmul.f32.gmra.mxu0 %v5521
        %v5904 = vpop.f32.mrf.mxu0
        %v5905 = vadd.f32 0.0, %v5904
        %5906 = vdwg.mxu0
        %5907 = vmatpush.msra.mxu0 0.0
        %5908 = vmatpush.msra.mxu0 0.0
        %5909 = vmatpush.msra.mxu0 0.0
        %5910 = vmatpush.msra.mxu0 0.0
        %5911 = vmatpush.msra.mxu0 0.0
        %5912 = vmatpush.msra.mxu0 0.0
        %5913 = vmatpush.msra.mxu0 0.0
        %5914 = vmatpush.msra.mxu0 0.0
        %5915 = vmatpush.msra.mxu0 %v4810
        %5916 = vmatpush.msra.mxu0 %v4809
        %5917 = vmatpush.msra.mxu0 %v4808
        %5918 = vmatpush.msra.mxu0 %v4807
        %5919 = vmatpush.msra.mxu0 %v4806
        %5920 = vmatpush.msra.mxu0 %v4805
        %5921 = vmatpush.msra.mxu0 %v4804
        %5922 = vmatpush.msra.mxu0 %v4803
        %5923 = vmatmul.f32.gmra.mxu0 %v5543
        %v5924 = vpop.f32.mrf.mxu0
        %v5925 = vadd.f32 0.0, %v5924
        %5926 = vdwg.mxu0
        %5927 = vmatpush.msra.mxu0 0.0
        %5928 = vmatpush.msra.mxu0 0.0
        %5929 = vmatpush.msra.mxu0 0.0
        %5930 = vmatpush.msra.mxu0 0.0
        %5931 = vmatpush.msra.mxu0 0.0
        %5932 = vmatpush.msra.mxu0 0.0
        %5933 = vmatpush.msra.mxu0 0.0
        %5934 = vmatpush.msra.mxu0 0.0
        %5935 = vmatpush.msra.mxu0 %v4818
        %5936 = vmatpush.msra.mxu0 %v4817
        %5937 = vmatpush.msra.mxu0 %v4816
        %5938 = vmatpush.msra.mxu0 %v4815
        %5939 = vmatpush.msra.mxu0 %v4814
        %5940 = vmatpush.msra.mxu0 %v4813
        %5941 = vmatpush.msra.mxu0 %v4812
        %5942 = vmatpush.msra.mxu0 %v4811
        %5943 = vmatmul.f32.gmra.mxu0 %v5565
        %v5944 = vpop.f32.mrf.mxu0
        %v5945 = vadd.f32 0.0, %v5944
        %5946 = vdwg.mxu0
        %5947 = vmatpush.msra.mxu0 0.0
        %5948 = vmatpush.msra.mxu0 0.0
        %5949 = vmatpush.msra.mxu0 0.0
        %5950 = vmatpush.msra.mxu0 0.0
        %5951 = vmatpush.msra.mxu0 0.0
        %5952 = vmatpush.msra.mxu0 0.0
        %5953 = vmatpush.msra.mxu0 0.0
        %5954 = vmatpush.msra.mxu0 0.0
        %5955 = vmatpush.msra.mxu0 %v4826
        %5956 = vmatpush.msra.mxu0 %v4825
        %5957 = vmatpush.msra.mxu0 %v4824
        %5958 = vmatpush.msra.mxu0 %v4823
        %5959 = vmatpush.msra.mxu0 %v4822
        %5960 = vmatpush.msra.mxu0 %v4821
        %5961 = vmatpush.msra.mxu0 %v4820
        %5962 = vmatpush.msra.mxu0 %v4819
        %5963 = vmatmul.f32.gmra.mxu0 %v5587
        %v5964 = vpop.f32.mrf.mxu0
        %v5965 = vadd.f32 0.0, %v5964
        %5966 = vdwg.mxu0
        %5967 = vmatpush.msra.mxu0 0.0
        %5968 = vmatpush.msra.mxu0 0.0
        %5969 = vmatpush.msra.mxu0 0.0
        %5970 = vmatpush.msra.mxu0 0.0
        %5971 = vmatpush.msra.mxu0 0.0
        %5972 = vmatpush.msra.mxu0 0.0
        %5973 = vmatpush.msra.mxu0 0.0
        %5974 = vmatpush.msra.mxu0 0.0
        %5975 = vmatpush.msra.mxu0 %v4834
        %5976 = vmatpush.msra.mxu0 %v4833
        %5977 = vmatpush.msra.mxu0 %v4832
        %5978 = vmatpush.msra.mxu0 %v4831
        %5979 = vmatpush.msra.mxu0 %v4830
        %5980 = vmatpush.msra.mxu0 %v4829
        %5981 = vmatpush.msra.mxu0 %v4828
        %5982 = vmatpush.msra.mxu0 %v4827
        %5983 = vmatmul.f32.gmra.mxu0 %v5609
        %v5984 = vpop.f32.mrf.mxu0
        %v5985 = vadd.f32 0.0, %v5984
        %5986 = vdwg.mxu0
        %5987 = vmatpush.msra.mxu0 0.0
        %5988 = vmatpush.msra.mxu0 0.0
        %5989 = vmatpush.msra.mxu0 0.0
        %5990 = vmatpush.msra.mxu0 0.0
        %5991 = vmatpush.msra.mxu0 0.0
        %5992 = vmatpush.msra.mxu0 0.0
        %5993 = vmatpush.msra.mxu0 0.0
        %5994 = vmatpush.msra.mxu0 0.0
        %5995 = vmatpush.msra.mxu0 %v4842
        %5996 = vmatpush.msra.mxu0 %v4841
        %5997 = vmatpush.msra.mxu0 %v4840
        %5998 = vmatpush.msra.mxu0 %v4839
        %5999 = vmatpush.msra.mxu0 %v4838
        %6000 = vmatpush.msra.mxu0 %v4837
        %6001 = vmatpush.msra.mxu0 %v4836
        %6002 = vmatpush.msra.mxu0 %v4835
        %6003 = vmatmul.f32.gmra.mxu0 %v5631
        %v6004 = vpop.f32.mrf.mxu0
        %v6005 = vadd.f32 0.0, %v6004
        %6006 = vdwg.mxu0
        %6007 = vmatpush.msra.mxu0 0.0
        %6008 = vmatpush.msra.mxu0 0.0
        %6009 = vmatpush.msra.mxu0 0.0
        %6010 = vmatpush.msra.mxu0 0.0
        %6011 = vmatpush.msra.mxu0 0.0
        %6012 = vmatpush.msra.mxu0 0.0
        %6013 = vmatpush.msra.mxu0 0.0
        %6014 = vmatpush.msra.mxu0 0.0
        %6015 = vmatpush.msra.mxu0 %v4850
        %6016 = vmatpush.msra.mxu0 %v4849
        %6017 = vmatpush.msra.mxu0 %v4848
        %6018 = vmatpush.msra.mxu0 %v4847
        %6019 = vmatpush.msra.mxu0 %v4846
        %6020 = vmatpush.msra.mxu0 %v4845
        %6021 = vmatpush.msra.mxu0 %v4844
        %6022 = vmatpush.msra.mxu0 %v4843
        %6023 = vmatmul.f32.gmra.mxu0 %v5653
        %v6024 = vpop.f32.mrf.mxu0
        %v6025 = vadd.f32 0.0, %v6024
        %6026 = vdwg.mxu0
        %6027 = vmatpush.msra.mxu0 0.0
        %6028 = vmatpush.msra.mxu0 0.0
        %6029 = vmatpush.msra.mxu0 0.0
        %6030 = vmatpush.msra.mxu0 0.0
        %6031 = vmatpush.msra.mxu0 0.0
        %6032 = vmatpush.msra.mxu0 0.0
        %6033 = vmatpush.msra.mxu0 0.0
        %6034 = vmatpush.msra.mxu0 0.0
        %6035 = vmatpush.msra.mxu0 %v4858
        %6036 = vmatpush.msra.mxu0 %v4857
        %6037 = vmatpush.msra.mxu0 %v4856
        %6038 = vmatpush.msra.mxu0 %v4855
        %6039 = vmatpush.msra.mxu0 %v4854
        %6040 = vmatpush.msra.mxu0 %v4853
        %6041 = vmatpush.msra.mxu0 %v4852
        %6042 = vmatpush.msra.mxu0 %v4851
        %6043 = vmatmul.f32.gmra.mxu0 %v5675
        %v6044 = vpop.f32.mrf.mxu0
        %v6045 = vadd.f32 0.0, %v6044
        %6046 = vdwg.mxu0
        %6047 = vmatpush.msra.mxu0 0.0
        %6048 = vmatpush.msra.mxu0 0.0
        %6049 = vmatpush.msra.mxu0 0.0
        %6050 = vmatpush.msra.mxu0 0.0
        %6051 = vmatpush.msra.mxu0 0.0
        %6052 = vmatpush.msra.mxu0 0.0
        %6053 = vmatpush.msra.mxu0 0.0
        %6054 = vmatpush.msra.mxu0 0.0
        %6055 = vmatpush.msra.mxu0 %v4866
        %6056 = vmatpush.msra.mxu0 %v4865
        %6057 = vmatpush.msra.mxu0 %v4864
        %6058 = vmatpush.msra.mxu0 %v4863
        %6059 = vmatpush.msra.mxu0 %v4862
        %6060 = vmatpush.msra.mxu0 %v4861
        %6061 = vmatpush.msra.mxu0 %v4860
        %6062 = vmatpush.msra.mxu0 %v4859
        %6063 = vmatmul.f32.gmra.mxu0 %v5697
        %v6064 = vpop.f32.mrf.mxu0
        %v6065 = vadd.f32 0.0, %v6064
        %6066 = vdwg.mxu0
        %6067 = vmatpush.msra.mxu0 0.0
        %6068 = vmatpush.msra.mxu0 0.0
        %6069 = vmatpush.msra.mxu0 0.0
        %6070 = vmatpush.msra.mxu0 0.0
        %6071 = vmatpush.msra.mxu0 0.0
        %6072 = vmatpush.msra.mxu0 0.0
        %6073 = vmatpush.msra.mxu0 0.0
        %6074 = vmatpush.msra.mxu0 0.0
        %6075 = vmatpush.msra.mxu0 %v4874
        %6076 = vmatpush.msra.mxu0 %v4873
        %6077 = vmatpush.msra.mxu0 %v4872
        %6078 = vmatpush.msra.mxu0 %v4871
        %6079 = vmatpush.msra.mxu0 %v4870
        %6080 = vmatpush.msra.mxu0 %v4869
        %6081 = vmatpush.msra.mxu0 %v4868
        %6082 = vmatpush.msra.mxu0 %v4867
        %6083 = vmatmul.f32.gmra.mxu0 %v5719
        %v6084 = vpop.f32.mrf.mxu0
        %v6085 = vadd.f32 0.0, %v6084
        %6086 = vdwg.mxu0
        %6087 = vmatpush.msra.mxu0 0.0
        %6088 = vmatpush.msra.mxu0 0.0
        %6089 = vmatpush.msra.mxu0 0.0
        %6090 = vmatpush.msra.mxu0 0.0
        %6091 = vmatpush.msra.mxu0 0.0
        %6092 = vmatpush.msra.mxu0 0.0
        %6093 = vmatpush.msra.mxu0 0.0
        %6094 = vmatpush.msra.mxu0 0.0
        %6095 = vmatpush.msra.mxu0 %v4882
        %6096 = vmatpush.msra.mxu0 %v4881
        %6097 = vmatpush.msra.mxu0 %v4880
        %6098 = vmatpush.msra.mxu0 %v4879
        %6099 = vmatpush.msra.mxu0 %v4878
        %6100 = vmatpush.msra.mxu0 %v4877
        %6101 = vmatpush.msra.mxu0 %v4876
        %6102 = vmatpush.msra.mxu0 %v4875
        %6103 = vmatmul.f32.gmra.mxu0 %v5741
        %v6104 = vpop.f32.mrf.mxu0
        %v6105 = vadd.f32 0.0, %v6104
        %6106 = vdwg.mxu0
        %6107 = vmatpush.msra.mxu0 0.0
        %6108 = vmatpush.msra.mxu0 0.0
        %6109 = vmatpush.msra.mxu0 0.0
        %6110 = vmatpush.msra.mxu0 0.0
        %6111 = vmatpush.msra.mxu0 0.0
        %6112 = vmatpush.msra.mxu0 0.0
        %6113 = vmatpush.msra.mxu0 0.0
        %6114 = vmatpush.msra.mxu0 0.0
        %6115 = vmatpush.msra.mxu0 %v4890
        %6116 = vmatpush.msra.mxu0 %v4889
        %6117 = vmatpush.msra.mxu0 %v4888
        %6118 = vmatpush.msra.mxu0 %v4887
        %6119 = vmatpush.msra.mxu0 %v4886
        %6120 = vmatpush.msra.mxu0 %v4885
        %6121 = vmatpush.msra.mxu0 %v4884
        %6122 = vmatpush.msra.mxu0 %v4883
        %6123 = vmatmul.f32.gmra.mxu0 %v5763
        %v6124 = vpop.f32.mrf.mxu0
        %v6125 = vadd.f32 0.0, %v6124
        %6126 = vdwg.mxu0
        %6127 = vmatpush.msra.mxu0 0.0
        %6128 = vmatpush.msra.mxu0 0.0
        %6129 = vmatpush.msra.mxu0 0.0
        %6130 = vmatpush.msra.mxu0 0.0
        %6131 = vmatpush.msra.mxu0 0.0
        %6132 = vmatpush.msra.mxu0 0.0
        %6133 = vmatpush.msra.mxu0 0.0
        %6134 = vmatpush.msra.mxu0 0.0
        %6135 = vmatpush.msra.mxu0 %v4898
        %6136 = vmatpush.msra.mxu0 %v4897
        %6137 = vmatpush.msra.mxu0 %v4896
        %6138 = vmatpush.msra.mxu0 %v4895
        %6139 = vmatpush.msra.mxu0 %v4894
        %6140 = vmatpush.msra.mxu0 %v4893
        %6141 = vmatpush.msra.mxu0 %v4892
        %6142 = vmatpush.msra.mxu0 %v4891
        %6143 = vmatmul.f32.gmra.mxu0 %v5785
        %v6144 = vpop.f32.mrf.mxu0
        %v6145 = vadd.f32 0.0, %v6144
        %6146 = vdwg.mxu0
        %6147 = vmatpush.msra.mxu0 0.0
        %6148 = vmatpush.msra.mxu0 0.0
        %6149 = vmatpush.msra.mxu0 0.0
        %6150 = vmatpush.msra.mxu0 0.0
        %6151 = vmatpush.msra.mxu0 0.0
        %6152 = vmatpush.msra.mxu0 0.0
        %6153 = vmatpush.msra.mxu0 0.0
        %6154 = vmatpush.msra.mxu0 0.0
        %6155 = vmatpush.msra.mxu0 %v4906
        %6156 = vmatpush.msra.mxu0 %v4905
        %6157 = vmatpush.msra.mxu0 %v4904
        %6158 = vmatpush.msra.mxu0 %v4903
        %6159 = vmatpush.msra.mxu0 %v4902
        %6160 = vmatpush.msra.mxu0 %v4901
        %6161 = vmatpush.msra.mxu0 %v4900
        %6162 = vmatpush.msra.mxu0 %v4899
        %6163 = vmatmul.f32.gmra.mxu0 %v5807
        %v6164 = vpop.f32.mrf.mxu0
        %v6165 = vadd.f32 0.0, %v6164
        %6166 = vdwg.mxu0
        %6167 = vmatpush.msra.mxu0 0.0
        %6168 = vmatpush.msra.mxu0 0.0
        %6169 = vmatpush.msra.mxu0 0.0
        %6170 = vmatpush.msra.mxu0 0.0
        %6171 = vmatpush.msra.mxu0 0.0
        %6172 = vmatpush.msra.mxu0 0.0
        %6173 = vmatpush.msra.mxu0 0.0
        %6174 = vmatpush.msra.mxu0 0.0
        %6175 = vmatpush.msra.mxu0 %v4914
        %6176 = vmatpush.msra.mxu0 %v4913
        %6177 = vmatpush.msra.mxu0 %v4912
        %6178 = vmatpush.msra.mxu0 %v4911
        %6179 = vmatpush.msra.mxu0 %v4910
        %6180 = vmatpush.msra.mxu0 %v4909
        %6181 = vmatpush.msra.mxu0 %v4908
        %6182 = vmatpush.msra.mxu0 %v4907
        %6183 = vmatmul.f32.gmra.mxu0 %v5829
        %v6184 = vpop.f32.mrf.mxu0
        %v6185 = vadd.f32 0.0, %v6184
        %6186 = vdwg.mxu0
        %6187 = vmatpush.msra.mxu0 0.0
        %6188 = vmatpush.msra.mxu0 0.0
        %6189 = vmatpush.msra.mxu0 0.0
        %6190 = vmatpush.msra.mxu0 0.0
        %6191 = vmatpush.msra.mxu0 0.0
        %6192 = vmatpush.msra.mxu0 0.0
        %6193 = vmatpush.msra.mxu0 0.0
        %6194 = vmatpush.msra.mxu0 0.0
        %6195 = vmatpush.msra.mxu0 %v4923
        %6196 = vmatpush.msra.mxu0 %v4922
        %6197 = vmatpush.msra.mxu0 %v4921
        %6198 = vmatpush.msra.mxu0 %v4920
        %6199 = vmatpush.msra.mxu0 %v4919
        %6200 = vmatpush.msra.mxu0 %v4918
        %6201 = vmatpush.msra.mxu0 %v4917
        %6202 = vmatpush.msra.mxu0 %v4916
        %6203 = vmatmul.f32.gmra.mxu0 %v5147
        %v6204 = vpop.f32.mrf.mxu0
        %v6205 = vadd.f32 %v5885, %v6204
        %6206 = vdwg.mxu0
        %6207 = vmatpush.msra.mxu0 0.0
        %6208 = vmatpush.msra.mxu0 0.0
        %6209 = vmatpush.msra.mxu0 0.0
        %6210 = vmatpush.msra.mxu0 0.0
        %6211 = vmatpush.msra.mxu0 0.0
        %6212 = vmatpush.msra.mxu0 0.0
        %6213 = vmatpush.msra.mxu0 0.0
        %6214 = vmatpush.msra.mxu0 0.0
        %6215 = vmatpush.msra.mxu0 %v4931
        %6216 = vmatpush.msra.mxu0 %v4930
        %6217 = vmatpush.msra.mxu0 %v4929
        %6218 = vmatpush.msra.mxu0 %v4928
        %6219 = vmatpush.msra.mxu0 %v4927
        %6220 = vmatpush.msra.mxu0 %v4926
        %6221 = vmatpush.msra.mxu0 %v4925
        %6222 = vmatpush.msra.mxu0 %v4924
        %6223 = vmatmul.f32.gmra.mxu0 %v5169
        %v6224 = vpop.f32.mrf.mxu0
        %v6225 = vadd.f32 %v5905, %v6224
        %6226 = vdwg.mxu0
        %6227 = vmatpush.msra.mxu0 0.0
        %6228 = vmatpush.msra.mxu0 0.0
        %6229 = vmatpush.msra.mxu0 0.0
        %6230 = vmatpush.msra.mxu0 0.0
        %6231 = vmatpush.msra.mxu0 0.0
        %6232 = vmatpush.msra.mxu0 0.0
        %6233 = vmatpush.msra.mxu0 0.0
        %6234 = vmatpush.msra.mxu0 0.0
        %6235 = vmatpush.msra.mxu0 %v4939
        %6236 = vmatpush.msra.mxu0 %v4938
        %6237 = vmatpush.msra.mxu0 %v4937
        %6238 = vmatpush.msra.mxu0 %v4936
        %6239 = vmatpush.msra.mxu0 %v4935
        %6240 = vmatpush.msra.mxu0 %v4934
        %6241 = vmatpush.msra.mxu0 %v4933
        %6242 = vmatpush.msra.mxu0 %v4932
        %6243 = vmatmul.f32.gmra.mxu0 %v5191
        %v6244 = vpop.f32.mrf.mxu0
        %v6245 = vadd.f32 %v5925, %v6244
        %6246 = vdwg.mxu0
        %6247 = vmatpush.msra.mxu0 0.0
        %6248 = vmatpush.msra.mxu0 0.0
        %6249 = vmatpush.msra.mxu0 0.0
        %6250 = vmatpush.msra.mxu0 0.0
        %6251 = vmatpush.msra.mxu0 0.0
        %6252 = vmatpush.msra.mxu0 0.0
        %6253 = vmatpush.msra.mxu0 0.0
        %6254 = vmatpush.msra.mxu0 0.0
        %6255 = vmatpush.msra.mxu0 %v4947
        %6256 = vmatpush.msra.mxu0 %v4946
        %6257 = vmatpush.msra.mxu0 %v4945
        %6258 = vmatpush.msra.mxu0 %v4944
        %6259 = vmatpush.msra.mxu0 %v4943
        %6260 = vmatpush.msra.mxu0 %v4942
        %6261 = vmatpush.msra.mxu0 %v4941
        %6262 = vmatpush.msra.mxu0 %v4940
        %6263 = vmatmul.f32.gmra.mxu0 %v5213
        %v6264 = vpop.f32.mrf.mxu0
        %v6265 = vadd.f32 %v5945, %v6264
        %6266 = vdwg.mxu0
        %6267 = vmatpush.msra.mxu0 0.0
        %6268 = vmatpush.msra.mxu0 0.0
        %6269 = vmatpush.msra.mxu0 0.0
        %6270 = vmatpush.msra.mxu0 0.0
        %6271 = vmatpush.msra.mxu0 0.0
        %6272 = vmatpush.msra.mxu0 0.0
        %6273 = vmatpush.msra.mxu0 0.0
        %6274 = vmatpush.msra.mxu0 0.0
        %6275 = vmatpush.msra.mxu0 %v4955
        %6276 = vmatpush.msra.mxu0 %v4954
        %6277 = vmatpush.msra.mxu0 %v4953
        %6278 = vmatpush.msra.mxu0 %v4952
        %6279 = vmatpush.msra.mxu0 %v4951
        %6280 = vmatpush.msra.mxu0 %v4950
        %6281 = vmatpush.msra.mxu0 %v4949
        %6282 = vmatpush.msra.mxu0 %v4948
        %6283 = vmatmul.f32.gmra.mxu0 %v5235
        %v6284 = vpop.f32.mrf.mxu0
        %v6285 = vadd.f32 %v5965, %v6284
        %6286 = vdwg.mxu0
        %6287 = vmatpush.msra.mxu0 0.0
        %6288 = vmatpush.msra.mxu0 0.0
        %6289 = vmatpush.msra.mxu0 0.0
        %6290 = vmatpush.msra.mxu0 0.0
        %6291 = vmatpush.msra.mxu0 0.0
        %6292 = vmatpush.msra.mxu0 0.0
        %6293 = vmatpush.msra.mxu0 0.0
        %6294 = vmatpush.msra.mxu0 0.0
        %6295 = vmatpush.msra.mxu0 %v4963
        %6296 = vmatpush.msra.mxu0 %v4962
        %6297 = vmatpush.msra.mxu0 %v4961
        %6298 = vmatpush.msra.mxu0 %v4960
        %6299 = vmatpush.msra.mxu0 %v4959
        %6300 = vmatpush.msra.mxu0 %v4958
        %6301 = vmatpush.msra.mxu0 %v4957
        %6302 = vmatpush.msra.mxu0 %v4956
        %6303 = vmatmul.f32.gmra.mxu0 %v5257
        %v6304 = vpop.f32.mrf.mxu0
        %v6305 = vadd.f32 %v5985, %v6304
        %6306 = vdwg.mxu0
        %6307 = vmatpush.msra.mxu0 0.0
        %6308 = vmatpush.msra.mxu0 0.0
        %6309 = vmatpush.msra.mxu0 0.0
        %6310 = vmatpush.msra.mxu0 0.0
        %6311 = vmatpush.msra.mxu0 0.0
        %6312 = vmatpush.msra.mxu0 0.0
        %6313 = vmatpush.msra.mxu0 0.0
        %6314 = vmatpush.msra.mxu0 0.0
        %6315 = vmatpush.msra.mxu0 %v4971
        %6316 = vmatpush.msra.mxu0 %v4970
        %6317 = vmatpush.msra.mxu0 %v4969
        %6318 = vmatpush.msra.mxu0 %v4968
        %6319 = vmatpush.msra.mxu0 %v4967
        %6320 = vmatpush.msra.mxu0 %v4966
        %6321 = vmatpush.msra.mxu0 %v4965
        %6322 = vmatpush.msra.mxu0 %v4964
        %6323 = vmatmul.f32.gmra.mxu0 %v5279
        %v6324 = vpop.f32.mrf.mxu0
        %v6325 = vadd.f32 %v6005, %v6324
        %6326 = vdwg.mxu0
        %6327 = vmatpush.msra.mxu0 0.0
        %6328 = vmatpush.msra.mxu0 0.0
        %6329 = vmatpush.msra.mxu0 0.0
        %6330 = vmatpush.msra.mxu0 0.0
        %6331 = vmatpush.msra.mxu0 0.0
        %6332 = vmatpush.msra.mxu0 0.0
        %6333 = vmatpush.msra.mxu0 0.0
        %6334 = vmatpush.msra.mxu0 0.0
        %6335 = vmatpush.msra.mxu0 %v4979
        %6336 = vmatpush.msra.mxu0 %v4978
        %6337 = vmatpush.msra.mxu0 %v4977
        %6338 = vmatpush.msra.mxu0 %v4976
        %6339 = vmatpush.msra.mxu0 %v4975
        %6340 = vmatpush.msra.mxu0 %v4974
        %6341 = vmatpush.msra.mxu0 %v4973
        %6342 = vmatpush.msra.mxu0 %v4972
        %6343 = vmatmul.f32.gmra.mxu0 %v5301
        %v6344 = vpop.f32.mrf.mxu0
        %v6345 = vadd.f32 %v6025, %v6344
        %6346 = vdwg.mxu0
        %6347 = vmatpush.msra.mxu0 0.0
        %6348 = vmatpush.msra.mxu0 0.0
        %6349 = vmatpush.msra.mxu0 0.0
        %6350 = vmatpush.msra.mxu0 0.0
        %6351 = vmatpush.msra.mxu0 0.0
        %6352 = vmatpush.msra.mxu0 0.0
        %6353 = vmatpush.msra.mxu0 0.0
        %6354 = vmatpush.msra.mxu0 0.0
        %6355 = vmatpush.msra.mxu0 %v4987
        %6356 = vmatpush.msra.mxu0 %v4986
        %6357 = vmatpush.msra.mxu0 %v4985
        %6358 = vmatpush.msra.mxu0 %v4984
        %6359 = vmatpush.msra.mxu0 %v4983
        %6360 = vmatpush.msra.mxu0 %v4982
        %6361 = vmatpush.msra.mxu0 %v4981
        %6362 = vmatpush.msra.mxu0 %v4980
        %6363 = vmatmul.f32.gmra.mxu0 %v5323
        %v6364 = vpop.f32.mrf.mxu0
        %v6365 = vadd.f32 %v6045, %v6364
        %6366 = vdwg.mxu0
        %6367 = vmatpush.msra.mxu0 0.0
        %6368 = vmatpush.msra.mxu0 0.0
        %6369 = vmatpush.msra.mxu0 0.0
        %6370 = vmatpush.msra.mxu0 0.0
        %6371 = vmatpush.msra.mxu0 0.0
        %6372 = vmatpush.msra.mxu0 0.0
        %6373 = vmatpush.msra.mxu0 0.0
        %6374 = vmatpush.msra.mxu0 0.0
        %6375 = vmatpush.msra.mxu0 %v4995
        %6376 = vmatpush.msra.mxu0 %v4994
        %6377 = vmatpush.msra.mxu0 %v4993
        %6378 = vmatpush.msra.mxu0 %v4992
        %6379 = vmatpush.msra.mxu0 %v4991
        %6380 = vmatpush.msra.mxu0 %v4990
        %6381 = vmatpush.msra.mxu0 %v4989
        %6382 = vmatpush.msra.mxu0 %v4988
        %6383 = vmatmul.f32.gmra.mxu0 %v5345
        %v6384 = vpop.f32.mrf.mxu0
        %v6385 = vadd.f32 %v6065, %v6384
        %6386 = vdwg.mxu0
        %6387 = vmatpush.msra.mxu0 0.0
        %6388 = vmatpush.msra.mxu0 0.0
        %6389 = vmatpush.msra.mxu0 0.0
        %6390 = vmatpush.msra.mxu0 0.0
        %6391 = vmatpush.msra.mxu0 0.0
        %6392 = vmatpush.msra.mxu0 0.0
        %6393 = vmatpush.msra.mxu0 0.0
        %6394 = vmatpush.msra.mxu0 0.0
        %6395 = vmatpush.msra.mxu0 %v5003
        %6396 = vmatpush.msra.mxu0 %v5002
        %6397 = vmatpush.msra.mxu0 %v5001
        %6398 = vmatpush.msra.mxu0 %v5000
        %6399 = vmatpush.msra.mxu0 %v4999
        %6400 = vmatpush.msra.mxu0 %v4998
        %6401 = vmatpush.msra.mxu0 %v4997
        %6402 = vmatpush.msra.mxu0 %v4996
        %6403 = vmatmul.f32.gmra.mxu0 %v5367
        %v6404 = vpop.f32.mrf.mxu0
        %v6405 = vadd.f32 %v6085, %v6404
        %6406 = vdwg.mxu0
        %6407 = vmatpush.msra.mxu0 0.0
        %6408 = vmatpush.msra.mxu0 0.0
        %6409 = vmatpush.msra.mxu0 0.0
        %6410 = vmatpush.msra.mxu0 0.0
        %6411 = vmatpush.msra.mxu0 0.0
        %6412 = vmatpush.msra.mxu0 0.0
        %6413 = vmatpush.msra.mxu0 0.0
        %6414 = vmatpush.msra.mxu0 0.0
        %6415 = vmatpush.msra.mxu0 %v5011
        %6416 = vmatpush.msra.mxu0 %v5010
        %6417 = vmatpush.msra.mxu0 %v5009
        %6418 = vmatpush.msra.mxu0 %v5008
        %6419 = vmatpush.msra.mxu0 %v5007
        %6420 = vmatpush.msra.mxu0 %v5006
        %6421 = vmatpush.msra.mxu0 %v5005
        %6422 = vmatpush.msra.mxu0 %v5004
        %6423 = vmatmul.f32.gmra.mxu0 %v5389
        %v6424 = vpop.f32.mrf.mxu0
        %v6425 = vadd.f32 %v6105, %v6424
        %6426 = vdwg.mxu0
        %6427 = vmatpush.msra.mxu0 0.0
        %6428 = vmatpush.msra.mxu0 0.0
        %6429 = vmatpush.msra.mxu0 0.0
        %6430 = vmatpush.msra.mxu0 0.0
        %6431 = vmatpush.msra.mxu0 0.0
        %6432 = vmatpush.msra.mxu0 0.0
        %6433 = vmatpush.msra.mxu0 0.0
        %6434 = vmatpush.msra.mxu0 0.0
        %6435 = vmatpush.msra.mxu0 %v5019
        %6436 = vmatpush.msra.mxu0 %v5018
        %6437 = vmatpush.msra.mxu0 %v5017
        %6438 = vmatpush.msra.mxu0 %v5016
        %6439 = vmatpush.msra.mxu0 %v5015
        %6440 = vmatpush.msra.mxu0 %v5014
        %6441 = vmatpush.msra.mxu0 %v5013
        %6442 = vmatpush.msra.mxu0 %v5012
        %6443 = vmatmul.f32.gmra.mxu0 %v5411
        %v6444 = vpop.f32.mrf.mxu0
        %v6445 = vadd.f32 %v6125, %v6444
        %6446 = vdwg.mxu0
        %6447 = vmatpush.msra.mxu0 0.0
        %6448 = vmatpush.msra.mxu0 0.0
        %6449 = vmatpush.msra.mxu0 0.0
        %6450 = vmatpush.msra.mxu0 0.0
        %6451 = vmatpush.msra.mxu0 0.0
        %6452 = vmatpush.msra.mxu0 0.0
        %6453 = vmatpush.msra.mxu0 0.0
        %6454 = vmatpush.msra.mxu0 0.0
        %6455 = vmatpush.msra.mxu0 %v5027
        %6456 = vmatpush.msra.mxu0 %v5026
        %6457 = vmatpush.msra.mxu0 %v5025
        %6458 = vmatpush.msra.mxu0 %v5024
        %6459 = vmatpush.msra.mxu0 %v5023
        %6460 = vmatpush.msra.mxu0 %v5022
        %6461 = vmatpush.msra.mxu0 %v5021
        %6462 = vmatpush.msra.mxu0 %v5020
        %6463 = vmatmul.f32.gmra.mxu0 %v5433
        %v6464 = vpop.f32.mrf.mxu0
        %v6465 = vadd.f32 %v6145, %v6464
        %6466 = vdwg.mxu0
        %6467 = vmatpush.msra.mxu0 0.0
        %6468 = vmatpush.msra.mxu0 0.0
        %6469 = vmatpush.msra.mxu0 0.0
        %6470 = vmatpush.msra.mxu0 0.0
        %6471 = vmatpush.msra.mxu0 0.0
        %6472 = vmatpush.msra.mxu0 0.0
        %6473 = vmatpush.msra.mxu0 0.0
        %6474 = vmatpush.msra.mxu0 0.0
        %6475 = vmatpush.msra.mxu0 %v5035
        %6476 = vmatpush.msra.mxu0 %v5034
        %6477 = vmatpush.msra.mxu0 %v5033
        %6478 = vmatpush.msra.mxu0 %v5032
        %6479 = vmatpush.msra.mxu0 %v5031
        %6480 = vmatpush.msra.mxu0 %v5030
        %6481 = vmatpush.msra.mxu0 %v5029
        %6482 = vmatpush.msra.mxu0 %v5028
        %6483 = vmatmul.f32.gmra.mxu0 %v5455
        %v6484 = vpop.f32.mrf.mxu0
        %v6485 = vadd.f32 %v6165, %v6484
        %6486 = vdwg.mxu0
        %6487 = vmatpush.msra.mxu0 0.0
        %6488 = vmatpush.msra.mxu0 0.0
        %6489 = vmatpush.msra.mxu0 0.0
        %6490 = vmatpush.msra.mxu0 0.0
        %6491 = vmatpush.msra.mxu0 0.0
        %6492 = vmatpush.msra.mxu0 0.0
        %6493 = vmatpush.msra.mxu0 0.0
        %6494 = vmatpush.msra.mxu0 0.0
        %6495 = vmatpush.msra.mxu0 %v5043
        %6496 = vmatpush.msra.mxu0 %v5042
        %6497 = vmatpush.msra.mxu0 %v5041
        %6498 = vmatpush.msra.mxu0 %v5040
        %6499 = vmatpush.msra.mxu0 %v5039
        %6500 = vmatpush.msra.mxu0 %v5038
        %6501 = vmatpush.msra.mxu0 %v5037
        %6502 = vmatpush.msra.mxu0 %v5036
        %6503 = vmatmul.f32.gmra.mxu0 %v5477
        %v6504 = vpop.f32.mrf.mxu0
        %v6505 = vadd.f32 %v6185, %v6504
        %6506 = vdwg.mxu0
        %v6523 = vrot.slane %v5852, 7
        %v6524 = vsel %vm2438, %v6523, %v5851
        %v6525 = vrot.slane %v5853, 6
        %v6526 = vsel %vm2441, %v6525, %v6524
        %v6527 = vrot.slane %v5854, 5
        %v6528 = vsel %vm2444, %v6527, %v6526
        %v6529 = vrot.slane %v5855, 4
        %v6530 = vsel %vm2447, %v6529, %v6528
        %v6531 = vrot.slane %v5856, 3
        %v6532 = vsel %vm2450, %v6531, %v6530
        %v6533 = vrot.slane %v5857, 2
        %v6534 = vsel %vm2453, %v6533, %v6532
        %v6535 = vrot.slane %v5858, 1
        %v6536 = vsel %vm2456, %v6535, %v6534
        %v6537 = vrot.slane %v5860, 7
        %v6538 = vsel %vm2438, %v6537, %v5859
        %v6539 = vrot.slane %v5861, 6
        %v6540 = vsel %vm2441, %v6539, %v6538
        %v6541 = vrot.slane %v5862, 5
        %v6542 = vsel %vm2444, %v6541, %v6540
        %v6543 = vrot.slane %v5863, 4
        %v6544 = vsel %vm2447, %v6543, %v6542
        %v6545 = vrot.slane %v5864, 3
        %v6546 = vsel %vm2450, %v6545, %v6544
        %v6547 = vrot.slane %v5865, 2
        %v6548 = vsel %vm2453, %v6547, %v6546
        %v6549 = vrot.slane %v5866, 1
        %v6550 = vsel %vm2456, %v6549, %v6548
        %v6569 = vrot.slane %v6225, 7
        %v6570 = vsel %vm2438, %v6569, %v6205
        %v6571 = vrot.slane %v6245, 6
        %v6572 = vsel %vm2441, %v6571, %v6570
        %v6573 = vrot.slane %v6265, 5
        %v6574 = vsel %vm2444, %v6573, %v6572
        %v6575 = vrot.slane %v6285, 4
        %v6576 = vsel %vm2447, %v6575, %v6574
        %v6577 = vrot.slane %v6305, 3
        %v6578 = vsel %vm2450, %v6577, %v6576
        %v6579 = vrot.slane %v6325, 2
        %v6580 = vsel %vm2453, %v6579, %v6578
        %v6581 = vrot.slane %v6345, 1
        %v6582 = vsel %vm2456, %v6581, %v6580
        %v6583 = vrot.slane %v6385, 7
        %v6584 = vsel %vm2438, %v6583, %v6365
        %v6585 = vrot.slane %v6405, 6
        %v6586 = vsel %vm2441, %v6585, %v6584
        %v6587 = vrot.slane %v6425, 5
        %v6588 = vsel %vm2444, %v6587, %v6586
        %v6589 = vrot.slane %v6445, 4
        %v6590 = vsel %vm2447, %v6589, %v6588
        %v6591 = vrot.slane %v6465, 3
        %v6592 = vsel %vm2450, %v6591, %v6590
        %v6593 = vrot.slane %v6485, 2
        %v6594 = vsel %vm2453, %v6593, %v6592
        %v6595 = vrot.slane %v6505, 1
        %v6596 = vsel %vm2456, %v6595, %v6594
        %6599 = vxpose.xlu0.b32.start [1/16] %v6536, 128
        %6600 = vxpose.xlu0.b32.cont [2/16] %v6550, 128
        %6601 = vxpose.xlu0.b32.cont [3/16] %v6582, 128
        %6602 = vxpose.xlu0.b32.cont [4/16] %v6596, 128
        %6603 = vxpose.xlu0.b32.cont [5/16] 0.0, 128
        %6604 = vxpose.xlu0.b32.cont [6/16] 0.0, 128
        %6605 = vxpose.xlu0.b32.cont [7/16] 0.0, 128
        %6606 = vxpose.xlu0.b32.cont [8/16] 0.0, 128
        %6607 = vxpose.xlu0.b32.cont [9/16] 0.0, 128
        %6608 = vxpose.xlu0.b32.cont [10/16] 0.0, 128
        %6609 = vxpose.xlu0.b32.cont [11/16] 0.0, 128
        %6610 = vxpose.xlu0.b32.cont [12/16] 0.0, 128
        %6611 = vxpose.xlu0.b32.cont [13/16] 0.0, 128
        %6612 = vxpose.xlu0.b32.cont [14/16] 0.0, 128
        %6613 = vxpose.xlu0.b32.cont [15/16] 0.0, 128
        %6614 = vxpose.xlu0.b32.end [16/16] 0.0, 128
        %v6615 = vpop.trf.xlu0
        %v6616 = vpop.trf.xlu0
        %v6617 = vpop.trf.xlu0
        %v6618 = vpop.trf.xlu0
        %v6619 = vpop.trf.xlu0
        %v6620 = vpop.trf.xlu0
        %v6621 = vpop.trf.xlu0
        %v6622 = vpop.trf.xlu0
        %v6623 = vpop.trf.xlu0
        %v6624 = vpop.trf.xlu0
        %v6625 = vpop.trf.xlu0
        %v6626 = vpop.trf.xlu0
        %v6627 = vpop.trf.xlu0
        %v6628 = vpop.trf.xlu0
        %v6629 = vpop.trf.xlu0
        %v6630 = vpop.trf.xlu0
        %v6632 = vsel %vm2552, %v6615, 0
        %v6635 = vsel %vm2552, %v6616, 0
        %v6638 = vsel %vm2552, %v6617, 0
        %v6641 = vsel %vm2552, %v6618, 0
        %v6644 = vsel %vm2552, %v6619, 0
        %v6647 = vsel %vm2552, %v6620, 0
        %v6650 = vsel %vm2552, %v6621, 0
        %v6653 = vsel %vm2552, %v6622, 0
        %6655 = vmatpush.msra.mxu0 0.0
        %6656 = vmatpush.msra.mxu0 0.0
        %6657 = vmatpush.msra.mxu0 0.0
        %6658 = vmatpush.msra.mxu0 0.0
        %6659 = vmatpush.msra.mxu0 0.0
        %6660 = vmatpush.msra.mxu0 0.0
        %6661 = vmatpush.msra.mxu0 0.0
        %6662 = vmatpush.msra.mxu0 0.0
        %6663 = vmatpush.msra.mxu0 0.0
        %6664 = vmatpush.msra.mxu0 0.0
        %6665 = vmatpush.msra.mxu0 0.0
        %6666 = vmatpush.msra.mxu0 0.0
        %6667 = vmatpush.msra.mxu0 %v690
        %6668 = vmatpush.msra.mxu0 %v689
        %6669 = vmatpush.msra.mxu0 %v688
        %6670 = vmatpush.msra.mxu0 %v687
        %6671 = vmatmul.f32.gmra.mxu0 %v6632
        %v6672 = vpop.f32.mrf.mxu0
        %v6673 = vadd.f32 0.0, %v6672
        %6674 = vmatmul.f32.gmra.mxu0 %v6635
        %v6675 = vpop.f32.mrf.mxu0
        %v6676 = vadd.f32 0.0, %v6675
        %6677 = vmatmul.f32.gmra.mxu0 %v6638
        %v6678 = vpop.f32.mrf.mxu0
        %v6679 = vadd.f32 0.0, %v6678
        %6680 = vmatmul.f32.gmra.mxu0 %v6641
        %v6681 = vpop.f32.mrf.mxu0
        %v6682 = vadd.f32 0.0, %v6681
        %6683 = vmatmul.f32.gmra.mxu0 %v6644
        %v6684 = vpop.f32.mrf.mxu0
        %v6685 = vadd.f32 0.0, %v6684
        %6686 = vmatmul.f32.gmra.mxu0 %v6647
        %v6687 = vpop.f32.mrf.mxu0
        %v6688 = vadd.f32 0.0, %v6687
        %6689 = vmatmul.f32.gmra.mxu0 %v6650
        %v6690 = vpop.f32.mrf.mxu0
        %v6691 = vadd.f32 0.0, %v6690
        %6692 = vmatmul.f32.gmra.mxu0 %v6653
        %v6693 = vpop.f32.mrf.mxu0
        %v6694 = vadd.f32 0.0, %v6693
        %6695 = vdwg.mxu0
        %v6697 = vsel %vm963, %v5045, 0
        %v6700 = vsel %vm963, %v5046, 0
        %v6703 = vsel %vm963, %v5047, 0
        %v6706 = vsel %vm963, %v5048, 0
        %v6709 = vsel %vm963, %v5049, 0
        %v6712 = vsel %vm963, %v5050, 0
        %v6715 = vsel %vm963, %v5051, 0
        %v6718 = vsel %vm963, %v5052, 0
        %6720 = vmatpush.msra.mxu0 0.0
        %6721 = vmatpush.msra.mxu0 0.0
        %6722 = vmatpush.msra.mxu0 0.0
        %6723 = vmatpush.msra.mxu0 0.0
        %6724 = vmatpush.msra.mxu0 0.0
        %6725 = vmatpush.msra.mxu0 0.0
        %6726 = vmatpush.msra.mxu0 0.0
        %6727 = vmatpush.msra.mxu0 0.0
        %6728 = vmatpush.msra.mxu0 %v4785
        %6729 = vmatpush.msra.mxu0 %v4784
        %6730 = vmatpush.msra.mxu0 %v4783
        %6731 = vmatpush.msra.mxu0 %v4782
        %6732 = vmatpush.msra.mxu0 %v4781
        %6733 = vmatpush.msra.mxu0 %v4780
        %6734 = vmatpush.msra.mxu0 %v4779
        %6735 = vmatpush.msra.mxu0 %v4778
        %6736 = vmatmul.f32.gmra.mxu0 %v6697
        %v6737 = vpop.f32.mrf.mxu0
        %v6738 = vadd.f32 0.0, %v6737
        %6739 = vmatmul.f32.gmra.mxu0 %v6700
        %v6740 = vpop.f32.mrf.mxu0
        %v6741 = vadd.f32 0.0, %v6740
        %6742 = vmatmul.f32.gmra.mxu0 %v6703
        %v6743 = vpop.f32.mrf.mxu0
        %v6744 = vadd.f32 0.0, %v6743
        %6745 = vmatmul.f32.gmra.mxu0 %v6706
        %v6746 = vpop.f32.mrf.mxu0
        %v6747 = vadd.f32 0.0, %v6746
        %6748 = vmatmul.f32.gmra.mxu0 %v6709
        %v6749 = vpop.f32.mrf.mxu0
        %v6750 = vadd.f32 0.0, %v6749
        %6751 = vmatmul.f32.gmra.mxu0 %v6712
        %v6752 = vpop.f32.mrf.mxu0
        %v6753 = vadd.f32 0.0, %v6752
        %6754 = vmatmul.f32.gmra.mxu0 %v6715
        %v6755 = vpop.f32.mrf.mxu0
        %v6756 = vadd.f32 0.0, %v6755
        %6757 = vmatmul.f32.gmra.mxu0 %v6718
        %v6758 = vpop.f32.mrf.mxu0
        %v6759 = vadd.f32 0.0, %v6758
        %6760 = vdwg.mxu0
        %v6761 = vadd.f32 %v6673, %v6738
        %v6762 = vadd.f32 %v6676, %v6741
        %v6763 = vadd.f32 %v6679, %v6744
        %v6764 = vadd.f32 %v6682, %v6747
        %v6765 = vadd.f32 %v6685, %v6750
        %v6766 = vadd.f32 %v6688, %v6753
        %v6767 = vadd.f32 %v6691, %v6756
        %v6768 = vadd.f32 %v6694, %v6759
        %6770 = vset.pattern.permute.xlu0 0
        %6771 = vperm.xlu0 %6770, %v5054
        %v6772 = vpop.permute.xlu0 %6771
        %6775 = vset.pattern.permute.xlu0 0
        %6776 = vperm.xlu0 %6775, %v5055
        %v6777 = vpop.permute.xlu0 %6776
        %6780 = vset.pattern.permute.xlu0 0
        %6781 = vperm.xlu0 %6780, %v5056
        %v6782 = vpop.permute.xlu0 %6781
        %6785 = vset.pattern.permute.xlu0 0
        %6786 = vperm.xlu0 %6785, %v5057
        %v6787 = vpop.permute.xlu0 %6786
        %6790 = vset.pattern.permute.xlu0 0
        %6791 = vperm.xlu0 %6790, %v5058
        %v6792 = vpop.permute.xlu0 %6791
        %6795 = vset.pattern.permute.xlu0 0
        %6796 = vperm.xlu0 %6795, %v5059
        %v6797 = vpop.permute.xlu0 %6796
        %6800 = vset.pattern.permute.xlu0 0
        %6801 = vperm.xlu0 %6800, %v5060
        %v6802 = vpop.permute.xlu0 %6801
        %6805 = vset.pattern.permute.xlu0 0
        %6806 = vperm.xlu0 %6805, %v5061
        %v6807 = vpop.permute.xlu0 %6806
        %v6809 = vadd.f32 %v6761, %v6772
        %v6810 = vadd.f32 %v6762, %v6777
        %v6811 = vadd.f32 %v6763, %v6782
        %v6812 = vadd.f32 %v6764, %v6787
        %v6813 = vadd.f32 %v6765, %v6792
        %v6814 = vadd.f32 %v6766, %v6797
        %v6815 = vadd.f32 %v6767, %v6802
        %v6816 = vadd.f32 %v6768, %v6807
        %v6817 = vmax.f32 %v6809, 0.0
        %v6818 = vmax.f32 %v6810, 0.0
        %v6819 = vmax.f32 %v6811, 0.0
        %v6820 = vmax.f32 %v6812, 0.0
        %v6821 = vmax.f32 %v6813, 0.0
        %v6822 = vmax.f32 %v6814, 0.0
        %v6823 = vmax.f32 %v6815, 0.0
        %v6824 = vmax.f32 %v6816, 0.0
        %s6825 = scalar_lea.vmem [#allocation9], 3072
        %v6826 = vld [vmem:[%s6825] sm:$0xff]
        %v6827 = vld [vmem:[%s6825 + $0x8] sm:$0xff]
        %v6828 = vld [vmem:[%s6825 + $0x10] sm:$0xff]
        %v6829 = vld [vmem:[%s6825 + $0x18] sm:$0xff]
        %v6830 = vld [vmem:[%s6825 + $0x20] sm:$0xff]
        %v6831 = vld [vmem:[%s6825 + $0x28] sm:$0xff]
        %v6832 = vld [vmem:[%s6825 + $0x30] sm:$0xff]
        %v6833 = vld [vmem:[%s6825 + $0x38] sm:$0xff]
        %v6834 = vld [vmem:[%s6825 + $0x40] sm:$0xff]
        %v6835 = vld [vmem:[%s6825 + $0x48] sm:$0xff]
        %v6836 = vld [vmem:[%s6825 + $0x50] sm:$0xff]
        %v6837 = vld [vmem:[%s6825 + $0x58] sm:$0xff]
        %v6838 = vld [vmem:[%s6825 + $0x60] sm:$0xff]
        %v6839 = vld [vmem:[%s6825 + $0x68] sm:$0xff]
        %v6840 = vld [vmem:[%s6825 + $0x70] sm:$0xff]
        %v6841 = vld [vmem:[%s6825 + $0x78] sm:$0xff]
        %v6842 = vld [vmem:[%s6825 + $0x80] sm:$0xff]
        %v6843 = vld [vmem:[%s6825 + $0x88] sm:$0xff]
        %v6844 = vld [vmem:[%s6825 + $0x90] sm:$0xff]
        %v6845 = vld [vmem:[%s6825 + $0x98] sm:$0xff]
        %v6846 = vld [vmem:[%s6825 + $0xa0] sm:$0xff]
        %v6847 = vld [vmem:[%s6825 + $0xa8] sm:$0xff]
        %v6848 = vld [vmem:[%s6825 + $0xb0] sm:$0xff]
        %v6849 = vld [vmem:[%s6825 + $0xb8] sm:$0xff]
        %v6850 = vld [vmem:[%s6825 + $0xc0] sm:$0xff]
        %v6851 = vld [vmem:[%s6825 + $0xc8] sm:$0xff]
        %v6852 = vld [vmem:[%s6825 + $0xd0] sm:$0xff]
        %v6853 = vld [vmem:[%s6825 + $0xd8] sm:$0xff]
        %v6854 = vld [vmem:[%s6825 + $0xe0] sm:$0xff]
        %v6855 = vld [vmem:[%s6825 + $0xe8] sm:$0xff]
        %v6856 = vld [vmem:[%s6825 + $0xf0] sm:$0xff]
        %v6857 = vld [vmem:[%s6825 + $0xf8] sm:$0xff]
        %v6858 = vld [vmem:[%s6825 + $0x100] sm:$0xff]
        %v6859 = vld [vmem:[%s6825 + $0x108] sm:$0xff]
        %v6860 = vld [vmem:[%s6825 + $0x110] sm:$0xff]
        %v6861 = vld [vmem:[%s6825 + $0x118] sm:$0xff]
        %v6862 = vld [vmem:[%s6825 + $0x120] sm:$0xff]
        %v6863 = vld [vmem:[%s6825 + $0x128] sm:$0xff]
        %v6864 = vld [vmem:[%s6825 + $0x130] sm:$0xff]
        %v6865 = vld [vmem:[%s6825 + $0x138] sm:$0xff]
        %v6866 = vld [vmem:[%s6825 + $0x140] sm:$0xff]
        %v6867 = vld [vmem:[%s6825 + $0x148] sm:$0xff]
        %v6868 = vld [vmem:[%s6825 + $0x150] sm:$0xff]
        %v6869 = vld [vmem:[%s6825 + $0x158] sm:$0xff]
        %v6870 = vld [vmem:[%s6825 + $0x160] sm:$0xff]
        %v6871 = vld [vmem:[%s6825 + $0x168] sm:$0xff]
        %v6872 = vld [vmem:[%s6825 + $0x170] sm:$0xff]
        %v6873 = vld [vmem:[%s6825 + $0x178] sm:$0xff]
        %v6874 = vld [vmem:[%s6825 + $0x180] sm:$0xff]
        %v6875 = vld [vmem:[%s6825 + $0x188] sm:$0xff]
        %v6876 = vld [vmem:[%s6825 + $0x190] sm:$0xff]
        %v6877 = vld [vmem:[%s6825 + $0x198] sm:$0xff]
        %v6878 = vld [vmem:[%s6825 + $0x1a0] sm:$0xff]
        %v6879 = vld [vmem:[%s6825 + $0x1a8] sm:$0xff]
        %v6880 = vld [vmem:[%s6825 + $0x1b0] sm:$0xff]
        %v6881 = vld [vmem:[%s6825 + $0x1b8] sm:$0xff]
        %v6882 = vld [vmem:[%s6825 + $0x1c0] sm:$0xff]
        %v6883 = vld [vmem:[%s6825 + $0x1c8] sm:$0xff]
        %v6884 = vld [vmem:[%s6825 + $0x1d0] sm:$0xff]
        %v6885 = vld [vmem:[%s6825 + $0x1d8] sm:$0xff]
        %v6886 = vld [vmem:[%s6825 + $0x1e0] sm:$0xff]
        %v6887 = vld [vmem:[%s6825 + $0x1e8] sm:$0xff]
        %v6888 = vld [vmem:[%s6825 + $0x1f0] sm:$0xff]
        %v6889 = vld [vmem:[%s6825 + $0x1f8] sm:$0xff]
        %v6890 = vld [vmem:[%s6825 + $0x200] sm:$0xff]
        %v6891 = vld [vmem:[%s6825 + $0x208] sm:$0xff]
        %v6892 = vld [vmem:[%s6825 + $0x210] sm:$0xff]
        %v6893 = vld [vmem:[%s6825 + $0x218] sm:$0xff]
        %v6894 = vld [vmem:[%s6825 + $0x220] sm:$0xff]
        %v6895 = vld [vmem:[%s6825 + $0x228] sm:$0xff]
        %v6896 = vld [vmem:[%s6825 + $0x230] sm:$0xff]
        %v6897 = vld [vmem:[%s6825 + $0x238] sm:$0xff]
        %v6898 = vld [vmem:[%s6825 + $0x240] sm:$0xff]
        %v6899 = vld [vmem:[%s6825 + $0x248] sm:$0xff]
        %v6900 = vld [vmem:[%s6825 + $0x250] sm:$0xff]
        %v6901 = vld [vmem:[%s6825 + $0x258] sm:$0xff]
        %v6902 = vld [vmem:[%s6825 + $0x260] sm:$0xff]
        %v6903 = vld [vmem:[%s6825 + $0x268] sm:$0xff]
        %v6904 = vld [vmem:[%s6825 + $0x270] sm:$0xff]
        %v6905 = vld [vmem:[%s6825 + $0x278] sm:$0xff]
        %v6906 = vld [vmem:[%s6825 + $0x280] sm:$0xff]
        %v6907 = vld [vmem:[%s6825 + $0x288] sm:$0xff]
        %v6908 = vld [vmem:[%s6825 + $0x290] sm:$0xff]
        %v6909 = vld [vmem:[%s6825 + $0x298] sm:$0xff]
        %v6910 = vld [vmem:[%s6825 + $0x2a0] sm:$0xff]
        %v6911 = vld [vmem:[%s6825 + $0x2a8] sm:$0xff]
        %v6912 = vld [vmem:[%s6825 + $0x2b0] sm:$0xff]
        %v6913 = vld [vmem:[%s6825 + $0x2b8] sm:$0xff]
        %v6914 = vld [vmem:[%s6825 + $0x2c0] sm:$0xff]
        %v6915 = vld [vmem:[%s6825 + $0x2c8] sm:$0xff]
        %v6916 = vld [vmem:[%s6825 + $0x2d0] sm:$0xff]
        %v6917 = vld [vmem:[%s6825 + $0x2d8] sm:$0xff]
        %v6918 = vld [vmem:[%s6825 + $0x2e0] sm:$0xff]
        %v6919 = vld [vmem:[%s6825 + $0x2e8] sm:$0xff]
        %v6920 = vld [vmem:[%s6825 + $0x2f0] sm:$0xff]
        %v6921 = vld [vmem:[%s6825 + $0x2f8] sm:$0xff]
        %v6922 = vld [vmem:[%s6825 + $0x300] sm:$0xff]
        %v6923 = vld [vmem:[%s6825 + $0x308] sm:$0xff]
        %v6924 = vld [vmem:[%s6825 + $0x310] sm:$0xff]
        %v6925 = vld [vmem:[%s6825 + $0x318] sm:$0xff]
        %v6926 = vld [vmem:[%s6825 + $0x320] sm:$0xff]
        %v6927 = vld [vmem:[%s6825 + $0x328] sm:$0xff]
        %v6928 = vld [vmem:[%s6825 + $0x330] sm:$0xff]
        %v6929 = vld [vmem:[%s6825 + $0x338] sm:$0xff]
        %v6930 = vld [vmem:[%s6825 + $0x340] sm:$0xff]
        %v6931 = vld [vmem:[%s6825 + $0x348] sm:$0xff]
        %v6932 = vld [vmem:[%s6825 + $0x350] sm:$0xff]
        %v6933 = vld [vmem:[%s6825 + $0x358] sm:$0xff]
        %v6934 = vld [vmem:[%s6825 + $0x360] sm:$0xff]
        %v6935 = vld [vmem:[%s6825 + $0x368] sm:$0xff]
        %v6936 = vld [vmem:[%s6825 + $0x370] sm:$0xff]
        %v6937 = vld [vmem:[%s6825 + $0x378] sm:$0xff]
        %v6938 = vld [vmem:[%s6825 + $0x380] sm:$0xff]
        %v6939 = vld [vmem:[%s6825 + $0x388] sm:$0xff]
        %v6940 = vld [vmem:[%s6825 + $0x390] sm:$0xff]
        %v6941 = vld [vmem:[%s6825 + $0x398] sm:$0xff]
        %v6942 = vld [vmem:[%s6825 + $0x3a0] sm:$0xff]
        %v6943 = vld [vmem:[%s6825 + $0x3a8] sm:$0xff]
        %v6944 = vld [vmem:[%s6825 + $0x3b0] sm:$0xff]
        %v6945 = vld [vmem:[%s6825 + $0x3b8] sm:$0xff]
        %v6946 = vld [vmem:[%s6825 + $0x3c0] sm:$0xff]
        %v6947 = vld [vmem:[%s6825 + $0x3c8] sm:$0xff]
        %v6948 = vld [vmem:[%s6825 + $0x3d0] sm:$0xff]
        %v6949 = vld [vmem:[%s6825 + $0x3d8] sm:$0xff]
        %v6950 = vld [vmem:[%s6825 + $0x3e0] sm:$0xff]
        %v6951 = vld [vmem:[%s6825 + $0x3e8] sm:$0xff]
        %v6952 = vld [vmem:[%s6825 + $0x3f0] sm:$0xff]
        %v6953 = vld [vmem:[%s6825 + $0x3f8] sm:$0xff]
        %s6954 = scalar_lea.vmem [#allocation11], 3072
        %v6955 = vld [vmem:[%s6954] sm:$0xff]
        %v6956 = vld [vmem:[%s6954 + $0x8] sm:$0xff]
        %v6957 = vld [vmem:[%s6954 + $0x10] sm:$0xff]
        %v6958 = vld [vmem:[%s6954 + $0x18] sm:$0xff]
        %v6959 = vld [vmem:[%s6954 + $0x20] sm:$0xff]
        %v6960 = vld [vmem:[%s6954 + $0x28] sm:$0xff]
        %v6961 = vld [vmem:[%s6954 + $0x30] sm:$0xff]
        %v6962 = vld [vmem:[%s6954 + $0x38] sm:$0xff]
        %v6963 = vld [vmem:[%s6954 + $0x40] sm:$0xff]
        %v6964 = vld [vmem:[%s6954 + $0x48] sm:$0xff]
        %v6965 = vld [vmem:[%s6954 + $0x50] sm:$0xff]
        %v6966 = vld [vmem:[%s6954 + $0x58] sm:$0xff]
        %v6967 = vld [vmem:[%s6954 + $0x60] sm:$0xff]
        %v6968 = vld [vmem:[%s6954 + $0x68] sm:$0xff]
        %v6969 = vld [vmem:[%s6954 + $0x70] sm:$0xff]
        %v6970 = vld [vmem:[%s6954 + $0x78] sm:$0xff]
        %v6971 = vld [vmem:[%s6954 + $0x80] sm:$0xff]
        %v6972 = vld [vmem:[%s6954 + $0x88] sm:$0xff]
        %v6973 = vld [vmem:[%s6954 + $0x90] sm:$0xff]
        %v6974 = vld [vmem:[%s6954 + $0x98] sm:$0xff]
        %v6975 = vld [vmem:[%s6954 + $0xa0] sm:$0xff]
        %v6976 = vld [vmem:[%s6954 + $0xa8] sm:$0xff]
        %v6977 = vld [vmem:[%s6954 + $0xb0] sm:$0xff]
        %v6978 = vld [vmem:[%s6954 + $0xb8] sm:$0xff]
        %v6979 = vld [vmem:[%s6954 + $0xc0] sm:$0xff]
        %v6980 = vld [vmem:[%s6954 + $0xc8] sm:$0xff]
        %v6981 = vld [vmem:[%s6954 + $0xd0] sm:$0xff]
        %v6982 = vld [vmem:[%s6954 + $0xd8] sm:$0xff]
        %v6983 = vld [vmem:[%s6954 + $0xe0] sm:$0xff]
        %v6984 = vld [vmem:[%s6954 + $0xe8] sm:$0xff]
        %v6985 = vld [vmem:[%s6954 + $0xf0] sm:$0xff]
        %v6986 = vld [vmem:[%s6954 + $0xf8] sm:$0xff]
        %v6987 = vld [vmem:[%s6954 + $0x100] sm:$0xff]
        %v6988 = vld [vmem:[%s6954 + $0x108] sm:$0xff]
        %v6989 = vld [vmem:[%s6954 + $0x110] sm:$0xff]
        %v6990 = vld [vmem:[%s6954 + $0x118] sm:$0xff]
        %v6991 = vld [vmem:[%s6954 + $0x120] sm:$0xff]
        %v6992 = vld [vmem:[%s6954 + $0x128] sm:$0xff]
        %v6993 = vld [vmem:[%s6954 + $0x130] sm:$0xff]
        %v6994 = vld [vmem:[%s6954 + $0x138] sm:$0xff]
        %v6995 = vld [vmem:[%s6954 + $0x140] sm:$0xff]
        %v6996 = vld [vmem:[%s6954 + $0x148] sm:$0xff]
        %v6997 = vld [vmem:[%s6954 + $0x150] sm:$0xff]
        %v6998 = vld [vmem:[%s6954 + $0x158] sm:$0xff]
        %v6999 = vld [vmem:[%s6954 + $0x160] sm:$0xff]
        %v7000 = vld [vmem:[%s6954 + $0x168] sm:$0xff]
        %v7001 = vld [vmem:[%s6954 + $0x170] sm:$0xff]
        %v7002 = vld [vmem:[%s6954 + $0x178] sm:$0xff]
        %v7003 = vld [vmem:[%s6954 + $0x180] sm:$0xff]
        %v7004 = vld [vmem:[%s6954 + $0x188] sm:$0xff]
        %v7005 = vld [vmem:[%s6954 + $0x190] sm:$0xff]
        %v7006 = vld [vmem:[%s6954 + $0x198] sm:$0xff]
        %v7007 = vld [vmem:[%s6954 + $0x1a0] sm:$0xff]
        %v7008 = vld [vmem:[%s6954 + $0x1a8] sm:$0xff]
        %v7009 = vld [vmem:[%s6954 + $0x1b0] sm:$0xff]
        %v7010 = vld [vmem:[%s6954 + $0x1b8] sm:$0xff]
        %v7011 = vld [vmem:[%s6954 + $0x1c0] sm:$0xff]
        %v7012 = vld [vmem:[%s6954 + $0x1c8] sm:$0xff]
        %v7013 = vld [vmem:[%s6954 + $0x1d0] sm:$0xff]
        %v7014 = vld [vmem:[%s6954 + $0x1d8] sm:$0xff]
        %v7015 = vld [vmem:[%s6954 + $0x1e0] sm:$0xff]
        %v7016 = vld [vmem:[%s6954 + $0x1e8] sm:$0xff]
        %v7017 = vld [vmem:[%s6954 + $0x1f0] sm:$0xff]
        %v7018 = vld [vmem:[%s6954 + $0x1f8] sm:$0xff]
        %v7019 = vld [vmem:[%s6954 + $0x200] sm:$0xff]
        %v7020 = vld [vmem:[%s6954 + $0x208] sm:$0xff]
        %v7021 = vld [vmem:[%s6954 + $0x210] sm:$0xff]
        %v7022 = vld [vmem:[%s6954 + $0x218] sm:$0xff]
        %v7023 = vld [vmem:[%s6954 + $0x220] sm:$0xff]
        %v7024 = vld [vmem:[%s6954 + $0x228] sm:$0xff]
        %v7025 = vld [vmem:[%s6954 + $0x230] sm:$0xff]
        %v7026 = vld [vmem:[%s6954 + $0x238] sm:$0xff]
        %v7027 = vld [vmem:[%s6954 + $0x240] sm:$0xff]
        %v7028 = vld [vmem:[%s6954 + $0x248] sm:$0xff]
        %v7029 = vld [vmem:[%s6954 + $0x250] sm:$0xff]
        %v7030 = vld [vmem:[%s6954 + $0x258] sm:$0xff]
        %v7031 = vld [vmem:[%s6954 + $0x260] sm:$0xff]
        %v7032 = vld [vmem:[%s6954 + $0x268] sm:$0xff]
        %v7033 = vld [vmem:[%s6954 + $0x270] sm:$0xff]
        %v7034 = vld [vmem:[%s6954 + $0x278] sm:$0xff]
        %v7035 = vld [vmem:[%s6954 + $0x280] sm:$0xff]
        %v7036 = vld [vmem:[%s6954 + $0x288] sm:$0xff]
        %v7037 = vld [vmem:[%s6954 + $0x290] sm:$0xff]
        %v7038 = vld [vmem:[%s6954 + $0x298] sm:$0xff]
        %v7039 = vld [vmem:[%s6954 + $0x2a0] sm:$0xff]
        %v7040 = vld [vmem:[%s6954 + $0x2a8] sm:$0xff]
        %v7041 = vld [vmem:[%s6954 + $0x2b0] sm:$0xff]
        %v7042 = vld [vmem:[%s6954 + $0x2b8] sm:$0xff]
        %v7043 = vld [vmem:[%s6954 + $0x2c0] sm:$0xff]
        %v7044 = vld [vmem:[%s6954 + $0x2c8] sm:$0xff]
        %v7045 = vld [vmem:[%s6954 + $0x2d0] sm:$0xff]
        %v7046 = vld [vmem:[%s6954 + $0x2d8] sm:$0xff]
        %v7047 = vld [vmem:[%s6954 + $0x2e0] sm:$0xff]
        %v7048 = vld [vmem:[%s6954 + $0x2e8] sm:$0xff]
        %v7049 = vld [vmem:[%s6954 + $0x2f0] sm:$0xff]
        %v7050 = vld [vmem:[%s6954 + $0x2f8] sm:$0xff]
        %v7051 = vld [vmem:[%s6954 + $0x300] sm:$0xff]
        %v7052 = vld [vmem:[%s6954 + $0x308] sm:$0xff]
        %v7053 = vld [vmem:[%s6954 + $0x310] sm:$0xff]
        %v7054 = vld [vmem:[%s6954 + $0x318] sm:$0xff]
        %v7055 = vld [vmem:[%s6954 + $0x320] sm:$0xff]
        %v7056 = vld [vmem:[%s6954 + $0x328] sm:$0xff]
        %v7057 = vld [vmem:[%s6954 + $0x330] sm:$0xff]
        %v7058 = vld [vmem:[%s6954 + $0x338] sm:$0xff]
        %v7059 = vld [vmem:[%s6954 + $0x340] sm:$0xff]
        %v7060 = vld [vmem:[%s6954 + $0x348] sm:$0xff]
        %v7061 = vld [vmem:[%s6954 + $0x350] sm:$0xff]
        %v7062 = vld [vmem:[%s6954 + $0x358] sm:$0xff]
        %v7063 = vld [vmem:[%s6954 + $0x360] sm:$0xff]
        %v7064 = vld [vmem:[%s6954 + $0x368] sm:$0xff]
        %v7065 = vld [vmem:[%s6954 + $0x370] sm:$0xff]
        %v7066 = vld [vmem:[%s6954 + $0x378] sm:$0xff]
        %v7067 = vld [vmem:[%s6954 + $0x380] sm:$0xff]
        %v7068 = vld [vmem:[%s6954 + $0x388] sm:$0xff]
        %v7069 = vld [vmem:[%s6954 + $0x390] sm:$0xff]
        %v7070 = vld [vmem:[%s6954 + $0x398] sm:$0xff]
        %v7071 = vld [vmem:[%s6954 + $0x3a0] sm:$0xff]
        %v7072 = vld [vmem:[%s6954 + $0x3a8] sm:$0xff]
        %v7073 = vld [vmem:[%s6954 + $0x3b0] sm:$0xff]
        %v7074 = vld [vmem:[%s6954 + $0x3b8] sm:$0xff]
        %v7075 = vld [vmem:[%s6954 + $0x3c0] sm:$0xff]
        %v7076 = vld [vmem:[%s6954 + $0x3c8] sm:$0xff]
        %v7077 = vld [vmem:[%s6954 + $0x3d0] sm:$0xff]
        %v7078 = vld [vmem:[%s6954 + $0x3d8] sm:$0xff]
        %v7079 = vld [vmem:[%s6954 + $0x3e0] sm:$0xff]
        %v7080 = vld [vmem:[%s6954 + $0x3e8] sm:$0xff]
        %v7081 = vld [vmem:[%s6954 + $0x3f0] sm:$0xff]
        %v7082 = vld [vmem:[%s6954 + $0x3f8] sm:$0xff]
        %s7083 = scalar_lea.vmem [#allocation12], 192
        %v7084 = vld [vmem:[%s7083] sm:$0xff]
        %v7085 = vld [vmem:[%s7083 + $0x8] sm:$0xff]
        %v7086 = vld [vmem:[%s7083 + $0x10] sm:$0xff]
        %v7087 = vld [vmem:[%s7083 + $0x18] sm:$0xff]
        %v7088 = vld [vmem:[%s7083 + $0x20] sm:$0xff]
        %v7089 = vld [vmem:[%s7083 + $0x28] sm:$0xff]
        %v7090 = vld [vmem:[%s7083 + $0x30] sm:$0xff]
        %v7091 = vld [vmem:[%s7083 + $0x38] sm:$0xff]
        %s7092 = scalar_lea.vmem %s6, 192
        %v7093 = vld [vmem:[%s7092] sm:$0xff]
        %v7094 = vld [vmem:[%s7092 + $0x8] sm:$0xff]
        %v7095 = vld [vmem:[%s7092 + $0x10] sm:$0xff]
        %v7096 = vld [vmem:[%s7092 + $0x18] sm:$0xff]
        %v7097 = vld [vmem:[%s7092 + $0x20] sm:$0xff]
        %v7098 = vld [vmem:[%s7092 + $0x28] sm:$0xff]
        %v7099 = vld [vmem:[%s7092 + $0x30] sm:$0xff]
        %v7100 = vld [vmem:[%s7092 + $0x38] sm:$0xff]
        %v7102 = vsel %vm963, %v6817, 0
        %v7105 = vsel %vm963, %v6818, 0
        %v7108 = vsel %vm963, %v6819, 0
        %v7111 = vsel %vm963, %v6820, 0
        %v7114 = vsel %vm963, %v6821, 0
        %v7117 = vsel %vm963, %v6822, 0
        %v7120 = vsel %vm963, %v6823, 0
        %v7123 = vsel %vm963, %v6824, 0
        %7125 = vmatpush.xpose.msra.mxu0 0.0
        %7126 = vmatpush.xpose.msra.mxu0 0.0
        %7127 = vmatpush.xpose.msra.mxu0 0.0
        %7128 = vmatpush.xpose.msra.mxu0 0.0
        %7129 = vmatpush.xpose.msra.mxu0 0.0
        %7130 = vmatpush.xpose.msra.mxu0 0.0
        %7131 = vmatpush.xpose.msra.mxu0 0.0
        %7132 = vmatpush.xpose.msra.mxu0 0.0
        %7133 = vmatpush.xpose.msra.mxu0 %v7123
        %7134 = vmatpush.xpose.msra.mxu0 %v7120
        %7135 = vmatpush.xpose.msra.mxu0 %v7117
        %7136 = vmatpush.xpose.msra.mxu0 %v7114
        %7137 = vmatpush.xpose.msra.mxu0 %v7111
        %7138 = vmatpush.xpose.msra.mxu0 %v7108
        %7139 = vmatpush.xpose.msra.mxu0 %v7105
        %7140 = vmatpush.xpose.msra.mxu0 %v7102
        %7141 = vmatmul.f32.gmra.mxu0 %v965
        %v7142 = vpop.f32.mrf.mxu0
        %v7143 = vadd.f32 0.0, %v7142
        %7144 = vmatmul.f32.gmra.mxu0 %v968
        %v7145 = vpop.f32.mrf.mxu0
        %v7146 = vadd.f32 0.0, %v7145
        %7147 = vmatmul.f32.gmra.mxu0 %v971
        %v7148 = vpop.f32.mrf.mxu0
        %v7149 = vadd.f32 0.0, %v7148
        %7150 = vmatmul.f32.gmra.mxu0 %v974
        %v7151 = vpop.f32.mrf.mxu0
        %v7152 = vadd.f32 0.0, %v7151
        %7153 = vdwg.mxu0
        %v7156 = vrot.slane %v7143, 1
        %v7157 = vrot.slane %v7143, 2
        %v7158 = vrot.slane %v7143, 3
        %v7159 = vrot.slane %v7143, 4
        %v7160 = vrot.slane %v7143, 5
        %v7161 = vrot.slane %v7143, 6
        %v7162 = vrot.slane %v7143, 7
        %v7163 = vrot.slane %v7146, 1
        %v7164 = vrot.slane %v7146, 2
        %v7165 = vrot.slane %v7146, 3
        %v7166 = vrot.slane %v7146, 4
        %v7167 = vrot.slane %v7146, 5
        %v7168 = vrot.slane %v7146, 6
        %v7169 = vrot.slane %v7146, 7
        %v7172 = vrot.slane %v7149, 1
        %v7173 = vrot.slane %v7149, 2
        %v7174 = vrot.slane %v7149, 3
        %v7175 = vrot.slane %v7149, 4
        %v7176 = vrot.slane %v7149, 5
        %v7177 = vrot.slane %v7149, 6
        %v7178 = vrot.slane %v7149, 7
        %v7179 = vrot.slane %v7152, 1
        %v7180 = vrot.slane %v7152, 2
        %v7181 = vrot.slane %v7152, 3
        %v7182 = vrot.slane %v7152, 4
        %v7183 = vrot.slane %v7152, 5
        %v7184 = vrot.slane %v7152, 6
        %v7185 = vrot.slane %v7152, 7
        %v7186 = vsel %vm963, %v7143, 0
        %7188 = vmatpush.msra.mxu0 0.0
        %7189 = vmatpush.msra.mxu0 0.0
        %7190 = vmatpush.msra.mxu0 0.0
        %7191 = vmatpush.msra.mxu0 0.0
        %7192 = vmatpush.msra.mxu0 0.0
        %7193 = vmatpush.msra.mxu0 0.0
        %7194 = vmatpush.msra.mxu0 0.0
        %7195 = vmatpush.msra.mxu0 0.0
        %7196 = vmatpush.msra.mxu0 %v6833
        %7197 = vmatpush.msra.mxu0 %v6832
        %7198 = vmatpush.msra.mxu0 %v6831
        %7199 = vmatpush.msra.mxu0 %v6830
        %7200 = vmatpush.msra.mxu0 %v6829
        %7201 = vmatpush.msra.mxu0 %v6828
        %7202 = vmatpush.msra.mxu0 %v6827
        %7203 = vmatpush.msra.mxu0 %v6826
        %7204 = vmatmul.f32.gmra.mxu0 %v7186
        %v7205 = vpop.f32.mrf.mxu0
        %v7206 = vadd.f32 0.0, %v7205
        %7207 = vdwg.mxu0
        %v7208 = vsel %vm963, %v7156, 0
        %7210 = vmatpush.msra.mxu0 0.0
        %7211 = vmatpush.msra.mxu0 0.0
        %7212 = vmatpush.msra.mxu0 0.0
        %7213 = vmatpush.msra.mxu0 0.0
        %7214 = vmatpush.msra.mxu0 0.0
        %7215 = vmatpush.msra.mxu0 0.0
        %7216 = vmatpush.msra.mxu0 0.0
        %7217 = vmatpush.msra.mxu0 0.0
        %7218 = vmatpush.msra.mxu0 %v6841
        %7219 = vmatpush.msra.mxu0 %v6840
        %7220 = vmatpush.msra.mxu0 %v6839
        %7221 = vmatpush.msra.mxu0 %v6838
        %7222 = vmatpush.msra.mxu0 %v6837
        %7223 = vmatpush.msra.mxu0 %v6836
        %7224 = vmatpush.msra.mxu0 %v6835
        %7225 = vmatpush.msra.mxu0 %v6834
        %7226 = vmatmul.f32.gmra.mxu0 %v7208
        %v7227 = vpop.f32.mrf.mxu0
        %v7228 = vadd.f32 0.0, %v7227
        %7229 = vdwg.mxu0
        %v7230 = vsel %vm963, %v7157, 0
        %7232 = vmatpush.msra.mxu0 0.0
        %7233 = vmatpush.msra.mxu0 0.0
        %7234 = vmatpush.msra.mxu0 0.0
        %7235 = vmatpush.msra.mxu0 0.0
        %7236 = vmatpush.msra.mxu0 0.0
        %7237 = vmatpush.msra.mxu0 0.0
        %7238 = vmatpush.msra.mxu0 0.0
        %7239 = vmatpush.msra.mxu0 0.0
        %7240 = vmatpush.msra.mxu0 %v6849
        %7241 = vmatpush.msra.mxu0 %v6848
        %7242 = vmatpush.msra.mxu0 %v6847
        %7243 = vmatpush.msra.mxu0 %v6846
        %7244 = vmatpush.msra.mxu0 %v6845
        %7245 = vmatpush.msra.mxu0 %v6844
        %7246 = vmatpush.msra.mxu0 %v6843
        %7247 = vmatpush.msra.mxu0 %v6842
        %7248 = vmatmul.f32.gmra.mxu0 %v7230
        %v7249 = vpop.f32.mrf.mxu0
        %v7250 = vadd.f32 0.0, %v7249
        %7251 = vdwg.mxu0
        %v7252 = vsel %vm963, %v7158, 0
        %7254 = vmatpush.msra.mxu0 0.0
        %7255 = vmatpush.msra.mxu0 0.0
        %7256 = vmatpush.msra.mxu0 0.0
        %7257 = vmatpush.msra.mxu0 0.0
        %7258 = vmatpush.msra.mxu0 0.0
        %7259 = vmatpush.msra.mxu0 0.0
        %7260 = vmatpush.msra.mxu0 0.0
        %7261 = vmatpush.msra.mxu0 0.0
        %7262 = vmatpush.msra.mxu0 %v6857
        %7263 = vmatpush.msra.mxu0 %v6856
        %7264 = vmatpush.msra.mxu0 %v6855
        %7265 = vmatpush.msra.mxu0 %v6854
        %7266 = vmatpush.msra.mxu0 %v6853
        %7267 = vmatpush.msra.mxu0 %v6852
        %7268 = vmatpush.msra.mxu0 %v6851
        %7269 = vmatpush.msra.mxu0 %v6850
        %7270 = vmatmul.f32.gmra.mxu0 %v7252
        %v7271 = vpop.f32.mrf.mxu0
        %v7272 = vadd.f32 0.0, %v7271
        %7273 = vdwg.mxu0
        %v7274 = vsel %vm963, %v7159, 0
        %7276 = vmatpush.msra.mxu0 0.0
        %7277 = vmatpush.msra.mxu0 0.0
        %7278 = vmatpush.msra.mxu0 0.0
        %7279 = vmatpush.msra.mxu0 0.0
        %7280 = vmatpush.msra.mxu0 0.0
        %7281 = vmatpush.msra.mxu0 0.0
        %7282 = vmatpush.msra.mxu0 0.0
        %7283 = vmatpush.msra.mxu0 0.0
        %7284 = vmatpush.msra.mxu0 %v6865
        %7285 = vmatpush.msra.mxu0 %v6864
        %7286 = vmatpush.msra.mxu0 %v6863
        %7287 = vmatpush.msra.mxu0 %v6862
        %7288 = vmatpush.msra.mxu0 %v6861
        %7289 = vmatpush.msra.mxu0 %v6860
        %7290 = vmatpush.msra.mxu0 %v6859
        %7291 = vmatpush.msra.mxu0 %v6858
        %7292 = vmatmul.f32.gmra.mxu0 %v7274
        %v7293 = vpop.f32.mrf.mxu0
        %v7294 = vadd.f32 0.0, %v7293
        %7295 = vdwg.mxu0
        %v7296 = vsel %vm963, %v7160, 0
        %7298 = vmatpush.msra.mxu0 0.0
        %7299 = vmatpush.msra.mxu0 0.0
        %7300 = vmatpush.msra.mxu0 0.0
        %7301 = vmatpush.msra.mxu0 0.0
        %7302 = vmatpush.msra.mxu0 0.0
        %7303 = vmatpush.msra.mxu0 0.0
        %7304 = vmatpush.msra.mxu0 0.0
        %7305 = vmatpush.msra.mxu0 0.0
        %7306 = vmatpush.msra.mxu0 %v6873
        %7307 = vmatpush.msra.mxu0 %v6872
        %7308 = vmatpush.msra.mxu0 %v6871
        %7309 = vmatpush.msra.mxu0 %v6870
        %7310 = vmatpush.msra.mxu0 %v6869
        %7311 = vmatpush.msra.mxu0 %v6868
        %7312 = vmatpush.msra.mxu0 %v6867
        %7313 = vmatpush.msra.mxu0 %v6866
        %7314 = vmatmul.f32.gmra.mxu0 %v7296
        %v7315 = vpop.f32.mrf.mxu0
        %v7316 = vadd.f32 0.0, %v7315
        %7317 = vdwg.mxu0
        %v7318 = vsel %vm963, %v7161, 0
        %7320 = vmatpush.msra.mxu0 0.0
        %7321 = vmatpush.msra.mxu0 0.0
        %7322 = vmatpush.msra.mxu0 0.0
        %7323 = vmatpush.msra.mxu0 0.0
        %7324 = vmatpush.msra.mxu0 0.0
        %7325 = vmatpush.msra.mxu0 0.0
        %7326 = vmatpush.msra.mxu0 0.0
        %7327 = vmatpush.msra.mxu0 0.0
        %7328 = vmatpush.msra.mxu0 %v6881
        %7329 = vmatpush.msra.mxu0 %v6880
        %7330 = vmatpush.msra.mxu0 %v6879
        %7331 = vmatpush.msra.mxu0 %v6878
        %7332 = vmatpush.msra.mxu0 %v6877
        %7333 = vmatpush.msra.mxu0 %v6876
        %7334 = vmatpush.msra.mxu0 %v6875
        %7335 = vmatpush.msra.mxu0 %v6874
        %7336 = vmatmul.f32.gmra.mxu0 %v7318
        %v7337 = vpop.f32.mrf.mxu0
        %v7338 = vadd.f32 0.0, %v7337
        %7339 = vdwg.mxu0
        %v7340 = vsel %vm963, %v7162, 0
        %7342 = vmatpush.msra.mxu0 0.0
        %7343 = vmatpush.msra.mxu0 0.0
        %7344 = vmatpush.msra.mxu0 0.0
        %7345 = vmatpush.msra.mxu0 0.0
        %7346 = vmatpush.msra.mxu0 0.0
        %7347 = vmatpush.msra.mxu0 0.0
        %7348 = vmatpush.msra.mxu0 0.0
        %7349 = vmatpush.msra.mxu0 0.0
        %7350 = vmatpush.msra.mxu0 %v6889
        %7351 = vmatpush.msra.mxu0 %v6888
        %7352 = vmatpush.msra.mxu0 %v6887
        %7353 = vmatpush.msra.mxu0 %v6886
        %7354 = vmatpush.msra.mxu0 %v6885
        %7355 = vmatpush.msra.mxu0 %v6884
        %7356 = vmatpush.msra.mxu0 %v6883
        %7357 = vmatpush.msra.mxu0 %v6882
        %7358 = vmatmul.f32.gmra.mxu0 %v7340
        %v7359 = vpop.f32.mrf.mxu0
        %v7360 = vadd.f32 0.0, %v7359
        %7361 = vdwg.mxu0
        %v7362 = vsel %vm963, %v7146, 0
        %7364 = vmatpush.msra.mxu0 0.0
        %7365 = vmatpush.msra.mxu0 0.0
        %7366 = vmatpush.msra.mxu0 0.0
        %7367 = vmatpush.msra.mxu0 0.0
        %7368 = vmatpush.msra.mxu0 0.0
        %7369 = vmatpush.msra.mxu0 0.0
        %7370 = vmatpush.msra.mxu0 0.0
        %7371 = vmatpush.msra.mxu0 0.0
        %7372 = vmatpush.msra.mxu0 %v6897
        %7373 = vmatpush.msra.mxu0 %v6896
        %7374 = vmatpush.msra.mxu0 %v6895
        %7375 = vmatpush.msra.mxu0 %v6894
        %7376 = vmatpush.msra.mxu0 %v6893
        %7377 = vmatpush.msra.mxu0 %v6892
        %7378 = vmatpush.msra.mxu0 %v6891
        %7379 = vmatpush.msra.mxu0 %v6890
        %7380 = vmatmul.f32.gmra.mxu0 %v7362
        %v7381 = vpop.f32.mrf.mxu0
        %v7382 = vadd.f32 0.0, %v7381
        %7383 = vdwg.mxu0
        %v7384 = vsel %vm963, %v7163, 0
        %7386 = vmatpush.msra.mxu0 0.0
        %7387 = vmatpush.msra.mxu0 0.0
        %7388 = vmatpush.msra.mxu0 0.0
        %7389 = vmatpush.msra.mxu0 0.0
        %7390 = vmatpush.msra.mxu0 0.0
        %7391 = vmatpush.msra.mxu0 0.0
        %7392 = vmatpush.msra.mxu0 0.0
        %7393 = vmatpush.msra.mxu0 0.0
        %7394 = vmatpush.msra.mxu0 %v6905
        %7395 = vmatpush.msra.mxu0 %v6904
        %7396 = vmatpush.msra.mxu0 %v6903
        %7397 = vmatpush.msra.mxu0 %v6902
        %7398 = vmatpush.msra.mxu0 %v6901
        %7399 = vmatpush.msra.mxu0 %v6900
        %7400 = vmatpush.msra.mxu0 %v6899
        %7401 = vmatpush.msra.mxu0 %v6898
        %7402 = vmatmul.f32.gmra.mxu0 %v7384
        %v7403 = vpop.f32.mrf.mxu0
        %v7404 = vadd.f32 0.0, %v7403
        %7405 = vdwg.mxu0
        %v7406 = vsel %vm963, %v7164, 0
        %7408 = vmatpush.msra.mxu0 0.0
        %7409 = vmatpush.msra.mxu0 0.0
        %7410 = vmatpush.msra.mxu0 0.0
        %7411 = vmatpush.msra.mxu0 0.0
        %7412 = vmatpush.msra.mxu0 0.0
        %7413 = vmatpush.msra.mxu0 0.0
        %7414 = vmatpush.msra.mxu0 0.0
        %7415 = vmatpush.msra.mxu0 0.0
        %7416 = vmatpush.msra.mxu0 %v6913
        %7417 = vmatpush.msra.mxu0 %v6912
        %7418 = vmatpush.msra.mxu0 %v6911
        %7419 = vmatpush.msra.mxu0 %v6910
        %7420 = vmatpush.msra.mxu0 %v6909
        %7421 = vmatpush.msra.mxu0 %v6908
        %7422 = vmatpush.msra.mxu0 %v6907
        %7423 = vmatpush.msra.mxu0 %v6906
        %7424 = vmatmul.f32.gmra.mxu0 %v7406
        %v7425 = vpop.f32.mrf.mxu0
        %v7426 = vadd.f32 0.0, %v7425
        %7427 = vdwg.mxu0
        %v7428 = vsel %vm963, %v7165, 0
        %7430 = vmatpush.msra.mxu0 0.0
        %7431 = vmatpush.msra.mxu0 0.0
        %7432 = vmatpush.msra.mxu0 0.0
        %7433 = vmatpush.msra.mxu0 0.0
        %7434 = vmatpush.msra.mxu0 0.0
        %7435 = vmatpush.msra.mxu0 0.0
        %7436 = vmatpush.msra.mxu0 0.0
        %7437 = vmatpush.msra.mxu0 0.0
        %7438 = vmatpush.msra.mxu0 %v6921
        %7439 = vmatpush.msra.mxu0 %v6920
        %7440 = vmatpush.msra.mxu0 %v6919
        %7441 = vmatpush.msra.mxu0 %v6918
        %7442 = vmatpush.msra.mxu0 %v6917
        %7443 = vmatpush.msra.mxu0 %v6916
        %7444 = vmatpush.msra.mxu0 %v6915
        %7445 = vmatpush.msra.mxu0 %v6914
        %7446 = vmatmul.f32.gmra.mxu0 %v7428
        %v7447 = vpop.f32.mrf.mxu0
        %v7448 = vadd.f32 0.0, %v7447
        %7449 = vdwg.mxu0
        %v7450 = vsel %vm963, %v7166, 0
        %7452 = vmatpush.msra.mxu0 0.0
        %7453 = vmatpush.msra.mxu0 0.0
        %7454 = vmatpush.msra.mxu0 0.0
        %7455 = vmatpush.msra.mxu0 0.0
        %7456 = vmatpush.msra.mxu0 0.0
        %7457 = vmatpush.msra.mxu0 0.0
        %7458 = vmatpush.msra.mxu0 0.0
        %7459 = vmatpush.msra.mxu0 0.0
        %7460 = vmatpush.msra.mxu0 %v6929
        %7461 = vmatpush.msra.mxu0 %v6928
        %7462 = vmatpush.msra.mxu0 %v6927
        %7463 = vmatpush.msra.mxu0 %v6926
        %7464 = vmatpush.msra.mxu0 %v6925
        %7465 = vmatpush.msra.mxu0 %v6924
        %7466 = vmatpush.msra.mxu0 %v6923
        %7467 = vmatpush.msra.mxu0 %v6922
        %7468 = vmatmul.f32.gmra.mxu0 %v7450
        %v7469 = vpop.f32.mrf.mxu0
        %v7470 = vadd.f32 0.0, %v7469
        %7471 = vdwg.mxu0
        %v7472 = vsel %vm963, %v7167, 0
        %7474 = vmatpush.msra.mxu0 0.0
        %7475 = vmatpush.msra.mxu0 0.0
        %7476 = vmatpush.msra.mxu0 0.0
        %7477 = vmatpush.msra.mxu0 0.0
        %7478 = vmatpush.msra.mxu0 0.0
        %7479 = vmatpush.msra.mxu0 0.0
        %7480 = vmatpush.msra.mxu0 0.0
        %7481 = vmatpush.msra.mxu0 0.0
        %7482 = vmatpush.msra.mxu0 %v6937
        %7483 = vmatpush.msra.mxu0 %v6936
        %7484 = vmatpush.msra.mxu0 %v6935
        %7485 = vmatpush.msra.mxu0 %v6934
        %7486 = vmatpush.msra.mxu0 %v6933
        %7487 = vmatpush.msra.mxu0 %v6932
        %7488 = vmatpush.msra.mxu0 %v6931
        %7489 = vmatpush.msra.mxu0 %v6930
        %7490 = vmatmul.f32.gmra.mxu0 %v7472
        %v7491 = vpop.f32.mrf.mxu0
        %v7492 = vadd.f32 0.0, %v7491
        %7493 = vdwg.mxu0
        %v7494 = vsel %vm963, %v7168, 0
        %7496 = vmatpush.msra.mxu0 0.0
        %7497 = vmatpush.msra.mxu0 0.0
        %7498 = vmatpush.msra.mxu0 0.0
        %7499 = vmatpush.msra.mxu0 0.0
        %7500 = vmatpush.msra.mxu0 0.0
        %7501 = vmatpush.msra.mxu0 0.0
        %7502 = vmatpush.msra.mxu0 0.0
        %7503 = vmatpush.msra.mxu0 0.0
        %7504 = vmatpush.msra.mxu0 %v6945
        %7505 = vmatpush.msra.mxu0 %v6944
        %7506 = vmatpush.msra.mxu0 %v6943
        %7507 = vmatpush.msra.mxu0 %v6942
        %7508 = vmatpush.msra.mxu0 %v6941
        %7509 = vmatpush.msra.mxu0 %v6940
        %7510 = vmatpush.msra.mxu0 %v6939
        %7511 = vmatpush.msra.mxu0 %v6938
        %7512 = vmatmul.f32.gmra.mxu0 %v7494
        %v7513 = vpop.f32.mrf.mxu0
        %v7514 = vadd.f32 0.0, %v7513
        %7515 = vdwg.mxu0
        %v7516 = vsel %vm963, %v7169, 0
        %7518 = vmatpush.msra.mxu0 0.0
        %7519 = vmatpush.msra.mxu0 0.0
        %7520 = vmatpush.msra.mxu0 0.0
        %7521 = vmatpush.msra.mxu0 0.0
        %7522 = vmatpush.msra.mxu0 0.0
        %7523 = vmatpush.msra.mxu0 0.0
        %7524 = vmatpush.msra.mxu0 0.0
        %7525 = vmatpush.msra.mxu0 0.0
        %7526 = vmatpush.msra.mxu0 %v6953
        %7527 = vmatpush.msra.mxu0 %v6952
        %7528 = vmatpush.msra.mxu0 %v6951
        %7529 = vmatpush.msra.mxu0 %v6950
        %7530 = vmatpush.msra.mxu0 %v6949
        %7531 = vmatpush.msra.mxu0 %v6948
        %7532 = vmatpush.msra.mxu0 %v6947
        %7533 = vmatpush.msra.mxu0 %v6946
        %7534 = vmatmul.f32.gmra.mxu0 %v7516
        %v7535 = vpop.f32.mrf.mxu0
        %v7536 = vadd.f32 0.0, %v7535
        %7537 = vdwg.mxu0
        %v7538 = vsel %vm963, %v7149, 0
        %7540 = vmatpush.msra.mxu0 0.0
        %7541 = vmatpush.msra.mxu0 0.0
        %7542 = vmatpush.msra.mxu0 0.0
        %7543 = vmatpush.msra.mxu0 0.0
        %7544 = vmatpush.msra.mxu0 0.0
        %7545 = vmatpush.msra.mxu0 0.0
        %7546 = vmatpush.msra.mxu0 0.0
        %7547 = vmatpush.msra.mxu0 0.0
        %7548 = vmatpush.msra.mxu0 %v6962
        %7549 = vmatpush.msra.mxu0 %v6961
        %7550 = vmatpush.msra.mxu0 %v6960
        %7551 = vmatpush.msra.mxu0 %v6959
        %7552 = vmatpush.msra.mxu0 %v6958
        %7553 = vmatpush.msra.mxu0 %v6957
        %7554 = vmatpush.msra.mxu0 %v6956
        %7555 = vmatpush.msra.mxu0 %v6955
        %7556 = vmatmul.f32.gmra.mxu0 %v7538
        %v7557 = vpop.f32.mrf.mxu0
        %v7558 = vadd.f32 0.0, %v7557
        %7559 = vdwg.mxu0
        %v7560 = vsel %vm963, %v7172, 0
        %7562 = vmatpush.msra.mxu0 0.0
        %7563 = vmatpush.msra.mxu0 0.0
        %7564 = vmatpush.msra.mxu0 0.0
        %7565 = vmatpush.msra.mxu0 0.0
        %7566 = vmatpush.msra.mxu0 0.0
        %7567 = vmatpush.msra.mxu0 0.0
        %7568 = vmatpush.msra.mxu0 0.0
        %7569 = vmatpush.msra.mxu0 0.0
        %7570 = vmatpush.msra.mxu0 %v6970
        %7571 = vmatpush.msra.mxu0 %v6969
        %7572 = vmatpush.msra.mxu0 %v6968
        %7573 = vmatpush.msra.mxu0 %v6967
        %7574 = vmatpush.msra.mxu0 %v6966
        %7575 = vmatpush.msra.mxu0 %v6965
        %7576 = vmatpush.msra.mxu0 %v6964
        %7577 = vmatpush.msra.mxu0 %v6963
        %7578 = vmatmul.f32.gmra.mxu0 %v7560
        %v7579 = vpop.f32.mrf.mxu0
        %v7580 = vadd.f32 0.0, %v7579
        %7581 = vdwg.mxu0
        %v7582 = vsel %vm963, %v7173, 0
        %7584 = vmatpush.msra.mxu0 0.0
        %7585 = vmatpush.msra.mxu0 0.0
        %7586 = vmatpush.msra.mxu0 0.0
        %7587 = vmatpush.msra.mxu0 0.0
        %7588 = vmatpush.msra.mxu0 0.0
        %7589 = vmatpush.msra.mxu0 0.0
        %7590 = vmatpush.msra.mxu0 0.0
        %7591 = vmatpush.msra.mxu0 0.0
        %7592 = vmatpush.msra.mxu0 %v6978
        %7593 = vmatpush.msra.mxu0 %v6977
        %7594 = vmatpush.msra.mxu0 %v6976
        %7595 = vmatpush.msra.mxu0 %v6975
        %7596 = vmatpush.msra.mxu0 %v6974
        %7597 = vmatpush.msra.mxu0 %v6973
        %7598 = vmatpush.msra.mxu0 %v6972
        %7599 = vmatpush.msra.mxu0 %v6971
        %7600 = vmatmul.f32.gmra.mxu0 %v7582
        %v7601 = vpop.f32.mrf.mxu0
        %v7602 = vadd.f32 0.0, %v7601
        %7603 = vdwg.mxu0
        %v7604 = vsel %vm963, %v7174, 0
        %7606 = vmatpush.msra.mxu0 0.0
        %7607 = vmatpush.msra.mxu0 0.0
        %7608 = vmatpush.msra.mxu0 0.0
        %7609 = vmatpush.msra.mxu0 0.0
        %7610 = vmatpush.msra.mxu0 0.0
        %7611 = vmatpush.msra.mxu0 0.0
        %7612 = vmatpush.msra.mxu0 0.0
        %7613 = vmatpush.msra.mxu0 0.0
        %7614 = vmatpush.msra.mxu0 %v6986
        %7615 = vmatpush.msra.mxu0 %v6985
        %7616 = vmatpush.msra.mxu0 %v6984
        %7617 = vmatpush.msra.mxu0 %v6983
        %7618 = vmatpush.msra.mxu0 %v6982
        %7619 = vmatpush.msra.mxu0 %v6981
        %7620 = vmatpush.msra.mxu0 %v6980
        %7621 = vmatpush.msra.mxu0 %v6979
        %7622 = vmatmul.f32.gmra.mxu0 %v7604
        %v7623 = vpop.f32.mrf.mxu0
        %v7624 = vadd.f32 0.0, %v7623
        %7625 = vdwg.mxu0
        %v7626 = vsel %vm963, %v7175, 0
        %7628 = vmatpush.msra.mxu0 0.0
        %7629 = vmatpush.msra.mxu0 0.0
        %7630 = vmatpush.msra.mxu0 0.0
        %7631 = vmatpush.msra.mxu0 0.0
        %7632 = vmatpush.msra.mxu0 0.0
        %7633 = vmatpush.msra.mxu0 0.0
        %7634 = vmatpush.msra.mxu0 0.0
        %7635 = vmatpush.msra.mxu0 0.0
        %7636 = vmatpush.msra.mxu0 %v6994
        %7637 = vmatpush.msra.mxu0 %v6993
        %7638 = vmatpush.msra.mxu0 %v6992
        %7639 = vmatpush.msra.mxu0 %v6991
        %7640 = vmatpush.msra.mxu0 %v6990
        %7641 = vmatpush.msra.mxu0 %v6989
        %7642 = vmatpush.msra.mxu0 %v6988
        %7643 = vmatpush.msra.mxu0 %v6987
        %7644 = vmatmul.f32.gmra.mxu0 %v7626
        %v7645 = vpop.f32.mrf.mxu0
        %v7646 = vadd.f32 0.0, %v7645
        %7647 = vdwg.mxu0
        %v7648 = vsel %vm963, %v7176, 0
        %7650 = vmatpush.msra.mxu0 0.0
        %7651 = vmatpush.msra.mxu0 0.0
        %7652 = vmatpush.msra.mxu0 0.0
        %7653 = vmatpush.msra.mxu0 0.0
        %7654 = vmatpush.msra.mxu0 0.0
        %7655 = vmatpush.msra.mxu0 0.0
        %7656 = vmatpush.msra.mxu0 0.0
        %7657 = vmatpush.msra.mxu0 0.0
        %7658 = vmatpush.msra.mxu0 %v7002
        %7659 = vmatpush.msra.mxu0 %v7001
        %7660 = vmatpush.msra.mxu0 %v7000
        %7661 = vmatpush.msra.mxu0 %v6999
        %7662 = vmatpush.msra.mxu0 %v6998
        %7663 = vmatpush.msra.mxu0 %v6997
        %7664 = vmatpush.msra.mxu0 %v6996
        %7665 = vmatpush.msra.mxu0 %v6995
        %7666 = vmatmul.f32.gmra.mxu0 %v7648
        %v7667 = vpop.f32.mrf.mxu0
        %v7668 = vadd.f32 0.0, %v7667
        %7669 = vdwg.mxu0
        %v7670 = vsel %vm963, %v7177, 0
        %7672 = vmatpush.msra.mxu0 0.0
        %7673 = vmatpush.msra.mxu0 0.0
        %7674 = vmatpush.msra.mxu0 0.0
        %7675 = vmatpush.msra.mxu0 0.0
        %7676 = vmatpush.msra.mxu0 0.0
        %7677 = vmatpush.msra.mxu0 0.0
        %7678 = vmatpush.msra.mxu0 0.0
        %7679 = vmatpush.msra.mxu0 0.0
        %7680 = vmatpush.msra.mxu0 %v7010
        %7681 = vmatpush.msra.mxu0 %v7009
        %7682 = vmatpush.msra.mxu0 %v7008
        %7683 = vmatpush.msra.mxu0 %v7007
        %7684 = vmatpush.msra.mxu0 %v7006
        %7685 = vmatpush.msra.mxu0 %v7005
        %7686 = vmatpush.msra.mxu0 %v7004
        %7687 = vmatpush.msra.mxu0 %v7003
        %7688 = vmatmul.f32.gmra.mxu0 %v7670
        %v7689 = vpop.f32.mrf.mxu0
        %v7690 = vadd.f32 0.0, %v7689
        %7691 = vdwg.mxu0
        %v7692 = vsel %vm963, %v7178, 0
        %7694 = vmatpush.msra.mxu0 0.0
        %7695 = vmatpush.msra.mxu0 0.0
        %7696 = vmatpush.msra.mxu0 0.0
        %7697 = vmatpush.msra.mxu0 0.0
        %7698 = vmatpush.msra.mxu0 0.0
        %7699 = vmatpush.msra.mxu0 0.0
        %7700 = vmatpush.msra.mxu0 0.0
        %7701 = vmatpush.msra.mxu0 0.0
        %7702 = vmatpush.msra.mxu0 %v7018
        %7703 = vmatpush.msra.mxu0 %v7017
        %7704 = vmatpush.msra.mxu0 %v7016
        %7705 = vmatpush.msra.mxu0 %v7015
        %7706 = vmatpush.msra.mxu0 %v7014
        %7707 = vmatpush.msra.mxu0 %v7013
        %7708 = vmatpush.msra.mxu0 %v7012
        %7709 = vmatpush.msra.mxu0 %v7011
        %7710 = vmatmul.f32.gmra.mxu0 %v7692
        %v7711 = vpop.f32.mrf.mxu0
        %v7712 = vadd.f32 0.0, %v7711
        %7713 = vdwg.mxu0
        %v7714 = vsel %vm963, %v7152, 0
        %7716 = vmatpush.msra.mxu0 0.0
        %7717 = vmatpush.msra.mxu0 0.0
        %7718 = vmatpush.msra.mxu0 0.0
        %7719 = vmatpush.msra.mxu0 0.0
        %7720 = vmatpush.msra.mxu0 0.0
        %7721 = vmatpush.msra.mxu0 0.0
        %7722 = vmatpush.msra.mxu0 0.0
        %7723 = vmatpush.msra.mxu0 0.0
        %7724 = vmatpush.msra.mxu0 %v7026
        %7725 = vmatpush.msra.mxu0 %v7025
        %7726 = vmatpush.msra.mxu0 %v7024
        %7727 = vmatpush.msra.mxu0 %v7023
        %7728 = vmatpush.msra.mxu0 %v7022
        %7729 = vmatpush.msra.mxu0 %v7021
        %7730 = vmatpush.msra.mxu0 %v7020
        %7731 = vmatpush.msra.mxu0 %v7019
        %7732 = vmatmul.f32.gmra.mxu0 %v7714
        %v7733 = vpop.f32.mrf.mxu0
        %v7734 = vadd.f32 0.0, %v7733
        %7735 = vdwg.mxu0
        %v7736 = vsel %vm963, %v7179, 0
        %7738 = vmatpush.msra.mxu0 0.0
        %7739 = vmatpush.msra.mxu0 0.0
        %7740 = vmatpush.msra.mxu0 0.0
        %7741 = vmatpush.msra.mxu0 0.0
        %7742 = vmatpush.msra.mxu0 0.0
        %7743 = vmatpush.msra.mxu0 0.0
        %7744 = vmatpush.msra.mxu0 0.0
        %7745 = vmatpush.msra.mxu0 0.0
        %7746 = vmatpush.msra.mxu0 %v7034
        %7747 = vmatpush.msra.mxu0 %v7033
        %7748 = vmatpush.msra.mxu0 %v7032
        %7749 = vmatpush.msra.mxu0 %v7031
        %7750 = vmatpush.msra.mxu0 %v7030
        %7751 = vmatpush.msra.mxu0 %v7029
        %7752 = vmatpush.msra.mxu0 %v7028
        %7753 = vmatpush.msra.mxu0 %v7027
        %7754 = vmatmul.f32.gmra.mxu0 %v7736
        %v7755 = vpop.f32.mrf.mxu0
        %v7756 = vadd.f32 0.0, %v7755
        %7757 = vdwg.mxu0
        %v7758 = vsel %vm963, %v7180, 0
        %7760 = vmatpush.msra.mxu0 0.0
        %7761 = vmatpush.msra.mxu0 0.0
        %7762 = vmatpush.msra.mxu0 0.0
        %7763 = vmatpush.msra.mxu0 0.0
        %7764 = vmatpush.msra.mxu0 0.0
        %7765 = vmatpush.msra.mxu0 0.0
        %7766 = vmatpush.msra.mxu0 0.0
        %7767 = vmatpush.msra.mxu0 0.0
        %7768 = vmatpush.msra.mxu0 %v7042
        %7769 = vmatpush.msra.mxu0 %v7041
        %7770 = vmatpush.msra.mxu0 %v7040
        %7771 = vmatpush.msra.mxu0 %v7039
        %7772 = vmatpush.msra.mxu0 %v7038
        %7773 = vmatpush.msra.mxu0 %v7037
        %7774 = vmatpush.msra.mxu0 %v7036
        %7775 = vmatpush.msra.mxu0 %v7035
        %7776 = vmatmul.f32.gmra.mxu0 %v7758
        %v7777 = vpop.f32.mrf.mxu0
        %v7778 = vadd.f32 0.0, %v7777
        %7779 = vdwg.mxu0
        %v7780 = vsel %vm963, %v7181, 0
        %7782 = vmatpush.msra.mxu0 0.0
        %7783 = vmatpush.msra.mxu0 0.0
        %7784 = vmatpush.msra.mxu0 0.0
        %7785 = vmatpush.msra.mxu0 0.0
        %7786 = vmatpush.msra.mxu0 0.0
        %7787 = vmatpush.msra.mxu0 0.0
        %7788 = vmatpush.msra.mxu0 0.0
        %7789 = vmatpush.msra.mxu0 0.0
        %7790 = vmatpush.msra.mxu0 %v7050
        %7791 = vmatpush.msra.mxu0 %v7049
        %7792 = vmatpush.msra.mxu0 %v7048
        %7793 = vmatpush.msra.mxu0 %v7047
        %7794 = vmatpush.msra.mxu0 %v7046
        %7795 = vmatpush.msra.mxu0 %v7045
        %7796 = vmatpush.msra.mxu0 %v7044
        %7797 = vmatpush.msra.mxu0 %v7043
        %7798 = vmatmul.f32.gmra.mxu0 %v7780
        %v7799 = vpop.f32.mrf.mxu0
        %v7800 = vadd.f32 0.0, %v7799
        %7801 = vdwg.mxu0
        %v7802 = vsel %vm963, %v7182, 0
        %7804 = vmatpush.msra.mxu0 0.0
        %7805 = vmatpush.msra.mxu0 0.0
        %7806 = vmatpush.msra.mxu0 0.0
        %7807 = vmatpush.msra.mxu0 0.0
        %7808 = vmatpush.msra.mxu0 0.0
        %7809 = vmatpush.msra.mxu0 0.0
        %7810 = vmatpush.msra.mxu0 0.0
        %7811 = vmatpush.msra.mxu0 0.0
        %7812 = vmatpush.msra.mxu0 %v7058
        %7813 = vmatpush.msra.mxu0 %v7057
        %7814 = vmatpush.msra.mxu0 %v7056
        %7815 = vmatpush.msra.mxu0 %v7055
        %7816 = vmatpush.msra.mxu0 %v7054
        %7817 = vmatpush.msra.mxu0 %v7053
        %7818 = vmatpush.msra.mxu0 %v7052
        %7819 = vmatpush.msra.mxu0 %v7051
        %7820 = vmatmul.f32.gmra.mxu0 %v7802
        %v7821 = vpop.f32.mrf.mxu0
        %v7822 = vadd.f32 0.0, %v7821
        %7823 = vdwg.mxu0
        %v7824 = vsel %vm963, %v7183, 0
        %7826 = vmatpush.msra.mxu0 0.0
        %7827 = vmatpush.msra.mxu0 0.0
        %7828 = vmatpush.msra.mxu0 0.0
        %7829 = vmatpush.msra.mxu0 0.0
        %7830 = vmatpush.msra.mxu0 0.0
        %7831 = vmatpush.msra.mxu0 0.0
        %7832 = vmatpush.msra.mxu0 0.0
        %7833 = vmatpush.msra.mxu0 0.0
        %7834 = vmatpush.msra.mxu0 %v7066
        %7835 = vmatpush.msra.mxu0 %v7065
        %7836 = vmatpush.msra.mxu0 %v7064
        %7837 = vmatpush.msra.mxu0 %v7063
        %7838 = vmatpush.msra.mxu0 %v7062
        %7839 = vmatpush.msra.mxu0 %v7061
        %7840 = vmatpush.msra.mxu0 %v7060
        %7841 = vmatpush.msra.mxu0 %v7059
        %7842 = vmatmul.f32.gmra.mxu0 %v7824
        %v7843 = vpop.f32.mrf.mxu0
        %v7844 = vadd.f32 0.0, %v7843
        %7845 = vdwg.mxu0
        %v7846 = vsel %vm963, %v7184, 0
        %7848 = vmatpush.msra.mxu0 0.0
        %7849 = vmatpush.msra.mxu0 0.0
        %7850 = vmatpush.msra.mxu0 0.0
        %7851 = vmatpush.msra.mxu0 0.0
        %7852 = vmatpush.msra.mxu0 0.0
        %7853 = vmatpush.msra.mxu0 0.0
        %7854 = vmatpush.msra.mxu0 0.0
        %7855 = vmatpush.msra.mxu0 0.0
        %7856 = vmatpush.msra.mxu0 %v7074
        %7857 = vmatpush.msra.mxu0 %v7073
        %7858 = vmatpush.msra.mxu0 %v7072
        %7859 = vmatpush.msra.mxu0 %v7071
        %7860 = vmatpush.msra.mxu0 %v7070
        %7861 = vmatpush.msra.mxu0 %v7069
        %7862 = vmatpush.msra.mxu0 %v7068
        %7863 = vmatpush.msra.mxu0 %v7067
        %7864 = vmatmul.f32.gmra.mxu0 %v7846
        %v7865 = vpop.f32.mrf.mxu0
        %v7866 = vadd.f32 0.0, %v7865
        %7867 = vdwg.mxu0
        %v7868 = vsel %vm963, %v7185, 0
        %7870 = vmatpush.msra.mxu0 0.0
        %7871 = vmatpush.msra.mxu0 0.0
        %7872 = vmatpush.msra.mxu0 0.0
        %7873 = vmatpush.msra.mxu0 0.0
        %7874 = vmatpush.msra.mxu0 0.0
        %7875 = vmatpush.msra.mxu0 0.0
        %7876 = vmatpush.msra.mxu0 0.0
        %7877 = vmatpush.msra.mxu0 0.0
        %7878 = vmatpush.msra.mxu0 %v7082
        %7879 = vmatpush.msra.mxu0 %v7081
        %7880 = vmatpush.msra.mxu0 %v7080
        %7881 = vmatpush.msra.mxu0 %v7079
        %7882 = vmatpush.msra.mxu0 %v7078
        %7883 = vmatpush.msra.mxu0 %v7077
        %7884 = vmatpush.msra.mxu0 %v7076
        %7885 = vmatpush.msra.mxu0 %v7075
        %7886 = vmatmul.f32.gmra.mxu0 %v7868
        %v7887 = vpop.f32.mrf.mxu0
        %v7888 = vadd.f32 0.0, %v7887
        %7889 = vdwg.mxu0
        %v7890 = vsub.f32 %v7206, %v7558
        %v7891 = vsub.f32 %v7228, %v7580
        %v7892 = vsub.f32 %v7250, %v7602
        %v7893 = vsub.f32 %v7272, %v7624
        %v7894 = vsub.f32 %v7294, %v7646
        %v7895 = vsub.f32 %v7316, %v7668
        %v7896 = vsub.f32 %v7338, %v7690
        %v7897 = vsub.f32 %v7360, %v7712
        %v7898 = vsub.f32 %v7382, %v7734
        %v7899 = vsub.f32 %v7404, %v7756
        %v7900 = vsub.f32 %v7426, %v7778
        %v7901 = vsub.f32 %v7448, %v7800
        %v7902 = vsub.f32 %v7470, %v7822
        %v7903 = vsub.f32 %v7492, %v7844
        %v7904 = vsub.f32 %v7514, %v7866
        %v7905 = vsub.f32 %v7536, %v7888
        %7906 = vmatpush.msra.mxu0 0.0
        %7907 = vmatpush.msra.mxu0 0.0
        %7908 = vmatpush.msra.mxu0 0.0
        %7909 = vmatpush.msra.mxu0 0.0
        %7910 = vmatpush.msra.mxu0 0.0
        %7911 = vmatpush.msra.mxu0 0.0
        %7912 = vmatpush.msra.mxu0 0.0
        %7913 = vmatpush.msra.mxu0 0.0
        %7914 = vmatpush.msra.mxu0 %v6833
        %7915 = vmatpush.msra.mxu0 %v6832
        %7916 = vmatpush.msra.mxu0 %v6831
        %7917 = vmatpush.msra.mxu0 %v6830
        %7918 = vmatpush.msra.mxu0 %v6829
        %7919 = vmatpush.msra.mxu0 %v6828
        %7920 = vmatpush.msra.mxu0 %v6827
        %7921 = vmatpush.msra.mxu0 %v6826
        %7922 = vmatmul.f32.gmra.mxu0 %v7538
        %v7923 = vpop.f32.mrf.mxu0
        %v7924 = vadd.f32 0.0, %v7923
        %7925 = vdwg.mxu0
        %7926 = vmatpush.msra.mxu0 0.0
        %7927 = vmatpush.msra.mxu0 0.0
        %7928 = vmatpush.msra.mxu0 0.0
        %7929 = vmatpush.msra.mxu0 0.0
        %7930 = vmatpush.msra.mxu0 0.0
        %7931 = vmatpush.msra.mxu0 0.0
        %7932 = vmatpush.msra.mxu0 0.0
        %7933 = vmatpush.msra.mxu0 0.0
        %7934 = vmatpush.msra.mxu0 %v6841
        %7935 = vmatpush.msra.mxu0 %v6840
        %7936 = vmatpush.msra.mxu0 %v6839
        %7937 = vmatpush.msra.mxu0 %v6838
        %7938 = vmatpush.msra.mxu0 %v6837
        %7939 = vmatpush.msra.mxu0 %v6836
        %7940 = vmatpush.msra.mxu0 %v6835
        %7941 = vmatpush.msra.mxu0 %v6834
        %7942 = vmatmul.f32.gmra.mxu0 %v7560
        %v7943 = vpop.f32.mrf.mxu0
        %v7944 = vadd.f32 0.0, %v7943
        %7945 = vdwg.mxu0
        %7946 = vmatpush.msra.mxu0 0.0
        %7947 = vmatpush.msra.mxu0 0.0
        %7948 = vmatpush.msra.mxu0 0.0
        %7949 = vmatpush.msra.mxu0 0.0
        %7950 = vmatpush.msra.mxu0 0.0
        %7951 = vmatpush.msra.mxu0 0.0
        %7952 = vmatpush.msra.mxu0 0.0
        %7953 = vmatpush.msra.mxu0 0.0
        %7954 = vmatpush.msra.mxu0 %v6849
        %7955 = vmatpush.msra.mxu0 %v6848
        %7956 = vmatpush.msra.mxu0 %v6847
        %7957 = vmatpush.msra.mxu0 %v6846
        %7958 = vmatpush.msra.mxu0 %v6845
        %7959 = vmatpush.msra.mxu0 %v6844
        %7960 = vmatpush.msra.mxu0 %v6843
        %7961 = vmatpush.msra.mxu0 %v6842
        %7962 = vmatmul.f32.gmra.mxu0 %v7582
        %v7963 = vpop.f32.mrf.mxu0
        %v7964 = vadd.f32 0.0, %v7963
        %7965 = vdwg.mxu0
        %7966 = vmatpush.msra.mxu0 0.0
        %7967 = vmatpush.msra.mxu0 0.0
        %7968 = vmatpush.msra.mxu0 0.0
        %7969 = vmatpush.msra.mxu0 0.0
        %7970 = vmatpush.msra.mxu0 0.0
        %7971 = vmatpush.msra.mxu0 0.0
        %7972 = vmatpush.msra.mxu0 0.0
        %7973 = vmatpush.msra.mxu0 0.0
        %7974 = vmatpush.msra.mxu0 %v6857
        %7975 = vmatpush.msra.mxu0 %v6856
        %7976 = vmatpush.msra.mxu0 %v6855
        %7977 = vmatpush.msra.mxu0 %v6854
        %7978 = vmatpush.msra.mxu0 %v6853
        %7979 = vmatpush.msra.mxu0 %v6852
        %7980 = vmatpush.msra.mxu0 %v6851
        %7981 = vmatpush.msra.mxu0 %v6850
        %7982 = vmatmul.f32.gmra.mxu0 %v7604
        %v7983 = vpop.f32.mrf.mxu0
        %v7984 = vadd.f32 0.0, %v7983
        %7985 = vdwg.mxu0
        %7986 = vmatpush.msra.mxu0 0.0
        %7987 = vmatpush.msra.mxu0 0.0
        %7988 = vmatpush.msra.mxu0 0.0
        %7989 = vmatpush.msra.mxu0 0.0
        %7990 = vmatpush.msra.mxu0 0.0
        %7991 = vmatpush.msra.mxu0 0.0
        %7992 = vmatpush.msra.mxu0 0.0
        %7993 = vmatpush.msra.mxu0 0.0
        %7994 = vmatpush.msra.mxu0 %v6865
        %7995 = vmatpush.msra.mxu0 %v6864
        %7996 = vmatpush.msra.mxu0 %v6863
        %7997 = vmatpush.msra.mxu0 %v6862
        %7998 = vmatpush.msra.mxu0 %v6861
        %7999 = vmatpush.msra.mxu0 %v6860
        %8000 = vmatpush.msra.mxu0 %v6859
        %8001 = vmatpush.msra.mxu0 %v6858
        %8002 = vmatmul.f32.gmra.mxu0 %v7626
        %v8003 = vpop.f32.mrf.mxu0
        %v8004 = vadd.f32 0.0, %v8003
        %8005 = vdwg.mxu0
        %8006 = vmatpush.msra.mxu0 0.0
        %8007 = vmatpush.msra.mxu0 0.0
        %8008 = vmatpush.msra.mxu0 0.0
        %8009 = vmatpush.msra.mxu0 0.0
        %8010 = vmatpush.msra.mxu0 0.0
        %8011 = vmatpush.msra.mxu0 0.0
        %8012 = vmatpush.msra.mxu0 0.0
        %8013 = vmatpush.msra.mxu0 0.0
        %8014 = vmatpush.msra.mxu0 %v6873
        %8015 = vmatpush.msra.mxu0 %v6872
        %8016 = vmatpush.msra.mxu0 %v6871
        %8017 = vmatpush.msra.mxu0 %v6870
        %8018 = vmatpush.msra.mxu0 %v6869
        %8019 = vmatpush.msra.mxu0 %v6868
        %8020 = vmatpush.msra.mxu0 %v6867
        %8021 = vmatpush.msra.mxu0 %v6866
        %8022 = vmatmul.f32.gmra.mxu0 %v7648
        %v8023 = vpop.f32.mrf.mxu0
        %v8024 = vadd.f32 0.0, %v8023
        %8025 = vdwg.mxu0
        %8026 = vmatpush.msra.mxu0 0.0
        %8027 = vmatpush.msra.mxu0 0.0
        %8028 = vmatpush.msra.mxu0 0.0
        %8029 = vmatpush.msra.mxu0 0.0
        %8030 = vmatpush.msra.mxu0 0.0
        %8031 = vmatpush.msra.mxu0 0.0
        %8032 = vmatpush.msra.mxu0 0.0
        %8033 = vmatpush.msra.mxu0 0.0
        %8034 = vmatpush.msra.mxu0 %v6881
        %8035 = vmatpush.msra.mxu0 %v6880
        %8036 = vmatpush.msra.mxu0 %v6879
        %8037 = vmatpush.msra.mxu0 %v6878
        %8038 = vmatpush.msra.mxu0 %v6877
        %8039 = vmatpush.msra.mxu0 %v6876
        %8040 = vmatpush.msra.mxu0 %v6875
        %8041 = vmatpush.msra.mxu0 %v6874
        %8042 = vmatmul.f32.gmra.mxu0 %v7670
        %v8043 = vpop.f32.mrf.mxu0
        %v8044 = vadd.f32 0.0, %v8043
        %8045 = vdwg.mxu0
        %8046 = vmatpush.msra.mxu0 0.0
        %8047 = vmatpush.msra.mxu0 0.0
        %8048 = vmatpush.msra.mxu0 0.0
        %8049 = vmatpush.msra.mxu0 0.0
        %8050 = vmatpush.msra.mxu0 0.0
        %8051 = vmatpush.msra.mxu0 0.0
        %8052 = vmatpush.msra.mxu0 0.0
        %8053 = vmatpush.msra.mxu0 0.0
        %8054 = vmatpush.msra.mxu0 %v6889
        %8055 = vmatpush.msra.mxu0 %v6888
        %8056 = vmatpush.msra.mxu0 %v6887
        %8057 = vmatpush.msra.mxu0 %v6886
        %8058 = vmatpush.msra.mxu0 %v6885
        %8059 = vmatpush.msra.mxu0 %v6884
        %8060 = vmatpush.msra.mxu0 %v6883
        %8061 = vmatpush.msra.mxu0 %v6882
        %8062 = vmatmul.f32.gmra.mxu0 %v7692
        %v8063 = vpop.f32.mrf.mxu0
        %v8064 = vadd.f32 0.0, %v8063
        %8065 = vdwg.mxu0
        %8066 = vmatpush.msra.mxu0 0.0
        %8067 = vmatpush.msra.mxu0 0.0
        %8068 = vmatpush.msra.mxu0 0.0
        %8069 = vmatpush.msra.mxu0 0.0
        %8070 = vmatpush.msra.mxu0 0.0
        %8071 = vmatpush.msra.mxu0 0.0
        %8072 = vmatpush.msra.mxu0 0.0
        %8073 = vmatpush.msra.mxu0 0.0
        %8074 = vmatpush.msra.mxu0 %v6897
        %8075 = vmatpush.msra.mxu0 %v6896
        %8076 = vmatpush.msra.mxu0 %v6895
        %8077 = vmatpush.msra.mxu0 %v6894
        %8078 = vmatpush.msra.mxu0 %v6893
        %8079 = vmatpush.msra.mxu0 %v6892
        %8080 = vmatpush.msra.mxu0 %v6891
        %8081 = vmatpush.msra.mxu0 %v6890
        %8082 = vmatmul.f32.gmra.mxu0 %v7714
        %v8083 = vpop.f32.mrf.mxu0
        %v8084 = vadd.f32 0.0, %v8083
        %8085 = vdwg.mxu0
        %8086 = vmatpush.msra.mxu0 0.0
        %8087 = vmatpush.msra.mxu0 0.0
        %8088 = vmatpush.msra.mxu0 0.0
        %8089 = vmatpush.msra.mxu0 0.0
        %8090 = vmatpush.msra.mxu0 0.0
        %8091 = vmatpush.msra.mxu0 0.0
        %8092 = vmatpush.msra.mxu0 0.0
        %8093 = vmatpush.msra.mxu0 0.0
        %8094 = vmatpush.msra.mxu0 %v6905
        %8095 = vmatpush.msra.mxu0 %v6904
        %8096 = vmatpush.msra.mxu0 %v6903
        %8097 = vmatpush.msra.mxu0 %v6902
        %8098 = vmatpush.msra.mxu0 %v6901
        %8099 = vmatpush.msra.mxu0 %v6900
        %8100 = vmatpush.msra.mxu0 %v6899
        %8101 = vmatpush.msra.mxu0 %v6898
        %8102 = vmatmul.f32.gmra.mxu0 %v7736
        %v8103 = vpop.f32.mrf.mxu0
        %v8104 = vadd.f32 0.0, %v8103
        %8105 = vdwg.mxu0
        %8106 = vmatpush.msra.mxu0 0.0
        %8107 = vmatpush.msra.mxu0 0.0
        %8108 = vmatpush.msra.mxu0 0.0
        %8109 = vmatpush.msra.mxu0 0.0
        %8110 = vmatpush.msra.mxu0 0.0
        %8111 = vmatpush.msra.mxu0 0.0
        %8112 = vmatpush.msra.mxu0 0.0
        %8113 = vmatpush.msra.mxu0 0.0
        %8114 = vmatpush.msra.mxu0 %v6913
        %8115 = vmatpush.msra.mxu0 %v6912
        %8116 = vmatpush.msra.mxu0 %v6911
        %8117 = vmatpush.msra.mxu0 %v6910
        %8118 = vmatpush.msra.mxu0 %v6909
        %8119 = vmatpush.msra.mxu0 %v6908
        %8120 = vmatpush.msra.mxu0 %v6907
        %8121 = vmatpush.msra.mxu0 %v6906
        %8122 = vmatmul.f32.gmra.mxu0 %v7758
        %v8123 = vpop.f32.mrf.mxu0
        %v8124 = vadd.f32 0.0, %v8123
        %8125 = vdwg.mxu0
        %8126 = vmatpush.msra.mxu0 0.0
        %8127 = vmatpush.msra.mxu0 0.0
        %8128 = vmatpush.msra.mxu0 0.0
        %8129 = vmatpush.msra.mxu0 0.0
        %8130 = vmatpush.msra.mxu0 0.0
        %8131 = vmatpush.msra.mxu0 0.0
        %8132 = vmatpush.msra.mxu0 0.0
        %8133 = vmatpush.msra.mxu0 0.0
        %8134 = vmatpush.msra.mxu0 %v6921
        %8135 = vmatpush.msra.mxu0 %v6920
        %8136 = vmatpush.msra.mxu0 %v6919
        %8137 = vmatpush.msra.mxu0 %v6918
        %8138 = vmatpush.msra.mxu0 %v6917
        %8139 = vmatpush.msra.mxu0 %v6916
        %8140 = vmatpush.msra.mxu0 %v6915
        %8141 = vmatpush.msra.mxu0 %v6914
        %8142 = vmatmul.f32.gmra.mxu0 %v7780
        %v8143 = vpop.f32.mrf.mxu0
        %v8144 = vadd.f32 0.0, %v8143
        %8145 = vdwg.mxu0
        %8146 = vmatpush.msra.mxu0 0.0
        %8147 = vmatpush.msra.mxu0 0.0
        %8148 = vmatpush.msra.mxu0 0.0
        %8149 = vmatpush.msra.mxu0 0.0
        %8150 = vmatpush.msra.mxu0 0.0
        %8151 = vmatpush.msra.mxu0 0.0
        %8152 = vmatpush.msra.mxu0 0.0
        %8153 = vmatpush.msra.mxu0 0.0
        %8154 = vmatpush.msra.mxu0 %v6929
        %8155 = vmatpush.msra.mxu0 %v6928
        %8156 = vmatpush.msra.mxu0 %v6927
        %8157 = vmatpush.msra.mxu0 %v6926
        %8158 = vmatpush.msra.mxu0 %v6925
        %8159 = vmatpush.msra.mxu0 %v6924
        %8160 = vmatpush.msra.mxu0 %v6923
        %8161 = vmatpush.msra.mxu0 %v6922
        %8162 = vmatmul.f32.gmra.mxu0 %v7802
        %v8163 = vpop.f32.mrf.mxu0
        %v8164 = vadd.f32 0.0, %v8163
        %8165 = vdwg.mxu0
        %8166 = vmatpush.msra.mxu0 0.0
        %8167 = vmatpush.msra.mxu0 0.0
        %8168 = vmatpush.msra.mxu0 0.0
        %8169 = vmatpush.msra.mxu0 0.0
        %8170 = vmatpush.msra.mxu0 0.0
        %8171 = vmatpush.msra.mxu0 0.0
        %8172 = vmatpush.msra.mxu0 0.0
        %8173 = vmatpush.msra.mxu0 0.0
        %8174 = vmatpush.msra.mxu0 %v6937
        %8175 = vmatpush.msra.mxu0 %v6936
        %8176 = vmatpush.msra.mxu0 %v6935
        %8177 = vmatpush.msra.mxu0 %v6934
        %8178 = vmatpush.msra.mxu0 %v6933
        %8179 = vmatpush.msra.mxu0 %v6932
        %8180 = vmatpush.msra.mxu0 %v6931
        %8181 = vmatpush.msra.mxu0 %v6930
        %8182 = vmatmul.f32.gmra.mxu0 %v7824
        %v8183 = vpop.f32.mrf.mxu0
        %v8184 = vadd.f32 0.0, %v8183
        %8185 = vdwg.mxu0
        %8186 = vmatpush.msra.mxu0 0.0
        %8187 = vmatpush.msra.mxu0 0.0
        %8188 = vmatpush.msra.mxu0 0.0
        %8189 = vmatpush.msra.mxu0 0.0
        %8190 = vmatpush.msra.mxu0 0.0
        %8191 = vmatpush.msra.mxu0 0.0
        %8192 = vmatpush.msra.mxu0 0.0
        %8193 = vmatpush.msra.mxu0 0.0
        %8194 = vmatpush.msra.mxu0 %v6945
        %8195 = vmatpush.msra.mxu0 %v6944
        %8196 = vmatpush.msra.mxu0 %v6943
        %8197 = vmatpush.msra.mxu0 %v6942
        %8198 = vmatpush.msra.mxu0 %v6941
        %8199 = vmatpush.msra.mxu0 %v6940
        %8200 = vmatpush.msra.mxu0 %v6939
        %8201 = vmatpush.msra.mxu0 %v6938
        %8202 = vmatmul.f32.gmra.mxu0 %v7846
        %v8203 = vpop.f32.mrf.mxu0
        %v8204 = vadd.f32 0.0, %v8203
        %8205 = vdwg.mxu0
        %8206 = vmatpush.msra.mxu0 0.0
        %8207 = vmatpush.msra.mxu0 0.0
        %8208 = vmatpush.msra.mxu0 0.0
        %8209 = vmatpush.msra.mxu0 0.0
        %8210 = vmatpush.msra.mxu0 0.0
        %8211 = vmatpush.msra.mxu0 0.0
        %8212 = vmatpush.msra.mxu0 0.0
        %8213 = vmatpush.msra.mxu0 0.0
        %8214 = vmatpush.msra.mxu0 %v6953
        %8215 = vmatpush.msra.mxu0 %v6952
        %8216 = vmatpush.msra.mxu0 %v6951
        %8217 = vmatpush.msra.mxu0 %v6950
        %8218 = vmatpush.msra.mxu0 %v6949
        %8219 = vmatpush.msra.mxu0 %v6948
        %8220 = vmatpush.msra.mxu0 %v6947
        %8221 = vmatpush.msra.mxu0 %v6946
        %8222 = vmatmul.f32.gmra.mxu0 %v7868
        %v8223 = vpop.f32.mrf.mxu0
        %v8224 = vadd.f32 0.0, %v8223
        %8225 = vdwg.mxu0
        %8226 = vmatpush.msra.mxu0 0.0
        %8227 = vmatpush.msra.mxu0 0.0
        %8228 = vmatpush.msra.mxu0 0.0
        %8229 = vmatpush.msra.mxu0 0.0
        %8230 = vmatpush.msra.mxu0 0.0
        %8231 = vmatpush.msra.mxu0 0.0
        %8232 = vmatpush.msra.mxu0 0.0
        %8233 = vmatpush.msra.mxu0 0.0
        %8234 = vmatpush.msra.mxu0 %v6962
        %8235 = vmatpush.msra.mxu0 %v6961
        %8236 = vmatpush.msra.mxu0 %v6960
        %8237 = vmatpush.msra.mxu0 %v6959
        %8238 = vmatpush.msra.mxu0 %v6958
        %8239 = vmatpush.msra.mxu0 %v6957
        %8240 = vmatpush.msra.mxu0 %v6956
        %8241 = vmatpush.msra.mxu0 %v6955
        %8242 = vmatmul.f32.gmra.mxu0 %v7186
        %v8243 = vpop.f32.mrf.mxu0
        %v8244 = vadd.f32 %v7924, %v8243
        %8245 = vdwg.mxu0
        %8246 = vmatpush.msra.mxu0 0.0
        %8247 = vmatpush.msra.mxu0 0.0
        %8248 = vmatpush.msra.mxu0 0.0
        %8249 = vmatpush.msra.mxu0 0.0
        %8250 = vmatpush.msra.mxu0 0.0
        %8251 = vmatpush.msra.mxu0 0.0
        %8252 = vmatpush.msra.mxu0 0.0
        %8253 = vmatpush.msra.mxu0 0.0
        %8254 = vmatpush.msra.mxu0 %v6970
        %8255 = vmatpush.msra.mxu0 %v6969
        %8256 = vmatpush.msra.mxu0 %v6968
        %8257 = vmatpush.msra.mxu0 %v6967
        %8258 = vmatpush.msra.mxu0 %v6966
        %8259 = vmatpush.msra.mxu0 %v6965
        %8260 = vmatpush.msra.mxu0 %v6964
        %8261 = vmatpush.msra.mxu0 %v6963
        %8262 = vmatmul.f32.gmra.mxu0 %v7208
        %v8263 = vpop.f32.mrf.mxu0
        %v8264 = vadd.f32 %v7944, %v8263
        %8265 = vdwg.mxu0
        %8266 = vmatpush.msra.mxu0 0.0
        %8267 = vmatpush.msra.mxu0 0.0
        %8268 = vmatpush.msra.mxu0 0.0
        %8269 = vmatpush.msra.mxu0 0.0
        %8270 = vmatpush.msra.mxu0 0.0
        %8271 = vmatpush.msra.mxu0 0.0
        %8272 = vmatpush.msra.mxu0 0.0
        %8273 = vmatpush.msra.mxu0 0.0
        %8274 = vmatpush.msra.mxu0 %v6978
        %8275 = vmatpush.msra.mxu0 %v6977
        %8276 = vmatpush.msra.mxu0 %v6976
        %8277 = vmatpush.msra.mxu0 %v6975
        %8278 = vmatpush.msra.mxu0 %v6974
        %8279 = vmatpush.msra.mxu0 %v6973
        %8280 = vmatpush.msra.mxu0 %v6972
        %8281 = vmatpush.msra.mxu0 %v6971
        %8282 = vmatmul.f32.gmra.mxu0 %v7230
        %v8283 = vpop.f32.mrf.mxu0
        %v8284 = vadd.f32 %v7964, %v8283
        %8285 = vdwg.mxu0
        %8286 = vmatpush.msra.mxu0 0.0
        %8287 = vmatpush.msra.mxu0 0.0
        %8288 = vmatpush.msra.mxu0 0.0
        %8289 = vmatpush.msra.mxu0 0.0
        %8290 = vmatpush.msra.mxu0 0.0
        %8291 = vmatpush.msra.mxu0 0.0
        %8292 = vmatpush.msra.mxu0 0.0
        %8293 = vmatpush.msra.mxu0 0.0
        %8294 = vmatpush.msra.mxu0 %v6986
        %8295 = vmatpush.msra.mxu0 %v6985
        %8296 = vmatpush.msra.mxu0 %v6984
        %8297 = vmatpush.msra.mxu0 %v6983
        %8298 = vmatpush.msra.mxu0 %v6982
        %8299 = vmatpush.msra.mxu0 %v6981
        %8300 = vmatpush.msra.mxu0 %v6980
        %8301 = vmatpush.msra.mxu0 %v6979
        %8302 = vmatmul.f32.gmra.mxu0 %v7252
        %v8303 = vpop.f32.mrf.mxu0
        %v8304 = vadd.f32 %v7984, %v8303
        %8305 = vdwg.mxu0
        %8306 = vmatpush.msra.mxu0 0.0
        %8307 = vmatpush.msra.mxu0 0.0
        %8308 = vmatpush.msra.mxu0 0.0
        %8309 = vmatpush.msra.mxu0 0.0
        %8310 = vmatpush.msra.mxu0 0.0
        %8311 = vmatpush.msra.mxu0 0.0
        %8312 = vmatpush.msra.mxu0 0.0
        %8313 = vmatpush.msra.mxu0 0.0
        %8314 = vmatpush.msra.mxu0 %v6994
        %8315 = vmatpush.msra.mxu0 %v6993
        %8316 = vmatpush.msra.mxu0 %v6992
        %8317 = vmatpush.msra.mxu0 %v6991
        %8318 = vmatpush.msra.mxu0 %v6990
        %8319 = vmatpush.msra.mxu0 %v6989
        %8320 = vmatpush.msra.mxu0 %v6988
        %8321 = vmatpush.msra.mxu0 %v6987
        %8322 = vmatmul.f32.gmra.mxu0 %v7274
        %v8323 = vpop.f32.mrf.mxu0
        %v8324 = vadd.f32 %v8004, %v8323
        %8325 = vdwg.mxu0
        %8326 = vmatpush.msra.mxu0 0.0
        %8327 = vmatpush.msra.mxu0 0.0
        %8328 = vmatpush.msra.mxu0 0.0
        %8329 = vmatpush.msra.mxu0 0.0
        %8330 = vmatpush.msra.mxu0 0.0
        %8331 = vmatpush.msra.mxu0 0.0
        %8332 = vmatpush.msra.mxu0 0.0
        %8333 = vmatpush.msra.mxu0 0.0
        %8334 = vmatpush.msra.mxu0 %v7002
        %8335 = vmatpush.msra.mxu0 %v7001
        %8336 = vmatpush.msra.mxu0 %v7000
        %8337 = vmatpush.msra.mxu0 %v6999
        %8338 = vmatpush.msra.mxu0 %v6998
        %8339 = vmatpush.msra.mxu0 %v6997
        %8340 = vmatpush.msra.mxu0 %v6996
        %8341 = vmatpush.msra.mxu0 %v6995
        %8342 = vmatmul.f32.gmra.mxu0 %v7296
        %v8343 = vpop.f32.mrf.mxu0
        %v8344 = vadd.f32 %v8024, %v8343
        %8345 = vdwg.mxu0
        %8346 = vmatpush.msra.mxu0 0.0
        %8347 = vmatpush.msra.mxu0 0.0
        %8348 = vmatpush.msra.mxu0 0.0
        %8349 = vmatpush.msra.mxu0 0.0
        %8350 = vmatpush.msra.mxu0 0.0
        %8351 = vmatpush.msra.mxu0 0.0
        %8352 = vmatpush.msra.mxu0 0.0
        %8353 = vmatpush.msra.mxu0 0.0
        %8354 = vmatpush.msra.mxu0 %v7010
        %8355 = vmatpush.msra.mxu0 %v7009
        %8356 = vmatpush.msra.mxu0 %v7008
        %8357 = vmatpush.msra.mxu0 %v7007
        %8358 = vmatpush.msra.mxu0 %v7006
        %8359 = vmatpush.msra.mxu0 %v7005
        %8360 = vmatpush.msra.mxu0 %v7004
        %8361 = vmatpush.msra.mxu0 %v7003
        %8362 = vmatmul.f32.gmra.mxu0 %v7318
        %v8363 = vpop.f32.mrf.mxu0
        %v8364 = vadd.f32 %v8044, %v8363
        %8365 = vdwg.mxu0
        %8366 = vmatpush.msra.mxu0 0.0
        %8367 = vmatpush.msra.mxu0 0.0
        %8368 = vmatpush.msra.mxu0 0.0
        %8369 = vmatpush.msra.mxu0 0.0
        %8370 = vmatpush.msra.mxu0 0.0
        %8371 = vmatpush.msra.mxu0 0.0
        %8372 = vmatpush.msra.mxu0 0.0
        %8373 = vmatpush.msra.mxu0 0.0
        %8374 = vmatpush.msra.mxu0 %v7018
        %8375 = vmatpush.msra.mxu0 %v7017
        %8376 = vmatpush.msra.mxu0 %v7016
        %8377 = vmatpush.msra.mxu0 %v7015
        %8378 = vmatpush.msra.mxu0 %v7014
        %8379 = vmatpush.msra.mxu0 %v7013
        %8380 = vmatpush.msra.mxu0 %v7012
        %8381 = vmatpush.msra.mxu0 %v7011
        %8382 = vmatmul.f32.gmra.mxu0 %v7340
        %v8383 = vpop.f32.mrf.mxu0
        %v8384 = vadd.f32 %v8064, %v8383
        %8385 = vdwg.mxu0
        %8386 = vmatpush.msra.mxu0 0.0
        %8387 = vmatpush.msra.mxu0 0.0
        %8388 = vmatpush.msra.mxu0 0.0
        %8389 = vmatpush.msra.mxu0 0.0
        %8390 = vmatpush.msra.mxu0 0.0
        %8391 = vmatpush.msra.mxu0 0.0
        %8392 = vmatpush.msra.mxu0 0.0
        %8393 = vmatpush.msra.mxu0 0.0
        %8394 = vmatpush.msra.mxu0 %v7026
        %8395 = vmatpush.msra.mxu0 %v7025
        %8396 = vmatpush.msra.mxu0 %v7024
        %8397 = vmatpush.msra.mxu0 %v7023
        %8398 = vmatpush.msra.mxu0 %v7022
        %8399 = vmatpush.msra.mxu0 %v7021
        %8400 = vmatpush.msra.mxu0 %v7020
        %8401 = vmatpush.msra.mxu0 %v7019
        %8402 = vmatmul.f32.gmra.mxu0 %v7362
        %v8403 = vpop.f32.mrf.mxu0
        %v8404 = vadd.f32 %v8084, %v8403
        %8405 = vdwg.mxu0
        %8406 = vmatpush.msra.mxu0 0.0
        %8407 = vmatpush.msra.mxu0 0.0
        %8408 = vmatpush.msra.mxu0 0.0
        %8409 = vmatpush.msra.mxu0 0.0
        %8410 = vmatpush.msra.mxu0 0.0
        %8411 = vmatpush.msra.mxu0 0.0
        %8412 = vmatpush.msra.mxu0 0.0
        %8413 = vmatpush.msra.mxu0 0.0
        %8414 = vmatpush.msra.mxu0 %v7034
        %8415 = vmatpush.msra.mxu0 %v7033
        %8416 = vmatpush.msra.mxu0 %v7032
        %8417 = vmatpush.msra.mxu0 %v7031
        %8418 = vmatpush.msra.mxu0 %v7030
        %8419 = vmatpush.msra.mxu0 %v7029
        %8420 = vmatpush.msra.mxu0 %v7028
        %8421 = vmatpush.msra.mxu0 %v7027
        %8422 = vmatmul.f32.gmra.mxu0 %v7384
        %v8423 = vpop.f32.mrf.mxu0
        %v8424 = vadd.f32 %v8104, %v8423
        %8425 = vdwg.mxu0
        %8426 = vmatpush.msra.mxu0 0.0
        %8427 = vmatpush.msra.mxu0 0.0
        %8428 = vmatpush.msra.mxu0 0.0
        %8429 = vmatpush.msra.mxu0 0.0
        %8430 = vmatpush.msra.mxu0 0.0
        %8431 = vmatpush.msra.mxu0 0.0
        %8432 = vmatpush.msra.mxu0 0.0
        %8433 = vmatpush.msra.mxu0 0.0
        %8434 = vmatpush.msra.mxu0 %v7042
        %8435 = vmatpush.msra.mxu0 %v7041
        %8436 = vmatpush.msra.mxu0 %v7040
        %8437 = vmatpush.msra.mxu0 %v7039
        %8438 = vmatpush.msra.mxu0 %v7038
        %8439 = vmatpush.msra.mxu0 %v7037
        %8440 = vmatpush.msra.mxu0 %v7036
        %8441 = vmatpush.msra.mxu0 %v7035
        %8442 = vmatmul.f32.gmra.mxu0 %v7406
        %v8443 = vpop.f32.mrf.mxu0
        %v8444 = vadd.f32 %v8124, %v8443
        %8445 = vdwg.mxu0
        %8446 = vmatpush.msra.mxu0 0.0
        %8447 = vmatpush.msra.mxu0 0.0
        %8448 = vmatpush.msra.mxu0 0.0
        %8449 = vmatpush.msra.mxu0 0.0
        %8450 = vmatpush.msra.mxu0 0.0
        %8451 = vmatpush.msra.mxu0 0.0
        %8452 = vmatpush.msra.mxu0 0.0
        %8453 = vmatpush.msra.mxu0 0.0
        %8454 = vmatpush.msra.mxu0 %v7050
        %8455 = vmatpush.msra.mxu0 %v7049
        %8456 = vmatpush.msra.mxu0 %v7048
        %8457 = vmatpush.msra.mxu0 %v7047
        %8458 = vmatpush.msra.mxu0 %v7046
        %8459 = vmatpush.msra.mxu0 %v7045
        %8460 = vmatpush.msra.mxu0 %v7044
        %8461 = vmatpush.msra.mxu0 %v7043
        %8462 = vmatmul.f32.gmra.mxu0 %v7428
        %v8463 = vpop.f32.mrf.mxu0
        %v8464 = vadd.f32 %v8144, %v8463
        %8465 = vdwg.mxu0
        %8466 = vmatpush.msra.mxu0 0.0
        %8467 = vmatpush.msra.mxu0 0.0
        %8468 = vmatpush.msra.mxu0 0.0
        %8469 = vmatpush.msra.mxu0 0.0
        %8470 = vmatpush.msra.mxu0 0.0
        %8471 = vmatpush.msra.mxu0 0.0
        %8472 = vmatpush.msra.mxu0 0.0
        %8473 = vmatpush.msra.mxu0 0.0
        %8474 = vmatpush.msra.mxu0 %v7058
        %8475 = vmatpush.msra.mxu0 %v7057
        %8476 = vmatpush.msra.mxu0 %v7056
        %8477 = vmatpush.msra.mxu0 %v7055
        %8478 = vmatpush.msra.mxu0 %v7054
        %8479 = vmatpush.msra.mxu0 %v7053
        %8480 = vmatpush.msra.mxu0 %v7052
        %8481 = vmatpush.msra.mxu0 %v7051
        %8482 = vmatmul.f32.gmra.mxu0 %v7450
        %v8483 = vpop.f32.mrf.mxu0
        %v8484 = vadd.f32 %v8164, %v8483
        %8485 = vdwg.mxu0
        %8486 = vmatpush.msra.mxu0 0.0
        %8487 = vmatpush.msra.mxu0 0.0
        %8488 = vmatpush.msra.mxu0 0.0
        %8489 = vmatpush.msra.mxu0 0.0
        %8490 = vmatpush.msra.mxu0 0.0
        %8491 = vmatpush.msra.mxu0 0.0
        %8492 = vmatpush.msra.mxu0 0.0
        %8493 = vmatpush.msra.mxu0 0.0
        %8494 = vmatpush.msra.mxu0 %v7066
        %8495 = vmatpush.msra.mxu0 %v7065
        %8496 = vmatpush.msra.mxu0 %v7064
        %8497 = vmatpush.msra.mxu0 %v7063
        %8498 = vmatpush.msra.mxu0 %v7062
        %8499 = vmatpush.msra.mxu0 %v7061
        %8500 = vmatpush.msra.mxu0 %v7060
        %8501 = vmatpush.msra.mxu0 %v7059
        %8502 = vmatmul.f32.gmra.mxu0 %v7472
        %v8503 = vpop.f32.mrf.mxu0
        %v8504 = vadd.f32 %v8184, %v8503
        %8505 = vdwg.mxu0
        %8506 = vmatpush.msra.mxu0 0.0
        %8507 = vmatpush.msra.mxu0 0.0
        %8508 = vmatpush.msra.mxu0 0.0
        %8509 = vmatpush.msra.mxu0 0.0
        %8510 = vmatpush.msra.mxu0 0.0
        %8511 = vmatpush.msra.mxu0 0.0
        %8512 = vmatpush.msra.mxu0 0.0
        %8513 = vmatpush.msra.mxu0 0.0
        %8514 = vmatpush.msra.mxu0 %v7074
        %8515 = vmatpush.msra.mxu0 %v7073
        %8516 = vmatpush.msra.mxu0 %v7072
        %8517 = vmatpush.msra.mxu0 %v7071
        %8518 = vmatpush.msra.mxu0 %v7070
        %8519 = vmatpush.msra.mxu0 %v7069
        %8520 = vmatpush.msra.mxu0 %v7068
        %8521 = vmatpush.msra.mxu0 %v7067
        %8522 = vmatmul.f32.gmra.mxu0 %v7494
        %v8523 = vpop.f32.mrf.mxu0
        %v8524 = vadd.f32 %v8204, %v8523
        %8525 = vdwg.mxu0
        %8526 = vmatpush.msra.mxu0 0.0
        %8527 = vmatpush.msra.mxu0 0.0
        %8528 = vmatpush.msra.mxu0 0.0
        %8529 = vmatpush.msra.mxu0 0.0
        %8530 = vmatpush.msra.mxu0 0.0
        %8531 = vmatpush.msra.mxu0 0.0
        %8532 = vmatpush.msra.mxu0 0.0
        %8533 = vmatpush.msra.mxu0 0.0
        %8534 = vmatpush.msra.mxu0 %v7082
        %8535 = vmatpush.msra.mxu0 %v7081
        %8536 = vmatpush.msra.mxu0 %v7080
        %8537 = vmatpush.msra.mxu0 %v7079
        %8538 = vmatpush.msra.mxu0 %v7078
        %8539 = vmatpush.msra.mxu0 %v7077
        %8540 = vmatpush.msra.mxu0 %v7076
        %8541 = vmatpush.msra.mxu0 %v7075
        %8542 = vmatmul.f32.gmra.mxu0 %v7516
        %v8543 = vpop.f32.mrf.mxu0
        %v8544 = vadd.f32 %v8224, %v8543
        %8545 = vdwg.mxu0
        %v8562 = vrot.slane %v7891, 7
        %v8563 = vsel %vm2438, %v8562, %v7890
        %v8564 = vrot.slane %v7892, 6
        %v8565 = vsel %vm2441, %v8564, %v8563
        %v8566 = vrot.slane %v7893, 5
        %v8567 = vsel %vm2444, %v8566, %v8565
        %v8568 = vrot.slane %v7894, 4
        %v8569 = vsel %vm2447, %v8568, %v8567
        %v8570 = vrot.slane %v7895, 3
        %v8571 = vsel %vm2450, %v8570, %v8569
        %v8572 = vrot.slane %v7896, 2
        %v8573 = vsel %vm2453, %v8572, %v8571
        %v8574 = vrot.slane %v7897, 1
        %v8575 = vsel %vm2456, %v8574, %v8573
        %v8576 = vrot.slane %v7899, 7
        %v8577 = vsel %vm2438, %v8576, %v7898
        %v8578 = vrot.slane %v7900, 6
        %v8579 = vsel %vm2441, %v8578, %v8577
        %v8580 = vrot.slane %v7901, 5
        %v8581 = vsel %vm2444, %v8580, %v8579
        %v8582 = vrot.slane %v7902, 4
        %v8583 = vsel %vm2447, %v8582, %v8581
        %v8584 = vrot.slane %v7903, 3
        %v8585 = vsel %vm2450, %v8584, %v8583
        %v8586 = vrot.slane %v7904, 2
        %v8587 = vsel %vm2453, %v8586, %v8585
        %v8588 = vrot.slane %v7905, 1
        %v8589 = vsel %vm2456, %v8588, %v8587
        %v8608 = vrot.slane %v8264, 7
        %v8609 = vsel %vm2438, %v8608, %v8244
        %v8610 = vrot.slane %v8284, 6
        %v8611 = vsel %vm2441, %v8610, %v8609
        %v8612 = vrot.slane %v8304, 5
        %v8613 = vsel %vm2444, %v8612, %v8611
        %v8614 = vrot.slane %v8324, 4
        %v8615 = vsel %vm2447, %v8614, %v8613
        %v8616 = vrot.slane %v8344, 3
        %v8617 = vsel %vm2450, %v8616, %v8615
        %v8618 = vrot.slane %v8364, 2
        %v8619 = vsel %vm2453, %v8618, %v8617
        %v8620 = vrot.slane %v8384, 1
        %v8621 = vsel %vm2456, %v8620, %v8619
        %v8622 = vrot.slane %v8424, 7
        %v8623 = vsel %vm2438, %v8622, %v8404
        %v8624 = vrot.slane %v8444, 6
        %v8625 = vsel %vm2441, %v8624, %v8623
        %v8626 = vrot.slane %v8464, 5
        %v8627 = vsel %vm2444, %v8626, %v8625
        %v8628 = vrot.slane %v8484, 4
        %v8629 = vsel %vm2447, %v8628, %v8627
        %v8630 = vrot.slane %v8504, 3
        %v8631 = vsel %vm2450, %v8630, %v8629
        %v8632 = vrot.slane %v8524, 2
        %v8633 = vsel %vm2453, %v8632, %v8631
        %v8634 = vrot.slane %v8544, 1
        %v8635 = vsel %vm2456, %v8634, %v8633
        %8638 = vxpose.xlu0.b32.start [1/16] %v8575, 128
        %8639 = vxpose.xlu0.b32.cont [2/16] %v8589, 128
        %8640 = vxpose.xlu0.b32.cont [3/16] %v8621, 128
        %8641 = vxpose.xlu0.b32.cont [4/16] %v8635, 128
        %8642 = vxpose.xlu0.b32.cont [5/16] 0.0, 128
        %8643 = vxpose.xlu0.b32.cont [6/16] 0.0, 128
        %8644 = vxpose.xlu0.b32.cont [7/16] 0.0, 128
        %8645 = vxpose.xlu0.b32.cont [8/16] 0.0, 128
        %8646 = vxpose.xlu0.b32.cont [9/16] 0.0, 128
        %8647 = vxpose.xlu0.b32.cont [10/16] 0.0, 128
        %8648 = vxpose.xlu0.b32.cont [11/16] 0.0, 128
        %8649 = vxpose.xlu0.b32.cont [12/16] 0.0, 128
        %8650 = vxpose.xlu0.b32.cont [13/16] 0.0, 128
        %8651 = vxpose.xlu0.b32.cont [14/16] 0.0, 128
        %8652 = vxpose.xlu0.b32.cont [15/16] 0.0, 128
        %8653 = vxpose.xlu0.b32.end [16/16] 0.0, 128
        %v8654 = vpop.trf.xlu0
        %v8655 = vpop.trf.xlu0
        %v8656 = vpop.trf.xlu0
        %v8657 = vpop.trf.xlu0
        %v8658 = vpop.trf.xlu0
        %v8659 = vpop.trf.xlu0
        %v8660 = vpop.trf.xlu0
        %v8661 = vpop.trf.xlu0
        %v8662 = vpop.trf.xlu0
        %v8663 = vpop.trf.xlu0
        %v8664 = vpop.trf.xlu0
        %v8665 = vpop.trf.xlu0
        %v8666 = vpop.trf.xlu0
        %v8667 = vpop.trf.xlu0
        %v8668 = vpop.trf.xlu0
        %v8669 = vpop.trf.xlu0
        %v8671 = vsel %vm2552, %v8654, 0
        %v8674 = vsel %vm2552, %v8655, 0
        %v8677 = vsel %vm2552, %v8656, 0
        %v8680 = vsel %vm2552, %v8657, 0
        %v8683 = vsel %vm2552, %v8658, 0
        %v8686 = vsel %vm2552, %v8659, 0
        %v8689 = vsel %vm2552, %v8660, 0
        %v8692 = vsel %vm2552, %v8661, 0
        %8694 = vmatpush.msra.mxu0 0.0
        %8695 = vmatpush.msra.mxu0 0.0
        %8696 = vmatpush.msra.mxu0 0.0
        %8697 = vmatpush.msra.mxu0 0.0
        %8698 = vmatpush.msra.mxu0 0.0
        %8699 = vmatpush.msra.mxu0 0.0
        %8700 = vmatpush.msra.mxu0 0.0
        %8701 = vmatpush.msra.mxu0 0.0
        %8702 = vmatpush.msra.mxu0 0.0
        %8703 = vmatpush.msra.mxu0 0.0
        %8704 = vmatpush.msra.mxu0 0.0
        %8705 = vmatpush.msra.mxu0 0.0
        %8706 = vmatpush.msra.mxu0 %v690
        %8707 = vmatpush.msra.mxu0 %v689
        %8708 = vmatpush.msra.mxu0 %v688
        %8709 = vmatpush.msra.mxu0 %v687
        %8710 = vmatmul.f32.gmra.mxu0 %v8671
        %v8711 = vpop.f32.mrf.mxu0
        %v8712 = vadd.f32 0.0, %v8711
        %8713 = vmatmul.f32.gmra.mxu0 %v8674
        %v8714 = vpop.f32.mrf.mxu0
        %v8715 = vadd.f32 0.0, %v8714
        %8716 = vmatmul.f32.gmra.mxu0 %v8677
        %v8717 = vpop.f32.mrf.mxu0
        %v8718 = vadd.f32 0.0, %v8717
        %8719 = vmatmul.f32.gmra.mxu0 %v8680
        %v8720 = vpop.f32.mrf.mxu0
        %v8721 = vadd.f32 0.0, %v8720
        %8722 = vmatmul.f32.gmra.mxu0 %v8683
        %v8723 = vpop.f32.mrf.mxu0
        %v8724 = vadd.f32 0.0, %v8723
        %8725 = vmatmul.f32.gmra.mxu0 %v8686
        %v8726 = vpop.f32.mrf.mxu0
        %v8727 = vadd.f32 0.0, %v8726
        %8728 = vmatmul.f32.gmra.mxu0 %v8689
        %v8729 = vpop.f32.mrf.mxu0
        %v8730 = vadd.f32 0.0, %v8729
        %8731 = vmatmul.f32.gmra.mxu0 %v8692
        %v8732 = vpop.f32.mrf.mxu0
        %v8733 = vadd.f32 0.0, %v8732
        %8734 = vdwg.mxu0
        %v8736 = vsel %vm963, %v7084, 0
        %v8739 = vsel %vm963, %v7085, 0
        %v8742 = vsel %vm963, %v7086, 0
        %v8745 = vsel %vm963, %v7087, 0
        %v8748 = vsel %vm963, %v7088, 0
        %v8751 = vsel %vm963, %v7089, 0
        %v8754 = vsel %vm963, %v7090, 0
        %v8757 = vsel %vm963, %v7091, 0
        %8759 = vmatpush.msra.mxu0 0.0
        %8760 = vmatpush.msra.mxu0 0.0
        %8761 = vmatpush.msra.mxu0 0.0
        %8762 = vmatpush.msra.mxu0 0.0
        %8763 = vmatpush.msra.mxu0 0.0
        %8764 = vmatpush.msra.mxu0 0.0
        %8765 = vmatpush.msra.mxu0 0.0
        %8766 = vmatpush.msra.mxu0 0.0
        %8767 = vmatpush.msra.mxu0 %v6824
        %8768 = vmatpush.msra.mxu0 %v6823
        %8769 = vmatpush.msra.mxu0 %v6822
        %8770 = vmatpush.msra.mxu0 %v6821
        %8771 = vmatpush.msra.mxu0 %v6820
        %8772 = vmatpush.msra.mxu0 %v6819
        %8773 = vmatpush.msra.mxu0 %v6818
        %8774 = vmatpush.msra.mxu0 %v6817
        %8775 = vmatmul.f32.gmra.mxu0 %v8736
        %v8776 = vpop.f32.mrf.mxu0
        %v8777 = vadd.f32 0.0, %v8776
        %8778 = vmatmul.f32.gmra.mxu0 %v8739
        %v8779 = vpop.f32.mrf.mxu0
        %v8780 = vadd.f32 0.0, %v8779
        %8781 = vmatmul.f32.gmra.mxu0 %v8742
        %v8782 = vpop.f32.mrf.mxu0
        %v8783 = vadd.f32 0.0, %v8782
        %8784 = vmatmul.f32.gmra.mxu0 %v8745
        %v8785 = vpop.f32.mrf.mxu0
        %v8786 = vadd.f32 0.0, %v8785
        %8787 = vmatmul.f32.gmra.mxu0 %v8748
        %v8788 = vpop.f32.mrf.mxu0
        %v8789 = vadd.f32 0.0, %v8788
        %8790 = vmatmul.f32.gmra.mxu0 %v8751
        %v8791 = vpop.f32.mrf.mxu0
        %v8792 = vadd.f32 0.0, %v8791
        %8793 = vmatmul.f32.gmra.mxu0 %v8754
        %v8794 = vpop.f32.mrf.mxu0
        %v8795 = vadd.f32 0.0, %v8794
        %8796 = vmatmul.f32.gmra.mxu0 %v8757
        %v8797 = vpop.f32.mrf.mxu0
        %v8798 = vadd.f32 0.0, %v8797
        %8799 = vdwg.mxu0
        %v8800 = vadd.f32 %v8712, %v8777
        %v8801 = vadd.f32 %v8715, %v8780
        %v8802 = vadd.f32 %v8718, %v8783
        %v8803 = vadd.f32 %v8721, %v8786
        %v8804 = vadd.f32 %v8724, %v8789
        %v8805 = vadd.f32 %v8727, %v8792
        %v8806 = vadd.f32 %v8730, %v8795
        %v8807 = vadd.f32 %v8733, %v8798
        %8809 = vset.pattern.permute.xlu0 0
        %8810 = vperm.xlu0 %8809, %v7093
        %v8811 = vpop.permute.xlu0 %8810
        %8814 = vset.pattern.permute.xlu0 0
        %8815 = vperm.xlu0 %8814, %v7094
        %v8816 = vpop.permute.xlu0 %8815
        %8819 = vset.pattern.permute.xlu0 0
        %8820 = vperm.xlu0 %8819, %v7095
        %v8821 = vpop.permute.xlu0 %8820
        %8824 = vset.pattern.permute.xlu0 0
        %8825 = vperm.xlu0 %8824, %v7096
        %v8826 = vpop.permute.xlu0 %8825
        %8829 = vset.pattern.permute.xlu0 0
        %8830 = vperm.xlu0 %8829, %v7097
        %v8831 = vpop.permute.xlu0 %8830
        %8834 = vset.pattern.permute.xlu0 0
        %8835 = vperm.xlu0 %8834, %v7098
        %v8836 = vpop.permute.xlu0 %8835
        %8839 = vset.pattern.permute.xlu0 0
        %8840 = vperm.xlu0 %8839, %v7099
        %v8841 = vpop.permute.xlu0 %8840
        %8844 = vset.pattern.permute.xlu0 0
        %8845 = vperm.xlu0 %8844, %v7100
        %v8846 = vpop.permute.xlu0 %8845
        %v8848 = vadd.f32 %v8800, %v8811
        %v8849 = vadd.f32 %v8801, %v8816
        %v8850 = vadd.f32 %v8802, %v8821
        %v8851 = vadd.f32 %v8803, %v8826
        %v8852 = vadd.f32 %v8804, %v8831
        %v8853 = vadd.f32 %v8805, %v8836
        %v8854 = vadd.f32 %v8806, %v8841
        %v8855 = vadd.f32 %v8807, %v8846
        %v8856 = vld [vmem:[%s9] sm:$0xff]
        %v8857 = vld [vmem:[%s9 + $0x8] sm:$0xff]
        %v8858 = vld [vmem:[%s9 + $0x10] sm:$0xff]
        %v8859 = vld [vmem:[%s9 + $0x18] sm:$0xff]
        %v8860 = vld [vmem:[%s9 + $0x20] sm:$0xff]
        %v8861 = vld [vmem:[%s9 + $0x28] sm:$0xff]
        %v8862 = vld [vmem:[%s9 + $0x30] sm:$0xff]
        %v8863 = vld [vmem:[%s9 + $0x38] sm:$0xff]
        %v8864 = vld [vmem:[%s9 + $0x40] sm:$0xff]
        %v8865 = vld [vmem:[%s9 + $0x48] sm:$0xff]
        %v8866 = vld [vmem:[%s9 + $0x50] sm:$0xff]
        %v8867 = vld [vmem:[%s9 + $0x58] sm:$0xff]
        %v8868 = vld [vmem:[%s9 + $0x60] sm:$0xff]
        %v8869 = vld [vmem:[%s9 + $0x68] sm:$0xff]
        %v8870 = vld [vmem:[%s9 + $0x70] sm:$0xff]
        %v8871 = vld [vmem:[%s9 + $0x78] sm:$0xff]
        %v8872 = vld [vmem:[%s10] sm:$0xff]
        %v8873 = vld [vmem:[%s10 + $0x8] sm:$0xff]
        %v8874 = vld [vmem:[%s10 + $0x10] sm:$0xff]
        %v8875 = vld [vmem:[%s10 + $0x18] sm:$0xff]
        %v8876 = vld [vmem:[%s10 + $0x20] sm:$0xff]
        %v8877 = vld [vmem:[%s10 + $0x28] sm:$0xff]
        %v8878 = vld [vmem:[%s10 + $0x30] sm:$0xff]
        %v8879 = vld [vmem:[%s10 + $0x38] sm:$0xff]
        %v8880 = vld [vmem:[%s10 + $0x40] sm:$0xff]
        %v8881 = vld [vmem:[%s10 + $0x48] sm:$0xff]
        %v8882 = vld [vmem:[%s10 + $0x50] sm:$0xff]
        %v8883 = vld [vmem:[%s10 + $0x58] sm:$0xff]
        %v8884 = vld [vmem:[%s10 + $0x60] sm:$0xff]
        %v8885 = vld [vmem:[%s10 + $0x68] sm:$0xff]
        %v8886 = vld [vmem:[%s10 + $0x70] sm:$0xff]
        %v8887 = vld [vmem:[%s10 + $0x78] sm:$0xff]
        %8889 = vset.pattern.permute.xlu0 0
        %8890 = vperm.xlu0 %8889, %v8872
        %v8891 = vpop.permute.xlu0 %8890
        %8894 = vset.pattern.permute.xlu0 0
        %8895 = vperm.xlu0 %8894, %v8873
        %v8896 = vpop.permute.xlu0 %8895
        %8899 = vset.pattern.permute.xlu0 0
        %8900 = vperm.xlu0 %8899, %v8874
        %v8901 = vpop.permute.xlu0 %8900
        %8904 = vset.pattern.permute.xlu0 0
        %8905 = vperm.xlu0 %8904, %v8875
        %v8906 = vpop.permute.xlu0 %8905
        %8909 = vset.pattern.permute.xlu0 0
        %8910 = vperm.xlu0 %8909, %v8876
        %v8911 = vpop.permute.xlu0 %8910
        %8914 = vset.pattern.permute.xlu0 0
        %8915 = vperm.xlu0 %8914, %v8877
        %v8916 = vpop.permute.xlu0 %8915
        %8919 = vset.pattern.permute.xlu0 0
        %8920 = vperm.xlu0 %8919, %v8878
        %v8921 = vpop.permute.xlu0 %8920
        %8924 = vset.pattern.permute.xlu0 0
        %8925 = vperm.xlu0 %8924, %v8879
        %v8926 = vpop.permute.xlu0 %8925
        %8929 = vset.pattern.permute.xlu0 0
        %8930 = vperm.xlu0 %8929, %v8880
        %v8931 = vpop.permute.xlu0 %8930
        %8934 = vset.pattern.permute.xlu0 0
        %8935 = vperm.xlu0 %8934, %v8881
        %v8936 = vpop.permute.xlu0 %8935
        %8939 = vset.pattern.permute.xlu0 0
        %8940 = vperm.xlu0 %8939, %v8882
        %v8941 = vpop.permute.xlu0 %8940
        %8944 = vset.pattern.permute.xlu0 0
        %8945 = vperm.xlu0 %8944, %v8883
        %v8946 = vpop.permute.xlu0 %8945
        %8949 = vset.pattern.permute.xlu0 0
        %8950 = vperm.xlu0 %8949, %v8884
        %v8951 = vpop.permute.xlu0 %8950
        %8954 = vset.pattern.permute.xlu0 0
        %8955 = vperm.xlu0 %8954, %v8885
        %v8956 = vpop.permute.xlu0 %8955
        %8959 = vset.pattern.permute.xlu0 0
        %8960 = vperm.xlu0 %8959, %v8886
        %v8961 = vpop.permute.xlu0 %8960
        %8964 = vset.pattern.permute.xlu0 0
        %8965 = vperm.xlu0 %8964, %v8887
        %v8966 = vpop.permute.xlu0 %8965
        %v8969 = vsel %vm963, %v8856, 0
        %v8972 = vsel %vm963, %v8857, 0
        %v8975 = vsel %vm963, %v8858, 0
        %v8978 = vsel %vm963, %v8859, 0
        %v8981 = vsel %vm963, %v8860, 0
        %v8984 = vsel %vm963, %v8861, 0
        %v8987 = vsel %vm963, %v8862, 0
        %v8990 = vsel %vm963, %v8863, 0
        %v8993 = vsel %vm963, %v8864, 0
        %v8996 = vsel %vm963, %v8865, 0
        %v8999 = vsel %vm963, %v8866, 0
        %v9002 = vsel %vm963, %v8867, 0
        %v9005 = vsel %vm963, %v8868, 0
        %v9008 = vsel %vm963, %v8869, 0
        %v9011 = vsel %vm963, %v8870, 0
        %v9014 = vsel %vm963, %v8871, 0
        %9016 = vmatpush.msra.mxu0 0.0
        %9017 = vmatpush.msra.mxu0 0.0
        %9018 = vmatpush.msra.mxu0 0.0
        %9019 = vmatpush.msra.mxu0 0.0
        %9020 = vmatpush.msra.mxu0 0.0
        %9021 = vmatpush.msra.mxu0 0.0
        %9022 = vmatpush.msra.mxu0 0.0
        %9023 = vmatpush.msra.mxu0 0.0
        %9024 = vmatpush.msra.mxu0 %v8855
        %9025 = vmatpush.msra.mxu0 %v8854
        %9026 = vmatpush.msra.mxu0 %v8853
        %9027 = vmatpush.msra.mxu0 %v8852
        %9028 = vmatpush.msra.mxu0 %v8851
        %9029 = vmatpush.msra.mxu0 %v8850
        %9030 = vmatpush.msra.mxu0 %v8849
        %9031 = vmatpush.msra.mxu0 %v8848
        %9032 = vmatmul.f32.gmra.mxu0 %v8969
        %v9033 = vpop.f32.mrf.mxu0
        %v9034 = vadd.f32 %v8891, %v9033
        %9035 = vmatmul.f32.gmra.mxu0 %v8972
        %v9036 = vpop.f32.mrf.mxu0
        %v9037 = vadd.f32 %v8896, %v9036
        %9038 = vmatmul.f32.gmra.mxu0 %v8975
        %v9039 = vpop.f32.mrf.mxu0
        %v9040 = vadd.f32 %v8901, %v9039
        %9041 = vmatmul.f32.gmra.mxu0 %v8978
        %v9042 = vpop.f32.mrf.mxu0
        %v9043 = vadd.f32 %v8906, %v9042
        %9044 = vmatmul.f32.gmra.mxu0 %v8981
        %v9045 = vpop.f32.mrf.mxu0
        %v9046 = vadd.f32 %v8911, %v9045
        %9047 = vmatmul.f32.gmra.mxu0 %v8984
        %v9048 = vpop.f32.mrf.mxu0
        %v9049 = vadd.f32 %v8916, %v9048
        %9050 = vmatmul.f32.gmra.mxu0 %v8987
        %v9051 = vpop.f32.mrf.mxu0
        %v9052 = vadd.f32 %v8921, %v9051
        %9053 = vmatmul.f32.gmra.mxu0 %v8990
        %v9054 = vpop.f32.mrf.mxu0
        %v9055 = vadd.f32 %v8926, %v9054
        %9056 = vmatmul.f32.gmra.mxu0 %v8993
        %v9057 = vpop.f32.mrf.mxu0
        %v9058 = vadd.f32 %v8931, %v9057
        %9059 = vmatmul.f32.gmra.mxu0 %v8996
        %v9060 = vpop.f32.mrf.mxu0
        %v9061 = vadd.f32 %v8936, %v9060
        %9062 = vmatmul.f32.gmra.mxu0 %v8999
        %v9063 = vpop.f32.mrf.mxu0
        %v9064 = vadd.f32 %v8941, %v9063
        %9065 = vmatmul.f32.gmra.mxu0 %v9002
        %v9066 = vpop.f32.mrf.mxu0
        %v9067 = vadd.f32 %v8946, %v9066
        %9068 = vmatmul.f32.gmra.mxu0 %v9005
        %v9069 = vpop.f32.mrf.mxu0
        %v9070 = vadd.f32 %v8951, %v9069
        %9071 = vmatmul.f32.gmra.mxu0 %v9008
        %v9072 = vpop.f32.mrf.mxu0
        %v9073 = vadd.f32 %v8956, %v9072
        %9074 = vmatmul.f32.gmra.mxu0 %v9011
        %v9075 = vpop.f32.mrf.mxu0
        %v9076 = vadd.f32 %v8961, %v9075
        %9077 = vmatmul.f32.gmra.mxu0 %v9014
        %v9078 = vpop.f32.mrf.mxu0
        %v9079 = vadd.f32 %v8966, %v9078
        %9080 = vdwg.mxu0
        %v9081 = vmax.f32 %v9034, 0.0
        %v9082 = vmax.f32 %v9037, 0.0
        %v9083 = vmax.f32 %v9040, 0.0
        %v9084 = vmax.f32 %v9043, 0.0
        %v9085 = vmax.f32 %v9046, 0.0
        %v9086 = vmax.f32 %v9049, 0.0
        %v9087 = vmax.f32 %v9052, 0.0
        %v9088 = vmax.f32 %v9055, 0.0
        %v9089 = vmax.f32 %v9058, 0.0
        %v9090 = vmax.f32 %v9061, 0.0
        %v9091 = vmax.f32 %v9064, 0.0
        %v9092 = vmax.f32 %v9067, 0.0
        %v9093 = vmax.f32 %v9070, 0.0
        %v9094 = vmax.f32 %v9073, 0.0
        %v9095 = vmax.f32 %v9076, 0.0
        %v9096 = vmax.f32 %v9079, 0.0
        %v9097 = vld [vmem:[#allocation14] sm:$0x1]
        %v9098 = vld [vmem:[#allocation2] sm:$0x1]
        %9100 = vset.pattern.permute.xlu0 0
        %9101 = vperm.xlu0 %9100, %v9098
        %v9102 = vpop.permute.xlu0 %9101
        %v9104 = vperm.slane %v9102, 0
        %9105 = vmatpush.msra.mxu0 %v9096
        %9106 = vmatpush.msra.mxu0 %v9095
        %9107 = vmatpush.msra.mxu0 %v9094
        %9108 = vmatpush.msra.mxu0 %v9093
        %9109 = vmatpush.msra.mxu0 %v9092
        %9110 = vmatpush.msra.mxu0 %v9091
        %9111 = vmatpush.msra.mxu0 %v9090
        %9112 = vmatpush.msra.mxu0 %v9089
        %9113 = vmatpush.msra.mxu0 %v9088
        %9114 = vmatpush.msra.mxu0 %v9087
        %9115 = vmatpush.msra.mxu0 %v9086
        %9116 = vmatpush.msra.mxu0 %v9085
        %9117 = vmatpush.msra.mxu0 %v9084
        %9118 = vmatpush.msra.mxu0 %v9083
        %9119 = vmatpush.msra.mxu0 %v9082
        %9120 = vmatpush.msra.mxu0 %v9081
        %9121 = vmatmul.f32.gmra.mxu0 %v9097
        %v9122 = vpop.f32.mrf.mxu0
        %v9123 = vadd.f32 %v9104, %v9122
        %9124 = vdwg.mxu0
        %vm9125 = vcmask 516096
        %9126 = vst.msk [vmem:[%s555] sm:$0x1] %vm9125, %v9123
        %s9127 = sand.u32 %s321, 1
        %s9128 = scalar_lea.sflag [#allocation5], %s9127
        %s9129 = sand.u32 %s321, 1
        %s9130 = scalar_lea.vmem [#allocation15], %s9129
        // Predicated region
        $region101: #{tpu_custom_call.1} parent=71 // pred_check
          %p9131 = pneg %p331
        $region102: #{tpu_custom_call.1} parent=71 // pred_check_branch
          %9133 = sbr.rel (%p9131) target = $region104
        $region103: #{tpu_custom_call.1} parent=71 // pred_region
          %9135 = vsyncadd %s9128, 0
          %s9136 = scalar_lea.hbm %s13, %s35
          %s9138 = sshll.u32 %s9130, 4
          %s9139 = int_to_ptr.vmem [resolvable:$true] %s9138
          %s9140 = sshll.u32 %s9136, 4
          %s9141 = int_to_ptr.hbm [resolvable:$true] %s9140
          %9143 = dma.vmem_to_hbm [thread:$0]  %s9139, 16, %s9141, %s9128
        $region104: #{tpu_custom_call.1} parent=71 // pred_fallthru
          _
      $region72: #{tpu_custom_call.1} parent=5 // pred_fallthru
        _
      %p9144 = scmp.le.s32.totalorder 2, %s30
      // Predicated region
      $region105: #{tpu_custom_call.1} parent=5 // pred_check
        %p9145 = pneg %p9144
      $region106: #{tpu_custom_call.1} parent=5 // pred_check_branch
        %9147 = sbr.rel (%p9145) target = $region108
      $region107: #{tpu_custom_call.1} parent=5 // pred_region
        %s9148 = ssub.s32 %s30, 2
        // Predicated region
        $region109: #{tpu_custom_call.1} parent=107 // pred_check
          %p9149 = pneg %p337
        $region110: #{tpu_custom_call.1} parent=107 // pred_check_branch
          %9151 = sbr.rel (%p9149) target = $region112
        $region111: #{tpu_custom_call.1} parent=107 // pred_region
          %s9152 = sand.u32 %s322, 1
          %s9153 = scalar_lea.sflag [#allocation5], %s9152
          %s9154 = sand.u32 %s322, 1
          %s9155 = scalar_lea.vmem [#allocation15], %s9154
          %9157 = dma.done %s9153, 16
        $region112: #{tpu_custom_call.1} parent=107 // pred_fallthru
          _
      $region108: #{tpu_custom_call.1} parent=5 // pred_fallthru
        _
    $region6: #{tpu_custom_call.1} parent=1 // loop_footer
      %s34 = sadd.s32 1, %s30
    $region7: #{tpu_custom_call.1} parent=1 // loop_footer_branch
      %29 = sbr.rel target = $region3
    $region8: #{tpu_custom_call.1} parent=1 // loop_exit
      _
    %9158 = vsyncpa [#allocation4], 1
    %s9159 = scalar_lea.sflag [#allocation4], 1
    %9160 = vsyncpa %s9159, 1
    %9161 = vsyncpa [#allocation7], 1
    %9162 = vsyncpa [#allocation10], 1
    %9163 = vsyncpa [#allocation13], 1
    %9164 = vsyncpa [#allocation5], 1
    %s9165 = scalar_lea.sflag [#allocation5], 1
    %9166 = vsyncpa %s9165, 1

</llo_original>
